<compile_context>
chip_gen: v5e
topology: v5e:2x2
jax: 0.10.0
libtpu: 0.0.40
codegen_flags: <defaults>
</compile_context>

<pallas_src>
import functools
import math

import jax
import jax.numpy as jnp
from jax.experimental import pallas as pl
from jax.experimental.pallas import tpu as pltpu

LANE = 128
_VMEM_LIMIT = 32 * 1024 * 1024


# ============================================================================
# small helpers
# ============================================================================
def _lane_pad(n):
    return max(LANE, ((n + LANE - 1) // LANE) * LANE)


def _leaky(x, leak):
    return jnp.where(x > 0, x, leak * x)


def _fs(shape):
    """Full-array BlockSpec for a single-step grid."""
    nd = len(shape)
    return pl.BlockSpec(tuple(shape), lambda i, _n=nd: (0,) * _n)


def _compiler_params():
    return pltpu.CompilerParams(dimension_semantics=("arbitrary",),
                                vmem_limit_bytes=_VMEM_LIMIT)


def _row_in_image(M, L, rows):
    """Row index within its image for every element of an [M, L] tile."""
    i = jax.lax.broadcasted_iota(jnp.int32, (M, L), 0)
    if (rows & (rows - 1)) == 0:       # power of two -> cheap bitwise path
        return jnp.bitwise_and(i, rows - 1)
    return i % rows


def _taps_lhs(h_scr, M, kh, rin, rows):
    """Fold the kh row taps into the matmul K dim: concatenate the kh sublane-shifted
    scratch windows along lanes. Out-of-image neighbour rows are masked to zero
    (zero contribution = sparse-Minkowski padding semantics)."""
    pad = (kh - 1) // 2
    wins = []
    for t in range(kh):
        win = h_scr[pl.ds(t, M), :]
        dt = t - pad
        if dt != 0:
            keep = jnp.logical_and(rin + dt >= 0, rin + dt < rows)
            win = jnp.where(keep, win, jnp.zeros_like(win))
        wins.append(win)
    if kh == 1:
        return wins[0]
    return jnp.concatenate(wins, axis=-1)


# ============================================================================
# Pallas kernels
# ============================================================================
def _conv_in_kernel(x_ref, w_ref, b_ref, o_ref, h_scr, *, rows, kh):
    """Input layer: plain k x k 'same' conv (no BN / activation).
    x_ref [M, L] bf16; w_ref [kh*L, N] bf16 (tap+column banded); b_ref [1, N] f32."""
    M, L = x_ref.shape
    pad = (kh - 1) // 2
    if pad > 0:
        h_scr[0:pad, :] = jnp.zeros((pad, L), h_scr.dtype)
        h_scr[pad + M:M + kh - 1, :] = jnp.zeros((kh - 1 - pad, L), h_scr.dtype)
    h_scr[pl.ds(pad, M), :] = x_ref[...]
    rin = _row_in_image(M, L, rows)
    lhs = _taps_lhs(h_scr, M, kh, rin, rows)
    y = jnp.dot(lhs, w_ref[...], preferred_element_type=jnp.float32) + b_ref[...]
    o_ref[...] = y.astype(o_ref.dtype)


def _resblocks_kernel(x_ref, w_ref, v_ref, o_ref, h_scr, *, reps, rows, leak):
    """All `reps` pre-activation ResNet blocks of one level in a single kernel.
    x_ref [M, L] bf16; w_ref [2*reps, 3*L, L] bf16; v_ref [2*reps, 3, L] f32
    (bias, scale, shift); h_scr [M+2, L] bf16 (halo rows zeroed once)."""
    M, L = x_ref.shape
    h_scr[0:1, :] = jnp.zeros((1, L), h_scr.dtype)
    h_scr[M + 1:M + 2, :] = jnp.zeros((1, L), h_scr.dtype)
    rin = _row_in_image(M, L, rows)
    x = x_ref[...].astype(jnp.float32)
    for r in range(reps):
        h = x
        for c in range(2):
            i = 2 * r + c
            v = v_ref[i]                                    # [3, L] f32
            a = _leaky(h * v[1:2, :] + v[2:3, :], leak)
            h_scr[pl.ds(1, M), :] = a.astype(jnp.bfloat16)  # single bf16 cast per conv
            lhs = _taps_lhs(h_scr, M, 3, rin, rows)         # [M, 3L], one K=3L dot
            h = jnp.dot(lhs, w_ref[i],
                        preferred_element_type=jnp.float32) + v[0:1, :]
        x = x + h                                           # identity residual (f32)
    o_ref[...] = x.astype(o_ref.dtype)


def _bn_matmul_kernel(x_ref, w_ref, v_ref, b_ref, o_ref, *, leak):
    """BN + LeakyReLU + matmul (used for the 2x2/s2 down conv on the row-pair-folded
    input). x [M, K] bf16; w [K, N] bf16; v [2, K] f32 (scale, shift); b [1, N] f32."""
    x = x_ref[...].astype(jnp.float32)
    v = v_ref[...]
    h = _leaky(x * v[0:1, :] + v[1:2, :], leak)
    y = jnp.dot(h.astype(jnp.bfloat16), w_ref[...],
                preferred_element_type=jnp.float32)
    o_ref[...] = (y + b_ref[...]).astype(o_ref.dtype)


def _up_lateral_kernel(x_ref, e_ref, wu_ref, wl_ref, v_ref, b_ref, o_ref, *, leak):
    """Fused decoder step: BN + LeakyReLU + 2x2/s2 transposed conv of the deep feature
    plus the lateral Linear of the skip, emitted di-major so the wrapper only needs a
    contiguous reshape. x [M, K] bf16; e [M, N] bf16; wu [K, N]; wl [N, N]."""
    x = x_ref[...].astype(jnp.float32)
    v = v_ref[...]
    h = _leaky(x * v[0:1, :] + v[1:2, :], leak)
    y = jnp.dot(h.astype(jnp.bfloat16), wu_ref[...],
                preferred_element_type=jnp.float32)
    y = y + jnp.dot(e_ref[...], wl_ref[...], preferred_element_type=jnp.float32)
    o_ref[...] = (y + b_ref[...]).astype(o_ref.dtype)


# ============================================================================
# pallas_call wrappers (single whole-batch step; activations bf16 in HBM)
# ============================================================================
def _call_conv_in(x, w, b, *, rows, kh, flops):
    M, L = x.shape
    n = w.shape[-1]
    ba = int(2 * x.size + 2 * w.size + 4 * b.size + 2 * M * n)
    return pl.pallas_call(
        functools.partial(_conv_in_kernel, rows=rows, kh=kh),
        out_shape=jax.ShapeDtypeStruct((M, n), jnp.bfloat16),
        grid=(1,),
        in_specs=[_fs(x.shape), _fs(w.shape), _fs(b.shape)],
        out_specs=_fs((M, n)),
        scratch_shapes=[pltpu.VMEM((M + kh - 1, L), jnp.bfloat16)],
        compiler_params=_compiler_params(),
        cost_estimate=pl.CostEstimate(flops=int(flops), transcendentals=0,
                                      bytes_accessed=ba),
    )(x, w, b)


def _call_resblocks(x, w, v, *, reps, rows, leak, flops):
    M, L = x.shape
    ba = int(4 * x.size + 2 * w.size + 4 * v.size)
    return pl.pallas_call(
        functools.partial(_resblocks_kernel, reps=reps, rows=rows, leak=leak),
        out_shape=jax.ShapeDtypeStruct((M, L), jnp.bfloat16),
        grid=(1,),
        in_specs=[_fs(x.shape), _fs(w.shape), _fs(v.shape)],
        out_specs=_fs((M, L)),
        scratch_shapes=[pltpu.VMEM((M + 2, L), jnp.bfloat16)],
        compiler_params=_compiler_params(),
        cost_estimate=pl.CostEstimate(flops=int(flops), transcendentals=0,
                                      bytes_accessed=ba),
    )(x, w, v)


def _call_bn_matmul(x, w, v, b, *, leak, flops):
    M, _ = x.shape
    N = w.shape[-1]
    ba = int(2 * x.size + 2 * w.size + 4 * v.size + 4 * b.size + 2 * M * N)
    return pl.pallas_call(
        functools.partial(_bn_matmul_kernel, leak=leak),
        out_shape=jax.ShapeDtypeStruct((M, N), jnp.bfloat16),
        grid=(1,),
        in_specs=[_fs(x.shape), _fs(w.shape), _fs(v.shape), _fs(b.shape)],
        out_specs=_fs((M, N)),
        compiler_params=_compiler_params(),
        cost_estimate=pl.CostEstimate(flops=int(flops), transcendentals=0,
                                      bytes_accessed=ba),
    )(x, w, v, b)


def _call_up_lateral(x, e, wu, wl, v, b, *, leak, flops):
    M, _ = x.shape
    N = wu.shape[-1]
    ba = int(2 * (x.size + e.size + wu.size + wl.size) + 4 * (v.size + b.size) + 2 * M * N)
    return pl.pallas_call(
        functools.partial(_up_lateral_kernel, leak=leak),
        out_shape=jax.ShapeDtypeStruct((M, N), jnp.bfloat16),
        grid=(1,),
        in_specs=[_fs(x.shape), _fs(e.shape), _fs(wu.shape), _fs(wl.shape),
                  _fs(v.shape), _fs(b.shape)],
        out_specs=_fs((M, N)),
        compiler_params=_compiler_params(),
        cost_estimate=pl.CostEstimate(flops=int(flops), transcendentals=0,
                                      bytes_accessed=ba),
    )(x, e, wu, wl, v, b)


# ============================================================================
# One-time parameter preparation (banded weights, folded BN) -- hoisted out of
# the jitted forward.
# ============================================================================
def _fold_bn(bn, eps=1e-5):
    scale = bn['gamma'] / jnp.sqrt(bn['var'] + eps)
    shift = bn['beta'] - bn['mean'] * scale
    return scale, shift


def _fold_vec(v, wd, lp):
    t = jnp.tile(jnp.asarray(v, jnp.float32), wd)
    return jnp.pad(t, (0, lp - t.shape[0]))


def _band_conv_same(w, wd, lp_in, lp_out):
    """[kh,kw,Cin,Cout] 'same' conv -> [kh*lp_in, lp_out] banded matrix (row taps stacked
    along K; column taps as block bands; zero-padded to 128-multiple lanes)."""
    kh, kw, cin, cout = w.shape
    p = (kw - 1) // 2
    mats = []
    for di in range(kh):
        m = jnp.zeros((wd, cin, wd, cout), w.dtype)
        for dj in range(kw):
            sel = jnp.eye(wd, wd, k=p - dj, dtype=w.dtype)
            m = m + jnp.einsum('ab,io->aibo', sel, w[di, dj])
        m = m.reshape(wd * cin, wd * cout)
        m = jnp.pad(m, ((0, lp_in - wd * cin), (0, lp_out - wd * cout)))
        mats.append(m)
    return jnp.concatenate(mats, axis=0)


def _band_down2(w, wd_in, lp_in, lp_out):
    """2x2/s2 conv -> [2*lp_in, lp_out] matrix acting on the row-pair-folded input."""
    kh, kw, cin, cout = w.shape
    wd_out = wd_in // kw
    mm = jnp.zeros((kh, wd_in, cin, wd_out, cout), w.dtype)
    for di in range(kh):
        for dj in range(kw):
            sel = (jnp.arange(wd_in)[:, None] ==
                   kw * jnp.arange(wd_out)[None, :] + dj).astype(w.dtype)
            mm = mm.at[di].add(jnp.einsum('ab,io->aibo', sel, w[di, dj]))
    mm = mm.reshape(kh, wd_in * cin, wd_out * cout)
    mm = jnp.pad(mm, ((0, 0), (0, lp_in - wd_in * cin), (0, lp_out - wd_out * cout)))
    return mm.reshape(kh * lp_in, lp_out)


def _band_up2(w, wd_in, lp_in, lp_out):
    """2x2/s2 transposed conv -> [lp_in, 2*lp_out]; the two output rows per input row
    are emitted di-major so only a contiguous reshape remains outside the kernel."""
    kh, kw, cin, cout = w.shape
    wd_out = wd_in * kw
    mm = jnp.zeros((wd_in, cin, kh, wd_out, cout), w.dtype)
    for di in range(kh):
        for dj in range(kw):
            sel = (kw * jnp.arange(wd_in)[:, None] + dj ==
                   jnp.arange(wd_out)[None, :]).astype(w.dtype)
            mm = mm.at[:, :, di, :, :].add(jnp.einsum('ab,io->aibo', sel, w[di, dj]))
    mm = mm.reshape(wd_in * cin, kh, wd_out * cout)
    mm = jnp.pad(mm, ((0, lp_in - wd_in * cin), (0, 0), (0, lp_out - wd_out * cout)))
    return mm.reshape(lp_in, kh * lp_out)


def _fold_lateral(wl, wd_out, lp_out):
    f = wl.shape[0]
    blk = jnp.kron(jnp.eye(wd_out, dtype=wl.dtype), wl)
    blk = jnp.pad(blk, ((0, lp_out - wd_out * f), (0, lp_out - wd_out * f)))
    return jnp.kron(jnp.eye(2, dtype=wl.dtype), blk)


def prepare_fpn_params(params, cfg, spatial_hw):
    depth, nf, reps = cfg['depth'], cfg['num_filters'], cfg['reps']
    _, W0 = spatial_hw
    nplanes = [(i + 1) * nf for i in range(depth)]
    widths = [W0 // (2 ** i) for i in range(depth)]
    lps = [_lane_pad(wd * c) for wd, c in zip(widths, nplanes)]
    lp_in = _lane_pad(W0 * cfg['num_input'])

    prep = {}
    prep['in_w'] = _band_conv_same(params['input_w'], W0, lp_in, lps[0]).astype(jnp.bfloat16)
    prep['in_b'] = _fold_vec(params['input_b'], W0, lps[0]).reshape(1, -1)

    def block_group(blocks, wd, lp):
        ws, vs = [], []
        for blk in blocks:
            for (w, b, bn) in ((blk['w1'], blk['b1'], blk['bn1']),
                               (blk['w2'], blk['b2'], blk['bn2'])):
                ws.append(_band_conv_same(w, wd, lp, lp))
                s, sh = _fold_bn(bn)
                vs.append(jnp.stack([_fold_vec(b, wd, lp),
                                     _fold_vec(s, wd, lp),
                                     _fold_vec(sh, wd, lp)]))
        return jnp.stack(ws).astype(jnp.bfloat16), jnp.stack(vs).astype(jnp.float32)

    prep['enc_w'], prep['enc_v'] = [], []
    for i in range(depth):
        w, v = block_group(params['encoding_block'][i], widths[i], lps[i])
        prep['enc_w'].append(w)
        prep['enc_v'].append(v)

    prep['down_w'], prep['down_v'], prep['down_b'] = [], [], []
    for i in range(depth - 1):
        pc = params['encoding_conv'][i]
        prep['down_w'].append(_band_down2(pc['w'], widths[i], lps[i], lps[i + 1])
                              .astype(jnp.bfloat16))
        s, sh = _fold_bn(pc['bn'])
        prep['down_v'].append(jnp.stack([jnp.tile(_fold_vec(s, widths[i], lps[i]), 2),
                                         jnp.tile(_fold_vec(sh, widths[i], lps[i]), 2)]))
        prep['down_b'].append(_fold_vec(pc['b'], widths[i + 1], lps[i + 1]).reshape(1, -1))

    prep['up_w'], prep['lat_w'], prep['up_v'], prep['up_b'] = [], [], [], []
    prep['dec_w'], prep['dec_v'] = [], []
    for i in range(depth - 1):
        li = depth - 1 - i
        lo = li - 1
        pc = params['decoding_conv'][i]
        prep['up_w'].append(_band_up2(pc['w'], widths[li], lps[li], lps[lo])
                            .astype(jnp.bfloat16))
        s, sh = _fold_bn(pc['bn'])
        prep['up_v'].append(jnp.stack([_fold_vec(s, widths[li], lps[li]),
                                       _fold_vec(sh, widths[li], lps[li])]))
        lat = params['lateral'][i]
        prep['lat_w'].append(_fold_lateral(lat['w'], widths[lo], lps[lo]).astype(jnp.bfloat16))
        prep['up_b'].append(jnp.tile(_fold_vec(pc['b'] + lat['b'], widths[lo], lps[lo]), 2)
                            .reshape(1, -1))
        w, v = block_group(params['decoding_block'][i], widths[lo], lps[lo])
        prep['dec_w'].append(w)
        prep['dec_v'].append(v)
    return prep


# ============================================================================
# Parameter initialization (deterministic, synthetic)
# ============================================================================
def init_bn(key, C):
    k1, k2, k3, k4 = jax.random.split(key, 4)
    return dict(
        gamma=1.0 + 0.1 * jax.random.normal(k1, (C,)),
        beta=0.1 * jax.random.normal(k2, (C,)),
        mean=0.1 * jax.random.normal(k3, (C,)),
        var=1.0 + 0.1 * jnp.abs(jax.random.normal(k4, (C,))),
    )


def init_conv(key, kh, kw, cin, cout):
    w = jax.random.normal(key, (kh, kw, cin, cout)) / math.sqrt(kh * kw * cin)
    b = jnp.zeros((cout,), jnp.float32)  # ME convs have bias=False by default
    return w, b


def init_resnet_block(key, F):
    k1, k2, k3, k4 = jax.random.split(key, 4)
    w1, b1 = init_conv(k1, 3, 3, F, F)
    w2, b2 = init_conv(k2, 3, 3, F, F)
    return dict(w1=w1, b1=b1, bn1=init_bn(k3, F),
                w2=w2, b2=b2, bn2=init_bn(k4, F))


def init_fpn_params(key, cfg):
    nf, depth, reps = cfg['num_filters'], cfg['depth'], cfg['reps']
    nPlanes = [(i + 1) * nf for i in range(depth)]
    keys = iter(jax.random.split(key, 256))
    params = {}
    ik = cfg['input_kernel']
    params['input_w'], params['input_b'] = init_conv(next(keys), ik, ik,
                                                     cfg['num_input'], nf)
    params['encoding_block'] = [
        [init_resnet_block(next(keys), F) for _ in range(reps)] for F in nPlanes
    ]
    params['encoding_conv'] = []
    for i in range(depth - 1):
        w, b = init_conv(next(keys), 2, 2, nPlanes[i], nPlanes[i + 1])
        params['encoding_conv'].append(dict(w=w, b=b, bn=init_bn(next(keys), nPlanes[i])))
    params['lateral'] = []
    for F in nPlanes[-2::-1]:
        k1, k2 = jax.random.split(next(keys))
        params['lateral'].append(dict(
            w=jax.random.normal(k1, (F, F)) / math.sqrt(F),
            b=0.1 * jax.random.normal(k2, (F,))))
    params['decoding_conv'] = []
    params['decoding_block'] = []
    for level in range(depth - 2, -1, -1):
        w, b = init_conv(next(keys), 2, 2, nPlanes[level + 1], nPlanes[level])
        params['decoding_conv'].append(
            dict(w=w, b=b, bn=init_bn(next(keys), nPlanes[level + 1])))
        params['decoding_block'].append(
            [init_resnet_block(next(keys), nPlanes[level]) for _ in range(reps)])
    return params


# ============================================================================
# FPN forward (operates on the flat width-folded bf16 layout [B*H, W*C padded])
# ============================================================================
def fpn_forward(prep, x_nchw, cfg):
    depth, nf, reps = cfg['depth'], cfg['num_filters'], cfg['reps']
    leak = cfg['leakiness']
    kh = cfg['input_kernel']
    B, c0, H0, W0 = x_nchw.shape
    nplanes = [(i + 1) * nf for i in range(depth)]
    widths = [W0 // (2 ** i) for i in range(depth)]
    heights = [H0 // (2 ** i) for i in range(depth)]
    lps = [_lane_pad(wd * c) for wd, c in zip(widths, nplanes)]
    lp_in = _lane_pad(W0 * c0)

    # NCHW -> [B*H, W*C] (lane-padded to 128 multiples), bf16.
    x = jnp.transpose(x_nchw, (0, 2, 3, 1)).reshape(B * H0, W0 * c0)
    x = jnp.pad(x, ((0, 0), (0, lp_in - W0 * c0))).astype(jnp.bfloat16)

    def to_nhwc(t, lev):
        r, wd, c = heights[lev], widths[lev], nplanes[lev]
        t = t.reshape(B, r, lps[lev])[:, :, :wd * c].reshape(B, r, wd, c)
        return t.astype(jnp.float32)

    def rb_flops(lev):
        return 2 * reps * 2 * B * heights[lev] * widths[lev] * 9 * nplanes[lev] ** 2

    # ---- input layer (plain conv, no BN / activation) ----
    x = _call_conv_in(x, prep['in_w'], prep['in_b'], rows=H0, kh=kh,
                      flops=2 * B * H0 * W0 * kh * kh * c0 * nplanes[0])

    # ---- encoder ----
    enc = [(x, 0)]
    for i in range(depth):
        x = _call_resblocks(x, prep['enc_w'][i], prep['enc_v'][i],
                            reps=reps, rows=heights[i], leak=leak, flops=rb_flops(i))
        enc.append((x, i))
        if i < depth - 1:
            xr = x.reshape(B * heights[i + 1], 2 * lps[i])   # fold row pair (contiguous)
            x = _call_bn_matmul(
                xr, prep['down_w'][i], prep['down_v'][i], prep['down_b'][i], leak=leak,
                flops=2 * B * heights[i + 1] * widths[i + 1] * 4 * nplanes[i] * nplanes[i + 1])

    # ---- decoder ----
    dec = []
    for i in range(depth - 1):
        li = depth - 1 - i
        lo = li - 1
        e2d, _ = enc[-i - 2]
        e_fold = e2d.reshape(B * heights[li], 2 * lps[lo])    # pair skip rows (contiguous)
        flops_up = (2 * B * heights[li] * widths[li] * 4 * nplanes[li] * nplanes[lo]
                    + 2 * B * heights[lo] * widths[lo] * nplanes[lo] ** 2)
        x = _call_up_lateral(x, e_fold, prep['up_w'][i], prep['lat_w'][i],
                             prep['up_v'][i], prep['up_b'][i], leak=leak, flops=flops_up)
        x = x.reshape(B * heights[lo], lps[lo])               # di-major -> row order (contiguous)
        x = _call_resblocks(x, prep['dec_w'][i], prep['dec_v'][i],
                            reps=reps, rows=heights[lo], leak=leak, flops=rb_flops(lo))
        dec.append((x, lo))

    return {
        'encoderTensors': [to_nhwc(t, lev) for (t, lev) in enc],
        'decoderTensors': [to_nhwc(t, lev) for (t, lev) in dec],
    }


# ============================================================================
# Demo
# ============================================================================
if __name__ == "__main__":
    cfg = dict(num_input=4, num_filters=8, depth=3, reps=2, leakiness=0.33,
               input_kernel=3)

    key = jax.random.PRNGKey(0)
    kp, kx = jax.random.split(key)
    params = init_fpn_params(kp, cfg)
    x = jax.random.normal(kx, (2, cfg['num_input'], 16, 16), jnp.float32)  # NCHW

    # One-time banded-weight / folded-BN preparation (outside the jitted forward).
    prep = prepare_fpn_params(params, cfg, (16, 16))

    fwd = jax.jit(lambda p, xin: fpn_forward(p, xin, cfg))
    out = jax.block_until_ready(fwd(prep, x))

    leaves = jax.tree_util.tree_leaves(out)
    assert len(out['encoderTensors']) == cfg['depth'] + 1
    assert len(out['decoderTensors']) == cfg['depth'] - 1
    assert out['decoderTensors'][-1].shape == (2, 16, 16, cfg['num_filters'])
    assert all(bool(jnp.all(jnp.isfinite(l))) for l in leaves)
    print("KERNEL_OK")
</pallas_src>

<mosaic_0001>
module attributes {stable_mosaic.version = 11 : i64} {
  func.func @_conv_in_kernel(%arg0: i32, %arg1: memref<32x128xbf16, #tpu.memory_space<vmem>>, %arg2: memref<384x128xbf16, #tpu.memory_space<vmem>>, %arg3: memref<1x128xf32, #tpu.memory_space<vmem>>, %arg4: memref<32x128xbf16, #tpu.memory_space<vmem>>, %arg5: memref<34x128xbf16, #tpu.memory_space<vmem>>) attributes {dimension_semantics = [#tpu.dimension_semantics<arbitrary>], iteration_bounds = array<i64: 1>, scalar_prefetch = 0 : i64, scratch_operands = 1 : i64, tpu.core_type = #tpu.core_type<tc>, window_params = [{pipeline_mode = #tpu.pipeline_mode<synchronous>, transform_indices = @transform_0, window_bounds = array<i64: 32, 128>}, {pipeline_mode = #tpu.pipeline_mode<synchronous>, transform_indices = @transform_1, window_bounds = array<i64: 384, 128>}, {pipeline_mode = #tpu.pipeline_mode<synchronous>, transform_indices = @transform_2, window_bounds = array<i64: 1, 128>}, {pipeline_mode = #tpu.pipeline_mode<synchronous>, transform_indices = @transform_3, window_bounds = array<i64: 32, 128>}]} {
    %cst = arith.constant 0.000000e+00 : bf16
    %0 = vector.broadcast %cst : bf16 to vector<1x128xbf16>
    %c0 = arith.constant 0 : index
    %c0_0 = arith.constant 0 : index
    %1 = vector.load %arg5[%c0, %c0_0] : memref<34x128xbf16, #tpu.memory_space<vmem>>, vector<1x128xbf16>
    tpu.vector_store %arg5[%c0, %c0_0], %0 {strides = array<i32>} : memref<34x128xbf16, #tpu.memory_space<vmem>>, vector<1x128xbf16>,
    %cst_1 = arith.constant 0.000000e+00 : bf16
    %2 = vector.broadcast %cst_1 : bf16 to vector<1x128xbf16>
    %c33 = arith.constant 33 : index
    %c0_2 = arith.constant 0 : index
    %3 = vector.load %arg5[%c33, %c0_2] : memref<34x128xbf16, #tpu.memory_space<vmem>>, vector<1x128xbf16>
    tpu.vector_store %arg5[%c33, %c0_2], %2 {strides = array<i32>} : memref<34x128xbf16, #tpu.memory_space<vmem>>, vector<1x128xbf16>,
    %c0_3 = arith.constant 0 : index
    %c0_4 = arith.constant 0 : index
    %4 = vector.load %arg1[%c0_3, %c0_4] : memref<32x128xbf16, #tpu.memory_space<vmem>>, vector<32x128xbf16>
    %c1 = arith.constant 1 : index
    %c0_5 = arith.constant 0 : index
    %5 = vector.load %arg5[%c1, %c0_5] : memref<34x128xbf16, #tpu.memory_space<vmem>>, vector<32x128xbf16>
    tpu.vector_store %arg5[%c1, %c0_5], %4 {strides = array<i32>} : memref<34x128xbf16, #tpu.memory_space<vmem>>, vector<32x128xbf16>,
    %6 = tpu.iota {dimensions = array<i32: 0>} : vector<32x128xi32>
    %c15_i32 = arith.constant 15 : i32
    %7 = vector.broadcast %c15_i32 : i32 to vector<32x128xi32>
    %8 = arith.andi %6, %7 : vector<32x128xi32>
    %c0_6 = arith.constant 0 : index
    %c0_7 = arith.constant 0 : index
    %9 = vector.load %arg5[%c0_6, %c0_7] : memref<34x128xbf16, #tpu.memory_space<vmem>>, vector<32x128xbf16>
    %c-1_i32 = arith.constant -1 : i32
    %10 = vector.broadcast %c-1_i32 : i32 to vector<32x128xi32>
    %11 = arith.addi %8, %10 : vector<32x128xi32>
    %c0_i32 = arith.constant 0 : i32
    %12 = vector.broadcast %c0_i32 : i32 to vector<32x128xi32>
    %13 = arith.cmpi sge, %11, %12 : vector<32x128xi32>
    %c-1_i32_8 = arith.constant -1 : i32
    %14 = vector.broadcast %c-1_i32_8 : i32 to vector<32x128xi32>
    %15 = arith.addi %8, %14 : vector<32x128xi32>
    %c16_i32 = arith.constant 16 : i32
    %16 = vector.broadcast %c16_i32 : i32 to vector<32x128xi32>
    %17 = arith.cmpi slt, %15, %16 : vector<32x128xi32>
    %18 = arith.andi %13, %17 : vector<32x128xi1>
    %cst_9 = arith.constant 0.000000e+00 : bf16
    %19 = vector.broadcast %cst_9 : bf16 to vector<32x128xbf16>
    %20 = arith.select %18, %9, %19 : vector<32x128xi1>, vector<32x128xbf16>
    %c1_10 = arith.constant 1 : index
    %c0_11 = arith.constant 0 : index
    %21 = vector.load %arg5[%c1_10, %c0_11] : memref<34x128xbf16, #tpu.memory_space<vmem>>, vector<32x128xbf16>
    %c2 = arith.constant 2 : index
    %c0_12 = arith.constant 0 : index
    %22 = vector.load %arg5[%c2, %c0_12] : memref<34x128xbf16, #tpu.memory_space<vmem>>, vector<32x128xbf16>
    %c1_i32 = arith.constant 1 : i32
    %23 = vector.broadcast %c1_i32 : i32 to vector<32x128xi32>
    %24 = arith.addi %8, %23 : vector<32x128xi32>
    %c0_i32_13 = arith.constant 0 : i32
    %25 = vector.broadcast %c0_i32_13 : i32 to vector<32x128xi32>
    %26 = arith.cmpi sge, %24, %25 : vector<32x128xi32>
    %c1_i32_14 = arith.constant 1 : i32
    %27 = vector.broadcast %c1_i32_14 : i32 to vector<32x128xi32>
    %28 = arith.addi %8, %27 : vector<32x128xi32>
    %c16_i32_15 = arith.constant 16 : i32
    %29 = vector.broadcast %c16_i32_15 : i32 to vector<32x128xi32>
    %30 = arith.cmpi slt, %28, %29 : vector<32x128xi32>
    %31 = arith.andi %26, %30 : vector<32x128xi1>
    %cst_16 = arith.constant 0.000000e+00 : bf16
    %32 = vector.broadcast %cst_16 : bf16 to vector<32x128xbf16>
    %33 = arith.select %31, %22, %32 : vector<32x128xi1>, vector<32x128xbf16>
    %34 = tpu.concatenate %20, %21, %33 in 1 : vector<32x128xbf16>, vector<32x128xbf16>, vector<32x128xbf16> -> vector<32x384xbf16>
    %c0_17 = arith.constant 0 : index
    %c0_18 = arith.constant 0 : index
    %35 = vector.load %arg2[%c0_17, %c0_18] : memref<384x128xbf16, #tpu.memory_space<vmem>>, vector<384x128xbf16>
    %cst_19 = arith.constant dense<0.000000e+00> : vector<32x128xf32>
    %36 = tpu.matmul %34, %35, %cst_19 {dimension_numbers = #tpu.dot_dimension_numbers<[1], [0], [0], [1], [0, 0, 1, 1], [], []>} : vector<32x384xbf16>, vector<384x128xbf16>, vector<32x128xf32> -> vector<32x128xf32>
    %c0_20 = arith.constant 0 : index
    %c0_21 = arith.constant 0 : index
    %37 = vector.load %arg3[%c0_20, %c0_21] : memref<1x128xf32, #tpu.memory_space<vmem>>, vector<1x128xf32>
    %38 = vector.broadcast %37 : vector<1x128xf32> to vector<32x128xf32>
    %39 = arith.addf %36, %38 : vector<32x128xf32>
    %40 = arith.truncf %39 : vector<32x128xf32> to vector<32x128xbf16>
    %c0_22 = arith.constant 0 : index
    %c0_23 = arith.constant 0 : index
    %41 = vector.load %arg4[%c0_22, %c0_23] : memref<32x128xbf16, #tpu.memory_space<vmem>>, vector<32x128xbf16>
    tpu.vector_store %arg4[%c0_22, %c0_23], %40 {strides = array<i32>} : memref<32x128xbf16, #tpu.memory_space<vmem>>, vector<32x128xbf16>,
    return
  }
  func.func @transform_0(%arg0: i32) -> (i32, i32) {
    %c0_i32 = arith.constant 0 : i32
    %c0_i32_0 = arith.constant 0 : i32
    %c0_i32_1 = arith.constant 0 : i32
    return %c0_i32, %c0_i32_0 : i32, i32
  }
  func.func @transform_1(%arg0: i32) -> (i32, i32) {
    %c0_i32 = arith.constant 0 : i32
    %c0_i32_0 = arith.constant 0 : i32
    %c0_i32_1 = arith.constant 0 : i32
    return %c0_i32, %c0_i32_0 : i32, i32
  }
  func.func @transform_2(%arg0: i32) -> (i32, i32) {
    %c0_i32 = arith.constant 0 : i32
    %c0_i32_0 = arith.constant 0 : i32
    %c0_i32_1 = arith.constant 0 : i32
    return %c0_i32, %c0_i32_0 : i32, i32
  }
  func.func @transform_3(%arg0: i32) -> (i32, i32) {
    %c0_i32 = arith.constant 0 : i32
    %c0_i32_0 = arith.constant 0 : i32
    %c0_i32_1 = arith.constant 0 : i32
    return %c0_i32, %c0_i32_0 : i32, i32
  }
}

module attributes {stable_mosaic.version = 11 : i64} {
  func.func @_bn_matmul_kernel(%arg0: i32, %arg1: memref<16x256xbf16, #tpu.memory_space<vmem>>, %arg2: memref<256x128xbf16, #tpu.memory_space<vmem>>, %arg3: memref<2x256xf32, #tpu.memory_space<vmem>>, %arg4: memref<1x128xf32, #tpu.memory_space<vmem>>, %arg5: memref<16x128xbf16, #tpu.memory_space<vmem>>) attributes {dimension_semantics = [#tpu.dimension_semantics<arbitrary>], iteration_bounds = array<i64: 1>, scalar_prefetch = 0 : i64, scratch_operands = 0 : i64, tpu.core_type = #tpu.core_type<tc>, window_params = [{pipeline_mode = #tpu.pipeline_mode<synchronous>, transform_indices = @transform_0, window_bounds = array<i64: 16, 256>}, {pipeline_mode = #tpu.pipeline_mode<synchronous>, transform_indices = @transform_1, window_bounds = array<i64: 256, 128>}, {pipeline_mode = #tpu.pipeline_mode<synchronous>, transform_indices = @transform_2, window_bounds = array<i64: 2, 256>}, {pipeline_mode = #tpu.pipeline_mode<synchronous>, transform_indices = @transform_3, window_bounds = array<i64: 1, 128>}, {pipeline_mode = #tpu.pipeline_mode<synchronous>, transform_indices = @transform_4, window_bounds = array<i64: 16, 128>}]} {
    %c0 = arith.constant 0 : index
    %c0_0 = arith.constant 0 : index
    %0 = vector.load %arg1[%c0, %c0_0] : memref<16x256xbf16, #tpu.memory_space<vmem>>, vector<16x256xbf16>
    %1 = arith.extf %0 : vector<16x256xbf16> to vector<16x256xf32>
    %c0_1 = arith.constant 0 : index
    %c0_2 = arith.constant 0 : index
    %2 = vector.load %arg3[%c0_1, %c0_2] : memref<2x256xf32, #tpu.memory_space<vmem>>, vector<2x256xf32>
    %3 = vector.extract_strided_slice %2 {offsets = [0, 0], sizes = [1, 256], strides = [1, 1]} : vector<2x256xf32> to vector<1x256xf32>
    %4 = vector.broadcast %3 : vector<1x256xf32> to vector<16x256xf32>
    %5 = arith.mulf %1, %4 : vector<16x256xf32>
    %6 = vector.extract_strided_slice %2 {offsets = [1, 0], sizes = [1, 256], strides = [1, 1]} : vector<2x256xf32> to vector<1x256xf32>
    %7 = vector.broadcast %6 : vector<1x256xf32> to vector<16x256xf32>
    %8 = arith.addf %5, %7 : vector<16x256xf32>
    %cst = arith.constant 0.000000e+00 : f32
    %9 = vector.broadcast %cst : f32 to vector<16x256xf32>
    %10 = arith.cmpf ogt, %8, %9 : vector<16x256xf32>
    %cst_3 = arith.constant 3.300000e-01 : f32
    %11 = vector.broadcast %cst_3 : f32 to vector<16x256xf32>
    %12 = arith.mulf %11, %8 : vector<16x256xf32>
    %13 = arith.select %10, %8, %12 : vector<16x256xi1>, vector<16x256xf32>
    %14 = arith.truncf %13 : vector<16x256xf32> to vector<16x256xbf16>
    %c0_4 = arith.constant 0 : index
    %c0_5 = arith.constant 0 : index
    %15 = vector.load %arg2[%c0_4, %c0_5] : memref<256x128xbf16, #tpu.memory_space<vmem>>, vector<256x128xbf16>
    %cst_6 = arith.constant dense<0.000000e+00> : vector<16x128xf32>
    %16 = tpu.matmul %14, %15, %cst_6 {dimension_numbers = #tpu.dot_dimension_numbers<[1], [0], [0], [1], [0, 0, 1, 1], [], []>} : vector<16x256xbf16>, vector<256x128xbf16>, vector<16x128xf32> -> vector<16x128xf32>
    %c0_7 = arith.constant 0 : index
    %c0_8 = arith.constant 0 : index
    %17 = vector.load %arg4[%c0_7, %c0_8] : memref<1x128xf32, #tpu.memory_space<vmem>>, vector<1x128xf32>
    %18 = vector.broadcast %17 : vector<1x128xf32> to vector<16x128xf32>
    %19 = arith.addf %16, %18 : vector<16x128xf32>
    %20 = arith.truncf %19 : vector<16x128xf32> to vector<16x128xbf16>
    %c0_9 = arith.constant 0 : index
    %c0_10 = arith.constant 0 : index
    %21 = vector.load %arg5[%c0_9, %c0_10] : memref<16x128xbf16, #tpu.memory_space<vmem>>, vector<16x128xbf16>
    tpu.vector_store %arg5[%c0_9, %c0_10], %20 {strides = array<i32>} : memref<16x128xbf16, #tpu.memory_space<vmem>>, vector<16x128xbf16>,
    return
  }
  func.func @transform_0(%arg0: i32) -> (i32, i32) {
    %c0_i32 = arith.constant 0 : i32
    %c0_i32_0 = arith.constant 0 : i32
    %c0_i32_1 = arith.constant 0 : i32
    return %c0_i32, %c0_i32_0 : i32, i32
  }
  func.func @transform_1(%arg0: i32) -> (i32, i32) {
    %c0_i32 = arith.constant 0 : i32
    %c0_i32_0 = arith.constant 0 : i32
    %c0_i32_1 = arith.constant 0 : i32
    return %c0_i32, %c0_i32_0 : i32, i32
  }
  func.func @transform_2(%arg0: i32) -> (i32, i32) {
    %c0_i32 = arith.constant 0 : i32
    %c0_i32_0 = arith.constant 0 : i32
    %c0_i32_1 = arith.constant 0 : i32
    return %c0_i32, %c0_i32_0 : i32, i32
  }
  func.func @transform_3(%arg0: i32) -> (i32, i32) {
    %c0_i32 = arith.constant 0 : i32
    %c0_i32_0 = arith.constant 0 : i32
    %c0_i32_1 = arith.constant 0 : i32
    return %c0_i32, %c0_i32_0 : i32, i32
  }
  func.func @transform_4(%arg0: i32) -> (i32, i32) {
    %c0_i32 = arith.constant 0 : i32
    %c0_i32_0 = arith.constant 0 : i32
    %c0_i32_1 = arith.constant 0 : i32
    return %c0_i32, %c0_i32_0 : i32, i32
  }
}

module attributes {stable_mosaic.version = 11 : i64} {
  func.func @_resblocks_kernel(%arg0: i32, %arg1: memref<32x128xbf16, #tpu.memory_space<vmem>>, %arg2: memref<4x384x128xbf16, #tpu.memory_space<vmem>>, %arg3: memref<4x3x128xf32, #tpu.memory_space<vmem>>, %arg4: memref<32x128xbf16, #tpu.memory_space<vmem>>, %arg5: memref<34x128xbf16, #tpu.memory_space<vmem>>) attributes {dimension_semantics = [#tpu.dimension_semantics<arbitrary>], iteration_bounds = array<i64: 1>, scalar_prefetch = 0 : i64, scratch_operands = 1 : i64, tpu.core_type = #tpu.core_type<tc>, window_params = [{pipeline_mode = #tpu.pipeline_mode<synchronous>, transform_indices = @transform_0, window_bounds = array<i64: 32, 128>}, {pipeline_mode = #tpu.pipeline_mode<synchronous>, transform_indices = @transform_1, window_bounds = array<i64: 4, 384, 128>}, {pipeline_mode = #tpu.pipeline_mode<synchronous>, transform_indices = @transform_2, window_bounds = array<i64: 4, 3, 128>}, {pipeline_mode = #tpu.pipeline_mode<synchronous>, transform_indices = @transform_3, window_bounds = array<i64: 32, 128>}]} {
    %cst = arith.constant 0.000000e+00 : bf16
    %0 = vector.broadcast %cst : bf16 to vector<1x128xbf16>
    %c0 = arith.constant 0 : index
    %c0_0 = arith.constant 0 : index
    %1 = vector.load %arg5[%c0, %c0_0] : memref<34x128xbf16, #tpu.memory_space<vmem>>, vector<1x128xbf16>
    tpu.vector_store %arg5[%c0, %c0_0], %0 {strides = array<i32>} : memref<34x128xbf16, #tpu.memory_space<vmem>>, vector<1x128xbf16>,
    %cst_1 = arith.constant 0.000000e+00 : bf16
    %2 = vector.broadcast %cst_1 : bf16 to vector<1x128xbf16>
    %c33 = arith.constant 33 : index
    %c0_2 = arith.constant 0 : index
    %3 = vector.load %arg5[%c33, %c0_2] : memref<34x128xbf16, #tpu.memory_space<vmem>>, vector<1x128xbf16>
    tpu.vector_store %arg5[%c33, %c0_2], %2 {strides = array<i32>} : memref<34x128xbf16, #tpu.memory_space<vmem>>, vector<1x128xbf16>,
    %4 = tpu.iota {dimensions = array<i32: 0>} : vector<32x128xi32>
    %c15_i32 = arith.constant 15 : i32
    %5 = vector.broadcast %c15_i32 : i32 to vector<32x128xi32>
    %6 = arith.andi %4, %5 : vector<32x128xi32>
    %c0_3 = arith.constant 0 : index
    %c0_4 = arith.constant 0 : index
    %7 = vector.load %arg1[%c0_3, %c0_4] : memref<32x128xbf16, #tpu.memory_space<vmem>>, vector<32x128xbf16>
    %8 = arith.extf %7 : vector<32x128xbf16> to vector<32x128xf32>
    %c0_5 = arith.constant 0 : index
    %c0_6 = arith.constant 0 : index
    %c0_7 = arith.constant 0 : index
    %9 = vector.load %arg3[%c0_5, %c0_6, %c0_7] : memref<4x3x128xf32, #tpu.memory_space<vmem>>, vector<1x3x128xf32>
    %10 = vector.shape_cast %9 : vector<1x3x128xf32> to vector<3x128xf32>
    %11 = vector.extract_strided_slice %10 {offsets = [1, 0], sizes = [1, 128], strides = [1, 1]} : vector<3x128xf32> to vector<1x128xf32>
    %12 = vector.broadcast %11 : vector<1x128xf32> to vector<32x128xf32>
    %13 = arith.mulf %8, %12 : vector<32x128xf32>
    %14 = vector.extract_strided_slice %10 {offsets = [2, 0], sizes = [1, 128], strides = [1, 1]} : vector<3x128xf32> to vector<1x128xf32>
    %15 = vector.broadcast %14 : vector<1x128xf32> to vector<32x128xf32>
    %16 = arith.addf %13, %15 : vector<32x128xf32>
    %cst_8 = arith.constant 0.000000e+00 : f32
    %17 = vector.broadcast %cst_8 : f32 to vector<32x128xf32>
    %18 = arith.cmpf ogt, %16, %17 : vector<32x128xf32>
    %cst_9 = arith.constant 3.300000e-01 : f32
    %19 = vector.broadcast %cst_9 : f32 to vector<32x128xf32>
    %20 = arith.mulf %19, %16 : vector<32x128xf32>
    %21 = arith.select %18, %16, %20 : vector<32x128xi1>, vector<32x128xf32>
    %22 = arith.truncf %21 : vector<32x128xf32> to vector<32x128xbf16>
    %c1 = arith.constant 1 : index
    %c0_10 = arith.constant 0 : index
    %23 = vector.load %arg5[%c1, %c0_10] : memref<34x128xbf16, #tpu.memory_space<vmem>>, vector<32x128xbf16>
    tpu.vector_store %arg5[%c1, %c0_10], %22 {strides = array<i32>} : memref<34x128xbf16, #tpu.memory_space<vmem>>, vector<32x128xbf16>,
    %c0_11 = arith.constant 0 : index
    %c0_12 = arith.constant 0 : index
    %24 = vector.load %arg5[%c0_11, %c0_12] : memref<34x128xbf16, #tpu.memory_space<vmem>>, vector<32x128xbf16>
    %c-1_i32 = arith.constant -1 : i32
    %25 = vector.broadcast %c-1_i32 : i32 to vector<32x128xi32>
    %26 = arith.addi %6, %25 : vector<32x128xi32>
    %c0_i32 = arith.constant 0 : i32
    %27 = vector.broadcast %c0_i32 : i32 to vector<32x128xi32>
    %28 = arith.cmpi sge, %26, %27 : vector<32x128xi32>
    %c-1_i32_13 = arith.constant -1 : i32
    %29 = vector.broadcast %c-1_i32_13 : i32 to vector<32x128xi32>
    %30 = arith.addi %6, %29 : vector<32x128xi32>
    %c16_i32 = arith.constant 16 : i32
    %31 = vector.broadcast %c16_i32 : i32 to vector<32x128xi32>
    %32 = arith.cmpi slt, %30, %31 : vector<32x128xi32>
    %33 = arith.andi %28, %32 : vector<32x128xi1>
    %cst_14 = arith.constant 0.000000e+00 : bf16
    %34 = vector.broadcast %cst_14 : bf16 to vector<32x128xbf16>
    %35 = arith.select %33, %24, %34 : vector<32x128xi1>, vector<32x128xbf16>
    %c1_15 = arith.constant 1 : index
    %c0_16 = arith.constant 0 : index
    %36 = vector.load %arg5[%c1_15, %c0_16] : memref<34x128xbf16, #tpu.memory_space<vmem>>, vector<32x128xbf16>
    %c2 = arith.constant 2 : index
    %c0_17 = arith.constant 0 : index
    %37 = vector.load %arg5[%c2, %c0_17] : memref<34x128xbf16, #tpu.memory_space<vmem>>, vector<32x128xbf16>
    %c1_i32 = arith.constant 1 : i32
    %38 = vector.broadcast %c1_i32 : i32 to vector<32x128xi32>
    %39 = arith.addi %6, %38 : vector<32x128xi32>
    %c0_i32_18 = arith.constant 0 : i32
    %40 = vector.broadcast %c0_i32_18 : i32 to vector<32x128xi32>
    %41 = arith.cmpi sge, %39, %40 : vector<32x128xi32>
    %c1_i32_19 = arith.constant 1 : i32
    %42 = vector.broadcast %c1_i32_19 : i32 to vector<32x128xi32>
    %43 = arith.addi %6, %42 : vector<32x128xi32>
    %c16_i32_20 = arith.constant 16 : i32
    %44 = vector.broadcast %c16_i32_20 : i32 to vector<32x128xi32>
    %45 = arith.cmpi slt, %43, %44 : vector<32x128xi32>
    %46 = arith.andi %41, %45 : vector<32x128xi1>
    %cst_21 = arith.constant 0.000000e+00 : bf16
    %47 = vector.broadcast %cst_21 : bf16 to vector<32x128xbf16>
    %48 = arith.select %46, %37, %47 : vector<32x128xi1>, vector<32x128xbf16>
    %49 = tpu.concatenate %35, %36, %48 in 1 : vector<32x128xbf16>, vector<32x128xbf16>, vector<32x128xbf16> -> vector<32x384xbf16>
    %c0_22 = arith.constant 0 : index
    %c0_23 = arith.constant 0 : index
    %c0_24 = arith.constant 0 : index
    %50 = vector.load %arg2[%c0_22, %c0_23, %c0_24] : memref<4x384x128xbf16, #tpu.memory_space<vmem>>, vector<1x384x128xbf16>
    %51 = vector.shape_cast %50 : vector<1x384x128xbf16> to vector<384x128xbf16>
    %cst_25 = arith.constant dense<0.000000e+00> : vector<32x128xf32>
    %52 = tpu.matmul %49, %51, %cst_25 {dimension_numbers = #tpu.dot_dimension_numbers<[1], [0], [0], [1], [0, 0, 1, 1], [], []>} : vector<32x384xbf16>, vector<384x128xbf16>, vector<32x128xf32> -> vector<32x128xf32>
    %53 = vector.extract_strided_slice %10 {offsets = [0, 0], sizes = [1, 128], strides = [1, 1]} : vector<3x128xf32> to vector<1x128xf32>
    %54 = vector.broadcast %53 : vector<1x128xf32> to vector<32x128xf32>
    %55 = arith.addf %52, %54 : vector<32x128xf32>
    %c1_26 = arith.constant 1 : index
    %c0_27 = arith.constant 0 : index
    %c0_28 = arith.constant 0 : index
    %56 = vector.load %arg3[%c1_26, %c0_27, %c0_28] : memref<4x3x128xf32, #tpu.memory_space<vmem>>, vector<1x3x128xf32>
    %57 = vector.shape_cast %56 : vector<1x3x128xf32> to vector<3x128xf32>
    %58 = vector.extract_strided_slice %57 {offsets = [1, 0], sizes = [1, 128], strides = [1, 1]} : vector<3x128xf32> to vector<1x128xf32>
    %59 = vector.broadcast %58 : vector<1x128xf32> to vector<32x128xf32>
    %60 = arith.mulf %55, %59 : vector<32x128xf32>
    %61 = vector.extract_strided_slice %57 {offsets = [2, 0], sizes = [1, 128], strides = [1, 1]} : vector<3x128xf32> to vector<1x128xf32>
    %62 = vector.broadcast %61 : vector<1x128xf32> to vector<32x128xf32>
    %63 = arith.addf %60, %62 : vector<32x128xf32>
    %cst_29 = arith.constant 0.000000e+00 : f32
    %64 = vector.broadcast %cst_29 : f32 to vector<32x128xf32>
    %65 = arith.cmpf ogt, %63, %64 : vector<32x128xf32>
    %cst_30 = arith.constant 3.300000e-01 : f32
    %66 = vector.broadcast %cst_30 : f32 to vector<32x128xf32>
    %67 = arith.mulf %66, %63 : vector<32x128xf32>
    %68 = arith.select %65, %63, %67 : vector<32x128xi1>, vector<32x128xf32>
    %69 = arith.truncf %68 : vector<32x128xf32> to vector<32x128xbf16>
    %c1_31 = arith.constant 1 : index
    %c0_32 = arith.constant 0 : index
    %70 = vector.load %arg5[%c1_31, %c0_32] : memref<34x128xbf16, #tpu.memory_space<vmem>>, vector<32x128xbf16>
    tpu.vector_store %arg5[%c1_31, %c0_32], %69 {strides = array<i32>} : memref<34x128xbf16, #tpu.memory_space<vmem>>, vector<32x128xbf16>,
    %c0_33 = arith.constant 0 : index
    %c0_34 = arith.constant 0 : index
    %71 = vector.load %arg5[%c0_33, %c0_34] : memref<34x128xbf16, #tpu.memory_space<vmem>>, vector<32x128xbf16>
    %c-1_i32_35 = arith.constant -1 : i32
    %72 = vector.broadcast %c-1_i32_35 : i32 to vector<32x128xi32>
    %73 = arith.addi %6, %72 : vector<32x128xi32>
    %c0_i32_36 = arith.constant 0 : i32
    %74 = vector.broadcast %c0_i32_36 : i32 to vector<32x128xi32>
    %75 = arith.cmpi sge, %73, %74 : vector<32x128xi32>
    %c-1_i32_37 = arith.constant -1 : i32
    %76 = vector.broadcast %c-1_i32_37 : i32 to vector<32x128xi32>
    %77 = arith.addi %6, %76 : vector<32x128xi32>
    %c16_i32_38 = arith.constant 16 : i32
    %78 = vector.broadcast %c16_i32_38 : i32 to vector<32x128xi32>
    %79 = arith.cmpi slt, %77, %78 : vector<32x128xi32>
    %80 = arith.andi %75, %79 : vector<32x128xi1>
    %cst_39 = arith.constant 0.000000e+00 : bf16
    %81 = vector.broadcast %cst_39 : bf16 to vector<32x128xbf16>
    %82 = arith.select %80, %71, %81 : vector<32x128xi1>, vector<32x128xbf16>
    %c1_40 = arith.constant 1 : index
    %c0_41 = arith.constant 0 : index
    %83 = vector.load %arg5[%c1_40, %c0_41] : memref<34x128xbf16, #tpu.memory_space<vmem>>, vector<32x128xbf16>
    %c2_42 = arith.constant 2 : index
    %c0_43 = arith.constant 0 : index
    %84 = vector.load %arg5[%c2_42, %c0_43] : memref<34x128xbf16, #tpu.memory_space<vmem>>, vector<32x128xbf16>
    %c1_i32_44 = arith.constant 1 : i32
    %85 = vector.broadcast %c1_i32_44 : i32 to vector<32x128xi32>
    %86 = arith.addi %6, %85 : vector<32x128xi32>
    %c0_i32_45 = arith.constant 0 : i32
    %87 = vector.broadcast %c0_i32_45 : i32 to vector<32x128xi32>
    %88 = arith.cmpi sge, %86, %87 : vector<32x128xi32>
    %c1_i32_46 = arith.constant 1 : i32
    %89 = vector.broadcast %c1_i32_46 : i32 to vector<32x128xi32>
    %90 = arith.addi %6, %89 : vector<32x128xi32>
    %c16_i32_47 = arith.constant 16 : i32
    %91 = vector.broadcast %c16_i32_47 : i32 to vector<32x128xi32>
    %92 = arith.cmpi slt, %90, %91 : vector<32x128xi32>
    %93 = arith.andi %88, %92 : vector<32x128xi1>
    %cst_48 = arith.constant 0.000000e+00 : bf16
    %94 = vector.broadcast %cst_48 : bf16 to vector<32x128xbf16>
    %95 = arith.select %93, %84, %94 : vector<32x128xi1>, vector<32x128xbf16>
    %96 = tpu.concatenate %82, %83, %95 in 1 : vector<32x128xbf16>, vector<32x128xbf16>, vector<32x128xbf16> -> vector<32x384xbf16>
    %c1_49 = arith.constant 1 : index
    %c0_50 = arith.constant 0 : index
    %c0_51 = arith.constant 0 : index
    %97 = vector.load %arg2[%c1_49, %c0_50, %c0_51] : memref<4x384x128xbf16, #tpu.memory_space<vmem>>, vector<1x384x128xbf16>
    %98 = vector.shape_cast %97 : vector<1x384x128xbf16> to vector<384x128xbf16>
    %cst_52 = arith.constant dense<0.000000e+00> : vector<32x128xf32>
    %99 = tpu.matmul %96, %98, %cst_52 {dimension_numbers = #tpu.dot_dimension_numbers<[1], [0], [0], [1], [0, 0, 1, 1], [], []>} : vector<32x384xbf16>, vector<384x128xbf16>, vector<32x128xf32> -> vector<32x128xf32>
    %100 = vector.extract_strided_slice %57 {offsets = [0, 0], sizes = [1, 128], strides = [1, 1]} : vector<3x128xf32> to vector<1x128xf32>
    %101 = vector.broadcast %100 : vector<1x128xf32> to vector<32x128xf32>
    %102 = arith.addf %99, %101 : vector<32x128xf32>
    %103 = arith.addf %8, %102 : vector<32x128xf32>
    %c2_53 = arith.constant 2 : index
    %c0_54 = arith.constant 0 : index
    %c0_55 = arith.constant 0 : index
    %104 = vector.load %arg3[%c2_53, %c0_54, %c0_55] : memref<4x3x128xf32, #tpu.memory_space<vmem>>, vector<1x3x128xf32>
    %105 = vector.shape_cast %104 : vector<1x3x128xf32> to vector<3x128xf32>
    %106 = vector.extract_strided_slice %105 {offsets = [1, 0], sizes = [1, 128], strides = [1, 1]} : vector<3x128xf32> to vector<1x128xf32>
    %107 = vector.broadcast %106 : vector<1x128xf32> to vector<32x128xf32>
    %108 = arith.mulf %103, %107 : vector<32x128xf32>
    %109 = vector.extract_strided_slice %105 {offsets = [2, 0], sizes = [1, 128], strides = [1, 1]} : vector<3x128xf32> to vector<1x128xf32>
    %110 = vector.broadcast %109 : vector<1x128xf32> to vector<32x128xf32>
    %111 = arith.addf %108, %110 : vector<32x128xf32>
    %cst_56 = arith.constant 0.000000e+00 : f32
    %112 = vector.broadcast %cst_56 : f32 to vector<32x128xf32>
    %113 = arith.cmpf ogt, %111, %112 : vector<32x128xf32>
    %cst_57 = arith.constant 3.300000e-01 : f32
    %114 = vector.broadcast %cst_57 : f32 to vector<32x128xf32>
    %115 = arith.mulf %114, %111 : vector<32x128xf32>
    %116 = arith.select %113, %111, %115 : vector<32x128xi1>, vector<32x128xf32>
    %117 = arith.truncf %116 : vector<32x128xf32> to vector<32x128xbf16>
    %c1_58 = arith.constant 1 : index
    %c0_59 = arith.constant 0 : index
    %118 = vector.load %arg5[%c1_58, %c0_59] : memref<34x128xbf16, #tpu.memory_space<vmem>>, vector<32x128xbf16>
    tpu.vector_store %arg5[%c1_58, %c0_59], %117 {strides = array<i32>} : memref<34x128xbf16, #tpu.memory_space<vmem>>, vector<32x128xbf16>,
    %c0_60 = arith.constant 0 : index
    %c0_61 = arith.constant 0 : index
    %119 = vector.load %arg5[%c0_60, %c0_61] : memref<34x128xbf16, #tpu.memory_space<vmem>>, vector<32x128xbf16>
    %c-1_i32_62 = arith.constant -1 : i32
    %120 = vector.broadcast %c-1_i32_62 : i32 to vector<32x128xi32>
    %121 = arith.addi %6, %120 : vector<32x128xi32>
    %c0_i32_63 = arith.constant 0 : i32
    %122 = vector.broadcast %c0_i32_63 : i32 to vector<32x128xi32>
    %123 = arith.cmpi sge, %121, %122 : vector<32x128xi32>
    %c-1_i32_64 = arith.constant -1 : i32
    %124 = vector.broadcast %c-1_i32_64 : i32 to vector<32x128xi32>
    %125 = arith.addi %6, %124 : vector<32x128xi32>
    %c16_i32_65 = arith.constant 16 : i32
    %126 = vector.broadcast %c16_i32_65 : i32 to vector<32x128xi32>
    %127 = arith.cmpi slt, %125, %126 : vector<32x128xi32>
    %128 = arith.andi %123, %127 : vector<32x128xi1>
    %cst_66 = arith.constant 0.000000e+00 : bf16
    %129 = vector.broadcast %cst_66 : bf16 to vector<32x128xbf16>
    %130 = arith.select %128, %119, %129 : vector<32x128xi1>, vector<32x128xbf16>
    %c1_67 = arith.constant 1 : index
    %c0_68 = arith.constant 0 : index
    %131 = vector.load %arg5[%c1_67, %c0_68] : memref<34x128xbf16, #tpu.memory_space<vmem>>, vector<32x128xbf16>
    %c2_69 = arith.constant 2 : index
    %c0_70 = arith.constant 0 : index
    %132 = vector.load %arg5[%c2_69, %c0_70] : memref<34x128xbf16, #tpu.memory_space<vmem>>, vector<32x128xbf16>
    %c1_i32_71 = arith.constant 1 : i32
    %133 = vector.broadcast %c1_i32_71 : i32 to vector<32x128xi32>
    %134 = arith.addi %6, %133 : vector<32x128xi32>
    %c0_i32_72 = arith.constant 0 : i32
    %135 = vector.broadcast %c0_i32_72 : i32 to vector<32x128xi32>
    %136 = arith.cmpi sge, %134, %135 : vector<32x128xi32>
    %c1_i32_73 = arith.constant 1 : i32
    %137 = vector.broadcast %c1_i32_73 : i32 to vector<32x128xi32>
    %138 = arith.addi %6, %137 : vector<32x128xi32>
    %c16_i32_74 = arith.constant 16 : i32
    %139 = vector.broadcast %c16_i32_74 : i32 to vector<32x128xi32>
    %140 = arith.cmpi slt, %138, %139 : vector<32x128xi32>
    %141 = arith.andi %136, %140 : vector<32x128xi1>
    %cst_75 = arith.constant 0.000000e+00 : bf16
    %142 = vector.broadcast %cst_75 : bf16 to vector<32x128xbf16>
    %143 = arith.select %141, %132, %142 : vector<32x128xi1>, vector<32x128xbf16>
    %144 = tpu.concatenate %130, %131, %143 in 1 : vector<32x128xbf16>, vector<32x128xbf16>, vector<32x128xbf16> -> vector<32x384xbf16>
    %c2_76 = arith.constant 2 : index
    %c0_77 = arith.constant 0 : index
    %c0_78 = arith.constant 0 : index
    %145 = vector.load %arg2[%c2_76, %c0_77, %c0_78] : memref<4x384x128xbf16, #tpu.memory_space<vmem>>, vector<1x384x128xbf16>
    %146 = vector.shape_cast %145 : vector<1x384x128xbf16> to vector<384x128xbf16>
    %cst_79 = arith.constant dense<0.000000e+00> : vector<32x128xf32>
    %147 = tpu.matmul %144, %146, %cst_79 {dimension_numbers = #tpu.dot_dimension_numbers<[1], [0], [0], [1], [0, 0, 1, 1], [], []>} : vector<32x384xbf16>, vector<384x128xbf16>, vector<32x128xf32> -> vector<32x128xf32>
    %148 = vector.extract_strided_slice %105 {offsets = [0, 0], sizes = [1, 128], strides = [1, 1]} : vector<3x128xf32> to vector<1x128xf32>
    %149 = vector.broadcast %148 : vector<1x128xf32> to vector<32x128xf32>
    %150 = arith.addf %147, %149 : vector<32x128xf32>
    %c3 = arith.constant 3 : index
    %c0_80 = arith.constant 0 : index
    %c0_81 = arith.constant 0 : index
    %151 = vector.load %arg3[%c3, %c0_80, %c0_81] : memref<4x3x128xf32, #tpu.memory_space<vmem>>, vector<1x3x128xf32>
    %152 = vector.shape_cast %151 : vector<1x3x128xf32> to vector<3x128xf32>
    %153 = vector.extract_strided_slice %152 {offsets = [1, 0], sizes = [1, 128], strides = [1, 1]} : vector<3x128xf32> to vector<1x128xf32>
    %154 = vector.broadcast %153 : vector<1x128xf32> to vector<32x128xf32>
    %155 = arith.mulf %150, %154 : vector<32x128xf32>
    %156 = vector.extract_strided_slice %152 {offsets = [2, 0], sizes = [1, 128], strides = [1, 1]} : vector<3x128xf32> to vector<1x128xf32>
    %157 = vector.broadcast %156 : vector<1x128xf32> to vector<32x128xf32>
    %158 = arith.addf %155, %157 : vector<32x128xf32>
    %cst_82 = arith.constant 0.000000e+00 : f32
    %159 = vector.broadcast %cst_82 : f32 to vector<32x128xf32>
    %160 = arith.cmpf ogt, %158, %159 : vector<32x128xf32>
    %cst_83 = arith.constant 3.300000e-01 : f32
    %161 = vector.broadcast %cst_83 : f32 to vector<32x128xf32>
    %162 = arith.mulf %161, %158 : vector<32x128xf32>
    %163 = arith.select %160, %158, %162 : vector<32x128xi1>, vector<32x128xf32>
    %164 = arith.truncf %163 : vector<32x128xf32> to vector<32x128xbf16>
    %c1_84 = arith.constant 1 : index
    %c0_85 = arith.constant 0 : index
    %165 = vector.load %arg5[%c1_84, %c0_85] : memref<34x128xbf16, #tpu.memory_space<vmem>>, vector<32x128xbf16>
    tpu.vector_store %arg5[%c1_84, %c0_85], %164 {strides = array<i32>} : memref<34x128xbf16, #tpu.memory_space<vmem>>, vector<32x128xbf16>,
    %c0_86 = arith.constant 0 : index
    %c0_87 = arith.constant 0 : index
    %166 = vector.load %arg5[%c0_86, %c0_87] : memref<34x128xbf16, #tpu.memory_space<vmem>>, vector<32x128xbf16>
    %c-1_i32_88 = arith.constant -1 : i32
    %167 = vector.broadcast %c-1_i32_88 : i32 to vector<32x128xi32>
    %168 = arith.addi %6, %167 : vector<32x128xi32>
    %c0_i32_89 = arith.constant 0 : i32
    %169 = vector.broadcast %c0_i32_89 : i32 to vector<32x128xi32>
    %170 = arith.cmpi sge, %168, %169 : vector<32x128xi32>
    %c-1_i32_90 = arith.constant -1 : i32
    %171 = vector.broadcast %c-1_i32_90 : i32 to vector<32x128xi32>
    %172 = arith.addi %6, %171 : vector<32x128xi32>
    %c16_i32_91 = arith.constant 16 : i32
    %173 = vector.broadcast %c16_i32_91 : i32 to vector<32x128xi32>
    %174 = arith.cmpi slt, %172, %173 : vector<32x128xi32>
    %175 = arith.andi %170, %174 : vector<32x128xi1>
    %cst_92 = arith.constant 0.000000e+00 : bf16
    %176 = vector.broadcast %cst_92 : bf16 to vector<32x128xbf16>
    %177 = arith.select %175, %166, %176 : vector<32x128xi1>, vector<32x128xbf16>
    %c1_93 = arith.constant 1 : index
    %c0_94 = arith.constant 0 : index
    %178 = vector.load %arg5[%c1_93, %c0_94] : memref<34x128xbf16, #tpu.memory_space<vmem>>, vector<32x128xbf16>
    %c2_95 = arith.constant 2 : index
    %c0_96 = arith.constant 0 : index
    %179 = vector.load %arg5[%c2_95, %c0_96] : memref<34x128xbf16, #tpu.memory_space<vmem>>, vector<32x128xbf16>
    %c1_i32_97 = arith.constant 1 : i32
    %180 = vector.broadcast %c1_i32_97 : i32 to vector<32x128xi32>
    %181 = arith.addi %6, %180 : vector<32x128xi32>
    %c0_i32_98 = arith.constant 0 : i32
    %182 = vector.broadcast %c0_i32_98 : i32 to vector<32x128xi32>
    %183 = arith.cmpi sge, %181, %182 : vector<32x128xi32>
    %c1_i32_99 = arith.constant 1 : i32
    %184 = vector.broadcast %c1_i32_99 : i32 to vector<32x128xi32>
    %185 = arith.addi %6, %184 : vector<32x128xi32>
    %c16_i32_100 = arith.constant 16 : i32
    %186 = vector.broadcast %c16_i32_100 : i32 to vector<32x128xi32>
    %187 = arith.cmpi slt, %185, %186 : vector<32x128xi32>
    %188 = arith.andi %183, %187 : vector<32x128xi1>
    %cst_101 = arith.constant 0.000000e+00 : bf16
    %189 = vector.broadcast %cst_101 : bf16 to vector<32x128xbf16>
    %190 = arith.select %188, %179, %189 : vector<32x128xi1>, vector<32x128xbf16>
    %191 = tpu.concatenate %177, %178, %190 in 1 : vector<32x128xbf16>, vector<32x128xbf16>, vector<32x128xbf16> -> vector<32x384xbf16>
    %c3_102 = arith.constant 3 : index
    %c0_103 = arith.constant 0 : index
    %c0_104 = arith.constant 0 : index
    %192 = vector.load %arg2[%c3_102, %c0_103, %c0_104] : memref<4x384x128xbf16, #tpu.memory_space<vmem>>, vector<1x384x128xbf16>
    %193 = vector.shape_cast %192 : vector<1x384x128xbf16> to vector<384x128xbf16>
    %cst_105 = arith.constant dense<0.000000e+00> : vector<32x128xf32>
    %194 = tpu.matmul %191, %193, %cst_105 {dimension_numbers = #tpu.dot_dimension_numbers<[1], [0], [0], [1], [0, 0, 1, 1], [], []>} : vector<32x384xbf16>, vector<384x128xbf16>, vector<32x128xf32> -> vector<32x128xf32>
    %195 = vector.extract_strided_slice %152 {offsets = [0, 0], sizes = [1, 128], strides = [1, 1]} : vector<3x128xf32> to vector<1x128xf32>
    %196 = vector.broadcast %195 : vector<1x128xf32> to vector<32x128xf32>
    %197 = arith.addf %194, %196 : vector<32x128xf32>
    %198 = arith.addf %103, %197 : vector<32x128xf32>
    %199 = arith.truncf %198 : vector<32x128xf32> to vector<32x128xbf16>
    %c0_106 = arith.constant 0 : index
    %c0_107 = arith.constant 0 : index
    %200 = vector.load %arg4[%c0_106, %c0_107] : memref<32x128xbf16, #tpu.memory_space<vmem>>, vector<32x128xbf16>
    tpu.vector_store %arg4[%c0_106, %c0_107], %199 {strides = array<i32>} : memref<32x128xbf16, #tpu.memory_space<vmem>>, vector<32x128xbf16>,
    return
  }
  func.func @transform_0(%arg0: i32) -> (i32, i32) {
    %c0_i32 = arith.constant 0 : i32
    %c0_i32_0 = arith.constant 0 : i32
    %c0_i32_1 = arith.constant 0 : i32
    return %c0_i32, %c0_i32_0 : i32, i32
  }
  func.func @transform_1(%arg0: i32) -> (i32, i32, i32) {
    %c0_i32 = arith.constant 0 : i32
    %c0_i32_0 = arith.constant 0 : i32
    %c0_i32_1 = arith.constant 0 : i32
    %c0_i32_2 = arith.constant 0 : i32
    return %c0_i32, %c0_i32_0, %c0_i32_1 : i32, i32, i32
  }
  func.func @transform_2(%arg0: i32) -> (i32, i32, i32) {
    %c0_i32 = arith.constant 0 : i32
    %c0_i32_0 = arith.constant 0 : i32
    %c0_i32_1 = arith.constant 0 : i32
    %c0_i32_2 = arith.constant 0 : i32
    return %c0_i32, %c0_i32_0, %c0_i32_1 : i32, i32, i32
  }
  func.func @transform_3(%arg0: i32) -> (i32, i32) {
    %c0_i32 = arith.constant 0 : i32
    %c0_i32_0 = arith.constant 0 : i32
    %c0_i32_1 = arith.constant 0 : i32
    return %c0_i32, %c0_i32_0 : i32, i32
  }
}

module attributes {stable_mosaic.version = 11 : i64} {
  func.func @_resblocks_kernel(%arg0: i32, %arg1: memref<16x128xbf16, #tpu.memory_space<vmem>>, %arg2: memref<4x384x128xbf16, #tpu.memory_space<vmem>>, %arg3: memref<4x3x128xf32, #tpu.memory_space<vmem>>, %arg4: memref<16x128xbf16, #tpu.memory_space<vmem>>, %arg5: memref<18x128xbf16, #tpu.memory_space<vmem>>) attributes {dimension_semantics = [#tpu.dimension_semantics<arbitrary>], iteration_bounds = array<i64: 1>, scalar_prefetch = 0 : i64, scratch_operands = 1 : i64, tpu.core_type = #tpu.core_type<tc>, window_params = [{pipeline_mode = #tpu.pipeline_mode<synchronous>, transform_indices = @transform_0, window_bounds = array<i64: 16, 128>}, {pipeline_mode = #tpu.pipeline_mode<synchronous>, transform_indices = @transform_1, window_bounds = array<i64: 4, 384, 128>}, {pipeline_mode = #tpu.pipeline_mode<synchronous>, transform_indices = @transform_2, window_bounds = array<i64: 4, 3, 128>}, {pipeline_mode = #tpu.pipeline_mode<synchronous>, transform_indices = @transform_3, window_bounds = array<i64: 16, 128>}]} {
    %cst = arith.constant 0.000000e+00 : bf16
    %0 = vector.broadcast %cst : bf16 to vector<1x128xbf16>
    %c0 = arith.constant 0 : index
    %c0_0 = arith.constant 0 : index
    %1 = vector.load %arg5[%c0, %c0_0] : memref<18x128xbf16, #tpu.memory_space<vmem>>, vector<1x128xbf16>
    tpu.vector_store %arg5[%c0, %c0_0], %0 {strides = array<i32>} : memref<18x128xbf16, #tpu.memory_space<vmem>>, vector<1x128xbf16>,
    %cst_1 = arith.constant 0.000000e+00 : bf16
    %2 = vector.broadcast %cst_1 : bf16 to vector<1x128xbf16>
    %c17 = arith.constant 17 : index
    %c0_2 = arith.constant 0 : index
    %3 = vector.load %arg5[%c17, %c0_2] : memref<18x128xbf16, #tpu.memory_space<vmem>>, vector<1x128xbf16>
    tpu.vector_store %arg5[%c17, %c0_2], %2 {strides = array<i32>} : memref<18x128xbf16, #tpu.memory_space<vmem>>, vector<1x128xbf16>,
    %4 = tpu.iota {dimensions = array<i32: 0>} : vector<16x128xi32>
    %c7_i32 = arith.constant 7 : i32
    %5 = vector.broadcast %c7_i32 : i32 to vector<16x128xi32>
    %6 = arith.andi %4, %5 : vector<16x128xi32>
    %c0_3 = arith.constant 0 : index
    %c0_4 = arith.constant 0 : index
    %7 = vector.load %arg1[%c0_3, %c0_4] : memref<16x128xbf16, #tpu.memory_space<vmem>>, vector<16x128xbf16>
    %8 = arith.extf %7 : vector<16x128xbf16> to vector<16x128xf32>
    %c0_5 = arith.constant 0 : index
    %c0_6 = arith.constant 0 : index
    %c0_7 = arith.constant 0 : index
    %9 = vector.load %arg3[%c0_5, %c0_6, %c0_7] : memref<4x3x128xf32, #tpu.memory_space<vmem>>, vector<1x3x128xf32>
    %10 = vector.shape_cast %9 : vector<1x3x128xf32> to vector<3x128xf32>
    %11 = vector.extract_strided_slice %10 {offsets = [1, 0], sizes = [1, 128], strides = [1, 1]} : vector<3x128xf32> to vector<1x128xf32>
    %12 = vector.broadcast %11 : vector<1x128xf32> to vector<16x128xf32>
    %13 = arith.mulf %8, %12 : vector<16x128xf32>
    %14 = vector.extract_strided_slice %10 {offsets = [2, 0], sizes = [1, 128], strides = [1, 1]} : vector<3x128xf32> to vector<1x128xf32>
    %15 = vector.broadcast %14 : vector<1x128xf32> to vector<16x128xf32>
    %16 = arith.addf %13, %15 : vector<16x128xf32>
    %cst_8 = arith.constant 0.000000e+00 : f32
    %17 = vector.broadcast %cst_8 : f32 to vector<16x128xf32>
    %18 = arith.cmpf ogt, %16, %17 : vector<16x128xf32>
    %cst_9 = arith.constant 3.300000e-01 : f32
    %19 = vector.broadcast %cst_9 : f32 to vector<16x128xf32>
    %20 = arith.mulf %19, %16 : vector<16x128xf32>
    %21 = arith.select %18, %16, %20 : vector<16x128xi1>, vector<16x128xf32>
    %22 = arith.truncf %21 : vector<16x128xf32> to vector<16x128xbf16>
    %c1 = arith.constant 1 : index
    %c0_10 = arith.constant 0 : index
    %23 = vector.load %arg5[%c1, %c0_10] : memref<18x128xbf16, #tpu.memory_space<vmem>>, vector<16x128xbf16>
    tpu.vector_store %arg5[%c1, %c0_10], %22 {strides = array<i32>} : memref<18x128xbf16, #tpu.memory_space<vmem>>, vector<16x128xbf16>,
    %c0_11 = arith.constant 0 : index
    %c0_12 = arith.constant 0 : index
    %24 = vector.load %arg5[%c0_11, %c0_12] : memref<18x128xbf16, #tpu.memory_space<vmem>>, vector<16x128xbf16>
    %c-1_i32 = arith.constant -1 : i32
    %25 = vector.broadcast %c-1_i32 : i32 to vector<16x128xi32>
    %26 = arith.addi %6, %25 : vector<16x128xi32>
    %c0_i32 = arith.constant 0 : i32
    %27 = vector.broadcast %c0_i32 : i32 to vector<16x128xi32>
    %28 = arith.cmpi sge, %26, %27 : vector<16x128xi32>
    %c-1_i32_13 = arith.constant -1 : i32
    %29 = vector.broadcast %c-1_i32_13 : i32 to vector<16x128xi32>
    %30 = arith.addi %6, %29 : vector<16x128xi32>
    %c8_i32 = arith.constant 8 : i32
    %31 = vector.broadcast %c8_i32 : i32 to vector<16x128xi32>
    %32 = arith.cmpi slt, %30, %31 : vector<16x128xi32>
    %33 = arith.andi %28, %32 : vector<16x128xi1>
    %cst_14 = arith.constant 0.000000e+00 : bf16
    %34 = vector.broadcast %cst_14 : bf16 to vector<16x128xbf16>
    %35 = arith.select %33, %24, %34 : vector<16x128xi1>, vector<16x128xbf16>
    %c1_15 = arith.constant 1 : index
    %c0_16 = arith.constant 0 : index
    %36 = vector.load %arg5[%c1_15, %c0_16] : memref<18x128xbf16, #tpu.memory_space<vmem>>, vector<16x128xbf16>
    %c2 = arith.constant 2 : index
    %c0_17 = arith.constant 0 : index
    %37 = vector.load %arg5[%c2, %c0_17] : memref<18x128xbf16, #tpu.memory_space<vmem>>, vector<16x128xbf16>
    %c1_i32 = arith.constant 1 : i32
    %38 = vector.broadcast %c1_i32 : i32 to vector<16x128xi32>
    %39 = arith.addi %6, %38 : vector<16x128xi32>
    %c0_i32_18 = arith.constant 0 : i32
    %40 = vector.broadcast %c0_i32_18 : i32 to vector<16x128xi32>
    %41 = arith.cmpi sge, %39, %40 : vector<16x128xi32>
    %c1_i32_19 = arith.constant 1 : i32
    %42 = vector.broadcast %c1_i32_19 : i32 to vector<16x128xi32>
    %43 = arith.addi %6, %42 : vector<16x128xi32>
    %c8_i32_20 = arith.constant 8 : i32
    %44 = vector.broadcast %c8_i32_20 : i32 to vector<16x128xi32>
    %45 = arith.cmpi slt, %43, %44 : vector<16x128xi32>
    %46 = arith.andi %41, %45 : vector<16x128xi1>
    %cst_21 = arith.constant 0.000000e+00 : bf16
    %47 = vector.broadcast %cst_21 : bf16 to vector<16x128xbf16>
    %48 = arith.select %46, %37, %47 : vector<16x128xi1>, vector<16x128xbf16>
    %49 = tpu.concatenate %35, %36, %48 in 1 : vector<16x128xbf16>, vector<16x128xbf16>, vector<16x128xbf16> -> vector<16x384xbf16>
    %c0_22 = arith.constant 0 : index
    %c0_23 = arith.constant 0 : index
    %c0_24 = arith.constant 0 : index
    %50 = vector.load %arg2[%c0_22, %c0_23, %c0_24] : memref<4x384x128xbf16, #tpu.memory_space<vmem>>, vector<1x384x128xbf16>
    %51 = vector.shape_cast %50 : vector<1x384x128xbf16> to vector<384x128xbf16>
    %cst_25 = arith.constant dense<0.000000e+00> : vector<16x128xf32>
    %52 = tpu.matmul %49, %51, %cst_25 {dimension_numbers = #tpu.dot_dimension_numbers<[1], [0], [0], [1], [0, 0, 1, 1], [], []>} : vector<16x384xbf16>, vector<384x128xbf16>, vector<16x128xf32> -> vector<16x128xf32>
    %53 = vector.extract_strided_slice %10 {offsets = [0, 0], sizes = [1, 128], strides = [1, 1]} : vector<3x128xf32> to vector<1x128xf32>
    %54 = vector.broadcast %53 : vector<1x128xf32> to vector<16x128xf32>
    %55 = arith.addf %52, %54 : vector<16x128xf32>
    %c1_26 = arith.constant 1 : index
    %c0_27 = arith.constant 0 : index
    %c0_28 = arith.constant 0 : index
    %56 = vector.load %arg3[%c1_26, %c0_27, %c0_28] : memref<4x3x128xf32, #tpu.memory_space<vmem>>, vector<1x3x128xf32>
    %57 = vector.shape_cast %56 : vector<1x3x128xf32> to vector<3x128xf32>
    %58 = vector.extract_strided_slice %57 {offsets = [1, 0], sizes = [1, 128], strides = [1, 1]} : vector<3x128xf32> to vector<1x128xf32>
    %59 = vector.broadcast %58 : vector<1x128xf32> to vector<16x128xf32>
    %60 = arith.mulf %55, %59 : vector<16x128xf32>
    %61 = vector.extract_strided_slice %57 {offsets = [2, 0], sizes = [1, 128], strides = [1, 1]} : vector<3x128xf32> to vector<1x128xf32>
    %62 = vector.broadcast %61 : vector<1x128xf32> to vector<16x128xf32>
    %63 = arith.addf %60, %62 : vector<16x128xf32>
    %cst_29 = arith.constant 0.000000e+00 : f32
    %64 = vector.broadcast %cst_29 : f32 to vector<16x128xf32>
    %65 = arith.cmpf ogt, %63, %64 : vector<16x128xf32>
    %cst_30 = arith.constant 3.300000e-01 : f32
    %66 = vector.broadcast %cst_30 : f32 to vector<16x128xf32>
    %67 = arith.mulf %66, %63 : vector<16x128xf32>
    %68 = arith.select %65, %63, %67 : vector<16x128xi1>, vector<16x128xf32>
    %69 = arith.truncf %68 : vector<16x128xf32> to vector<16x128xbf16>
    %c1_31 = arith.constant 1 : index
    %c0_32 = arith.constant 0 : index
    %70 = vector.load %arg5[%c1_31, %c0_32] : memref<18x128xbf16, #tpu.memory_space<vmem>>, vector<16x128xbf16>
    tpu.vector_store %arg5[%c1_31, %c0_32], %69 {strides = array<i32>} : memref<18x128xbf16, #tpu.memory_space<vmem>>, vector<16x128xbf16>,
    %c0_33 = arith.constant 0 : index
    %c0_34 = arith.constant 0 : index
    %71 = vector.load %arg5[%c0_33, %c0_34] : memref<18x128xbf16, #tpu.memory_space<vmem>>, vector<16x128xbf16>
    %c-1_i32_35 = arith.constant -1 : i32
    %72 = vector.broadcast %c-1_i32_35 : i32 to vector<16x128xi32>
    %73 = arith.addi %6, %72 : vector<16x128xi32>
    %c0_i32_36 = arith.constant 0 : i32
    %74 = vector.broadcast %c0_i32_36 : i32 to vector<16x128xi32>
    %75 = arith.cmpi sge, %73, %74 : vector<16x128xi32>
    %c-1_i32_37 = arith.constant -1 : i32
    %76 = vector.broadcast %c-1_i32_37 : i32 to vector<16x128xi32>
    %77 = arith.addi %6, %76 : vector<16x128xi32>
    %c8_i32_38 = arith.constant 8 : i32
    %78 = vector.broadcast %c8_i32_38 : i32 to vector<16x128xi32>
    %79 = arith.cmpi slt, %77, %78 : vector<16x128xi32>
    %80 = arith.andi %75, %79 : vector<16x128xi1>
    %cst_39 = arith.constant 0.000000e+00 : bf16
    %81 = vector.broadcast %cst_39 : bf16 to vector<16x128xbf16>
    %82 = arith.select %80, %71, %81 : vector<16x128xi1>, vector<16x128xbf16>
    %c1_40 = arith.constant 1 : index
    %c0_41 = arith.constant 0 : index
    %83 = vector.load %arg5[%c1_40, %c0_41] : memref<18x128xbf16, #tpu.memory_space<vmem>>, vector<16x128xbf16>
    %c2_42 = arith.constant 2 : index
    %c0_43 = arith.constant 0 : index
    %84 = vector.load %arg5[%c2_42, %c0_43] : memref<18x128xbf16, #tpu.memory_space<vmem>>, vector<16x128xbf16>
    %c1_i32_44 = arith.constant 1 : i32
    %85 = vector.broadcast %c1_i32_44 : i32 to vector<16x128xi32>
    %86 = arith.addi %6, %85 : vector<16x128xi32>
    %c0_i32_45 = arith.constant 0 : i32
    %87 = vector.broadcast %c0_i32_45 : i32 to vector<16x128xi32>
    %88 = arith.cmpi sge, %86, %87 : vector<16x128xi32>
    %c1_i32_46 = arith.constant 1 : i32
    %89 = vector.broadcast %c1_i32_46 : i32 to vector<16x128xi32>
    %90 = arith.addi %6, %89 : vector<16x128xi32>
    %c8_i32_47 = arith.constant 8 : i32
    %91 = vector.broadcast %c8_i32_47 : i32 to vector<16x128xi32>
    %92 = arith.cmpi slt, %90, %91 : vector<16x128xi32>
    %93 = arith.andi %88, %92 : vector<16x128xi1>
    %cst_48 = arith.constant 0.000000e+00 : bf16
    %94 = vector.broadcast %cst_48 : bf16 to vector<16x128xbf16>
    %95 = arith.select %93, %84, %94 : vector<16x128xi1>, vector<16x128xbf16>
    %96 = tpu.concatenate %82, %83, %95 in 1 : vector<16x128xbf16>, vector<16x128xbf16>, vector<16x128xbf16> -> vector<16x384xbf16>
    %c1_49 = arith.constant 1 : index
    %c0_50 = arith.constant 0 : index
    %c0_51 = arith.constant 0 : index
    %97 = vector.load %arg2[%c1_49, %c0_50, %c0_51] : memref<4x384x128xbf16, #tpu.memory_space<vmem>>, vector<1x384x128xbf16>
    %98 = vector.shape_cast %97 : vector<1x384x128xbf16> to vector<384x128xbf16>
    %cst_52 = arith.constant dense<0.000000e+00> : vector<16x128xf32>
    %99 = tpu.matmul %96, %98, %cst_52 {dimension_numbers = #tpu.dot_dimension_numbers<[1], [0], [0], [1], [0, 0, 1, 1], [], []>} : vector<16x384xbf16>, vector<384x128xbf16>, vector<16x128xf32> -> vector<16x128xf32>
    %100 = vector.extract_strided_slice %57 {offsets = [0, 0], sizes = [1, 128], strides = [1, 1]} : vector<3x128xf32> to vector<1x128xf32>
    %101 = vector.broadcast %100 : vector<1x128xf32> to vector<16x128xf32>
    %102 = arith.addf %99, %101 : vector<16x128xf32>
    %103 = arith.addf %8, %102 : vector<16x128xf32>
    %c2_53 = arith.constant 2 : index
    %c0_54 = arith.constant 0 : index
    %c0_55 = arith.constant 0 : index
    %104 = vector.load %arg3[%c2_53, %c0_54, %c0_55] : memref<4x3x128xf32, #tpu.memory_space<vmem>>, vector<1x3x128xf32>
    %105 = vector.shape_cast %104 : vector<1x3x128xf32> to vector<3x128xf32>
    %106 = vector.extract_strided_slice %105 {offsets = [1, 0], sizes = [1, 128], strides = [1, 1]} : vector<3x128xf32> to vector<1x128xf32>
    %107 = vector.broadcast %106 : vector<1x128xf32> to vector<16x128xf32>
    %108 = arith.mulf %103, %107 : vector<16x128xf32>
    %109 = vector.extract_strided_slice %105 {offsets = [2, 0], sizes = [1, 128], strides = [1, 1]} : vector<3x128xf32> to vector<1x128xf32>
    %110 = vector.broadcast %109 : vector<1x128xf32> to vector<16x128xf32>
    %111 = arith.addf %108, %110 : vector<16x128xf32>
    %cst_56 = arith.constant 0.000000e+00 : f32
    %112 = vector.broadcast %cst_56 : f32 to vector<16x128xf32>
    %113 = arith.cmpf ogt, %111, %112 : vector<16x128xf32>
    %cst_57 = arith.constant 3.300000e-01 : f32
    %114 = vector.broadcast %cst_57 : f32 to vector<16x128xf32>
    %115 = arith.mulf %114, %111 : vector<16x128xf32>
    %116 = arith.select %113, %111, %115 : vector<16x128xi1>, vector<16x128xf32>
    %117 = arith.truncf %116 : vector<16x128xf32> to vector<16x128xbf16>
    %c1_58 = arith.constant 1 : index
    %c0_59 = arith.constant 0 : index
    %118 = vector.load %arg5[%c1_58, %c0_59] : memref<18x128xbf16, #tpu.memory_space<vmem>>, vector<16x128xbf16>
    tpu.vector_store %arg5[%c1_58, %c0_59], %117 {strides = array<i32>} : memref<18x128xbf16, #tpu.memory_space<vmem>>, vector<16x128xbf16>,
    %c0_60 = arith.constant 0 : index
    %c0_61 = arith.constant 0 : index
    %119 = vector.load %arg5[%c0_60, %c0_61] : memref<18x128xbf16, #tpu.memory_space<vmem>>, vector<16x128xbf16>
    %c-1_i32_62 = arith.constant -1 : i32
    %120 = vector.broadcast %c-1_i32_62 : i32 to vector<16x128xi32>
    %121 = arith.addi %6, %120 : vector<16x128xi32>
    %c0_i32_63 = arith.constant 0 : i32
    %122 = vector.broadcast %c0_i32_63 : i32 to vector<16x128xi32>
    %123 = arith.cmpi sge, %121, %122 : vector<16x128xi32>
    %c-1_i32_64 = arith.constant -1 : i32
    %124 = vector.broadcast %c-1_i32_64 : i32 to vector<16x128xi32>
    %125 = arith.addi %6, %124 : vector<16x128xi32>
    %c8_i32_65 = arith.constant 8 : i32
    %126 = vector.broadcast %c8_i32_65 : i32 to vector<16x128xi32>
    %127 = arith.cmpi slt, %125, %126 : vector<16x128xi32>
    %128 = arith.andi %123, %127 : vector<16x128xi1>
    %cst_66 = arith.constant 0.000000e+00 : bf16
    %129 = vector.broadcast %cst_66 : bf16 to vector<16x128xbf16>
    %130 = arith.select %128, %119, %129 : vector<16x128xi1>, vector<16x128xbf16>
    %c1_67 = arith.constant 1 : index
    %c0_68 = arith.constant 0 : index
    %131 = vector.load %arg5[%c1_67, %c0_68] : memref<18x128xbf16, #tpu.memory_space<vmem>>, vector<16x128xbf16>
    %c2_69 = arith.constant 2 : index
    %c0_70 = arith.constant 0 : index
    %132 = vector.load %arg5[%c2_69, %c0_70] : memref<18x128xbf16, #tpu.memory_space<vmem>>, vector<16x128xbf16>
    %c1_i32_71 = arith.constant 1 : i32
    %133 = vector.broadcast %c1_i32_71 : i32 to vector<16x128xi32>
    %134 = arith.addi %6, %133 : vector<16x128xi32>
    %c0_i32_72 = arith.constant 0 : i32
    %135 = vector.broadcast %c0_i32_72 : i32 to vector<16x128xi32>
    %136 = arith.cmpi sge, %134, %135 : vector<16x128xi32>
    %c1_i32_73 = arith.constant 1 : i32
    %137 = vector.broadcast %c1_i32_73 : i32 to vector<16x128xi32>
    %138 = arith.addi %6, %137 : vector<16x128xi32>
    %c8_i32_74 = arith.constant 8 : i32
    %139 = vector.broadcast %c8_i32_74 : i32 to vector<16x128xi32>
    %140 = arith.cmpi slt, %138, %139 : vector<16x128xi32>
    %141 = arith.andi %136, %140 : vector<16x128xi1>
    %cst_75 = arith.constant 0.000000e+00 : bf16
    %142 = vector.broadcast %cst_75 : bf16 to vector<16x128xbf16>
    %143 = arith.select %141, %132, %142 : vector<16x128xi1>, vector<16x128xbf16>
    %144 = tpu.concatenate %130, %131, %143 in 1 : vector<16x128xbf16>, vector<16x128xbf16>, vector<16x128xbf16> -> vector<16x384xbf16>
    %c2_76 = arith.constant 2 : index
    %c0_77 = arith.constant 0 : index
    %c0_78 = arith.constant 0 : index
    %145 = vector.load %arg2[%c2_76, %c0_77, %c0_78] : memref<4x384x128xbf16, #tpu.memory_space<vmem>>, vector<1x384x128xbf16>
    %146 = vector.shape_cast %145 : vector<1x384x128xbf16> to vector<384x128xbf16>
    %cst_79 = arith.constant dense<0.000000e+00> : vector<16x128xf32>
    %147 = tpu.matmul %144, %146, %cst_79 {dimension_numbers = #tpu.dot_dimension_numbers<[1], [0], [0], [1], [0, 0, 1, 1], [], []>} : vector<16x384xbf16>, vector<384x128xbf16>, vector<16x128xf32> -> vector<16x128xf32>
    %148 = vector.extract_strided_slice %105 {offsets = [0, 0], sizes = [1, 128], strides = [1, 1]} : vector<3x128xf32> to vector<1x128xf32>
    %149 = vector.broadcast %148 : vector<1x128xf32> to vector<16x128xf32>
    %150 = arith.addf %147, %149 : vector<16x128xf32>
    %c3 = arith.constant 3 : index
    %c0_80 = arith.constant 0 : index
    %c0_81 = arith.constant 0 : index
    %151 = vector.load %arg3[%c3, %c0_80, %c0_81] : memref<4x3x128xf32, #tpu.memory_space<vmem>>, vector<1x3x128xf32>
    %152 = vector.shape_cast %151 : vector<1x3x128xf32> to vector<3x128xf32>
    %153 = vector.extract_strided_slice %152 {offsets = [1, 0], sizes = [1, 128], strides = [1, 1]} : vector<3x128xf32> to vector<1x128xf32>
    %154 = vector.broadcast %153 : vector<1x128xf32> to vector<16x128xf32>
    %155 = arith.mulf %150, %154 : vector<16x128xf32>
    %156 = vector.extract_strided_slice %152 {offsets = [2, 0], sizes = [1, 128], strides = [1, 1]} : vector<3x128xf32> to vector<1x128xf32>
    %157 = vector.broadcast %156 : vector<1x128xf32> to vector<16x128xf32>
    %158 = arith.addf %155, %157 : vector<16x128xf32>
    %cst_82 = arith.constant 0.000000e+00 : f32
    %159 = vector.broadcast %cst_82 : f32 to vector<16x128xf32>
    %160 = arith.cmpf ogt, %158, %159 : vector<16x128xf32>
    %cst_83 = arith.constant 3.300000e-01 : f32
    %161 = vector.broadcast %cst_83 : f32 to vector<16x128xf32>
    %162 = arith.mulf %161, %158 : vector<16x128xf32>
    %163 = arith.select %160, %158, %162 : vector<16x128xi1>, vector<16x128xf32>
    %164 = arith.truncf %163 : vector<16x128xf32> to vector<16x128xbf16>
    %c1_84 = arith.constant 1 : index
    %c0_85 = arith.constant 0 : index
    %165 = vector.load %arg5[%c1_84, %c0_85] : memref<18x128xbf16, #tpu.memory_space<vmem>>, vector<16x128xbf16>
    tpu.vector_store %arg5[%c1_84, %c0_85], %164 {strides = array<i32>} : memref<18x128xbf16, #tpu.memory_space<vmem>>, vector<16x128xbf16>,
    %c0_86 = arith.constant 0 : index
    %c0_87 = arith.constant 0 : index
    %166 = vector.load %arg5[%c0_86, %c0_87] : memref<18x128xbf16, #tpu.memory_space<vmem>>, vector<16x128xbf16>
    %c-1_i32_88 = arith.constant -1 : i32
    %167 = vector.broadcast %c-1_i32_88 : i32 to vector<16x128xi32>
    %168 = arith.addi %6, %167 : vector<16x128xi32>
    %c0_i32_89 = arith.constant 0 : i32
    %169 = vector.broadcast %c0_i32_89 : i32 to vector<16x128xi32>
    %170 = arith.cmpi sge, %168, %169 : vector<16x128xi32>
    %c-1_i32_90 = arith.constant -1 : i32
    %171 = vector.broadcast %c-1_i32_90 : i32 to vector<16x128xi32>
    %172 = arith.addi %6, %171 : vector<16x128xi32>
    %c8_i32_91 = arith.constant 8 : i32
    %173 = vector.broadcast %c8_i32_91 : i32 to vector<16x128xi32>
    %174 = arith.cmpi slt, %172, %173 : vector<16x128xi32>
    %175 = arith.andi %170, %174 : vector<16x128xi1>
    %cst_92 = arith.constant 0.000000e+00 : bf16
    %176 = vector.broadcast %cst_92 : bf16 to vector<16x128xbf16>
    %177 = arith.select %175, %166, %176 : vector<16x128xi1>, vector<16x128xbf16>
    %c1_93 = arith.constant 1 : index
    %c0_94 = arith.constant 0 : index
    %178 = vector.load %arg5[%c1_93, %c0_94] : memref<18x128xbf16, #tpu.memory_space<vmem>>, vector<16x128xbf16>
    %c2_95 = arith.constant 2 : index
    %c0_96 = arith.constant 0 : index
    %179 = vector.load %arg5[%c2_95, %c0_96] : memref<18x128xbf16, #tpu.memory_space<vmem>>, vector<16x128xbf16>
    %c1_i32_97 = arith.constant 1 : i32
    %180 = vector.broadcast %c1_i32_97 : i32 to vector<16x128xi32>
    %181 = arith.addi %6, %180 : vector<16x128xi32>
    %c0_i32_98 = arith.constant 0 : i32
    %182 = vector.broadcast %c0_i32_98 : i32 to vector<16x128xi32>
    %183 = arith.cmpi sge, %181, %182 : vector<16x128xi32>
    %c1_i32_99 = arith.constant 1 : i32
    %184 = vector.broadcast %c1_i32_99 : i32 to vector<16x128xi32>
    %185 = arith.addi %6, %184 : vector<16x128xi32>
    %c8_i32_100 = arith.constant 8 : i32
    %186 = vector.broadcast %c8_i32_100 : i32 to vector<16x128xi32>
    %187 = arith.cmpi slt, %185, %186 : vector<16x128xi32>
    %188 = arith.andi %183, %187 : vector<16x128xi1>
    %cst_101 = arith.constant 0.000000e+00 : bf16
    %189 = vector.broadcast %cst_101 : bf16 to vector<16x128xbf16>
    %190 = arith.select %188, %179, %189 : vector<16x128xi1>, vector<16x128xbf16>
    %191 = tpu.concatenate %177, %178, %190 in 1 : vector<16x128xbf16>, vector<16x128xbf16>, vector<16x128xbf16> -> vector<16x384xbf16>
    %c3_102 = arith.constant 3 : index
    %c0_103 = arith.constant 0 : index
    %c0_104 = arith.constant 0 : index
    %192 = vector.load %arg2[%c3_102, %c0_103, %c0_104] : memref<4x384x128xbf16, #tpu.memory_space<vmem>>, vector<1x384x128xbf16>
    %193 = vector.shape_cast %192 : vector<1x384x128xbf16> to vector<384x128xbf16>
    %cst_105 = arith.constant dense<0.000000e+00> : vector<16x128xf32>
    %194 = tpu.matmul %191, %193, %cst_105 {dimension_numbers = #tpu.dot_dimension_numbers<[1], [0], [0], [1], [0, 0, 1, 1], [], []>} : vector<16x384xbf16>, vector<384x128xbf16>, vector<16x128xf32> -> vector<16x128xf32>
    %195 = vector.extract_strided_slice %152 {offsets = [0, 0], sizes = [1, 128], strides = [1, 1]} : vector<3x128xf32> to vector<1x128xf32>
    %196 = vector.broadcast %195 : vector<1x128xf32> to vector<16x128xf32>
    %197 = arith.addf %194, %196 : vector<16x128xf32>
    %198 = arith.addf %103, %197 : vector<16x128xf32>
    %199 = arith.truncf %198 : vector<16x128xf32> to vector<16x128xbf16>
    %c0_106 = arith.constant 0 : index
    %c0_107 = arith.constant 0 : index
    %200 = vector.load %arg4[%c0_106, %c0_107] : memref<16x128xbf16, #tpu.memory_space<vmem>>, vector<16x128xbf16>
    tpu.vector_store %arg4[%c0_106, %c0_107], %199 {strides = array<i32>} : memref<16x128xbf16, #tpu.memory_space<vmem>>, vector<16x128xbf16>,
    return
  }
  func.func @transform_0(%arg0: i32) -> (i32, i32) {
    %c0_i32 = arith.constant 0 : i32
    %c0_i32_0 = arith.constant 0 : i32
    %c0_i32_1 = arith.constant 0 : i32
    return %c0_i32, %c0_i32_0 : i32, i32
  }
  func.func @transform_1(%arg0: i32) -> (i32, i32, i32) {
    %c0_i32 = arith.constant 0 : i32
    %c0_i32_0 = arith.constant 0 : i32
    %c0_i32_1 = arith.constant 0 : i32
    %c0_i32_2 = arith.constant 0 : i32
    return %c0_i32, %c0_i32_0, %c0_i32_1 : i32, i32, i32
  }
  func.func @transform_2(%arg0: i32) -> (i32, i32, i32) {
    %c0_i32 = arith.constant 0 : i32
    %c0_i32_0 = arith.constant 0 : i32
    %c0_i32_1 = arith.constant 0 : i32
    %c0_i32_2 = arith.constant 0 : i32
    return %c0_i32, %c0_i32_0, %c0_i32_1 : i32, i32, i32
  }
  func.func @transform_3(%arg0: i32) -> (i32, i32) {
    %c0_i32 = arith.constant 0 : i32
    %c0_i32_0 = arith.constant 0 : i32
    %c0_i32_1 = arith.constant 0 : i32
    return %c0_i32, %c0_i32_0 : i32, i32
  }
}

module attributes {stable_mosaic.version = 11 : i64} {
  func.func @_bn_matmul_kernel(%arg0: i32, %arg1: memref<8x256xbf16, #tpu.memory_space<vmem>>, %arg2: memref<256x128xbf16, #tpu.memory_space<vmem>>, %arg3: memref<2x256xf32, #tpu.memory_space<vmem>>, %arg4: memref<1x128xf32, #tpu.memory_space<vmem>>, %arg5: memref<8x128xbf16, #tpu.memory_space<vmem>>) attributes {dimension_semantics = [#tpu.dimension_semantics<arbitrary>], iteration_bounds = array<i64: 1>, scalar_prefetch = 0 : i64, scratch_operands = 0 : i64, tpu.core_type = #tpu.core_type<tc>, window_params = [{pipeline_mode = #tpu.pipeline_mode<synchronous>, transform_indices = @transform_0, window_bounds = array<i64: 8, 256>}, {pipeline_mode = #tpu.pipeline_mode<synchronous>, transform_indices = @transform_1, window_bounds = array<i64: 256, 128>}, {pipeline_mode = #tpu.pipeline_mode<synchronous>, transform_indices = @transform_2, window_bounds = array<i64: 2, 256>}, {pipeline_mode = #tpu.pipeline_mode<synchronous>, transform_indices = @transform_3, window_bounds = array<i64: 1, 128>}, {pipeline_mode = #tpu.pipeline_mode<synchronous>, transform_indices = @transform_4, window_bounds = array<i64: 8, 128>}]} {
    %c0 = arith.constant 0 : index
    %c0_0 = arith.constant 0 : index
    %0 = vector.load %arg1[%c0, %c0_0] : memref<8x256xbf16, #tpu.memory_space<vmem>>, vector<8x256xbf16>
    %1 = arith.extf %0 : vector<8x256xbf16> to vector<8x256xf32>
    %c0_1 = arith.constant 0 : index
    %c0_2 = arith.constant 0 : index
    %2 = vector.load %arg3[%c0_1, %c0_2] : memref<2x256xf32, #tpu.memory_space<vmem>>, vector<2x256xf32>
    %3 = vector.extract_strided_slice %2 {offsets = [0, 0], sizes = [1, 256], strides = [1, 1]} : vector<2x256xf32> to vector<1x256xf32>
    %4 = vector.broadcast %3 : vector<1x256xf32> to vector<8x256xf32>
    %5 = arith.mulf %1, %4 : vector<8x256xf32>
    %6 = vector.extract_strided_slice %2 {offsets = [1, 0], sizes = [1, 256], strides = [1, 1]} : vector<2x256xf32> to vector<1x256xf32>
    %7 = vector.broadcast %6 : vector<1x256xf32> to vector<8x256xf32>
    %8 = arith.addf %5, %7 : vector<8x256xf32>
    %cst = arith.constant 0.000000e+00 : f32
    %9 = vector.broadcast %cst : f32 to vector<8x256xf32>
    %10 = arith.cmpf ogt, %8, %9 : vector<8x256xf32>
    %cst_3 = arith.constant 3.300000e-01 : f32
    %11 = vector.broadcast %cst_3 : f32 to vector<8x256xf32>
    %12 = arith.mulf %11, %8 : vector<8x256xf32>
    %13 = arith.select %10, %8, %12 : vector<8x256xi1>, vector<8x256xf32>
    %14 = arith.truncf %13 : vector<8x256xf32> to vector<8x256xbf16>
    %c0_4 = arith.constant 0 : index
    %c0_5 = arith.constant 0 : index
    %15 = vector.load %arg2[%c0_4, %c0_5] : memref<256x128xbf16, #tpu.memory_space<vmem>>, vector<256x128xbf16>
    %cst_6 = arith.constant dense<0.000000e+00> : vector<8x128xf32>
    %16 = tpu.matmul %14, %15, %cst_6 {dimension_numbers = #tpu.dot_dimension_numbers<[1], [0], [0], [1], [0, 0, 1, 1], [], []>} : vector<8x256xbf16>, vector<256x128xbf16>, vector<8x128xf32> -> vector<8x128xf32>
    %c0_7 = arith.constant 0 : index
    %c0_8 = arith.constant 0 : index
    %17 = vector.load %arg4[%c0_7, %c0_8] : memref<1x128xf32, #tpu.memory_space<vmem>>, vector<1x128xf32>
    %18 = vector.broadcast %17 : vector<1x128xf32> to vector<8x128xf32>
    %19 = arith.addf %16, %18 : vector<8x128xf32>
    %20 = arith.truncf %19 : vector<8x128xf32> to vector<8x128xbf16>
    %c0_9 = arith.constant 0 : index
    %c0_10 = arith.constant 0 : index
    %21 = vector.load %arg5[%c0_9, %c0_10] : memref<8x128xbf16, #tpu.memory_space<vmem>>, vector<8x128xbf16>
    tpu.vector_store %arg5[%c0_9, %c0_10], %20 {strides = array<i32>} : memref<8x128xbf16, #tpu.memory_space<vmem>>, vector<8x128xbf16>,
    return
  }
  func.func @transform_0(%arg0: i32) -> (i32, i32) {
    %c0_i32 = arith.constant 0 : i32
    %c0_i32_0 = arith.constant 0 : i32
    %c0_i32_1 = arith.constant 0 : i32
    return %c0_i32, %c0_i32_0 : i32, i32
  }
  func.func @transform_1(%arg0: i32) -> (i32, i32) {
    %c0_i32 = arith.constant 0 : i32
    %c0_i32_0 = arith.constant 0 : i32
    %c0_i32_1 = arith.constant 0 : i32
    return %c0_i32, %c0_i32_0 : i32, i32
  }
  func.func @transform_2(%arg0: i32) -> (i32, i32) {
    %c0_i32 = arith.constant 0 : i32
    %c0_i32_0 = arith.constant 0 : i32
    %c0_i32_1 = arith.constant 0 : i32
    return %c0_i32, %c0_i32_0 : i32, i32
  }
  func.func @transform_3(%arg0: i32) -> (i32, i32) {
    %c0_i32 = arith.constant 0 : i32
    %c0_i32_0 = arith.constant 0 : i32
    %c0_i32_1 = arith.constant 0 : i32
    return %c0_i32, %c0_i32_0 : i32, i32
  }
  func.func @transform_4(%arg0: i32) -> (i32, i32) {
    %c0_i32 = arith.constant 0 : i32
    %c0_i32_0 = arith.constant 0 : i32
    %c0_i32_1 = arith.constant 0 : i32
    return %c0_i32, %c0_i32_0 : i32, i32
  }
}

module attributes {stable_mosaic.version = 11 : i64} {
  func.func @_resblocks_kernel(%arg0: i32, %arg1: memref<8x128xbf16, #tpu.memory_space<vmem>>, %arg2: memref<4x384x128xbf16, #tpu.memory_space<vmem>>, %arg3: memref<4x3x128xf32, #tpu.memory_space<vmem>>, %arg4: memref<8x128xbf16, #tpu.memory_space<vmem>>, %arg5: memref<10x128xbf16, #tpu.memory_space<vmem>>) attributes {dimension_semantics = [#tpu.dimension_semantics<arbitrary>], iteration_bounds = array<i64: 1>, scalar_prefetch = 0 : i64, scratch_operands = 1 : i64, tpu.core_type = #tpu.core_type<tc>, window_params = [{pipeline_mode = #tpu.pipeline_mode<synchronous>, transform_indices = @transform_0, window_bounds = array<i64: 8, 128>}, {pipeline_mode = #tpu.pipeline_mode<synchronous>, transform_indices = @transform_1, window_bounds = array<i64: 4, 384, 128>}, {pipeline_mode = #tpu.pipeline_mode<synchronous>, transform_indices = @transform_2, window_bounds = array<i64: 4, 3, 128>}, {pipeline_mode = #tpu.pipeline_mode<synchronous>, transform_indices = @transform_3, window_bounds = array<i64: 8, 128>}]} {
    %cst = arith.constant 0.000000e+00 : bf16
    %0 = vector.broadcast %cst : bf16 to vector<1x128xbf16>
    %c0 = arith.constant 0 : index
    %c0_0 = arith.constant 0 : index
    %1 = vector.load %arg5[%c0, %c0_0] : memref<10x128xbf16, #tpu.memory_space<vmem>>, vector<1x128xbf16>
    tpu.vector_store %arg5[%c0, %c0_0], %0 {strides = array<i32>} : memref<10x128xbf16, #tpu.memory_space<vmem>>, vector<1x128xbf16>,
    %cst_1 = arith.constant 0.000000e+00 : bf16
    %2 = vector.broadcast %cst_1 : bf16 to vector<1x128xbf16>
    %c9 = arith.constant 9 : index
    %c0_2 = arith.constant 0 : index
    %3 = vector.load %arg5[%c9, %c0_2] : memref<10x128xbf16, #tpu.memory_space<vmem>>, vector<1x128xbf16>
    tpu.vector_store %arg5[%c9, %c0_2], %2 {strides = array<i32>} : memref<10x128xbf16, #tpu.memory_space<vmem>>, vector<1x128xbf16>,
    %4 = tpu.iota {dimensions = array<i32: 0>} : vector<8x128xi32>
    %c3_i32 = arith.constant 3 : i32
    %5 = vector.broadcast %c3_i32 : i32 to vector<8x128xi32>
    %6 = arith.andi %4, %5 : vector<8x128xi32>
    %c0_3 = arith.constant 0 : index
    %c0_4 = arith.constant 0 : index
    %7 = vector.load %arg1[%c0_3, %c0_4] : memref<8x128xbf16, #tpu.memory_space<vmem>>, vector<8x128xbf16>
    %8 = arith.extf %7 : vector<8x128xbf16> to vector<8x128xf32>
    %c0_5 = arith.constant 0 : index
    %c0_6 = arith.constant 0 : index
    %c0_7 = arith.constant 0 : index
    %9 = vector.load %arg3[%c0_5, %c0_6, %c0_7] : memref<4x3x128xf32, #tpu.memory_space<vmem>>, vector<1x3x128xf32>
    %10 = vector.shape_cast %9 : vector<1x3x128xf32> to vector<3x128xf32>
    %11 = vector.extract_strided_slice %10 {offsets = [1, 0], sizes = [1, 128], strides = [1, 1]} : vector<3x128xf32> to vector<1x128xf32>
    %12 = vector.broadcast %11 : vector<1x128xf32> to vector<8x128xf32>
    %13 = arith.mulf %8, %12 : vector<8x128xf32>
    %14 = vector.extract_strided_slice %10 {offsets = [2, 0], sizes = [1, 128], strides = [1, 1]} : vector<3x128xf32> to vector<1x128xf32>
    %15 = vector.broadcast %14 : vector<1x128xf32> to vector<8x128xf32>
    %16 = arith.addf %13, %15 : vector<8x128xf32>
    %cst_8 = arith.constant 0.000000e+00 : f32
    %17 = vector.broadcast %cst_8 : f32 to vector<8x128xf32>
    %18 = arith.cmpf ogt, %16, %17 : vector<8x128xf32>
    %cst_9 = arith.constant 3.300000e-01 : f32
    %19 = vector.broadcast %cst_9 : f32 to vector<8x128xf32>
    %20 = arith.mulf %19, %16 : vector<8x128xf32>
    %21 = arith.select %18, %16, %20 : vector<8x128xi1>, vector<8x128xf32>
    %22 = arith.truncf %21 : vector<8x128xf32> to vector<8x128xbf16>
    %c1 = arith.constant 1 : index
    %c0_10 = arith.constant 0 : index
    %23 = vector.load %arg5[%c1, %c0_10] : memref<10x128xbf16, #tpu.memory_space<vmem>>, vector<8x128xbf16>
    tpu.vector_store %arg5[%c1, %c0_10], %22 {strides = array<i32>} : memref<10x128xbf16, #tpu.memory_space<vmem>>, vector<8x128xbf16>,
    %c0_11 = arith.constant 0 : index
    %c0_12 = arith.constant 0 : index
    %24 = vector.load %arg5[%c0_11, %c0_12] : memref<10x128xbf16, #tpu.memory_space<vmem>>, vector<8x128xbf16>
    %c-1_i32 = arith.constant -1 : i32
    %25 = vector.broadcast %c-1_i32 : i32 to vector<8x128xi32>
    %26 = arith.addi %6, %25 : vector<8x128xi32>
    %c0_i32 = arith.constant 0 : i32
    %27 = vector.broadcast %c0_i32 : i32 to vector<8x128xi32>
    %28 = arith.cmpi sge, %26, %27 : vector<8x128xi32>
    %c-1_i32_13 = arith.constant -1 : i32
    %29 = vector.broadcast %c-1_i32_13 : i32 to vector<8x128xi32>
    %30 = arith.addi %6, %29 : vector<8x128xi32>
    %c4_i32 = arith.constant 4 : i32
    %31 = vector.broadcast %c4_i32 : i32 to vector<8x128xi32>
    %32 = arith.cmpi slt, %30, %31 : vector<8x128xi32>
    %33 = arith.andi %28, %32 : vector<8x128xi1>
    %cst_14 = arith.constant 0.000000e+00 : bf16
    %34 = vector.broadcast %cst_14 : bf16 to vector<8x128xbf16>
    %35 = arith.select %33, %24, %34 : vector<8x128xi1>, vector<8x128xbf16>
    %c1_15 = arith.constant 1 : index
    %c0_16 = arith.constant 0 : index
    %36 = vector.load %arg5[%c1_15, %c0_16] : memref<10x128xbf16, #tpu.memory_space<vmem>>, vector<8x128xbf16>
    %c2 = arith.constant 2 : index
    %c0_17 = arith.constant 0 : index
    %37 = vector.load %arg5[%c2, %c0_17] : memref<10x128xbf16, #tpu.memory_space<vmem>>, vector<8x128xbf16>
    %c1_i32 = arith.constant 1 : i32
    %38 = vector.broadcast %c1_i32 : i32 to vector<8x128xi32>
    %39 = arith.addi %6, %38 : vector<8x128xi32>
    %c0_i32_18 = arith.constant 0 : i32
    %40 = vector.broadcast %c0_i32_18 : i32 to vector<8x128xi32>
    %41 = arith.cmpi sge, %39, %40 : vector<8x128xi32>
    %c1_i32_19 = arith.constant 1 : i32
    %42 = vector.broadcast %c1_i32_19 : i32 to vector<8x128xi32>
    %43 = arith.addi %6, %42 : vector<8x128xi32>
    %c4_i32_20 = arith.constant 4 : i32
    %44 = vector.broadcast %c4_i32_20 : i32 to vector<8x128xi32>
    %45 = arith.cmpi slt, %43, %44 : vector<8x128xi32>
    %46 = arith.andi %41, %45 : vector<8x128xi1>
    %cst_21 = arith.constant 0.000000e+00 : bf16
    %47 = vector.broadcast %cst_21 : bf16 to vector<8x128xbf16>
    %48 = arith.select %46, %37, %47 : vector<8x128xi1>, vector<8x128xbf16>
    %49 = tpu.concatenate %35, %36, %48 in 1 : vector<8x128xbf16>, vector<8x128xbf16>, vector<8x128xbf16> -> vector<8x384xbf16>
    %c0_22 = arith.constant 0 : index
    %c0_23 = arith.constant 0 : index
    %c0_24 = arith.constant 0 : index
    %50 = vector.load %arg2[%c0_22, %c0_23, %c0_24] : memref<4x384x128xbf16, #tpu.memory_space<vmem>>, vector<1x384x128xbf16>
    %51 = vector.shape_cast %50 : vector<1x384x128xbf16> to vector<384x128xbf16>
    %cst_25 = arith.constant dense<0.000000e+00> : vector<8x128xf32>
    %52 = tpu.matmul %49, %51, %cst_25 {dimension_numbers = #tpu.dot_dimension_numbers<[1], [0], [0], [1], [0, 0, 1, 1], [], []>} : vector<8x384xbf16>, vector<384x128xbf16>, vector<8x128xf32> -> vector<8x128xf32>
    %53 = vector.extract_strided_slice %10 {offsets = [0, 0], sizes = [1, 128], strides = [1, 1]} : vector<3x128xf32> to vector<1x128xf32>
    %54 = vector.broadcast %53 : vector<1x128xf32> to vector<8x128xf32>
    %55 = arith.addf %52, %54 : vector<8x128xf32>
    %c1_26 = arith.constant 1 : index
    %c0_27 = arith.constant 0 : index
    %c0_28 = arith.constant 0 : index
    %56 = vector.load %arg3[%c1_26, %c0_27, %c0_28] : memref<4x3x128xf32, #tpu.memory_space<vmem>>, vector<1x3x128xf32>
    %57 = vector.shape_cast %56 : vector<1x3x128xf32> to vector<3x128xf32>
    %58 = vector.extract_strided_slice %57 {offsets = [1, 0], sizes = [1, 128], strides = [1, 1]} : vector<3x128xf32> to vector<1x128xf32>
    %59 = vector.broadcast %58 : vector<1x128xf32> to vector<8x128xf32>
    %60 = arith.mulf %55, %59 : vector<8x128xf32>
    %61 = vector.extract_strided_slice %57 {offsets = [2, 0], sizes = [1, 128], strides = [1, 1]} : vector<3x128xf32> to vector<1x128xf32>
    %62 = vector.broadcast %61 : vector<1x128xf32> to vector<8x128xf32>
    %63 = arith.addf %60, %62 : vector<8x128xf32>
    %cst_29 = arith.constant 0.000000e+00 : f32
    %64 = vector.broadcast %cst_29 : f32 to vector<8x128xf32>
    %65 = arith.cmpf ogt, %63, %64 : vector<8x128xf32>
    %cst_30 = arith.constant 3.300000e-01 : f32
    %66 = vector.broadcast %cst_30 : f32 to vector<8x128xf32>
    %67 = arith.mulf %66, %63 : vector<8x128xf32>
    %68 = arith.select %65, %63, %67 : vector<8x128xi1>, vector<8x128xf32>
    %69 = arith.truncf %68 : vector<8x128xf32> to vector<8x128xbf16>
    %c1_31 = arith.constant 1 : index
    %c0_32 = arith.constant 0 : index
    %70 = vector.load %arg5[%c1_31, %c0_32] : memref<10x128xbf16, #tpu.memory_space<vmem>>, vector<8x128xbf16>
    tpu.vector_store %arg5[%c1_31, %c0_32], %69 {strides = array<i32>} : memref<10x128xbf16, #tpu.memory_space<vmem>>, vector<8x128xbf16>,
    %c0_33 = arith.constant 0 : index
    %c0_34 = arith.constant 0 : index
    %71 = vector.load %arg5[%c0_33, %c0_34] : memref<10x128xbf16, #tpu.memory_space<vmem>>, vector<8x128xbf16>
    %c-1_i32_35 = arith.constant -1 : i32
    %72 = vector.broadcast %c-1_i32_35 : i32 to vector<8x128xi32>
    %73 = arith.addi %6, %72 : vector<8x128xi32>
    %c0_i32_36 = arith.constant 0 : i32
    %74 = vector.broadcast %c0_i32_36 : i32 to vector<8x128xi32>
    %75 = arith.cmpi sge, %73, %74 : vector<8x128xi32>
    %c-1_i32_37 = arith.constant -1 : i32
    %76 = vector.broadcast %c-1_i32_37 : i32 to vector<8x128xi32>
    %77 = arith.addi %6, %76 : vector<8x128xi32>
    %c4_i32_38 = arith.constant 4 : i32
    %78 = vector.broadcast %c4_i32_38 : i32 to vector<8x128xi32>
    %79 = arith.cmpi slt, %77, %78 : vector<8x128xi32>
    %80 = arith.andi %75, %79 : vector<8x128xi1>
    %cst_39 = arith.constant 0.000000e+00 : bf16
    %81 = vector.broadcast %cst_39 : bf16 to vector<8x128xbf16>
    %82 = arith.select %80, %71, %81 : vector<8x128xi1>, vector<8x128xbf16>
    %c1_40 = arith.constant 1 : index
    %c0_41 = arith.constant 0 : index
    %83 = vector.load %arg5[%c1_40, %c0_41] : memref<10x128xbf16, #tpu.memory_space<vmem>>, vector<8x128xbf16>
    %c2_42 = arith.constant 2 : index
    %c0_43 = arith.constant 0 : index
    %84 = vector.load %arg5[%c2_42, %c0_43] : memref<10x128xbf16, #tpu.memory_space<vmem>>, vector<8x128xbf16>
    %c1_i32_44 = arith.constant 1 : i32
    %85 = vector.broadcast %c1_i32_44 : i32 to vector<8x128xi32>
    %86 = arith.addi %6, %85 : vector<8x128xi32>
    %c0_i32_45 = arith.constant 0 : i32
    %87 = vector.broadcast %c0_i32_45 : i32 to vector<8x128xi32>
    %88 = arith.cmpi sge, %86, %87 : vector<8x128xi32>
    %c1_i32_46 = arith.constant 1 : i32
    %89 = vector.broadcast %c1_i32_46 : i32 to vector<8x128xi32>
    %90 = arith.addi %6, %89 : vector<8x128xi32>
    %c4_i32_47 = arith.constant 4 : i32
    %91 = vector.broadcast %c4_i32_47 : i32 to vector<8x128xi32>
    %92 = arith.cmpi slt, %90, %91 : vector<8x128xi32>
    %93 = arith.andi %88, %92 : vector<8x128xi1>
    %cst_48 = arith.constant 0.000000e+00 : bf16
    %94 = vector.broadcast %cst_48 : bf16 to vector<8x128xbf16>
    %95 = arith.select %93, %84, %94 : vector<8x128xi1>, vector<8x128xbf16>
    %96 = tpu.concatenate %82, %83, %95 in 1 : vector<8x128xbf16>, vector<8x128xbf16>, vector<8x128xbf16> -> vector<8x384xbf16>
    %c1_49 = arith.constant 1 : index
    %c0_50 = arith.constant 0 : index
    %c0_51 = arith.constant 0 : index
    %97 = vector.load %arg2[%c1_49, %c0_50, %c0_51] : memref<4x384x128xbf16, #tpu.memory_space<vmem>>, vector<1x384x128xbf16>
    %98 = vector.shape_cast %97 : vector<1x384x128xbf16> to vector<384x128xbf16>
    %cst_52 = arith.constant dense<0.000000e+00> : vector<8x128xf32>
    %99 = tpu.matmul %96, %98, %cst_52 {dimension_numbers = #tpu.dot_dimension_numbers<[1], [0], [0], [1], [0, 0, 1, 1], [], []>} : vector<8x384xbf16>, vector<384x128xbf16>, vector<8x128xf32> -> vector<8x128xf32>
    %100 = vector.extract_strided_slice %57 {offsets = [0, 0], sizes = [1, 128], strides = [1, 1]} : vector<3x128xf32> to vector<1x128xf32>
    %101 = vector.broadcast %100 : vector<1x128xf32> to vector<8x128xf32>
    %102 = arith.addf %99, %101 : vector<8x128xf32>
    %103 = arith.addf %8, %102 : vector<8x128xf32>
    %c2_53 = arith.constant 2 : index
    %c0_54 = arith.constant 0 : index
    %c0_55 = arith.constant 0 : index
    %104 = vector.load %arg3[%c2_53, %c0_54, %c0_55] : memref<4x3x128xf32, #tpu.memory_space<vmem>>, vector<1x3x128xf32>
    %105 = vector.shape_cast %104 : vector<1x3x128xf32> to vector<3x128xf32>
    %106 = vector.extract_strided_slice %105 {offsets = [1, 0], sizes = [1, 128], strides = [1, 1]} : vector<3x128xf32> to vector<1x128xf32>
    %107 = vector.broadcast %106 : vector<1x128xf32> to vector<8x128xf32>
    %108 = arith.mulf %103, %107 : vector<8x128xf32>
    %109 = vector.extract_strided_slice %105 {offsets = [2, 0], sizes = [1, 128], strides = [1, 1]} : vector<3x128xf32> to vector<1x128xf32>
    %110 = vector.broadcast %109 : vector<1x128xf32> to vector<8x128xf32>
    %111 = arith.addf %108, %110 : vector<8x128xf32>
    %cst_56 = arith.constant 0.000000e+00 : f32
    %112 = vector.broadcast %cst_56 : f32 to vector<8x128xf32>
    %113 = arith.cmpf ogt, %111, %112 : vector<8x128xf32>
    %cst_57 = arith.constant 3.300000e-01 : f32
    %114 = vector.broadcast %cst_57 : f32 to vector<8x128xf32>
    %115 = arith.mulf %114, %111 : vector<8x128xf32>
    %116 = arith.select %113, %111, %115 : vector<8x128xi1>, vector<8x128xf32>
    %117 = arith.truncf %116 : vector<8x128xf32> to vector<8x128xbf16>
    %c1_58 = arith.constant 1 : index
    %c0_59 = arith.constant 0 : index
    %118 = vector.load %arg5[%c1_58, %c0_59] : memref<10x128xbf16, #tpu.memory_space<vmem>>, vector<8x128xbf16>
    tpu.vector_store %arg5[%c1_58, %c0_59], %117 {strides = array<i32>} : memref<10x128xbf16, #tpu.memory_space<vmem>>, vector<8x128xbf16>,
    %c0_60 = arith.constant 0 : index
    %c0_61 = arith.constant 0 : index
    %119 = vector.load %arg5[%c0_60, %c0_61] : memref<10x128xbf16, #tpu.memory_space<vmem>>, vector<8x128xbf16>
    %c-1_i32_62 = arith.constant -1 : i32
    %120 = vector.broadcast %c-1_i32_62 : i32 to vector<8x128xi32>
    %121 = arith.addi %6, %120 : vector<8x128xi32>
    %c0_i32_63 = arith.constant 0 : i32
    %122 = vector.broadcast %c0_i32_63 : i32 to vector<8x128xi32>
    %123 = arith.cmpi sge, %121, %122 : vector<8x128xi32>
    %c-1_i32_64 = arith.constant -1 : i32
    %124 = vector.broadcast %c-1_i32_64 : i32 to vector<8x128xi32>
    %125 = arith.addi %6, %124 : vector<8x128xi32>
    %c4_i32_65 = arith.constant 4 : i32
    %126 = vector.broadcast %c4_i32_65 : i32 to vector<8x128xi32>
    %127 = arith.cmpi slt, %125, %126 : vector<8x128xi32>
    %128 = arith.andi %123, %127 : vector<8x128xi1>
    %cst_66 = arith.constant 0.000000e+00 : bf16
    %129 = vector.broadcast %cst_66 : bf16 to vector<8x128xbf16>
    %130 = arith.select %128, %119, %129 : vector<8x128xi1>, vector<8x128xbf16>
    %c1_67 = arith.constant 1 : index
    %c0_68 = arith.constant 0 : index
    %131 = vector.load %arg5[%c1_67, %c0_68] : memref<10x128xbf16, #tpu.memory_space<vmem>>, vector<8x128xbf16>
    %c2_69 = arith.constant 2 : index
    %c0_70 = arith.constant 0 : index
    %132 = vector.load %arg5[%c2_69, %c0_70] : memref<10x128xbf16, #tpu.memory_space<vmem>>, vector<8x128xbf16>
    %c1_i32_71 = arith.constant 1 : i32
    %133 = vector.broadcast %c1_i32_71 : i32 to vector<8x128xi32>
    %134 = arith.addi %6, %133 : vector<8x128xi32>
    %c0_i32_72 = arith.constant 0 : i32
    %135 = vector.broadcast %c0_i32_72 : i32 to vector<8x128xi32>
    %136 = arith.cmpi sge, %134, %135 : vector<8x128xi32>
    %c1_i32_73 = arith.constant 1 : i32
    %137 = vector.broadcast %c1_i32_73 : i32 to vector<8x128xi32>
    %138 = arith.addi %6, %137 : vector<8x128xi32>
    %c4_i32_74 = arith.constant 4 : i32
    %139 = vector.broadcast %c4_i32_74 : i32 to vector<8x128xi32>
    %140 = arith.cmpi slt, %138, %139 : vector<8x128xi32>
    %141 = arith.andi %136, %140 : vector<8x128xi1>
    %cst_75 = arith.constant 0.000000e+00 : bf16
    %142 = vector.broadcast %cst_75 : bf16 to vector<8x128xbf16>
    %143 = arith.select %141, %132, %142 : vector<8x128xi1>, vector<8x128xbf16>
    %144 = tpu.concatenate %130, %131, %143 in 1 : vector<8x128xbf16>, vector<8x128xbf16>, vector<8x128xbf16> -> vector<8x384xbf16>
    %c2_76 = arith.constant 2 : index
    %c0_77 = arith.constant 0 : index
    %c0_78 = arith.constant 0 : index
    %145 = vector.load %arg2[%c2_76, %c0_77, %c0_78] : memref<4x384x128xbf16, #tpu.memory_space<vmem>>, vector<1x384x128xbf16>
    %146 = vector.shape_cast %145 : vector<1x384x128xbf16> to vector<384x128xbf16>
    %cst_79 = arith.constant dense<0.000000e+00> : vector<8x128xf32>
    %147 = tpu.matmul %144, %146, %cst_79 {dimension_numbers = #tpu.dot_dimension_numbers<[1], [0], [0], [1], [0, 0, 1, 1], [], []>} : vector<8x384xbf16>, vector<384x128xbf16>, vector<8x128xf32> -> vector<8x128xf32>
    %148 = vector.extract_strided_slice %105 {offsets = [0, 0], sizes = [1, 128], strides = [1, 1]} : vector<3x128xf32> to vector<1x128xf32>
    %149 = vector.broadcast %148 : vector<1x128xf32> to vector<8x128xf32>
    %150 = arith.addf %147, %149 : vector<8x128xf32>
    %c3 = arith.constant 3 : index
    %c0_80 = arith.constant 0 : index
    %c0_81 = arith.constant 0 : index
    %151 = vector.load %arg3[%c3, %c0_80, %c0_81] : memref<4x3x128xf32, #tpu.memory_space<vmem>>, vector<1x3x128xf32>
    %152 = vector.shape_cast %151 : vector<1x3x128xf32> to vector<3x128xf32>
    %153 = vector.extract_strided_slice %152 {offsets = [1, 0], sizes = [1, 128], strides = [1, 1]} : vector<3x128xf32> to vector<1x128xf32>
    %154 = vector.broadcast %153 : vector<1x128xf32> to vector<8x128xf32>
    %155 = arith.mulf %150, %154 : vector<8x128xf32>
    %156 = vector.extract_strided_slice %152 {offsets = [2, 0], sizes = [1, 128], strides = [1, 1]} : vector<3x128xf32> to vector<1x128xf32>
    %157 = vector.broadcast %156 : vector<1x128xf32> to vector<8x128xf32>
    %158 = arith.addf %155, %157 : vector<8x128xf32>
    %cst_82 = arith.constant 0.000000e+00 : f32
    %159 = vector.broadcast %cst_82 : f32 to vector<8x128xf32>
    %160 = arith.cmpf ogt, %158, %159 : vector<8x128xf32>
    %cst_83 = arith.constant 3.300000e-01 : f32
    %161 = vector.broadcast %cst_83 : f32 to vector<8x128xf32>
    %162 = arith.mulf %161, %158 : vector<8x128xf32>
    %163 = arith.select %160, %158, %162 : vector<8x128xi1>, vector<8x128xf32>
    %164 = arith.truncf %163 : vector<8x128xf32> to vector<8x128xbf16>
    %c1_84 = arith.constant 1 : index
    %c0_85 = arith.constant 0 : index
    %165 = vector.load %arg5[%c1_84, %c0_85] : memref<10x128xbf16, #tpu.memory_space<vmem>>, vector<8x128xbf16>
    tpu.vector_store %arg5[%c1_84, %c0_85], %164 {strides = array<i32>} : memref<10x128xbf16, #tpu.memory_space<vmem>>, vector<8x128xbf16>,
    %c0_86 = arith.constant 0 : index
    %c0_87 = arith.constant 0 : index
    %166 = vector.load %arg5[%c0_86, %c0_87] : memref<10x128xbf16, #tpu.memory_space<vmem>>, vector<8x128xbf16>
    %c-1_i32_88 = arith.constant -1 : i32
    %167 = vector.broadcast %c-1_i32_88 : i32 to vector<8x128xi32>
    %168 = arith.addi %6, %167 : vector<8x128xi32>
    %c0_i32_89 = arith.constant 0 : i32
    %169 = vector.broadcast %c0_i32_89 : i32 to vector<8x128xi32>
    %170 = arith.cmpi sge, %168, %169 : vector<8x128xi32>
    %c-1_i32_90 = arith.constant -1 : i32
    %171 = vector.broadcast %c-1_i32_90 : i32 to vector<8x128xi32>
    %172 = arith.addi %6, %171 : vector<8x128xi32>
    %c4_i32_91 = arith.constant 4 : i32
    %173 = vector.broadcast %c4_i32_91 : i32 to vector<8x128xi32>
    %174 = arith.cmpi slt, %172, %173 : vector<8x128xi32>
    %175 = arith.andi %170, %174 : vector<8x128xi1>
    %cst_92 = arith.constant 0.000000e+00 : bf16
    %176 = vector.broadcast %cst_92 : bf16 to vector<8x128xbf16>
    %177 = arith.select %175, %166, %176 : vector<8x128xi1>, vector<8x128xbf16>
    %c1_93 = arith.constant 1 : index
    %c0_94 = arith.constant 0 : index
    %178 = vector.load %arg5[%c1_93, %c0_94] : memref<10x128xbf16, #tpu.memory_space<vmem>>, vector<8x128xbf16>
    %c2_95 = arith.constant 2 : index
    %c0_96 = arith.constant 0 : index
    %179 = vector.load %arg5[%c2_95, %c0_96] : memref<10x128xbf16, #tpu.memory_space<vmem>>, vector<8x128xbf16>
    %c1_i32_97 = arith.constant 1 : i32
    %180 = vector.broadcast %c1_i32_97 : i32 to vector<8x128xi32>
    %181 = arith.addi %6, %180 : vector<8x128xi32>
    %c0_i32_98 = arith.constant 0 : i32
    %182 = vector.broadcast %c0_i32_98 : i32 to vector<8x128xi32>
    %183 = arith.cmpi sge, %181, %182 : vector<8x128xi32>
    %c1_i32_99 = arith.constant 1 : i32
    %184 = vector.broadcast %c1_i32_99 : i32 to vector<8x128xi32>
    %185 = arith.addi %6, %184 : vector<8x128xi32>
    %c4_i32_100 = arith.constant 4 : i32
    %186 = vector.broadcast %c4_i32_100 : i32 to vector<8x128xi32>
    %187 = arith.cmpi slt, %185, %186 : vector<8x128xi32>
    %188 = arith.andi %183, %187 : vector<8x128xi1>
    %cst_101 = arith.constant 0.000000e+00 : bf16
    %189 = vector.broadcast %cst_101 : bf16 to vector<8x128xbf16>
    %190 = arith.select %188, %179, %189 : vector<8x128xi1>, vector<8x128xbf16>
    %191 = tpu.concatenate %177, %178, %190 in 1 : vector<8x128xbf16>, vector<8x128xbf16>, vector<8x128xbf16> -> vector<8x384xbf16>
    %c3_102 = arith.constant 3 : index
    %c0_103 = arith.constant 0 : index
    %c0_104 = arith.constant 0 : index
    %192 = vector.load %arg2[%c3_102, %c0_103, %c0_104] : memref<4x384x128xbf16, #tpu.memory_space<vmem>>, vector<1x384x128xbf16>
    %193 = vector.shape_cast %192 : vector<1x384x128xbf16> to vector<384x128xbf16>
    %cst_105 = arith.constant dense<0.000000e+00> : vector<8x128xf32>
    %194 = tpu.matmul %191, %193, %cst_105 {dimension_numbers = #tpu.dot_dimension_numbers<[1], [0], [0], [1], [0, 0, 1, 1], [], []>} : vector<8x384xbf16>, vector<384x128xbf16>, vector<8x128xf32> -> vector<8x128xf32>
    %195 = vector.extract_strided_slice %152 {offsets = [0, 0], sizes = [1, 128], strides = [1, 1]} : vector<3x128xf32> to vector<1x128xf32>
    %196 = vector.broadcast %195 : vector<1x128xf32> to vector<8x128xf32>
    %197 = arith.addf %194, %196 : vector<8x128xf32>
    %198 = arith.addf %103, %197 : vector<8x128xf32>
    %199 = arith.truncf %198 : vector<8x128xf32> to vector<8x128xbf16>
    %c0_106 = arith.constant 0 : index
    %c0_107 = arith.constant 0 : index
    %200 = vector.load %arg4[%c0_106, %c0_107] : memref<8x128xbf16, #tpu.memory_space<vmem>>, vector<8x128xbf16>
    tpu.vector_store %arg4[%c0_106, %c0_107], %199 {strides = array<i32>} : memref<8x128xbf16, #tpu.memory_space<vmem>>, vector<8x128xbf16>,
    return
  }
  func.func @transform_0(%arg0: i32) -> (i32, i32) {
    %c0_i32 = arith.constant 0 : i32
    %c0_i32_0 = arith.constant 0 : i32
    %c0_i32_1 = arith.constant 0 : i32
    return %c0_i32, %c0_i32_0 : i32, i32
  }
  func.func @transform_1(%arg0: i32) -> (i32, i32, i32) {
    %c0_i32 = arith.constant 0 : i32
    %c0_i32_0 = arith.constant 0 : i32
    %c0_i32_1 = arith.constant 0 : i32
    %c0_i32_2 = arith.constant 0 : i32
    return %c0_i32, %c0_i32_0, %c0_i32_1 : i32, i32, i32
  }
  func.func @transform_2(%arg0: i32) -> (i32, i32, i32) {
    %c0_i32 = arith.constant 0 : i32
    %c0_i32_0 = arith.constant 0 : i32
    %c0_i32_1 = arith.constant 0 : i32
    %c0_i32_2 = arith.constant 0 : i32
    return %c0_i32, %c0_i32_0, %c0_i32_1 : i32, i32, i32
  }
  func.func @transform_3(%arg0: i32) -> (i32, i32) {
    %c0_i32 = arith.constant 0 : i32
    %c0_i32_0 = arith.constant 0 : i32
    %c0_i32_1 = arith.constant 0 : i32
    return %c0_i32, %c0_i32_0 : i32, i32
  }
}

module attributes {stable_mosaic.version = 11 : i64} {
  func.func @_up_lateral_kernel(%arg0: i32, %arg1: memref<8x128xbf16, #tpu.memory_space<vmem>>, %arg2: memref<8x256xbf16, #tpu.memory_space<vmem>>, %arg3: memref<128x256xbf16, #tpu.memory_space<vmem>>, %arg4: memref<256x256xbf16, #tpu.memory_space<vmem>>, %arg5: memref<2x128xf32, #tpu.memory_space<vmem>>, %arg6: memref<1x256xf32, #tpu.memory_space<vmem>>, %arg7: memref<8x256xbf16, #tpu.memory_space<vmem>>) attributes {dimension_semantics = [#tpu.dimension_semantics<arbitrary>], iteration_bounds = array<i64: 1>, scalar_prefetch = 0 : i64, scratch_operands = 0 : i64, tpu.core_type = #tpu.core_type<tc>, window_params = [{pipeline_mode = #tpu.pipeline_mode<synchronous>, transform_indices = @transform_0, window_bounds = array<i64: 8, 128>}, {pipeline_mode = #tpu.pipeline_mode<synchronous>, transform_indices = @transform_1, window_bounds = array<i64: 8, 256>}, {pipeline_mode = #tpu.pipeline_mode<synchronous>, transform_indices = @transform_2, window_bounds = array<i64: 128, 256>}, {pipeline_mode = #tpu.pipeline_mode<synchronous>, transform_indices = @transform_3, window_bounds = array<i64: 256, 256>}, {pipeline_mode = #tpu.pipeline_mode<synchronous>, transform_indices = @transform_4, window_bounds = array<i64: 2, 128>}, {pipeline_mode = #tpu.pipeline_mode<synchronous>, transform_indices = @transform_5, window_bounds = array<i64: 1, 256>}, {pipeline_mode = #tpu.pipeline_mode<synchronous>, transform_indices = @transform_6, window_bounds = array<i64: 8, 256>}]} {
    %c0 = arith.constant 0 : index
    %c0_0 = arith.constant 0 : index
    %0 = vector.load %arg1[%c0, %c0_0] : memref<8x128xbf16, #tpu.memory_space<vmem>>, vector<8x128xbf16>
    %1 = arith.extf %0 : vector<8x128xbf16> to vector<8x128xf32>
    %c0_1 = arith.constant 0 : index
    %c0_2 = arith.constant 0 : index
    %2 = vector.load %arg5[%c0_1, %c0_2] : memref<2x128xf32, #tpu.memory_space<vmem>>, vector<2x128xf32>
    %3 = vector.extract_strided_slice %2 {offsets = [0, 0], sizes = [1, 128], strides = [1, 1]} : vector<2x128xf32> to vector<1x128xf32>
    %4 = vector.broadcast %3 : vector<1x128xf32> to vector<8x128xf32>
    %5 = arith.mulf %1, %4 : vector<8x128xf32>
    %6 = vector.extract_strided_slice %2 {offsets = [1, 0], sizes = [1, 128], strides = [1, 1]} : vector<2x128xf32> to vector<1x128xf32>
    %7 = vector.broadcast %6 : vector<1x128xf32> to vector<8x128xf32>
    %8 = arith.addf %5, %7 : vector<8x128xf32>
    %cst = arith.constant 0.000000e+00 : f32
    %9 = vector.broadcast %cst : f32 to vector<8x128xf32>
    %10 = arith.cmpf ogt, %8, %9 : vector<8x128xf32>
    %cst_3 = arith.constant 3.300000e-01 : f32
    %11 = vector.broadcast %cst_3 : f32 to vector<8x128xf32>
    %12 = arith.mulf %11, %8 : vector<8x128xf32>
    %13 = arith.select %10, %8, %12 : vector<8x128xi1>, vector<8x128xf32>
    %14 = arith.truncf %13 : vector<8x128xf32> to vector<8x128xbf16>
    %c0_4 = arith.constant 0 : index
    %c0_5 = arith.constant 0 : index
    %15 = vector.load %arg3[%c0_4, %c0_5] : memref<128x256xbf16, #tpu.memory_space<vmem>>, vector<128x256xbf16>
    %cst_6 = arith.constant dense<0.000000e+00> : vector<8x256xf32>
    %16 = tpu.matmul %14, %15, %cst_6 {dimension_numbers = #tpu.dot_dimension_numbers<[1], [0], [0], [1], [0, 0, 1, 1], [], []>} : vector<8x128xbf16>, vector<128x256xbf16>, vector<8x256xf32> -> vector<8x256xf32>
    %c0_7 = arith.constant 0 : index
    %c0_8 = arith.constant 0 : index
    %17 = vector.load %arg2[%c0_7, %c0_8] : memref<8x256xbf16, #tpu.memory_space<vmem>>, vector<8x256xbf16>
    %c0_9 = arith.constant 0 : index
    %c0_10 = arith.constant 0 : index
    %18 = vector.load %arg4[%c0_9, %c0_10] : memref<256x256xbf16, #tpu.memory_space<vmem>>, vector<256x256xbf16>
    %cst_11 = arith.constant dense<0.000000e+00> : vector<8x256xf32>
    %19 = tpu.matmul %17, %18, %cst_11 {dimension_numbers = #tpu.dot_dimension_numbers<[1], [0], [0], [1], [0, 0, 1, 1], [], []>} : vector<8x256xbf16>, vector<256x256xbf16>, vector<8x256xf32> -> vector<8x256xf32>
    %20 = arith.addf %16, %19 : vector<8x256xf32>
    %c0_12 = arith.constant 0 : index
    %c0_13 = arith.constant 0 : index
    %21 = vector.load %arg6[%c0_12, %c0_13] : memref<1x256xf32, #tpu.memory_space<vmem>>, vector<1x256xf32>
    %22 = vector.broadcast %21 : vector<1x256xf32> to vector<8x256xf32>
    %23 = arith.addf %20, %22 : vector<8x256xf32>
    %24 = arith.truncf %23 : vector<8x256xf32> to vector<8x256xbf16>
    %c0_14 = arith.constant 0 : index
    %c0_15 = arith.constant 0 : index
    %25 = vector.load %arg7[%c0_14, %c0_15] : memref<8x256xbf16, #tpu.memory_space<vmem>>, vector<8x256xbf16>
    tpu.vector_store %arg7[%c0_14, %c0_15], %24 {strides = array<i32>} : memref<8x256xbf16, #tpu.memory_space<vmem>>, vector<8x256xbf16>,
    return
  }
  func.func @transform_0(%arg0: i32) -> (i32, i32) {
    %c0_i32 = arith.constant 0 : i32
    %c0_i32_0 = arith.constant 0 : i32
    %c0_i32_1 = arith.constant 0 : i32
    return %c0_i32, %c0_i32_0 : i32, i32
  }
  func.func @transform_1(%arg0: i32) -> (i32, i32) {
    %c0_i32 = arith.constant 0 : i32
    %c0_i32_0 = arith.constant 0 : i32
    %c0_i32_1 = arith.constant 0 : i32
    return %c0_i32, %c0_i32_0 : i32, i32
  }
  func.func @transform_2(%arg0: i32) -> (i32, i32) {
    %c0_i32 = arith.constant 0 : i32
    %c0_i32_0 = arith.constant 0 : i32
    %c0_i32_1 = arith.constant 0 : i32
    return %c0_i32, %c0_i32_0 : i32, i32
  }
  func.func @transform_3(%arg0: i32) -> (i32, i32) {
    %c0_i32 = arith.constant 0 : i32
    %c0_i32_0 = arith.constant 0 : i32
    %c0_i32_1 = arith.constant 0 : i32
    return %c0_i32, %c0_i32_0 : i32, i32
  }
  func.func @transform_4(%arg0: i32) -> (i32, i32) {
    %c0_i32 = arith.constant 0 : i32
    %c0_i32_0 = arith.constant 0 : i32
    %c0_i32_1 = arith.constant 0 : i32
    return %c0_i32, %c0_i32_0 : i32, i32
  }
  func.func @transform_5(%arg0: i32) -> (i32, i32) {
    %c0_i32 = arith.constant 0 : i32
    %c0_i32_0 = arith.constant 0 : i32
    %c0_i32_1 = arith.constant 0 : i32
    return %c0_i32, %c0_i32_0 : i32, i32
  }
  func.func @transform_6(%arg0: i32) -> (i32, i32) {
    %c0_i32 = arith.constant 0 : i32
    %c0_i32_0 = arith.constant 0 : i32
    %c0_i32_1 = arith.constant 0 : i32
    return %c0_i32, %c0_i32_0 : i32, i32
  }
}

module attributes {stable_mosaic.version = 11 : i64} {
  func.func @_up_lateral_kernel(%arg0: i32, %arg1: memref<16x128xbf16, #tpu.memory_space<vmem>>, %arg2: memref<16x256xbf16, #tpu.memory_space<vmem>>, %arg3: memref<128x256xbf16, #tpu.memory_space<vmem>>, %arg4: memref<256x256xbf16, #tpu.memory_space<vmem>>, %arg5: memref<2x128xf32, #tpu.memory_space<vmem>>, %arg6: memref<1x256xf32, #tpu.memory_space<vmem>>, %arg7: memref<16x256xbf16, #tpu.memory_space<vmem>>) attributes {dimension_semantics = [#tpu.dimension_semantics<arbitrary>], iteration_bounds = array<i64: 1>, scalar_prefetch = 0 : i64, scratch_operands = 0 : i64, tpu.core_type = #tpu.core_type<tc>, window_params = [{pipeline_mode = #tpu.pipeline_mode<synchronous>, transform_indices = @transform_0, window_bounds = array<i64: 16, 128>}, {pipeline_mode = #tpu.pipeline_mode<synchronous>, transform_indices = @transform_1, window_bounds = array<i64: 16, 256>}, {pipeline_mode = #tpu.pipeline_mode<synchronous>, transform_indices = @transform_2, window_bounds = array<i64: 128, 256>}, {pipeline_mode = #tpu.pipeline_mode<synchronous>, transform_indices = @transform_3, window_bounds = array<i64: 256, 256>}, {pipeline_mode = #tpu.pipeline_mode<synchronous>, transform_indices = @transform_4, window_bounds = array<i64: 2, 128>}, {pipeline_mode = #tpu.pipeline_mode<synchronous>, transform_indices = @transform_5, window_bounds = array<i64: 1, 256>}, {pipeline_mode = #tpu.pipeline_mode<synchronous>, transform_indices = @transform_6, window_bounds = array<i64: 16, 256>}]} {
    %c0 = arith.constant 0 : index
    %c0_0 = arith.constant 0 : index
    %0 = vector.load %arg1[%c0, %c0_0] : memref<16x128xbf16, #tpu.memory_space<vmem>>, vector<16x128xbf16>
    %1 = arith.extf %0 : vector<16x128xbf16> to vector<16x128xf32>
    %c0_1 = arith.constant 0 : index
    %c0_2 = arith.constant 0 : index
    %2 = vector.load %arg5[%c0_1, %c0_2] : memref<2x128xf32, #tpu.memory_space<vmem>>, vector<2x128xf32>
    %3 = vector.extract_strided_slice %2 {offsets = [0, 0], sizes = [1, 128], strides = [1, 1]} : vector<2x128xf32> to vector<1x128xf32>
    %4 = vector.broadcast %3 : vector<1x128xf32> to vector<16x128xf32>
    %5 = arith.mulf %1, %4 : vector<16x128xf32>
    %6 = vector.extract_strided_slice %2 {offsets = [1, 0], sizes = [1, 128], strides = [1, 1]} : vector<2x128xf32> to vector<1x128xf32>
    %7 = vector.broadcast %6 : vector<1x128xf32> to vector<16x128xf32>
    %8 = arith.addf %5, %7 : vector<16x128xf32>
    %cst = arith.constant 0.000000e+00 : f32
    %9 = vector.broadcast %cst : f32 to vector<16x128xf32>
    %10 = arith.cmpf ogt, %8, %9 : vector<16x128xf32>
    %cst_3 = arith.constant 3.300000e-01 : f32
    %11 = vector.broadcast %cst_3 : f32 to vector<16x128xf32>
    %12 = arith.mulf %11, %8 : vector<16x128xf32>
    %13 = arith.select %10, %8, %12 : vector<16x128xi1>, vector<16x128xf32>
    %14 = arith.truncf %13 : vector<16x128xf32> to vector<16x128xbf16>
    %c0_4 = arith.constant 0 : index
    %c0_5 = arith.constant 0 : index
    %15 = vector.load %arg3[%c0_4, %c0_5] : memref<128x256xbf16, #tpu.memory_space<vmem>>, vector<128x256xbf16>
    %cst_6 = arith.constant dense<0.000000e+00> : vector<16x256xf32>
    %16 = tpu.matmul %14, %15, %cst_6 {dimension_numbers = #tpu.dot_dimension_numbers<[1], [0], [0], [1], [0, 0, 1, 1], [], []>} : vector<16x128xbf16>, vector<128x256xbf16>, vector<16x256xf32> -> vector<16x256xf32>
    %c0_7 = arith.constant 0 : index
    %c0_8 = arith.constant 0 : index
    %17 = vector.load %arg2[%c0_7, %c0_8] : memref<16x256xbf16, #tpu.memory_space<vmem>>, vector<16x256xbf16>
    %c0_9 = arith.constant 0 : index
    %c0_10 = arith.constant 0 : index
    %18 = vector.load %arg4[%c0_9, %c0_10] : memref<256x256xbf16, #tpu.memory_space<vmem>>, vector<256x256xbf16>
    %cst_11 = arith.constant dense<0.000000e+00> : vector<16x256xf32>
    %19 = tpu.matmul %17, %18, %cst_11 {dimension_numbers = #tpu.dot_dimension_numbers<[1], [0], [0], [1], [0, 0, 1, 1], [], []>} : vector<16x256xbf16>, vector<256x256xbf16>, vector<16x256xf32> -> vector<16x256xf32>
    %20 = arith.addf %16, %19 : vector<16x256xf32>
    %c0_12 = arith.constant 0 : index
    %c0_13 = arith.constant 0 : index
    %21 = vector.load %arg6[%c0_12, %c0_13] : memref<1x256xf32, #tpu.memory_space<vmem>>, vector<1x256xf32>
    %22 = vector.broadcast %21 : vector<1x256xf32> to vector<16x256xf32>
    %23 = arith.addf %20, %22 : vector<16x256xf32>
    %24 = arith.truncf %23 : vector<16x256xf32> to vector<16x256xbf16>
    %c0_14 = arith.constant 0 : index
    %c0_15 = arith.constant 0 : index
    %25 = vector.load %arg7[%c0_14, %c0_15] : memref<16x256xbf16, #tpu.memory_space<vmem>>, vector<16x256xbf16>
    tpu.vector_store %arg7[%c0_14, %c0_15], %24 {strides = array<i32>} : memref<16x256xbf16, #tpu.memory_space<vmem>>, vector<16x256xbf16>,
    return
  }
  func.func @transform_0(%arg0: i32) -> (i32, i32) {
    %c0_i32 = arith.constant 0 : i32
    %c0_i32_0 = arith.constant 0 : i32
    %c0_i32_1 = arith.constant 0 : i32
    return %c0_i32, %c0_i32_0 : i32, i32
  }
  func.func @transform_1(%arg0: i32) -> (i32, i32) {
    %c0_i32 = arith.constant 0 : i32
    %c0_i32_0 = arith.constant 0 : i32
    %c0_i32_1 = arith.constant 0 : i32
    return %c0_i32, %c0_i32_0 : i32, i32
  }
  func.func @transform_2(%arg0: i32) -> (i32, i32) {
    %c0_i32 = arith.constant 0 : i32
    %c0_i32_0 = arith.constant 0 : i32
    %c0_i32_1 = arith.constant 0 : i32
    return %c0_i32, %c0_i32_0 : i32, i32
  }
  func.func @transform_3(%arg0: i32) -> (i32, i32) {
    %c0_i32 = arith.constant 0 : i32
    %c0_i32_0 = arith.constant 0 : i32
    %c0_i32_1 = arith.constant 0 : i32
    return %c0_i32, %c0_i32_0 : i32, i32
  }
  func.func @transform_4(%arg0: i32) -> (i32, i32) {
    %c0_i32 = arith.constant 0 : i32
    %c0_i32_0 = arith.constant 0 : i32
    %c0_i32_1 = arith.constant 0 : i32
    return %c0_i32, %c0_i32_0 : i32, i32
  }
  func.func @transform_5(%arg0: i32) -> (i32, i32) {
    %c0_i32 = arith.constant 0 : i32
    %c0_i32_0 = arith.constant 0 : i32
    %c0_i32_1 = arith.constant 0 : i32
    return %c0_i32, %c0_i32_0 : i32, i32
  }
  func.func @transform_6(%arg0: i32) -> (i32, i32) {
    %c0_i32 = arith.constant 0 : i32
    %c0_i32_0 = arith.constant 0 : i32
    %c0_i32_1 = arith.constant 0 : i32
    return %c0_i32, %c0_i32_0 : i32, i32
  }
}

</mosaic_0001>

<llo_original>
// kernel: _lambda_.12
$region0: #{_lambda_.12}
  #allocation0 [shape = 'u32[]', space=smem, size = 0x4, offset = 0x4, fixed_abs, tag = 'smem constant byte address 0x4 - core index']
  #allocation1 [shape = 'u32[72,128]{1,0:T(1,128)}', space=vmem, size = 0x9000, scoped, tag = 'internal scratch']
  %s0 = inlined_call_operand.vmem [shape: bf16[16,256], index: 0, kind: input, shape index: {}]
  %s1 = inlined_call_operand.vmem [shape: bf16[256,128], index: 1, kind: input, shape index: {}]
  %s2 = inlined_call_operand.vmem [shape: f32[2,256], index: 2, kind: input, shape index: {}]
  %s3 = inlined_call_operand.vmem [shape: f32[1,128], index: 3, kind: input, shape index: {}]
  %s4 = inlined_call_operand.vmem [shape: bf16[16,128], index: 4, kind: output, shape index: {}]
  %s5 = sld [smem:[#allocation0]]
  $region26: #{_lambda_.12} parent=0
    _
  %s7 = ssub.s32 1, %s5
  %s8 = scalar_select 0, %s7, %s5
  // Predicated region
  $region2: #{_lambda_.12} parent=0 // pred_check
    _
  $region3: #{_lambda_.12} parent=0 // pred_check_branch
    %10 = sbr.rel (0) target = $region5
  $region4: #{_lambda_.12} parent=0 // pred_region
    _
  $region5: #{_lambda_.12} parent=0 // pred_fallthru
    _
  // Predicated region
  $region6: #{_lambda_.12} parent=0 // pred_check
    _
  $region7: #{_lambda_.12} parent=0 // pred_check_branch
    %12 = sbr.rel (0) target = $region9
  $region8: #{_lambda_.12} parent=0 // pred_region
    _
  $region9: #{_lambda_.12} parent=0 // pred_fallthru
    _
  // Predicated region
  $region10: #{_lambda_.12} parent=0 // pred_check
    _
  $region11: #{_lambda_.12} parent=0 // pred_check_branch
    %14 = sbr.rel (0) target = $region13
  $region12: #{_lambda_.12} parent=0 // pred_region
    _
  $region13: #{_lambda_.12} parent=0 // pred_fallthru
    _
  // Predicated region
  $region14: #{_lambda_.12} parent=0 // pred_check
    _
  $region15: #{_lambda_.12} parent=0 // pred_check_branch
    %16 = sbr.rel (0) target = $region17
  $region16: #{_lambda_.12} parent=0 // pred_region
    _
  $region17: #{_lambda_.12} parent=0 // pred_fallthru
    _
  %v17 = vld [vmem:[%s0] sm:$0xff]
  %v18 = vld [vmem:[%s0 + $0x8] sm:$0xff]
  %v19 = vunpack.c.l.bf16 %v17
  %v20 = vunpack.c.h.bf16 %v17
  %v21 = vunpack.c.l.bf16 %v18
  %v22 = vunpack.c.h.bf16 %v18
  %v23 = vld [vmem:[%s2] sm:$0xf]
  %v25 = vperm.slane %v23, 0
  %v26 = vperm.slane %v23, 2
  %v29 = vperm.slane %v25, 0
  %v30 = vperm.slane %v26, 0
  %v31 = vmul.f32 %v19, %v29
  %v32 = vmul.f32 %v20, %v30
  %v33 = vmul.f32 %v21, %v29
  %v34 = vmul.f32 %v22, %v30
  %v35 = vperm.slane %v23, 1
  %v36 = vperm.slane %v23, 3
  %v39 = vperm.slane %v35, 1
  %v40 = vperm.slane %v36, 1
  %v41 = vadd.f32 %v31, %v39
  %v42 = vadd.f32 %v32, %v40
  %v43 = vadd.f32 %v33, %v39
  %v44 = vadd.f32 %v34, %v40
  %vm45 = vcmp.gt.f32.partialorder %v41, 0.0
  %vm46 = vcmp.gt.f32.partialorder %v42, 0.0
  %vm47 = vcmp.gt.f32.partialorder %v43, 0.0
  %vm48 = vcmp.gt.f32.partialorder %v44, 0.0
  %v49 = vmul.f32 %v41, 0.33
  %v50 = vmul.f32 %v42, 0.33
  %v51 = vmul.f32 %v43, 0.33
  %v52 = vmul.f32 %v44, 0.33
  %v53 = vsel %vm45, %v41, %v49
  %v54 = vsel %vm46, %v42, %v50
  %v55 = vsel %vm47, %v43, %v51
  %v56 = vsel %vm48, %v44, %v52
  %v57 = vpack.c.bf16 %v55, %v53
  %v58 = vpack.c.bf16 %v56, %v54
  %v59 = vld [vmem:[%s1] sm:$0xf]
  %v60 = vld [vmem:[%s1 + $0x4] sm:$0xf]
  %v61 = vld [vmem:[%s1 + $0x8] sm:$0xf]
  %v62 = vld [vmem:[%s1 + $0xc] sm:$0xf]
  %v63 = vld [vmem:[%s1 + $0x10] sm:$0xf]
  %v64 = vld [vmem:[%s1 + $0x14] sm:$0xf]
  %v65 = vld [vmem:[%s1 + $0x18] sm:$0xf]
  %v66 = vld [vmem:[%s1 + $0x1c] sm:$0xf]
  %v67 = vld [vmem:[%s1 + $0x20] sm:$0xf]
  %v68 = vld [vmem:[%s1 + $0x24] sm:$0xf]
  %v69 = vld [vmem:[%s1 + $0x28] sm:$0xf]
  %v70 = vld [vmem:[%s1 + $0x2c] sm:$0xf]
  %v71 = vld [vmem:[%s1 + $0x30] sm:$0xf]
  %v72 = vld [vmem:[%s1 + $0x34] sm:$0xf]
  %v73 = vld [vmem:[%s1 + $0x38] sm:$0xf]
  %v74 = vld [vmem:[%s1 + $0x3c] sm:$0xf]
  %v75 = vld [vmem:[%s1 + $0x40] sm:$0xf]
  %v76 = vld [vmem:[%s1 + $0x44] sm:$0xf]
  %v77 = vld [vmem:[%s1 + $0x48] sm:$0xf]
  %v78 = vld [vmem:[%s1 + $0x4c] sm:$0xf]
  %v79 = vld [vmem:[%s1 + $0x50] sm:$0xf]
  %v80 = vld [vmem:[%s1 + $0x54] sm:$0xf]
  %v81 = vld [vmem:[%s1 + $0x58] sm:$0xf]
  %v82 = vld [vmem:[%s1 + $0x5c] sm:$0xf]
  %v83 = vld [vmem:[%s1 + $0x60] sm:$0xf]
  %v84 = vld [vmem:[%s1 + $0x64] sm:$0xf]
  %v85 = vld [vmem:[%s1 + $0x68] sm:$0xf]
  %v86 = vld [vmem:[%s1 + $0x6c] sm:$0xf]
  %v87 = vld [vmem:[%s1 + $0x70] sm:$0xf]
  %v88 = vld [vmem:[%s1 + $0x74] sm:$0xf]
  %v89 = vld [vmem:[%s1 + $0x78] sm:$0xf]
  %v90 = vld [vmem:[%s1 + $0x7c] sm:$0xf]
  %v91 = vld [vmem:[%s3] sm:$0x1]
  %v93 = vperm.slane %v91, 0
  %v127 = vunpack.c.l.b16 %v59
  %v128 = vunpack.c.l.b16 %v60
  %v129 = vunpack.c.l.b16 %v61
  %v130 = vunpack.c.l.b16 %v62
  %v131 = vunpack.c.l.b16 %v63
  %v132 = vunpack.c.l.b16 %v64
  %v133 = vunpack.c.l.b16 %v65
  %v134 = vunpack.c.l.b16 %v66
  %v135 = vunpack.c.l.b16 %v67
  %v136 = vunpack.c.l.b16 %v68
  %v137 = vunpack.c.l.b16 %v69
  %v138 = vunpack.c.l.b16 %v70
  %v139 = vunpack.c.l.b16 %v71
  %v140 = vunpack.c.l.b16 %v72
  %v141 = vunpack.c.l.b16 %v73
  %v142 = vunpack.c.l.b16 %v74
  %v143 = vunpack.c.l.b16 %v75
  %v144 = vunpack.c.l.b16 %v76
  %v145 = vunpack.c.l.b16 %v77
  %v146 = vunpack.c.l.b16 %v78
  %v147 = vunpack.c.l.b16 %v79
  %v148 = vunpack.c.l.b16 %v80
  %v149 = vunpack.c.l.b16 %v81
  %v150 = vunpack.c.l.b16 %v82
  %v151 = vunpack.c.l.b16 %v83
  %v152 = vunpack.c.l.b16 %v84
  %v153 = vunpack.c.l.b16 %v85
  %v154 = vunpack.c.l.b16 %v86
  %v155 = vunpack.c.l.b16 %v87
  %v156 = vunpack.c.l.b16 %v88
  %v157 = vunpack.c.l.b16 %v89
  %v158 = vunpack.c.l.b16 %v90
  %v159 = vpack.c.b16 %v128, %v127
  %v160 = vpack.c.b16 %v130, %v129
  %v161 = vpack.c.b16 %v132, %v131
  %v162 = vpack.c.b16 %v134, %v133
  %v163 = vpack.c.b16 %v136, %v135
  %v164 = vpack.c.b16 %v138, %v137
  %v165 = vpack.c.b16 %v140, %v139
  %v166 = vpack.c.b16 %v142, %v141
  %v167 = vpack.c.b16 %v144, %v143
  %v168 = vpack.c.b16 %v146, %v145
  %v169 = vpack.c.b16 %v148, %v147
  %v170 = vpack.c.b16 %v150, %v149
  %v171 = vpack.c.b16 %v152, %v151
  %v172 = vpack.c.b16 %v154, %v153
  %v173 = vpack.c.b16 %v156, %v155
  %v174 = vpack.c.b16 %v158, %v157
  %191 = vmatpush.bf16.msra.mxu0 %v166
  %192 = vmatpush.bf16.msra.mxu0 %v165
  %193 = vmatpush.bf16.msra.mxu0 %v164
  %194 = vmatpush.bf16.msra.mxu0 %v163
  %195 = vmatpush.bf16.msra.mxu0 %v162
  %196 = vmatpush.bf16.msra.mxu0 %v161
  %197 = vmatpush.bf16.msra.mxu0 %v160
  %198 = vmatpush.bf16.msra.mxu0 %v159
  %199 = vmatmul.bf16.gmra.mxu0 %v57
  %v200 = vpop.f32.mrf.mxu0
  %v201 = vadd.f32 %v93, %v200
  %v202 = vpop.f32.mrf.mxu0
  %v203 = vadd.f32 %v93, %v202
  %204 = vdwg.mxu0
  %205 = vmatpush.bf16.msra.mxu0 %v174
  %206 = vmatpush.bf16.msra.mxu0 %v173
  %207 = vmatpush.bf16.msra.mxu0 %v172
  %208 = vmatpush.bf16.msra.mxu0 %v171
  %209 = vmatpush.bf16.msra.mxu0 %v170
  %210 = vmatpush.bf16.msra.mxu0 %v169
  %211 = vmatpush.bf16.msra.mxu0 %v168
  %212 = vmatpush.bf16.msra.mxu0 %v167
  %213 = vmatmul.bf16.gmra.mxu0 %v58
  %v214 = vpop.f32.mrf.mxu0
  %v215 = vadd.f32 %v201, %v214
  %v216 = vpop.f32.mrf.mxu0
  %v217 = vadd.f32 %v203, %v216
  %218 = vdwg.mxu0
  %v219 = vpack.c.bf16 %v215, %v215
  %v220 = vpack.c.bf16 %v217, %v217
  %221 = vst [vmem:[%s4] sm:$0xf] %v219
  %222 = vst [vmem:[%s4 + $0x4] sm:$0xf] %v220
  // Predicated region
  $region18: #{_lambda_.12} parent=0 // pred_check
    _
  $region19: #{_lambda_.12} parent=0 // pred_check_branch
    %224 = sbr.rel (0) target = $region21
  $region20: #{_lambda_.12} parent=0 // pred_region
    _
  $region21: #{_lambda_.12} parent=0 // pred_fallthru
    _
  // Predicated region
  $region22: #{_lambda_.12} parent=0 // pred_check
    _
  $region23: #{_lambda_.12} parent=0 // pred_check_branch
    %226 = sbr.rel (0) target = $region25
  $region24: #{_lambda_.12} parent=0 // pred_region
    _
  $region25: #{_lambda_.12} parent=0 // pred_fallthru
    _

// kernel: _lambda_.10
$region0: #{_lambda_.10}
  #allocation0 [shape = 'u32[]', space=smem, size = 0x4, offset = 0x4, fixed_abs, tag = 'smem constant byte address 0x4 - core index']
  #allocation1 [shape = 'u32[72,128]{1,0:T(1,128)}', space=vmem, size = 0x9000, scoped, tag = 'internal scratch']
  #allocation2 [shape = 'bf16[34,128]{1,0:T(8,128)(2,1)}', space=vmem, size = 0x2800, scoped, tag = 'scratch operand']
  %s0 = inlined_call_operand.vmem [shape: bf16[32,128], index: 0, kind: input, shape index: {}]
  %s1 = inlined_call_operand.hbm [shape: bf16[384,128], index: 1, kind: input, shape index: {}]
  %s2 = inlined_call_operand.vmem [shape: f32[1,128], index: 2, kind: input, shape index: {}]
  %s3 = inlined_call_operand.vmem [shape: bf16[32,128], index: 3, kind: output, shape index: {}]
  %s4 = sld [smem:[#allocation0]]
  $region26: #{_lambda_.10} parent=0
    _
  %s6 = ssub.s32 1, %s4
  %s7 = scalar_select 0, %s6, %s4
  $region1: #{_lambda_.10} parent=0
    #allocation3 [shape = 'u8[98304]{0}', space=vmem, size = 0x18000, scoped, tag = 'input window, operand 1, single buffered']
    #allocation4 [shape = 's32[1]{0}', space=sflag, size = 0x4, scoped, tag = 'scoped memory for _lambda_.10']
    %8 = vsyncpa [#allocation4], 0
    // Predicated region
    $region2: #{_lambda_.10} parent=1 // pred_check
      _
    $region3: #{_lambda_.10} parent=1 // pred_check_branch
      %10 = sbr.rel (0) target = $region5
    $region4: #{_lambda_.10} parent=1 // pred_region
      _
    $region5: #{_lambda_.10} parent=1 // pred_fallthru
      _
    // Predicated region
    $region6: #{_lambda_.10} parent=1 // pred_check
      _
    $region7: #{_lambda_.10} parent=1 // pred_check_branch
      %12 = sbr.rel (0) target = $region9
    $region8: #{_lambda_.10} parent=1 // pred_region
      %14 = vsyncadd [#allocation4], 0
      %s15 = sshll.u32 %s1, 4
      %s16 = int_to_ptr.hbm [resolvable:$true] %s15
      %s17 = sshll.u32 [#allocation3], 4
      %s18 = int_to_ptr.vmem [resolvable:$true] %s17
      %23 = dma.hbm_to_vmem [thread:$0]  %s16, 3072, %s18, [#allocation4], 64, 64, 4
    $region9: #{_lambda_.10} parent=1 // pred_fallthru
      _
    // Predicated region
    $region10: #{_lambda_.10} parent=1 // pred_check
      _
    $region11: #{_lambda_.10} parent=1 // pred_check_branch
      %25 = sbr.rel (0) target = $region13
    $region12: #{_lambda_.10} parent=1 // pred_region
      _
    $region13: #{_lambda_.10} parent=1 // pred_fallthru
      _
    // Predicated region
    $region14: #{_lambda_.10} parent=1 // pred_check
      _
    $region15: #{_lambda_.10} parent=1 // pred_check_branch
      %27 = sbr.rel (0) target = $region17
    $region16: #{_lambda_.10} parent=1 // pred_region
      %29 = dma.done [#allocation4], 3072
    $region17: #{_lambda_.10} parent=1 // pred_fallthru
      _
    %vm33 = vcmask 1040384
    %vm34 = vsmask.f32 256
    %vm35 = vmand %vm33, %vm34
    %v36 = vld [vmem:[#allocation2] sm:$0x1]
    %v37 = vsel %vm35, 0, %v36
    %38 = vst [vmem:[#allocation2] sm:$0x1] %v37
    %vm39 = vsmask.f32 7938
    %vm40 = vmand %vm33, %vm39
    %v41 = vld [vmem:[#allocation2 + $0x10] sm:$0x1]
    %v42 = vsel %vm40, 0, %v41
    %43 = vst [vmem:[#allocation2 + $0x10] sm:$0x1] %v42
    %v44 = vld [vmem:[%s0] sm:$0xf]
    %v45 = vld [vmem:[%s0 + $0x4] sm:$0xf]
    %v46 = vld [vmem:[%s0 + $0x8] sm:$0xf]
    %v47 = vld [vmem:[%s0 + $0xc] sm:$0xf]
    %vm48 = vsmask.f32 4368
    %vm49 = vmor %vm34, %vm48
    %v51 = vshrl.u32 %v44, 16
    %v53 = vrot.slane %v51, 7
    %v54 = vshll.u32 %v44, 16
    %v56 = vor.u32 %v53, %v54
    %v57 = vrot.slane %v53, 4
    %v59 = vshrl.u32 %v45, 16
    %v61 = vrot.slane %v59, 7
    %v62 = vshll.u32 %v45, 16
    %v64 = vor.u32 %v61, %v62
    %v65 = vsel %vm49, %v57, %v64
    %v66 = vrot.slane %v61, 4
    %v68 = vshrl.u32 %v46, 16
    %v70 = vrot.slane %v68, 7
    %v71 = vshll.u32 %v46, 16
    %v73 = vor.u32 %v70, %v71
    %v74 = vsel %vm49, %v66, %v73
    %v75 = vrot.slane %v70, 4
    %v77 = vshrl.u32 %v47, 16
    %v79 = vrot.slane %v77, 7
    %v80 = vshll.u32 %v47, 16
    %v82 = vor.u32 %v79, %v80
    %v83 = vsel %vm49, %v75, %v82
    %v84 = vrot.slane %v79, 4
    %vm90 = vcmask 1043456
    %vm91 = vmand %vm90, %vm39
    %v92 = vld [vmem:[#allocation2] sm:$0xf]
    %v93 = vsel %vm91, %v56, %v92
    %94 = vst [vmem:[#allocation2] sm:$0xf] %v93
    %95 = vst [vmem:[#allocation2 + $0x4] sm:$0xf] %v65
    %96 = vst [vmem:[#allocation2 + $0x8] sm:$0xf] %v74
    %97 = vst [vmem:[#allocation2 + $0xc] sm:$0xf] %v83
    %v98 = vld [vmem:[#allocation2 + $0x10] sm:$0x1]
    %v99 = vsel %vm35, %v84, %v98
    %100 = vst [vmem:[#allocation2 + $0x10] sm:$0x1] %v99
    %v101 = vlaneseq
    %v102 = vshrl.u32 %v101, 7
    %v103 = vadd.s32 %v102, 8
    %v104 = vadd.s32 %v102, 16
    %v105 = vadd.s32 %v102, 24
    %v106 = vand.u32 %v102, 15
    %v107 = vand.u32 %v103, 15
    %v108 = vand.u32 %v104, 15
    %v109 = vand.u32 %v105, 15
    %v110 = vld [vmem:[#allocation2] sm:$0xf]
    %v111 = vld [vmem:[#allocation2 + $0x4] sm:$0xf]
    %v112 = vld [vmem:[#allocation2 + $0x8] sm:$0xf]
    %v113 = vld [vmem:[#allocation2 + $0xc] sm:$0xf]
    %v114 = vadd.s32 %v106, 4294967295
    %v115 = vadd.s32 %v107, 4294967295
    %v116 = vadd.s32 %v108, 4294967295
    %v117 = vadd.s32 %v109, 4294967295
    %vm118 = vcmp.ge.s32.totalorder %v114, 0
    %vm119 = vcmp.ge.s32.totalorder %v115, 0
    %vm120 = vcmp.ge.s32.totalorder %v116, 0
    %vm121 = vcmp.ge.s32.totalorder %v117, 0
    %vm122 = vcmp.lt.s32.totalorder %v114, 16
    %vm123 = vcmp.lt.s32.totalorder %v115, 16
    %vm124 = vcmp.lt.s32.totalorder %v116, 16
    %vm125 = vcmp.lt.s32.totalorder %v117, 16
    %vm126 = vmand %vm118, %vm122
    %vm127 = vmand %vm119, %vm123
    %vm128 = vmand %vm120, %vm124
    %vm129 = vmand %vm121, %vm125
    %vm130 = vmpackc.low %vm126, %vm126
    %vm131 = vmpackc.low %vm127, %vm127
    %vm132 = vmpackc.low %vm128, %vm128
    %vm133 = vmpackc.low %vm129, %vm129
    %v134 = vsel %vm130, %v110, 0
    %v135 = vsel %vm131, %v111, 0
    %v136 = vsel %vm132, %v112, 0
    %v137 = vsel %vm133, %v113, 0
    %v138 = vld [vmem:[#allocation2 + $0x10] sm:$0x1]
    %v139 = vld [vmem:[#allocation2] sm:$0xe]
    %v140 = vadd.s32 %v106, 1
    %v141 = vadd.s32 %v107, 1
    %v142 = vadd.s32 %v108, 1
    %v143 = vadd.s32 %v109, 1
    %vm144 = vcmp.ge.s32.totalorder %v140, 0
    %vm145 = vcmp.ge.s32.totalorder %v141, 0
    %vm146 = vcmp.ge.s32.totalorder %v142, 0
    %vm147 = vcmp.ge.s32.totalorder %v143, 0
    %vm148 = vcmp.lt.s32.totalorder %v140, 16
    %vm149 = vcmp.lt.s32.totalorder %v141, 16
    %vm150 = vcmp.lt.s32.totalorder %v142, 16
    %vm151 = vcmp.lt.s32.totalorder %v143, 16
    %vm152 = vmand %vm144, %vm148
    %vm153 = vmand %vm145, %vm149
    %vm154 = vmand %vm146, %vm150
    %vm155 = vmand %vm147, %vm151
    %vm156 = vmpackc.low %vm152, %vm152
    %vm157 = vmpackc.low %vm153, %vm153
    %vm158 = vmpackc.low %vm154, %vm154
    %vm159 = vmpackc.low %vm155, %vm155
    %v160 = vsel %vm156, 65537, 0
    %v161 = vsel %vm157, 65537, 0
    %v162 = vsel %vm158, 65537, 0
    %v163 = vsel %vm159, 65537, 0
    %vm164 = vcmask 1044484
    %vm165 = vmor %vm33, %vm164
    %v166 = vrot.slane %v160, 7
    %v167 = vrot.slane %v166, 4
    %v168 = vrot.slane %v161, 7
    %v169 = vsel %vm165, %v167, %v168
    %v170 = vrot.slane %v168, 4
    %v171 = vrot.slane %v162, 7
    %v172 = vsel %vm165, %v170, %v171
    %v173 = vrot.slane %v171, 4
    %v174 = vrot.slane %v163, 7
    %v175 = vsel %vm165, %v173, %v174
    %v176 = vrot.slane %v174, 4
    %v177 = vunpack.c.l.b16 %v166
    %v178 = vunpack.c.h.b16 %v166
    %v179 = vunpack.c.l.b16 0
    %v180 = vunpack.c.h.b16 0
    %vm181 = vcmp.ne.s32.totalorder %v177, %v179
    %vm182 = vcmp.ne.s32.totalorder %v178, %v180
    %vm183 = vmpackc.low %vm182, %vm181
    %v184 = vunpack.c.l.b16 %v169
    %v185 = vunpack.c.h.b16 %v169
    %v186 = vunpack.c.l.b16 0
    %v187 = vunpack.c.h.b16 0
    %vm188 = vcmp.ne.s32.totalorder %v184, %v186
    %vm189 = vcmp.ne.s32.totalorder %v185, %v187
    %vm190 = vmpackc.low %vm189, %vm188
    %v191 = vunpack.c.l.b16 %v172
    %v192 = vunpack.c.h.b16 %v172
    %v193 = vunpack.c.l.b16 0
    %v194 = vunpack.c.h.b16 0
    %vm195 = vcmp.ne.s32.totalorder %v191, %v193
    %vm196 = vcmp.ne.s32.totalorder %v192, %v194
    %vm197 = vmpackc.low %vm196, %vm195
    %v198 = vunpack.c.l.b16 %v175
    %v199 = vunpack.c.h.b16 %v175
    %v200 = vunpack.c.l.b16 0
    %v201 = vunpack.c.h.b16 0
    %vm202 = vcmp.ne.s32.totalorder %v198, %v200
    %vm203 = vcmp.ne.s32.totalorder %v199, %v201
    %vm204 = vmpackc.low %vm203, %vm202
    %v205 = vunpack.c.l.b16 %v176
    %v206 = vunpack.c.h.b16 %v176
    %v207 = vunpack.c.l.b16 0
    %v208 = vunpack.c.h.b16 0
    %vm209 = vcmp.ne.s32.totalorder %v205, %v207
    %vm210 = vcmp.ne.s32.totalorder %v206, %v208
    %vm211 = vmpackc.low %vm210, %vm209
    %v212 = vsel %vm183, %v139, 0
    %v213 = vsel %vm190, %v111, 0
    %v214 = vsel %vm197, %v112, 0
    %v215 = vsel %vm204, %v113, 0
    %v216 = vsel %vm211, %v138, 0
    %v221 = vunpack.c.l.b16 %v134
    %v222 = vunpack.c.l.b16 %v135
    %v223 = vunpack.c.l.b16 %v136
    %v224 = vunpack.c.l.b16 %v137
    %v225 = vpack.c.b16 %v222, %v221
    %v226 = vpack.c.b16 %v224, %v223
    %v234 = vunpack.c.l.b16 %v110
    %v235 = vunpack.c.l.b16 %v111
    %v236 = vunpack.c.l.b16 %v112
    %v237 = vunpack.c.l.b16 %v113
    %v238 = vunpack.c.l.b16 %v138
    %v239 = vpack.c.b16 %v235, %v234
    %v240 = vpack.c.b16 %v237, %v236
    %v241 = vpack.c.b16 %v238, %v238
    %vm242 = vsmask.f32 7424
    %v244 = vshrl.u32 %v239, 16
    %v246 = vshll.u32 %v239, 16
    %v248 = vrot.slane %v246, 1
    %v249 = vor.u32 %v244, %v248
    %v251 = vshll.u32 %v240, 16
    %v253 = vrot.slane %v251, 1
    %v254 = vsel %vm242, %v249, %v253
    %v255 = vshrl.u32 %v240, 16
    %v257 = vor.u32 %v255, %v253
    %v259 = vshll.u32 %v241, 16
    %v261 = vrot.slane %v259, 1
    %v262 = vsel %vm242, %v257, %v261
    %v270 = vunpack.c.l.b16 %v212
    %v271 = vunpack.c.l.b16 %v213
    %v272 = vunpack.c.l.b16 %v214
    %v273 = vunpack.c.l.b16 %v215
    %v274 = vunpack.c.l.b16 %v216
    %v275 = vpack.c.b16 %v271, %v270
    %v276 = vpack.c.b16 %v273, %v272
    %v277 = vpack.c.b16 %v274, %v274
    %vm278 = vcmask 1046528
    %v279 = vrot.slane %v275, 1
    %v280 = vrot.slane %v276, 1
    %v281 = vsel %vm278, %v279, %v280
    %v282 = vrot.slane %v277, 1
    %v283 = vsel %vm278, %v280, %v282
    %v286 = vld [vmem:[#allocation3] sm:$0xf]
    %v287 = vld [vmem:[#allocation3 + $0x4] sm:$0xf]
    %v288 = vld [vmem:[#allocation3 + $0x8] sm:$0xf]
    %v289 = vld [vmem:[#allocation3 + $0xc] sm:$0xf]
    %v290 = vld [vmem:[#allocation3 + $0x10] sm:$0xf]
    %v291 = vld [vmem:[#allocation3 + $0x14] sm:$0xf]
    %v292 = vld [vmem:[#allocation3 + $0x18] sm:$0xf]
    %v293 = vld [vmem:[#allocation3 + $0x1c] sm:$0xf]
    %v294 = vld [vmem:[#allocation3 + $0x20] sm:$0xf]
    %v295 = vld [vmem:[#allocation3 + $0x24] sm:$0xf]
    %v296 = vld [vmem:[#allocation3 + $0x28] sm:$0xf]
    %v297 = vld [vmem:[#allocation3 + $0x2c] sm:$0xf]
    %v298 = vld [vmem:[#allocation3 + $0x30] sm:$0xf]
    %v299 = vld [vmem:[#allocation3 + $0x34] sm:$0xf]
    %v300 = vld [vmem:[#allocation3 + $0x38] sm:$0xf]
    %v301 = vld [vmem:[#allocation3 + $0x3c] sm:$0xf]
    %v302 = vld [vmem:[#allocation3 + $0x40] sm:$0xf]
    %v303 = vld [vmem:[#allocation3 + $0x44] sm:$0xf]
    %v304 = vld [vmem:[#allocation3 + $0x48] sm:$0xf]
    %v305 = vld [vmem:[#allocation3 + $0x4c] sm:$0xf]
    %v306 = vld [vmem:[#allocation3 + $0x50] sm:$0xf]
    %v307 = vld [vmem:[#allocation3 + $0x54] sm:$0xf]
    %v308 = vld [vmem:[#allocation3 + $0x58] sm:$0xf]
    %v309 = vld [vmem:[#allocation3 + $0x5c] sm:$0xf]
    %v310 = vld [vmem:[#allocation3 + $0x60] sm:$0xf]
    %v311 = vld [vmem:[#allocation3 + $0x64] sm:$0xf]
    %v312 = vld [vmem:[#allocation3 + $0x68] sm:$0xf]
    %v313 = vld [vmem:[#allocation3 + $0x6c] sm:$0xf]
    %v314 = vld [vmem:[#allocation3 + $0x70] sm:$0xf]
    %v315 = vld [vmem:[#allocation3 + $0x74] sm:$0xf]
    %v316 = vld [vmem:[#allocation3 + $0x78] sm:$0xf]
    %v317 = vld [vmem:[#allocation3 + $0x7c] sm:$0xf]
    %v318 = vld [vmem:[#allocation3 + $0x80] sm:$0xf]
    %v319 = vld [vmem:[#allocation3 + $0x84] sm:$0xf]
    %v320 = vld [vmem:[#allocation3 + $0x88] sm:$0xf]
    %v321 = vld [vmem:[#allocation3 + $0x8c] sm:$0xf]
    %v322 = vld [vmem:[#allocation3 + $0x90] sm:$0xf]
    %v323 = vld [vmem:[#allocation3 + $0x94] sm:$0xf]
    %v324 = vld [vmem:[#allocation3 + $0x98] sm:$0xf]
    %v325 = vld [vmem:[#allocation3 + $0x9c] sm:$0xf]
    %v326 = vld [vmem:[#allocation3 + $0xa0] sm:$0xf]
    %v327 = vld [vmem:[#allocation3 + $0xa4] sm:$0xf]
    %v328 = vld [vmem:[#allocation3 + $0xa8] sm:$0xf]
    %v329 = vld [vmem:[#allocation3 + $0xac] sm:$0xf]
    %v330 = vld [vmem:[#allocation3 + $0xb0] sm:$0xf]
    %v331 = vld [vmem:[#allocation3 + $0xb4] sm:$0xf]
    %v332 = vld [vmem:[#allocation3 + $0xb8] sm:$0xf]
    %v333 = vld [vmem:[#allocation3 + $0xbc] sm:$0xf]
    %v334 = vld [vmem:[%s2] sm:$0x1]
    %v336 = vperm.slane %v334, 0
    %v386 = vunpack.c.l.b16 %v286
    %v387 = vunpack.c.l.b16 %v287
    %v388 = vunpack.c.l.b16 %v288
    %v389 = vunpack.c.l.b16 %v289
    %v390 = vunpack.c.l.b16 %v290
    %v391 = vunpack.c.l.b16 %v291
    %v392 = vunpack.c.l.b16 %v292
    %v393 = vunpack.c.l.b16 %v293
    %v394 = vunpack.c.l.b16 %v294
    %v395 = vunpack.c.l.b16 %v295
    %v396 = vunpack.c.l.b16 %v296
    %v397 = vunpack.c.l.b16 %v297
    %v398 = vunpack.c.l.b16 %v298
    %v399 = vunpack.c.l.b16 %v299
    %v400 = vunpack.c.l.b16 %v300
    %v401 = vunpack.c.l.b16 %v301
    %v402 = vunpack.c.l.b16 %v302
    %v403 = vunpack.c.l.b16 %v303
    %v404 = vunpack.c.l.b16 %v304
    %v405 = vunpack.c.l.b16 %v305
    %v406 = vunpack.c.l.b16 %v306
    %v407 = vunpack.c.l.b16 %v307
    %v408 = vunpack.c.l.b16 %v308
    %v409 = vunpack.c.l.b16 %v309
    %v410 = vunpack.c.l.b16 %v310
    %v411 = vunpack.c.l.b16 %v311
    %v412 = vunpack.c.l.b16 %v312
    %v413 = vunpack.c.l.b16 %v313
    %v414 = vunpack.c.l.b16 %v314
    %v415 = vunpack.c.l.b16 %v315
    %v416 = vunpack.c.l.b16 %v316
    %v417 = vunpack.c.l.b16 %v317
    %v418 = vunpack.c.l.b16 %v318
    %v419 = vunpack.c.l.b16 %v319
    %v420 = vunpack.c.l.b16 %v320
    %v421 = vunpack.c.l.b16 %v321
    %v422 = vunpack.c.l.b16 %v322
    %v423 = vunpack.c.l.b16 %v323
    %v424 = vunpack.c.l.b16 %v324
    %v425 = vunpack.c.l.b16 %v325
    %v426 = vunpack.c.l.b16 %v326
    %v427 = vunpack.c.l.b16 %v327
    %v428 = vunpack.c.l.b16 %v328
    %v429 = vunpack.c.l.b16 %v329
    %v430 = vunpack.c.l.b16 %v330
    %v431 = vunpack.c.l.b16 %v331
    %v432 = vunpack.c.l.b16 %v332
    %v433 = vunpack.c.l.b16 %v333
    %v434 = vpack.c.b16 %v387, %v386
    %v435 = vpack.c.b16 %v389, %v388
    %v436 = vpack.c.b16 %v391, %v390
    %v437 = vpack.c.b16 %v393, %v392
    %v438 = vpack.c.b16 %v395, %v394
    %v439 = vpack.c.b16 %v397, %v396
    %v440 = vpack.c.b16 %v399, %v398
    %v441 = vpack.c.b16 %v401, %v400
    %v442 = vpack.c.b16 %v403, %v402
    %v443 = vpack.c.b16 %v405, %v404
    %v444 = vpack.c.b16 %v407, %v406
    %v445 = vpack.c.b16 %v409, %v408
    %v446 = vpack.c.b16 %v411, %v410
    %v447 = vpack.c.b16 %v413, %v412
    %v448 = vpack.c.b16 %v415, %v414
    %v449 = vpack.c.b16 %v417, %v416
    %v450 = vpack.c.b16 %v419, %v418
    %v451 = vpack.c.b16 %v421, %v420
    %v452 = vpack.c.b16 %v423, %v422
    %v453 = vpack.c.b16 %v425, %v424
    %v454 = vpack.c.b16 %v427, %v426
    %v455 = vpack.c.b16 %v429, %v428
    %v456 = vpack.c.b16 %v431, %v430
    %v457 = vpack.c.b16 %v433, %v432
    %482 = vmatpush.bf16.msra.mxu0 %v441
    %483 = vmatpush.bf16.msra.mxu0 %v440
    %484 = vmatpush.bf16.msra.mxu0 %v439
    %485 = vmatpush.bf16.msra.mxu0 %v438
    %486 = vmatpush.bf16.msra.mxu0 %v437
    %487 = vmatpush.bf16.msra.mxu0 %v436
    %488 = vmatpush.bf16.msra.mxu0 %v435
    %489 = vmatpush.bf16.msra.mxu0 %v434
    %490 = vmatmul.bf16.gmra.mxu0 %v225
    %v491 = vpop.f32.mrf.mxu0
    %v492 = vadd.f32 %v336, %v491
    %v493 = vpop.f32.mrf.mxu0
    %v494 = vadd.f32 %v336, %v493
    %495 = vmatmul.bf16.gmra.mxu0 %v226
    %v496 = vpop.f32.mrf.mxu0
    %v497 = vadd.f32 %v336, %v496
    %v498 = vpop.f32.mrf.mxu0
    %v499 = vadd.f32 %v336, %v498
    %500 = vdwg.mxu0
    %501 = vmatpush.bf16.msra.mxu0 %v449
    %502 = vmatpush.bf16.msra.mxu0 %v448
    %503 = vmatpush.bf16.msra.mxu0 %v447
    %504 = vmatpush.bf16.msra.mxu0 %v446
    %505 = vmatpush.bf16.msra.mxu0 %v445
    %506 = vmatpush.bf16.msra.mxu0 %v444
    %507 = vmatpush.bf16.msra.mxu0 %v443
    %508 = vmatpush.bf16.msra.mxu0 %v442
    %509 = vmatmul.bf16.gmra.mxu0 %v254
    %v510 = vpop.f32.mrf.mxu0
    %v511 = vadd.f32 %v492, %v510
    %v512 = vpop.f32.mrf.mxu0
    %v513 = vadd.f32 %v494, %v512
    %514 = vmatmul.bf16.gmra.mxu0 %v262
    %v515 = vpop.f32.mrf.mxu0
    %v516 = vadd.f32 %v497, %v515
    %v517 = vpop.f32.mrf.mxu0
    %v518 = vadd.f32 %v499, %v517
    %519 = vdwg.mxu0
    %520 = vmatpush.bf16.msra.mxu0 %v457
    %521 = vmatpush.bf16.msra.mxu0 %v456
    %522 = vmatpush.bf16.msra.mxu0 %v455
    %523 = vmatpush.bf16.msra.mxu0 %v454
    %524 = vmatpush.bf16.msra.mxu0 %v453
    %525 = vmatpush.bf16.msra.mxu0 %v452
    %526 = vmatpush.bf16.msra.mxu0 %v451
    %527 = vmatpush.bf16.msra.mxu0 %v450
    %528 = vmatmul.bf16.gmra.mxu0 %v281
    %v529 = vpop.f32.mrf.mxu0
    %v530 = vadd.f32 %v511, %v529
    %v531 = vpop.f32.mrf.mxu0
    %v532 = vadd.f32 %v513, %v531
    %533 = vmatmul.bf16.gmra.mxu0 %v283
    %v534 = vpop.f32.mrf.mxu0
    %v535 = vadd.f32 %v516, %v534
    %v536 = vpop.f32.mrf.mxu0
    %v537 = vadd.f32 %v518, %v536
    %538 = vdwg.mxu0
    %v539 = vpack.c.bf16 %v530, %v530
    %v540 = vpack.c.bf16 %v532, %v532
    %v541 = vpack.c.bf16 %v535, %v535
    %v542 = vpack.c.bf16 %v537, %v537
    %543 = vst [vmem:[%s3] sm:$0xf] %v539
    %544 = vst [vmem:[%s3 + $0x4] sm:$0xf] %v540
    %545 = vst [vmem:[%s3 + $0x8] sm:$0xf] %v541
    %546 = vst [vmem:[%s3 + $0xc] sm:$0xf] %v542
    // Predicated region
    $region18: #{_lambda_.10} parent=1 // pred_check
      _
    $region19: #{_lambda_.10} parent=1 // pred_check_branch
      %548 = sbr.rel (0) target = $region21
    $region20: #{_lambda_.10} parent=1 // pred_region
      _
    $region21: #{_lambda_.10} parent=1 // pred_fallthru
      _
    // Predicated region
    $region22: #{_lambda_.10} parent=1 // pred_check
      _
    $region23: #{_lambda_.10} parent=1 // pred_check_branch
      %550 = sbr.rel (0) target = $region25
    $region24: #{_lambda_.10} parent=1 // pred_region
      _
    $region25: #{_lambda_.10} parent=1 // pred_fallthru
      _
    %551 = vsyncpa [#allocation4], 1

// kernel: _lambda_.13
$region0: #{_lambda_.13}
  #allocation0 [shape = 'u32[]', space=smem, size = 0x4, offset = 0x4, fixed_abs, tag = 'smem constant byte address 0x4 - core index']
  #allocation1 [shape = 'u32[72,128]{1,0:T(1,128)}', space=vmem, size = 0x9000, scoped, tag = 'internal scratch']
  #allocation2 [shape = 'bf16[18,128]{1,0:T(8,128)(2,1)}', space=vmem, size = 0x1800, scoped, tag = 'scratch operand']
  %s0 = inlined_call_operand.vmem [shape: bf16[16,128], index: 0, kind: input, shape index: {}]
  %s1 = inlined_call_operand.vmem [shape: bf16[4,384,128], index: 1, kind: input, shape index: {}]
  %s2 = inlined_call_operand.vmem [shape: f32[4,3,128], index: 2, kind: input, shape index: {}]
  %s3 = inlined_call_operand.vmem [shape: bf16[16,128], index: 3, kind: output, shape index: {}]
  %s4 = sld [smem:[#allocation0]]
  $region22: #{_lambda_.13} parent=0
    _
  %s6 = ssub.s32 1, %s4
  %s7 = scalar_select 0, %s6, %s4
  // Predicated region
  $region2: #{_lambda_.13} parent=0 // pred_check
    _
  $region3: #{_lambda_.13} parent=0 // pred_check_branch
    %9 = sbr.rel (0) target = $region5
  $region4: #{_lambda_.13} parent=0 // pred_region
    _
  $region5: #{_lambda_.13} parent=0 // pred_fallthru
    _
  // Predicated region
  $region6: #{_lambda_.13} parent=0 // pred_check
    _
  $region7: #{_lambda_.13} parent=0 // pred_check_branch
    %11 = sbr.rel (0) target = $region9
  $region8: #{_lambda_.13} parent=0 // pred_region
    _
  $region9: #{_lambda_.13} parent=0 // pred_fallthru
    _
  // Predicated region
  $region10: #{_lambda_.13} parent=0 // pred_check
    _
  $region11: #{_lambda_.13} parent=0 // pred_check_branch
    %13 = sbr.rel (0) target = $region13
  $region12: #{_lambda_.13} parent=0 // pred_region
    _
  $region13: #{_lambda_.13} parent=0 // pred_fallthru
    _
  %vm17 = vcmask 1040384
  %vm18 = vsmask.f32 256
  %vm19 = vmand %vm17, %vm18
  %v20 = vld [vmem:[#allocation2] sm:$0x1]
  %v21 = vsel %vm19, 0, %v20
  %22 = vst [vmem:[#allocation2] sm:$0x1] %v21
  %vm23 = vsmask.f32 7938
  %vm24 = vmand %vm17, %vm23
  %v25 = vld [vmem:[#allocation2 + $0x8] sm:$0x1]
  %v26 = vsel %vm24, 0, %v25
  %27 = vst [vmem:[#allocation2 + $0x8] sm:$0x1] %v26
  %v28 = vlaneseq
  %v29 = vshrl.u32 %v28, 7
  %v30 = vadd.s32 %v29, 8
  %v31 = vand.u32 %v29, 7
  %v32 = vand.u32 %v30, 7
  %v33 = vld [vmem:[%s0] sm:$0xf]
  %v34 = vld [vmem:[%s0 + $0x4] sm:$0xf]
  %v35 = vunpack.c.l.bf16 %v33
  %v36 = vunpack.c.l.bf16 %v34
  %v37 = vld [vmem:[%s2] sm:$0x7]
  %v38 = vperm.slane %v37, 1
  %v39 = vmul.f32 %v35, %v38
  %v40 = vmul.f32 %v36, %v38
  %v41 = vperm.slane %v37, 2
  %v42 = vadd.f32 %v39, %v41
  %v43 = vadd.f32 %v40, %v41
  %vm44 = vcmp.gt.f32.partialorder %v42, 0.0
  %vm45 = vcmp.gt.f32.partialorder %v43, 0.0
  %v46 = vmul.f32 %v42, 0.33
  %v47 = vmul.f32 %v43, 0.33
  %v48 = vsel %vm44, %v42, %v46
  %v49 = vsel %vm45, %v43, %v47
  %v50 = vpack.c.bf16 %v48, %v48
  %v51 = vpack.c.bf16 %v49, %v49
  %vm52 = vsmask.f32 4368
  %vm53 = vmor %vm18, %vm52
  %v55 = vshrl.u32 %v50, 16
  %v57 = vrot.slane %v55, 7
  %v58 = vshll.u32 %v50, 16
  %v60 = vor.u32 %v57, %v58
  %v61 = vrot.slane %v57, 4
  %v63 = vshrl.u32 %v51, 16
  %v65 = vrot.slane %v63, 7
  %v66 = vshll.u32 %v51, 16
  %v68 = vor.u32 %v65, %v66
  %v69 = vsel %vm53, %v61, %v68
  %v70 = vrot.slane %v65, 4
  %vm74 = vcmask 1043456
  %vm75 = vmand %vm74, %vm23
  %v76 = vld [vmem:[#allocation2] sm:$0xf]
  %v77 = vsel %vm75, %v60, %v76
  %78 = vst [vmem:[#allocation2] sm:$0xf] %v77
  %79 = vst [vmem:[#allocation2 + $0x4] sm:$0xf] %v69
  %v80 = vld [vmem:[#allocation2 + $0x8] sm:$0x1]
  %v81 = vsel %vm19, %v70, %v80
  %82 = vst [vmem:[#allocation2 + $0x8] sm:$0x1] %v81
  %v83 = vld [vmem:[#allocation2] sm:$0xf]
  %v84 = vld [vmem:[#allocation2 + $0x4] sm:$0xf]
  %v85 = vadd.s32 %v31, 4294967295
  %v86 = vadd.s32 %v32, 4294967295
  %vm87 = vcmp.ge.s32.totalorder %v85, 0
  %vm88 = vcmp.ge.s32.totalorder %v86, 0
  %vm89 = vcmp.lt.s32.totalorder %v85, 8
  %vm90 = vcmp.lt.s32.totalorder %v86, 8
  %vm91 = vmand %vm87, %vm89
  %vm92 = vmand %vm88, %vm90
  %vm93 = vmpackc.low %vm91, %vm91
  %vm94 = vmpackc.low %vm92, %vm92
  %v95 = vsel %vm93, %v83, 0
  %v96 = vsel %vm94, %v84, 0
  %v97 = vld [vmem:[#allocation2 + $0x8] sm:$0x1]
  %v98 = vld [vmem:[#allocation2] sm:$0xe]
  %v99 = vadd.s32 %v31, 1
  %v100 = vadd.s32 %v32, 1
  %vm101 = vcmp.ge.s32.totalorder %v99, 0
  %vm102 = vcmp.ge.s32.totalorder %v100, 0
  %vm103 = vcmp.lt.s32.totalorder %v99, 8
  %vm104 = vcmp.lt.s32.totalorder %v100, 8
  %vm105 = vmand %vm101, %vm103
  %vm106 = vmand %vm102, %vm104
  %vm107 = vmpackc.low %vm105, %vm105
  %vm108 = vmpackc.low %vm106, %vm106
  %v109 = vsel %vm107, 65537, 0
  %v110 = vsel %vm108, 65537, 0
  %vm111 = vcmask 1044484
  %vm112 = vmor %vm17, %vm111
  %v113 = vrot.slane %v109, 7
  %v114 = vrot.slane %v113, 4
  %v115 = vrot.slane %v110, 7
  %v116 = vsel %vm112, %v114, %v115
  %v117 = vrot.slane %v115, 4
  %v118 = vunpack.c.l.b16 %v113
  %v119 = vunpack.c.h.b16 %v113
  %v120 = vunpack.c.l.b16 0
  %v121 = vunpack.c.h.b16 0
  %vm122 = vcmp.ne.s32.totalorder %v118, %v120
  %vm123 = vcmp.ne.s32.totalorder %v119, %v121
  %vm124 = vmpackc.low %vm123, %vm122
  %v125 = vunpack.c.l.b16 %v116
  %v126 = vunpack.c.h.b16 %v116
  %v127 = vunpack.c.l.b16 0
  %v128 = vunpack.c.h.b16 0
  %vm129 = vcmp.ne.s32.totalorder %v125, %v127
  %vm130 = vcmp.ne.s32.totalorder %v126, %v128
  %vm131 = vmpackc.low %vm130, %vm129
  %v132 = vunpack.c.l.b16 %v117
  %v133 = vunpack.c.h.b16 %v117
  %v134 = vunpack.c.l.b16 0
  %v135 = vunpack.c.h.b16 0
  %vm136 = vcmp.ne.s32.totalorder %v132, %v134
  %vm137 = vcmp.ne.s32.totalorder %v133, %v135
  %vm138 = vmpackc.low %vm137, %vm136
  %v139 = vsel %vm124, %v98, 0
  %v140 = vsel %vm131, %v84, 0
  %v141 = vsel %vm138, %v97, 0
  %v144 = vunpack.c.l.b16 %v95
  %v145 = vunpack.c.l.b16 %v96
  %v146 = vpack.c.b16 %v145, %v144
  %v151 = vunpack.c.l.b16 %v83
  %v152 = vunpack.c.l.b16 %v84
  %v153 = vunpack.c.l.b16 %v97
  %v154 = vpack.c.b16 %v152, %v151
  %v155 = vpack.c.b16 %v153, %v153
  %vm156 = vsmask.f32 7424
  %v158 = vshrl.u32 %v154, 16
  %v160 = vshll.u32 %v154, 16
  %v162 = vrot.slane %v160, 1
  %v163 = vor.u32 %v158, %v162
  %v165 = vshll.u32 %v155, 16
  %v167 = vrot.slane %v165, 1
  %v168 = vsel %vm156, %v163, %v167
  %v173 = vunpack.c.l.b16 %v139
  %v174 = vunpack.c.l.b16 %v140
  %v175 = vunpack.c.l.b16 %v141
  %v176 = vpack.c.b16 %v174, %v173
  %v177 = vpack.c.b16 %v175, %v175
  %vm178 = vcmask 1046528
  %v179 = vrot.slane %v176, 1
  %v180 = vrot.slane %v177, 1
  %v181 = vsel %vm178, %v179, %v180
  %v183 = vld [vmem:[%s1] sm:$0xf]
  %v184 = vld [vmem:[%s1 + $0x4] sm:$0xf]
  %v185 = vld [vmem:[%s1 + $0x8] sm:$0xf]
  %v186 = vld [vmem:[%s1 + $0xc] sm:$0xf]
  %v187 = vld [vmem:[%s1 + $0x10] sm:$0xf]
  %v188 = vld [vmem:[%s1 + $0x14] sm:$0xf]
  %v189 = vld [vmem:[%s1 + $0x18] sm:$0xf]
  %v190 = vld [vmem:[%s1 + $0x1c] sm:$0xf]
  %v191 = vld [vmem:[%s1 + $0x20] sm:$0xf]
  %v192 = vld [vmem:[%s1 + $0x24] sm:$0xf]
  %v193 = vld [vmem:[%s1 + $0x28] sm:$0xf]
  %v194 = vld [vmem:[%s1 + $0x2c] sm:$0xf]
  %v195 = vld [vmem:[%s1 + $0x30] sm:$0xf]
  %v196 = vld [vmem:[%s1 + $0x34] sm:$0xf]
  %v197 = vld [vmem:[%s1 + $0x38] sm:$0xf]
  %v198 = vld [vmem:[%s1 + $0x3c] sm:$0xf]
  %v199 = vld [vmem:[%s1 + $0x40] sm:$0xf]
  %v200 = vld [vmem:[%s1 + $0x44] sm:$0xf]
  %v201 = vld [vmem:[%s1 + $0x48] sm:$0xf]
  %v202 = vld [vmem:[%s1 + $0x4c] sm:$0xf]
  %v203 = vld [vmem:[%s1 + $0x50] sm:$0xf]
  %v204 = vld [vmem:[%s1 + $0x54] sm:$0xf]
  %v205 = vld [vmem:[%s1 + $0x58] sm:$0xf]
  %v206 = vld [vmem:[%s1 + $0x5c] sm:$0xf]
  %v207 = vld [vmem:[%s1 + $0x60] sm:$0xf]
  %v208 = vld [vmem:[%s1 + $0x64] sm:$0xf]
  %v209 = vld [vmem:[%s1 + $0x68] sm:$0xf]
  %v210 = vld [vmem:[%s1 + $0x6c] sm:$0xf]
  %v211 = vld [vmem:[%s1 + $0x70] sm:$0xf]
  %v212 = vld [vmem:[%s1 + $0x74] sm:$0xf]
  %v213 = vld [vmem:[%s1 + $0x78] sm:$0xf]
  %v214 = vld [vmem:[%s1 + $0x7c] sm:$0xf]
  %v215 = vld [vmem:[%s1 + $0x80] sm:$0xf]
  %v216 = vld [vmem:[%s1 + $0x84] sm:$0xf]
  %v217 = vld [vmem:[%s1 + $0x88] sm:$0xf]
  %v218 = vld [vmem:[%s1 + $0x8c] sm:$0xf]
  %v219 = vld [vmem:[%s1 + $0x90] sm:$0xf]
  %v220 = vld [vmem:[%s1 + $0x94] sm:$0xf]
  %v221 = vld [vmem:[%s1 + $0x98] sm:$0xf]
  %v222 = vld [vmem:[%s1 + $0x9c] sm:$0xf]
  %v223 = vld [vmem:[%s1 + $0xa0] sm:$0xf]
  %v224 = vld [vmem:[%s1 + $0xa4] sm:$0xf]
  %v225 = vld [vmem:[%s1 + $0xa8] sm:$0xf]
  %v226 = vld [vmem:[%s1 + $0xac] sm:$0xf]
  %v227 = vld [vmem:[%s1 + $0xb0] sm:$0xf]
  %v228 = vld [vmem:[%s1 + $0xb4] sm:$0xf]
  %v229 = vld [vmem:[%s1 + $0xb8] sm:$0xf]
  %v230 = vld [vmem:[%s1 + $0xbc] sm:$0xf]
  %v231 = vperm.slane %v37, 0
  %v280 = vunpack.c.l.b16 %v183
  %v281 = vunpack.c.l.b16 %v184
  %v282 = vunpack.c.l.b16 %v185
  %v283 = vunpack.c.l.b16 %v186
  %v284 = vunpack.c.l.b16 %v187
  %v285 = vunpack.c.l.b16 %v188
  %v286 = vunpack.c.l.b16 %v189
  %v287 = vunpack.c.l.b16 %v190
  %v288 = vunpack.c.l.b16 %v191
  %v289 = vunpack.c.l.b16 %v192
  %v290 = vunpack.c.l.b16 %v193
  %v291 = vunpack.c.l.b16 %v194
  %v292 = vunpack.c.l.b16 %v195
  %v293 = vunpack.c.l.b16 %v196
  %v294 = vunpack.c.l.b16 %v197
  %v295 = vunpack.c.l.b16 %v198
  %v296 = vunpack.c.l.b16 %v199
  %v297 = vunpack.c.l.b16 %v200
  %v298 = vunpack.c.l.b16 %v201
  %v299 = vunpack.c.l.b16 %v202
  %v300 = vunpack.c.l.b16 %v203
  %v301 = vunpack.c.l.b16 %v204
  %v302 = vunpack.c.l.b16 %v205
  %v303 = vunpack.c.l.b16 %v206
  %v304 = vunpack.c.l.b16 %v207
  %v305 = vunpack.c.l.b16 %v208
  %v306 = vunpack.c.l.b16 %v209
  %v307 = vunpack.c.l.b16 %v210
  %v308 = vunpack.c.l.b16 %v211
  %v309 = vunpack.c.l.b16 %v212
  %v310 = vunpack.c.l.b16 %v213
  %v311 = vunpack.c.l.b16 %v214
  %v312 = vunpack.c.l.b16 %v215
  %v313 = vunpack.c.l.b16 %v216
  %v314 = vunpack.c.l.b16 %v217
  %v315 = vunpack.c.l.b16 %v218
  %v316 = vunpack.c.l.b16 %v219
  %v317 = vunpack.c.l.b16 %v220
  %v318 = vunpack.c.l.b16 %v221
  %v319 = vunpack.c.l.b16 %v222
  %v320 = vunpack.c.l.b16 %v223
  %v321 = vunpack.c.l.b16 %v224
  %v322 = vunpack.c.l.b16 %v225
  %v323 = vunpack.c.l.b16 %v226
  %v324 = vunpack.c.l.b16 %v227
  %v325 = vunpack.c.l.b16 %v228
  %v326 = vunpack.c.l.b16 %v229
  %v327 = vunpack.c.l.b16 %v230
  %v328 = vpack.c.b16 %v281, %v280
  %v329 = vpack.c.b16 %v283, %v282
  %v330 = vpack.c.b16 %v285, %v284
  %v331 = vpack.c.b16 %v287, %v286
  %v332 = vpack.c.b16 %v289, %v288
  %v333 = vpack.c.b16 %v291, %v290
  %v334 = vpack.c.b16 %v293, %v292
  %v335 = vpack.c.b16 %v295, %v294
  %v336 = vpack.c.b16 %v297, %v296
  %v337 = vpack.c.b16 %v299, %v298
  %v338 = vpack.c.b16 %v301, %v300
  %v339 = vpack.c.b16 %v303, %v302
  %v340 = vpack.c.b16 %v305, %v304
  %v341 = vpack.c.b16 %v307, %v306
  %v342 = vpack.c.b16 %v309, %v308
  %v343 = vpack.c.b16 %v311, %v310
  %v344 = vpack.c.b16 %v313, %v312
  %v345 = vpack.c.b16 %v315, %v314
  %v346 = vpack.c.b16 %v317, %v316
  %v347 = vpack.c.b16 %v319, %v318
  %v348 = vpack.c.b16 %v321, %v320
  %v349 = vpack.c.b16 %v323, %v322
  %v350 = vpack.c.b16 %v325, %v324
  %v351 = vpack.c.b16 %v327, %v326
  %376 = vmatpush.bf16.msra.mxu0 %v335
  %377 = vmatpush.bf16.msra.mxu0 %v334
  %378 = vmatpush.bf16.msra.mxu0 %v333
  %379 = vmatpush.bf16.msra.mxu0 %v332
  %380 = vmatpush.bf16.msra.mxu0 %v331
  %381 = vmatpush.bf16.msra.mxu0 %v330
  %382 = vmatpush.bf16.msra.mxu0 %v329
  %383 = vmatpush.bf16.msra.mxu0 %v328
  %384 = vmatmul.bf16.gmra.mxu0 %v146
  %v385 = vpop.f32.mrf.mxu0
  %v386 = vadd.f32 %v231, %v385
  %v387 = vpop.f32.mrf.mxu0
  %v388 = vadd.f32 %v231, %v387
  %389 = vdwg.mxu0
  %390 = vmatpush.bf16.msra.mxu0 %v343
  %391 = vmatpush.bf16.msra.mxu0 %v342
  %392 = vmatpush.bf16.msra.mxu0 %v341
  %393 = vmatpush.bf16.msra.mxu0 %v340
  %394 = vmatpush.bf16.msra.mxu0 %v339
  %395 = vmatpush.bf16.msra.mxu0 %v338
  %396 = vmatpush.bf16.msra.mxu0 %v337
  %397 = vmatpush.bf16.msra.mxu0 %v336
  %398 = vmatmul.bf16.gmra.mxu0 %v168
  %v399 = vpop.f32.mrf.mxu0
  %v400 = vadd.f32 %v386, %v399
  %v401 = vpop.f32.mrf.mxu0
  %v402 = vadd.f32 %v388, %v401
  %403 = vdwg.mxu0
  %404 = vmatpush.bf16.msra.mxu0 %v351
  %405 = vmatpush.bf16.msra.mxu0 %v350
  %406 = vmatpush.bf16.msra.mxu0 %v349
  %407 = vmatpush.bf16.msra.mxu0 %v348
  %408 = vmatpush.bf16.msra.mxu0 %v347
  %409 = vmatpush.bf16.msra.mxu0 %v346
  %410 = vmatpush.bf16.msra.mxu0 %v345
  %411 = vmatpush.bf16.msra.mxu0 %v344
  %412 = vmatmul.bf16.gmra.mxu0 %v181
  %v413 = vpop.f32.mrf.mxu0
  %v414 = vadd.f32 %v400, %v413
  %v415 = vpop.f32.mrf.mxu0
  %v416 = vadd.f32 %v402, %v415
  %417 = vdwg.mxu0
  %s418 = scalar_lea.vmem %s2, 4
  %v419 = vld [vmem:[%s418] sm:$0x7]
  %v420 = vperm.slane %v419, 1
  %v421 = vmul.f32 %v414, %v420
  %v422 = vmul.f32 %v416, %v420
  %v423 = vperm.slane %v419, 2
  %v424 = vadd.f32 %v421, %v423
  %v425 = vadd.f32 %v422, %v423
  %vm426 = vcmp.gt.f32.partialorder %v424, 0.0
  %vm427 = vcmp.gt.f32.partialorder %v425, 0.0
  %v428 = vmul.f32 %v424, 0.33
  %v429 = vmul.f32 %v425, 0.33
  %v430 = vsel %vm426, %v424, %v428
  %v431 = vsel %vm427, %v425, %v429
  %v432 = vpack.c.bf16 %v430, %v430
  %v433 = vpack.c.bf16 %v431, %v431
  %v435 = vshrl.u32 %v432, 16
  %v437 = vrot.slane %v435, 7
  %v438 = vshll.u32 %v432, 16
  %v440 = vor.u32 %v437, %v438
  %v441 = vrot.slane %v437, 4
  %v443 = vshrl.u32 %v433, 16
  %v445 = vrot.slane %v443, 7
  %v446 = vshll.u32 %v433, 16
  %v448 = vor.u32 %v445, %v446
  %v449 = vsel %vm53, %v441, %v448
  %v450 = vrot.slane %v445, 4
  %v454 = vsel %vm75, %v440, %v83
  %455 = vst [vmem:[#allocation2] sm:$0xf] %v454
  %456 = vst [vmem:[#allocation2 + $0x4] sm:$0xf] %v449
  %v457 = vld [vmem:[#allocation2 + $0x8] sm:$0x1]
  %v458 = vsel %vm19, %v450, %v457
  %459 = vst [vmem:[#allocation2 + $0x8] sm:$0x1] %v458
  %v460 = vld [vmem:[#allocation2] sm:$0xf]
  %v461 = vld [vmem:[#allocation2 + $0x4] sm:$0xf]
  %v462 = vsel %vm93, %v460, 0
  %v463 = vsel %vm94, %v461, 0
  %v464 = vld [vmem:[#allocation2 + $0x8] sm:$0x1]
  %v465 = vld [vmem:[#allocation2] sm:$0xe]
  %v466 = vsel %vm124, %v465, 0
  %v467 = vsel %vm131, %v461, 0
  %v468 = vsel %vm138, %v464, 0
  %v471 = vunpack.c.l.b16 %v462
  %v472 = vunpack.c.l.b16 %v463
  %v473 = vpack.c.b16 %v472, %v471
  %v478 = vunpack.c.l.b16 %v460
  %v479 = vunpack.c.l.b16 %v461
  %v480 = vunpack.c.l.b16 %v464
  %v481 = vpack.c.b16 %v479, %v478
  %v482 = vpack.c.b16 %v480, %v480
  %v484 = vshrl.u32 %v481, 16
  %v486 = vshll.u32 %v481, 16
  %v488 = vrot.slane %v486, 1
  %v489 = vor.u32 %v484, %v488
  %v491 = vshll.u32 %v482, 16
  %v493 = vrot.slane %v491, 1
  %v494 = vsel %vm156, %v489, %v493
  %v499 = vunpack.c.l.b16 %v466
  %v500 = vunpack.c.l.b16 %v467
  %v501 = vunpack.c.l.b16 %v468
  %v502 = vpack.c.b16 %v500, %v499
  %v503 = vpack.c.b16 %v501, %v501
  %v504 = vrot.slane %v502, 1
  %v505 = vrot.slane %v503, 1
  %v506 = vsel %vm178, %v504, %v505
  %s508 = scalar_lea.vmem %s1, 192
  %v509 = vld [vmem:[%s508] sm:$0xf]
  %v510 = vld [vmem:[%s508 + $0x4] sm:$0xf]
  %v511 = vld [vmem:[%s508 + $0x8] sm:$0xf]
  %v512 = vld [vmem:[%s508 + $0xc] sm:$0xf]
  %v513 = vld [vmem:[%s508 + $0x10] sm:$0xf]
  %v514 = vld [vmem:[%s508 + $0x14] sm:$0xf]
  %v515 = vld [vmem:[%s508 + $0x18] sm:$0xf]
  %v516 = vld [vmem:[%s508 + $0x1c] sm:$0xf]
  %v517 = vld [vmem:[%s508 + $0x20] sm:$0xf]
  %v518 = vld [vmem:[%s508 + $0x24] sm:$0xf]
  %v519 = vld [vmem:[%s508 + $0x28] sm:$0xf]
  %v520 = vld [vmem:[%s508 + $0x2c] sm:$0xf]
  %v521 = vld [vmem:[%s508 + $0x30] sm:$0xf]
  %v522 = vld [vmem:[%s508 + $0x34] sm:$0xf]
  %v523 = vld [vmem:[%s508 + $0x38] sm:$0xf]
  %v524 = vld [vmem:[%s508 + $0x3c] sm:$0xf]
  %v525 = vld [vmem:[%s508 + $0x40] sm:$0xf]
  %v526 = vld [vmem:[%s508 + $0x44] sm:$0xf]
  %v527 = vld [vmem:[%s508 + $0x48] sm:$0xf]
  %v528 = vld [vmem:[%s508 + $0x4c] sm:$0xf]
  %v529 = vld [vmem:[%s508 + $0x50] sm:$0xf]
  %v530 = vld [vmem:[%s508 + $0x54] sm:$0xf]
  %v531 = vld [vmem:[%s508 + $0x58] sm:$0xf]
  %v532 = vld [vmem:[%s508 + $0x5c] sm:$0xf]
  %v533 = vld [vmem:[%s508 + $0x60] sm:$0xf]
  %v534 = vld [vmem:[%s508 + $0x64] sm:$0xf]
  %v535 = vld [vmem:[%s508 + $0x68] sm:$0xf]
  %v536 = vld [vmem:[%s508 + $0x6c] sm:$0xf]
  %v537 = vld [vmem:[%s508 + $0x70] sm:$0xf]
  %v538 = vld [vmem:[%s508 + $0x74] sm:$0xf]
  %v539 = vld [vmem:[%s508 + $0x78] sm:$0xf]
  %v540 = vld [vmem:[%s508 + $0x7c] sm:$0xf]
  %v541 = vld [vmem:[%s508 + $0x80] sm:$0xf]
  %v542 = vld [vmem:[%s508 + $0x84] sm:$0xf]
  %v543 = vld [vmem:[%s508 + $0x88] sm:$0xf]
  %v544 = vld [vmem:[%s508 + $0x8c] sm:$0xf]
  %v545 = vld [vmem:[%s508 + $0x90] sm:$0xf]
  %v546 = vld [vmem:[%s508 + $0x94] sm:$0xf]
  %v547 = vld [vmem:[%s508 + $0x98] sm:$0xf]
  %v548 = vld [vmem:[%s508 + $0x9c] sm:$0xf]
  %v549 = vld [vmem:[%s508 + $0xa0] sm:$0xf]
  %v550 = vld [vmem:[%s508 + $0xa4] sm:$0xf]
  %v551 = vld [vmem:[%s508 + $0xa8] sm:$0xf]
  %v552 = vld [vmem:[%s508 + $0xac] sm:$0xf]
  %v553 = vld [vmem:[%s508 + $0xb0] sm:$0xf]
  %v554 = vld [vmem:[%s508 + $0xb4] sm:$0xf]
  %v555 = vld [vmem:[%s508 + $0xb8] sm:$0xf]
  %v556 = vld [vmem:[%s508 + $0xbc] sm:$0xf]
  %v557 = vperm.slane %v419, 0
  %v606 = vunpack.c.l.b16 %v509
  %v607 = vunpack.c.l.b16 %v510
  %v608 = vunpack.c.l.b16 %v511
  %v609 = vunpack.c.l.b16 %v512
  %v610 = vunpack.c.l.b16 %v513
  %v611 = vunpack.c.l.b16 %v514
  %v612 = vunpack.c.l.b16 %v515
  %v613 = vunpack.c.l.b16 %v516
  %v614 = vunpack.c.l.b16 %v517
  %v615 = vunpack.c.l.b16 %v518
  %v616 = vunpack.c.l.b16 %v519
  %v617 = vunpack.c.l.b16 %v520
  %v618 = vunpack.c.l.b16 %v521
  %v619 = vunpack.c.l.b16 %v522
  %v620 = vunpack.c.l.b16 %v523
  %v621 = vunpack.c.l.b16 %v524
  %v622 = vunpack.c.l.b16 %v525
  %v623 = vunpack.c.l.b16 %v526
  %v624 = vunpack.c.l.b16 %v527
  %v625 = vunpack.c.l.b16 %v528
  %v626 = vunpack.c.l.b16 %v529
  %v627 = vunpack.c.l.b16 %v530
  %v628 = vunpack.c.l.b16 %v531
  %v629 = vunpack.c.l.b16 %v532
  %v630 = vunpack.c.l.b16 %v533
  %v631 = vunpack.c.l.b16 %v534
  %v632 = vunpack.c.l.b16 %v535
  %v633 = vunpack.c.l.b16 %v536
  %v634 = vunpack.c.l.b16 %v537
  %v635 = vunpack.c.l.b16 %v538
  %v636 = vunpack.c.l.b16 %v539
  %v637 = vunpack.c.l.b16 %v540
  %v638 = vunpack.c.l.b16 %v541
  %v639 = vunpack.c.l.b16 %v542
  %v640 = vunpack.c.l.b16 %v543
  %v641 = vunpack.c.l.b16 %v544
  %v642 = vunpack.c.l.b16 %v545
  %v643 = vunpack.c.l.b16 %v546
  %v644 = vunpack.c.l.b16 %v547
  %v645 = vunpack.c.l.b16 %v548
  %v646 = vunpack.c.l.b16 %v549
  %v647 = vunpack.c.l.b16 %v550
  %v648 = vunpack.c.l.b16 %v551
  %v649 = vunpack.c.l.b16 %v552
  %v650 = vunpack.c.l.b16 %v553
  %v651 = vunpack.c.l.b16 %v554
  %v652 = vunpack.c.l.b16 %v555
  %v653 = vunpack.c.l.b16 %v556
  %v654 = vpack.c.b16 %v607, %v606
  %v655 = vpack.c.b16 %v609, %v608
  %v656 = vpack.c.b16 %v611, %v610
  %v657 = vpack.c.b16 %v613, %v612
  %v658 = vpack.c.b16 %v615, %v614
  %v659 = vpack.c.b16 %v617, %v616
  %v660 = vpack.c.b16 %v619, %v618
  %v661 = vpack.c.b16 %v621, %v620
  %v662 = vpack.c.b16 %v623, %v622
  %v663 = vpack.c.b16 %v625, %v624
  %v664 = vpack.c.b16 %v627, %v626
  %v665 = vpack.c.b16 %v629, %v628
  %v666 = vpack.c.b16 %v631, %v630
  %v667 = vpack.c.b16 %v633, %v632
  %v668 = vpack.c.b16 %v635, %v634
  %v669 = vpack.c.b16 %v637, %v636
  %v670 = vpack.c.b16 %v639, %v638
  %v671 = vpack.c.b16 %v641, %v640
  %v672 = vpack.c.b16 %v643, %v642
  %v673 = vpack.c.b16 %v645, %v644
  %v674 = vpack.c.b16 %v647, %v646
  %v675 = vpack.c.b16 %v649, %v648
  %v676 = vpack.c.b16 %v651, %v650
  %v677 = vpack.c.b16 %v653, %v652
  %702 = vmatpush.bf16.msra.mxu0 %v661
  %703 = vmatpush.bf16.msra.mxu0 %v660
  %704 = vmatpush.bf16.msra.mxu0 %v659
  %705 = vmatpush.bf16.msra.mxu0 %v658
  %706 = vmatpush.bf16.msra.mxu0 %v657
  %707 = vmatpush.bf16.msra.mxu0 %v656
  %708 = vmatpush.bf16.msra.mxu0 %v655
  %709 = vmatpush.bf16.msra.mxu0 %v654
  %710 = vmatmul.bf16.gmra.mxu0 %v473
  %v711 = vpop.f32.mrf.mxu0
  %v712 = vadd.f32 %v557, %v711
  %v713 = vpop.f32.mrf.mxu0
  %v714 = vadd.f32 %v557, %v713
  %715 = vdwg.mxu0
  %716 = vmatpush.bf16.msra.mxu0 %v669
  %717 = vmatpush.bf16.msra.mxu0 %v668
  %718 = vmatpush.bf16.msra.mxu0 %v667
  %719 = vmatpush.bf16.msra.mxu0 %v666
  %720 = vmatpush.bf16.msra.mxu0 %v665
  %721 = vmatpush.bf16.msra.mxu0 %v664
  %722 = vmatpush.bf16.msra.mxu0 %v663
  %723 = vmatpush.bf16.msra.mxu0 %v662
  %724 = vmatmul.bf16.gmra.mxu0 %v494
  %v725 = vpop.f32.mrf.mxu0
  %v726 = vadd.f32 %v712, %v725
  %v727 = vpop.f32.mrf.mxu0
  %v728 = vadd.f32 %v714, %v727
  %729 = vdwg.mxu0
  %730 = vmatpush.bf16.msra.mxu0 %v677
  %731 = vmatpush.bf16.msra.mxu0 %v676
  %732 = vmatpush.bf16.msra.mxu0 %v675
  %733 = vmatpush.bf16.msra.mxu0 %v674
  %734 = vmatpush.bf16.msra.mxu0 %v673
  %735 = vmatpush.bf16.msra.mxu0 %v672
  %736 = vmatpush.bf16.msra.mxu0 %v671
  %737 = vmatpush.bf16.msra.mxu0 %v670
  %738 = vmatmul.bf16.gmra.mxu0 %v506
  %v739 = vpop.f32.mrf.mxu0
  %v740 = vadd.f32 %v726, %v739
  %v741 = vpop.f32.mrf.mxu0
  %v742 = vadd.f32 %v728, %v741
  %743 = vdwg.mxu0
  %v744 = vadd.f32 %v35, %v740
  %v745 = vadd.f32 %v36, %v742
  %s746 = scalar_lea.vmem %s2, 8
  %v747 = vld [vmem:[%s746] sm:$0x7]
  %v748 = vperm.slane %v747, 1
  %v749 = vmul.f32 %v744, %v748
  %v750 = vmul.f32 %v745, %v748
  %v751 = vperm.slane %v747, 2
  %v752 = vadd.f32 %v749, %v751
  %v753 = vadd.f32 %v750, %v751
  %vm754 = vcmp.gt.f32.partialorder %v752, 0.0
  %vm755 = vcmp.gt.f32.partialorder %v753, 0.0
  %v756 = vmul.f32 %v752, 0.33
  %v757 = vmul.f32 %v753, 0.33
  %v758 = vsel %vm754, %v752, %v756
  %v759 = vsel %vm755, %v753, %v757
  %v760 = vpack.c.bf16 %v758, %v758
  %v761 = vpack.c.bf16 %v759, %v759
  %v763 = vshrl.u32 %v760, 16
  %v765 = vrot.slane %v763, 7
  %v766 = vshll.u32 %v760, 16
  %v768 = vor.u32 %v765, %v766
  %v769 = vrot.slane %v765, 4
  %v771 = vshrl.u32 %v761, 16
  %v773 = vrot.slane %v771, 7
  %v774 = vshll.u32 %v761, 16
  %v776 = vor.u32 %v773, %v774
  %v777 = vsel %vm53, %v769, %v776
  %v778 = vrot.slane %v773, 4
  %v782 = vsel %vm75, %v768, %v460
  %783 = vst [vmem:[#allocation2] sm:$0xf] %v782
  %784 = vst [vmem:[#allocation2 + $0x4] sm:$0xf] %v777
  %v785 = vld [vmem:[#allocation2 + $0x8] sm:$0x1]
  %v786 = vsel %vm19, %v778, %v785
  %787 = vst [vmem:[#allocation2 + $0x8] sm:$0x1] %v786
  %v788 = vld [vmem:[#allocation2] sm:$0xf]
  %v789 = vld [vmem:[#allocation2 + $0x4] sm:$0xf]
  %v790 = vsel %vm93, %v788, 0
  %v791 = vsel %vm94, %v789, 0
  %v792 = vld [vmem:[#allocation2 + $0x8] sm:$0x1]
  %v793 = vld [vmem:[#allocation2] sm:$0xe]
  %v794 = vsel %vm124, %v793, 0
  %v795 = vsel %vm131, %v789, 0
  %v796 = vsel %vm138, %v792, 0
  %v799 = vunpack.c.l.b16 %v790
  %v800 = vunpack.c.l.b16 %v791
  %v801 = vpack.c.b16 %v800, %v799
  %v806 = vunpack.c.l.b16 %v788
  %v807 = vunpack.c.l.b16 %v789
  %v808 = vunpack.c.l.b16 %v792
  %v809 = vpack.c.b16 %v807, %v806
  %v810 = vpack.c.b16 %v808, %v808
  %v812 = vshrl.u32 %v809, 16
  %v814 = vshll.u32 %v809, 16
  %v816 = vrot.slane %v814, 1
  %v817 = vor.u32 %v812, %v816
  %v819 = vshll.u32 %v810, 16
  %v821 = vrot.slane %v819, 1
  %v822 = vsel %vm156, %v817, %v821
  %v827 = vunpack.c.l.b16 %v794
  %v828 = vunpack.c.l.b16 %v795
  %v829 = vunpack.c.l.b16 %v796
  %v830 = vpack.c.b16 %v828, %v827
  %v831 = vpack.c.b16 %v829, %v829
  %v832 = vrot.slane %v830, 1
  %v833 = vrot.slane %v831, 1
  %v834 = vsel %vm178, %v832, %v833
  %s836 = scalar_lea.vmem %s1, 384
  %v837 = vld [vmem:[%s836] sm:$0xf]
  %v838 = vld [vmem:[%s836 + $0x4] sm:$0xf]
  %v839 = vld [vmem:[%s836 + $0x8] sm:$0xf]
  %v840 = vld [vmem:[%s836 + $0xc] sm:$0xf]
  %v841 = vld [vmem:[%s836 + $0x10] sm:$0xf]
  %v842 = vld [vmem:[%s836 + $0x14] sm:$0xf]
  %v843 = vld [vmem:[%s836 + $0x18] sm:$0xf]
  %v844 = vld [vmem:[%s836 + $0x1c] sm:$0xf]
  %v845 = vld [vmem:[%s836 + $0x20] sm:$0xf]
  %v846 = vld [vmem:[%s836 + $0x24] sm:$0xf]
  %v847 = vld [vmem:[%s836 + $0x28] sm:$0xf]
  %v848 = vld [vmem:[%s836 + $0x2c] sm:$0xf]
  %v849 = vld [vmem:[%s836 + $0x30] sm:$0xf]
  %v850 = vld [vmem:[%s836 + $0x34] sm:$0xf]
  %v851 = vld [vmem:[%s836 + $0x38] sm:$0xf]
  %v852 = vld [vmem:[%s836 + $0x3c] sm:$0xf]
  %v853 = vld [vmem:[%s836 + $0x40] sm:$0xf]
  %v854 = vld [vmem:[%s836 + $0x44] sm:$0xf]
  %v855 = vld [vmem:[%s836 + $0x48] sm:$0xf]
  %v856 = vld [vmem:[%s836 + $0x4c] sm:$0xf]
  %v857 = vld [vmem:[%s836 + $0x50] sm:$0xf]
  %v858 = vld [vmem:[%s836 + $0x54] sm:$0xf]
  %v859 = vld [vmem:[%s836 + $0x58] sm:$0xf]
  %v860 = vld [vmem:[%s836 + $0x5c] sm:$0xf]
  %v861 = vld [vmem:[%s836 + $0x60] sm:$0xf]
  %v862 = vld [vmem:[%s836 + $0x64] sm:$0xf]
  %v863 = vld [vmem:[%s836 + $0x68] sm:$0xf]
  %v864 = vld [vmem:[%s836 + $0x6c] sm:$0xf]
  %v865 = vld [vmem:[%s836 + $0x70] sm:$0xf]
  %v866 = vld [vmem:[%s836 + $0x74] sm:$0xf]
  %v867 = vld [vmem:[%s836 + $0x78] sm:$0xf]
  %v868 = vld [vmem:[%s836 + $0x7c] sm:$0xf]
  %v869 = vld [vmem:[%s836 + $0x80] sm:$0xf]
  %v870 = vld [vmem:[%s836 + $0x84] sm:$0xf]
  %v871 = vld [vmem:[%s836 + $0x88] sm:$0xf]
  %v872 = vld [vmem:[%s836 + $0x8c] sm:$0xf]
  %v873 = vld [vmem:[%s836 + $0x90] sm:$0xf]
  %v874 = vld [vmem:[%s836 + $0x94] sm:$0xf]
  %v875 = vld [vmem:[%s836 + $0x98] sm:$0xf]
  %v876 = vld [vmem:[%s836 + $0x9c] sm:$0xf]
  %v877 = vld [vmem:[%s836 + $0xa0] sm:$0xf]
  %v878 = vld [vmem:[%s836 + $0xa4] sm:$0xf]
  %v879 = vld [vmem:[%s836 + $0xa8] sm:$0xf]
  %v880 = vld [vmem:[%s836 + $0xac] sm:$0xf]
  %v881 = vld [vmem:[%s836 + $0xb0] sm:$0xf]
  %v882 = vld [vmem:[%s836 + $0xb4] sm:$0xf]
  %v883 = vld [vmem:[%s836 + $0xb8] sm:$0xf]
  %v884 = vld [vmem:[%s836 + $0xbc] sm:$0xf]
  %v885 = vperm.slane %v747, 0
  %v934 = vunpack.c.l.b16 %v837
  %v935 = vunpack.c.l.b16 %v838
  %v936 = vunpack.c.l.b16 %v839
  %v937 = vunpack.c.l.b16 %v840
  %v938 = vunpack.c.l.b16 %v841
  %v939 = vunpack.c.l.b16 %v842
  %v940 = vunpack.c.l.b16 %v843
  %v941 = vunpack.c.l.b16 %v844
  %v942 = vunpack.c.l.b16 %v845
  %v943 = vunpack.c.l.b16 %v846
  %v944 = vunpack.c.l.b16 %v847
  %v945 = vunpack.c.l.b16 %v848
  %v946 = vunpack.c.l.b16 %v849
  %v947 = vunpack.c.l.b16 %v850
  %v948 = vunpack.c.l.b16 %v851
  %v949 = vunpack.c.l.b16 %v852
  %v950 = vunpack.c.l.b16 %v853
  %v951 = vunpack.c.l.b16 %v854
  %v952 = vunpack.c.l.b16 %v855
  %v953 = vunpack.c.l.b16 %v856
  %v954 = vunpack.c.l.b16 %v857
  %v955 = vunpack.c.l.b16 %v858
  %v956 = vunpack.c.l.b16 %v859
  %v957 = vunpack.c.l.b16 %v860
  %v958 = vunpack.c.l.b16 %v861
  %v959 = vunpack.c.l.b16 %v862
  %v960 = vunpack.c.l.b16 %v863
  %v961 = vunpack.c.l.b16 %v864
  %v962 = vunpack.c.l.b16 %v865
  %v963 = vunpack.c.l.b16 %v866
  %v964 = vunpack.c.l.b16 %v867
  %v965 = vunpack.c.l.b16 %v868
  %v966 = vunpack.c.l.b16 %v869
  %v967 = vunpack.c.l.b16 %v870
  %v968 = vunpack.c.l.b16 %v871
  %v969 = vunpack.c.l.b16 %v872
  %v970 = vunpack.c.l.b16 %v873
  %v971 = vunpack.c.l.b16 %v874
  %v972 = vunpack.c.l.b16 %v875
  %v973 = vunpack.c.l.b16 %v876
  %v974 = vunpack.c.l.b16 %v877
  %v975 = vunpack.c.l.b16 %v878
  %v976 = vunpack.c.l.b16 %v879
  %v977 = vunpack.c.l.b16 %v880
  %v978 = vunpack.c.l.b16 %v881
  %v979 = vunpack.c.l.b16 %v882
  %v980 = vunpack.c.l.b16 %v883
  %v981 = vunpack.c.l.b16 %v884
  %v982 = vpack.c.b16 %v935, %v934
  %v983 = vpack.c.b16 %v937, %v936
  %v984 = vpack.c.b16 %v939, %v938
  %v985 = vpack.c.b16 %v941, %v940
  %v986 = vpack.c.b16 %v943, %v942
  %v987 = vpack.c.b16 %v945, %v944
  %v988 = vpack.c.b16 %v947, %v946
  %v989 = vpack.c.b16 %v949, %v948
  %v990 = vpack.c.b16 %v951, %v950
  %v991 = vpack.c.b16 %v953, %v952
  %v992 = vpack.c.b16 %v955, %v954
  %v993 = vpack.c.b16 %v957, %v956
  %v994 = vpack.c.b16 %v959, %v958
  %v995 = vpack.c.b16 %v961, %v960
  %v996 = vpack.c.b16 %v963, %v962
  %v997 = vpack.c.b16 %v965, %v964
  %v998 = vpack.c.b16 %v967, %v966
  %v999 = vpack.c.b16 %v969, %v968
  %v1000 = vpack.c.b16 %v971, %v970
  %v1001 = vpack.c.b16 %v973, %v972
  %v1002 = vpack.c.b16 %v975, %v974
  %v1003 = vpack.c.b16 %v977, %v976
  %v1004 = vpack.c.b16 %v979, %v978
  %v1005 = vpack.c.b16 %v981, %v980
  %1030 = vmatpush.bf16.msra.mxu0 %v989
  %1031 = vmatpush.bf16.msra.mxu0 %v988
  %1032 = vmatpush.bf16.msra.mxu0 %v987
  %1033 = vmatpush.bf16.msra.mxu0 %v986
  %1034 = vmatpush.bf16.msra.mxu0 %v985
  %1035 = vmatpush.bf16.msra.mxu0 %v984
  %1036 = vmatpush.bf16.msra.mxu0 %v983
  %1037 = vmatpush.bf16.msra.mxu0 %v982
  %1038 = vmatmul.bf16.gmra.mxu0 %v801
  %v1039 = vpop.f32.mrf.mxu0
  %v1040 = vadd.f32 %v885, %v1039
  %v1041 = vpop.f32.mrf.mxu0
  %v1042 = vadd.f32 %v885, %v1041
  %1043 = vdwg.mxu0
  %1044 = vmatpush.bf16.msra.mxu0 %v997
  %1045 = vmatpush.bf16.msra.mxu0 %v996
  %1046 = vmatpush.bf16.msra.mxu0 %v995
  %1047 = vmatpush.bf16.msra.mxu0 %v994
  %1048 = vmatpush.bf16.msra.mxu0 %v993
  %1049 = vmatpush.bf16.msra.mxu0 %v992
  %1050 = vmatpush.bf16.msra.mxu0 %v991
  %1051 = vmatpush.bf16.msra.mxu0 %v990
  %1052 = vmatmul.bf16.gmra.mxu0 %v822
  %v1053 = vpop.f32.mrf.mxu0
  %v1054 = vadd.f32 %v1040, %v1053
  %v1055 = vpop.f32.mrf.mxu0
  %v1056 = vadd.f32 %v1042, %v1055
  %1057 = vdwg.mxu0
  %1058 = vmatpush.bf16.msra.mxu0 %v1005
  %1059 = vmatpush.bf16.msra.mxu0 %v1004
  %1060 = vmatpush.bf16.msra.mxu0 %v1003
  %1061 = vmatpush.bf16.msra.mxu0 %v1002
  %1062 = vmatpush.bf16.msra.mxu0 %v1001
  %1063 = vmatpush.bf16.msra.mxu0 %v1000
  %1064 = vmatpush.bf16.msra.mxu0 %v999
  %1065 = vmatpush.bf16.msra.mxu0 %v998
  %1066 = vmatmul.bf16.gmra.mxu0 %v834
  %v1067 = vpop.f32.mrf.mxu0
  %v1068 = vadd.f32 %v1054, %v1067
  %v1069 = vpop.f32.mrf.mxu0
  %v1070 = vadd.f32 %v1056, %v1069
  %1071 = vdwg.mxu0
  %s1072 = scalar_lea.vmem %s2, 12
  %v1073 = vld [vmem:[%s1072] sm:$0x7]
  %v1074 = vperm.slane %v1073, 1
  %v1075 = vmul.f32 %v1068, %v1074
  %v1076 = vmul.f32 %v1070, %v1074
  %v1077 = vperm.slane %v1073, 2
  %v1078 = vadd.f32 %v1075, %v1077
  %v1079 = vadd.f32 %v1076, %v1077
  %vm1080 = vcmp.gt.f32.partialorder %v1078, 0.0
  %vm1081 = vcmp.gt.f32.partialorder %v1079, 0.0
  %v1082 = vmul.f32 %v1078, 0.33
  %v1083 = vmul.f32 %v1079, 0.33
  %v1084 = vsel %vm1080, %v1078, %v1082
  %v1085 = vsel %vm1081, %v1079, %v1083
  %v1086 = vpack.c.bf16 %v1084, %v1084
  %v1087 = vpack.c.bf16 %v1085, %v1085
  %v1089 = vshrl.u32 %v1086, 16
  %v1091 = vrot.slane %v1089, 7
  %v1092 = vshll.u32 %v1086, 16
  %v1094 = vor.u32 %v1091, %v1092
  %v1095 = vrot.slane %v1091, 4
  %v1097 = vshrl.u32 %v1087, 16
  %v1099 = vrot.slane %v1097, 7
  %v1100 = vshll.u32 %v1087, 16
  %v1102 = vor.u32 %v1099, %v1100
  %v1103 = vsel %vm53, %v1095, %v1102
  %v1104 = vrot.slane %v1099, 4
  %v1108 = vsel %vm75, %v1094, %v788
  %1109 = vst [vmem:[#allocation2] sm:$0xf] %v1108
  %1110 = vst [vmem:[#allocation2 + $0x4] sm:$0xf] %v1103
  %v1111 = vld [vmem:[#allocation2 + $0x8] sm:$0x1]
  %v1112 = vsel %vm19, %v1104, %v1111
  %1113 = vst [vmem:[#allocation2 + $0x8] sm:$0x1] %v1112
  %v1114 = vld [vmem:[#allocation2] sm:$0xf]
  %v1115 = vld [vmem:[#allocation2 + $0x4] sm:$0xf]
  %v1116 = vsel %vm93, %v1114, 0
  %v1117 = vsel %vm94, %v1115, 0
  %v1118 = vld [vmem:[#allocation2 + $0x8] sm:$0x1]
  %v1119 = vld [vmem:[#allocation2] sm:$0xe]
  %v1120 = vsel %vm124, %v1119, 0
  %v1121 = vsel %vm131, %v1115, 0
  %v1122 = vsel %vm138, %v1118, 0
  %v1125 = vunpack.c.l.b16 %v1116
  %v1126 = vunpack.c.l.b16 %v1117
  %v1127 = vpack.c.b16 %v1126, %v1125
  %v1132 = vunpack.c.l.b16 %v1114
  %v1133 = vunpack.c.l.b16 %v1115
  %v1134 = vunpack.c.l.b16 %v1118
  %v1135 = vpack.c.b16 %v1133, %v1132
  %v1136 = vpack.c.b16 %v1134, %v1134
  %v1138 = vshrl.u32 %v1135, 16
  %v1140 = vshll.u32 %v1135, 16
  %v1142 = vrot.slane %v1140, 1
  %v1143 = vor.u32 %v1138, %v1142
  %v1145 = vshll.u32 %v1136, 16
  %v1147 = vrot.slane %v1145, 1
  %v1148 = vsel %vm156, %v1143, %v1147
  %v1153 = vunpack.c.l.b16 %v1120
  %v1154 = vunpack.c.l.b16 %v1121
  %v1155 = vunpack.c.l.b16 %v1122
  %v1156 = vpack.c.b16 %v1154, %v1153
  %v1157 = vpack.c.b16 %v1155, %v1155
  %v1158 = vrot.slane %v1156, 1
  %v1159 = vrot.slane %v1157, 1
  %v1160 = vsel %vm178, %v1158, %v1159
  %s1162 = scalar_lea.vmem %s1, 576
  %v1163 = vld [vmem:[%s1162] sm:$0xf]
  %v1164 = vld [vmem:[%s1162 + $0x4] sm:$0xf]
  %v1165 = vld [vmem:[%s1162 + $0x8] sm:$0xf]
  %v1166 = vld [vmem:[%s1162 + $0xc] sm:$0xf]
  %v1167 = vld [vmem:[%s1162 + $0x10] sm:$0xf]
  %v1168 = vld [vmem:[%s1162 + $0x14] sm:$0xf]
  %v1169 = vld [vmem:[%s1162 + $0x18] sm:$0xf]
  %v1170 = vld [vmem:[%s1162 + $0x1c] sm:$0xf]
  %v1171 = vld [vmem:[%s1162 + $0x20] sm:$0xf]
  %v1172 = vld [vmem:[%s1162 + $0x24] sm:$0xf]
  %v1173 = vld [vmem:[%s1162 + $0x28] sm:$0xf]
  %v1174 = vld [vmem:[%s1162 + $0x2c] sm:$0xf]
  %v1175 = vld [vmem:[%s1162 + $0x30] sm:$0xf]
  %v1176 = vld [vmem:[%s1162 + $0x34] sm:$0xf]
  %v1177 = vld [vmem:[%s1162 + $0x38] sm:$0xf]
  %v1178 = vld [vmem:[%s1162 + $0x3c] sm:$0xf]
  %v1179 = vld [vmem:[%s1162 + $0x40] sm:$0xf]
  %v1180 = vld [vmem:[%s1162 + $0x44] sm:$0xf]
  %v1181 = vld [vmem:[%s1162 + $0x48] sm:$0xf]
  %v1182 = vld [vmem:[%s1162 + $0x4c] sm:$0xf]
  %v1183 = vld [vmem:[%s1162 + $0x50] sm:$0xf]
  %v1184 = vld [vmem:[%s1162 + $0x54] sm:$0xf]
  %v1185 = vld [vmem:[%s1162 + $0x58] sm:$0xf]
  %v1186 = vld [vmem:[%s1162 + $0x5c] sm:$0xf]
  %v1187 = vld [vmem:[%s1162 + $0x60] sm:$0xf]
  %v1188 = vld [vmem:[%s1162 + $0x64] sm:$0xf]
  %v1189 = vld [vmem:[%s1162 + $0x68] sm:$0xf]
  %v1190 = vld [vmem:[%s1162 + $0x6c] sm:$0xf]
  %v1191 = vld [vmem:[%s1162 + $0x70] sm:$0xf]
  %v1192 = vld [vmem:[%s1162 + $0x74] sm:$0xf]
  %v1193 = vld [vmem:[%s1162 + $0x78] sm:$0xf]
  %v1194 = vld [vmem:[%s1162 + $0x7c] sm:$0xf]
  %v1195 = vld [vmem:[%s1162 + $0x80] sm:$0xf]
  %v1196 = vld [vmem:[%s1162 + $0x84] sm:$0xf]
  %v1197 = vld [vmem:[%s1162 + $0x88] sm:$0xf]
  %v1198 = vld [vmem:[%s1162 + $0x8c] sm:$0xf]
  %v1199 = vld [vmem:[%s1162 + $0x90] sm:$0xf]
  %v1200 = vld [vmem:[%s1162 + $0x94] sm:$0xf]
  %v1201 = vld [vmem:[%s1162 + $0x98] sm:$0xf]
  %v1202 = vld [vmem:[%s1162 + $0x9c] sm:$0xf]
  %v1203 = vld [vmem:[%s1162 + $0xa0] sm:$0xf]
  %v1204 = vld [vmem:[%s1162 + $0xa4] sm:$0xf]
  %v1205 = vld [vmem:[%s1162 + $0xa8] sm:$0xf]
  %v1206 = vld [vmem:[%s1162 + $0xac] sm:$0xf]
  %v1207 = vld [vmem:[%s1162 + $0xb0] sm:$0xf]
  %v1208 = vld [vmem:[%s1162 + $0xb4] sm:$0xf]
  %v1209 = vld [vmem:[%s1162 + $0xb8] sm:$0xf]
  %v1210 = vld [vmem:[%s1162 + $0xbc] sm:$0xf]
  %v1211 = vperm.slane %v1073, 0
  %v1260 = vunpack.c.l.b16 %v1163
  %v1261 = vunpack.c.l.b16 %v1164
  %v1262 = vunpack.c.l.b16 %v1165
  %v1263 = vunpack.c.l.b16 %v1166
  %v1264 = vunpack.c.l.b16 %v1167
  %v1265 = vunpack.c.l.b16 %v1168
  %v1266 = vunpack.c.l.b16 %v1169
  %v1267 = vunpack.c.l.b16 %v1170
  %v1268 = vunpack.c.l.b16 %v1171
  %v1269 = vunpack.c.l.b16 %v1172
  %v1270 = vunpack.c.l.b16 %v1173
  %v1271 = vunpack.c.l.b16 %v1174
  %v1272 = vunpack.c.l.b16 %v1175
  %v1273 = vunpack.c.l.b16 %v1176
  %v1274 = vunpack.c.l.b16 %v1177
  %v1275 = vunpack.c.l.b16 %v1178
  %v1276 = vunpack.c.l.b16 %v1179
  %v1277 = vunpack.c.l.b16 %v1180
  %v1278 = vunpack.c.l.b16 %v1181
  %v1279 = vunpack.c.l.b16 %v1182
  %v1280 = vunpack.c.l.b16 %v1183
  %v1281 = vunpack.c.l.b16 %v1184
  %v1282 = vunpack.c.l.b16 %v1185
  %v1283 = vunpack.c.l.b16 %v1186
  %v1284 = vunpack.c.l.b16 %v1187
  %v1285 = vunpack.c.l.b16 %v1188
  %v1286 = vunpack.c.l.b16 %v1189
  %v1287 = vunpack.c.l.b16 %v1190
  %v1288 = vunpack.c.l.b16 %v1191
  %v1289 = vunpack.c.l.b16 %v1192
  %v1290 = vunpack.c.l.b16 %v1193
  %v1291 = vunpack.c.l.b16 %v1194
  %v1292 = vunpack.c.l.b16 %v1195
  %v1293 = vunpack.c.l.b16 %v1196
  %v1294 = vunpack.c.l.b16 %v1197
  %v1295 = vunpack.c.l.b16 %v1198
  %v1296 = vunpack.c.l.b16 %v1199
  %v1297 = vunpack.c.l.b16 %v1200
  %v1298 = vunpack.c.l.b16 %v1201
  %v1299 = vunpack.c.l.b16 %v1202
  %v1300 = vunpack.c.l.b16 %v1203
  %v1301 = vunpack.c.l.b16 %v1204
  %v1302 = vunpack.c.l.b16 %v1205
  %v1303 = vunpack.c.l.b16 %v1206
  %v1304 = vunpack.c.l.b16 %v1207
  %v1305 = vunpack.c.l.b16 %v1208
  %v1306 = vunpack.c.l.b16 %v1209
  %v1307 = vunpack.c.l.b16 %v1210
  %v1308 = vpack.c.b16 %v1261, %v1260
  %v1309 = vpack.c.b16 %v1263, %v1262
  %v1310 = vpack.c.b16 %v1265, %v1264
  %v1311 = vpack.c.b16 %v1267, %v1266
  %v1312 = vpack.c.b16 %v1269, %v1268
  %v1313 = vpack.c.b16 %v1271, %v1270
  %v1314 = vpack.c.b16 %v1273, %v1272
  %v1315 = vpack.c.b16 %v1275, %v1274
  %v1316 = vpack.c.b16 %v1277, %v1276
  %v1317 = vpack.c.b16 %v1279, %v1278
  %v1318 = vpack.c.b16 %v1281, %v1280
  %v1319 = vpack.c.b16 %v1283, %v1282
  %v1320 = vpack.c.b16 %v1285, %v1284
  %v1321 = vpack.c.b16 %v1287, %v1286
  %v1322 = vpack.c.b16 %v1289, %v1288
  %v1323 = vpack.c.b16 %v1291, %v1290
  %v1324 = vpack.c.b16 %v1293, %v1292
  %v1325 = vpack.c.b16 %v1295, %v1294
  %v1326 = vpack.c.b16 %v1297, %v1296
  %v1327 = vpack.c.b16 %v1299, %v1298
  %v1328 = vpack.c.b16 %v1301, %v1300
  %v1329 = vpack.c.b16 %v1303, %v1302
  %v1330 = vpack.c.b16 %v1305, %v1304
  %v1331 = vpack.c.b16 %v1307, %v1306
  %1356 = vmatpush.bf16.msra.mxu0 %v1315
  %1357 = vmatpush.bf16.msra.mxu0 %v1314
  %1358 = vmatpush.bf16.msra.mxu0 %v1313
  %1359 = vmatpush.bf16.msra.mxu0 %v1312
  %1360 = vmatpush.bf16.msra.mxu0 %v1311
  %1361 = vmatpush.bf16.msra.mxu0 %v1310
  %1362 = vmatpush.bf16.msra.mxu0 %v1309
  %1363 = vmatpush.bf16.msra.mxu0 %v1308
  %1364 = vmatmul.bf16.gmra.mxu0 %v1127
  %v1365 = vpop.f32.mrf.mxu0
  %v1366 = vadd.f32 %v1211, %v1365
  %v1367 = vpop.f32.mrf.mxu0
  %v1368 = vadd.f32 %v1211, %v1367
  %1369 = vdwg.mxu0
  %1370 = vmatpush.bf16.msra.mxu0 %v1323
  %1371 = vmatpush.bf16.msra.mxu0 %v1322
  %1372 = vmatpush.bf16.msra.mxu0 %v1321
  %1373 = vmatpush.bf16.msra.mxu0 %v1320
  %1374 = vmatpush.bf16.msra.mxu0 %v1319
  %1375 = vmatpush.bf16.msra.mxu0 %v1318
  %1376 = vmatpush.bf16.msra.mxu0 %v1317
  %1377 = vmatpush.bf16.msra.mxu0 %v1316
  %1378 = vmatmul.bf16.gmra.mxu0 %v1148
  %v1379 = vpop.f32.mrf.mxu0
  %v1380 = vadd.f32 %v1366, %v1379
  %v1381 = vpop.f32.mrf.mxu0
  %v1382 = vadd.f32 %v1368, %v1381
  %1383 = vdwg.mxu0
  %1384 = vmatpush.bf16.msra.mxu0 %v1331
  %1385 = vmatpush.bf16.msra.mxu0 %v1330
  %1386 = vmatpush.bf16.msra.mxu0 %v1329
  %1387 = vmatpush.bf16.msra.mxu0 %v1328
  %1388 = vmatpush.bf16.msra.mxu0 %v1327
  %1389 = vmatpush.bf16.msra.mxu0 %v1326
  %1390 = vmatpush.bf16.msra.mxu0 %v1325
  %1391 = vmatpush.bf16.msra.mxu0 %v1324
  %1392 = vmatmul.bf16.gmra.mxu0 %v1160
  %v1393 = vpop.f32.mrf.mxu0
  %v1394 = vadd.f32 %v1380, %v1393
  %v1395 = vpop.f32.mrf.mxu0
  %v1396 = vadd.f32 %v1382, %v1395
  %1397 = vdwg.mxu0
  %v1398 = vadd.f32 %v744, %v1394
  %v1399 = vadd.f32 %v745, %v1396
  %v1400 = vpack.c.bf16 %v1398, %v1398
  %v1401 = vpack.c.bf16 %v1399, %v1399
  %1402 = vst [vmem:[%s3] sm:$0xf] %v1400
  %1403 = vst [vmem:[%s3 + $0x4] sm:$0xf] %v1401
  // Predicated region
  $region14: #{_lambda_.13} parent=0 // pred_check
    _
  $region15: #{_lambda_.13} parent=0 // pred_check_branch
    %1405 = sbr.rel (0) target = $region17
  $region16: #{_lambda_.13} parent=0 // pred_region
    _
  $region17: #{_lambda_.13} parent=0 // pred_fallthru
    _
  // Predicated region
  $region18: #{_lambda_.13} parent=0 // pred_check
    _
  $region19: #{_lambda_.13} parent=0 // pred_check_branch
    %1407 = sbr.rel (0) target = $region21
  $region20: #{_lambda_.13} parent=0 // pred_region
    _
  $region21: #{_lambda_.13} parent=0 // pred_fallthru
    _

// kernel: _lambda_.14
$region0: #{_lambda_.14}
  #allocation0 [shape = 'u32[]', space=smem, size = 0x4, offset = 0x4, fixed_abs, tag = 'smem constant byte address 0x4 - core index']
  #allocation1 [shape = 'u32[72,128]{1,0:T(1,128)}', space=vmem, size = 0x9000, scoped, tag = 'internal scratch']
  %s0 = inlined_call_operand.vmem [shape: bf16[8,256], index: 0, kind: input, shape index: {}]
  %s1 = inlined_call_operand.vmem [shape: bf16[256,128], index: 1, kind: input, shape index: {}]
  %s2 = inlined_call_operand.vmem [shape: f32[2,256], index: 2, kind: input, shape index: {}]
  %s3 = inlined_call_operand.vmem [shape: f32[1,128], index: 3, kind: input, shape index: {}]
  %s4 = inlined_call_operand.vmem [shape: bf16[8,128], index: 4, kind: output, shape index: {}]
  %s5 = sld [smem:[#allocation0]]
  $region26: #{_lambda_.14} parent=0
    _
  %s7 = ssub.s32 1, %s5
  %s8 = scalar_select 0, %s7, %s5
  // Predicated region
  $region2: #{_lambda_.14} parent=0 // pred_check
    _
  $region3: #{_lambda_.14} parent=0 // pred_check_branch
    %10 = sbr.rel (0) target = $region5
  $region4: #{_lambda_.14} parent=0 // pred_region
    _
  $region5: #{_lambda_.14} parent=0 // pred_fallthru
    _
  // Predicated region
  $region6: #{_lambda_.14} parent=0 // pred_check
    _
  $region7: #{_lambda_.14} parent=0 // pred_check_branch
    %12 = sbr.rel (0) target = $region9
  $region8: #{_lambda_.14} parent=0 // pred_region
    _
  $region9: #{_lambda_.14} parent=0 // pred_fallthru
    _
  // Predicated region
  $region10: #{_lambda_.14} parent=0 // pred_check
    _
  $region11: #{_lambda_.14} parent=0 // pred_check_branch
    %14 = sbr.rel (0) target = $region13
  $region12: #{_lambda_.14} parent=0 // pred_region
    _
  $region13: #{_lambda_.14} parent=0 // pred_fallthru
    _
  // Predicated region
  $region14: #{_lambda_.14} parent=0 // pred_check
    _
  $region15: #{_lambda_.14} parent=0 // pred_check_branch
    %16 = sbr.rel (0) target = $region17
  $region16: #{_lambda_.14} parent=0 // pred_region
    _
  $region17: #{_lambda_.14} parent=0 // pred_fallthru
    _
  %v17 = vld [vmem:[%s0] sm:$0xff]
  %v18 = vunpack.c.l.bf16 %v17
  %v19 = vunpack.c.h.bf16 %v17
  %v20 = vld [vmem:[%s2] sm:$0xf]
  %v22 = vperm.slane %v20, 0
  %v23 = vperm.slane %v20, 2
  %v26 = vperm.slane %v22, 0
  %v27 = vperm.slane %v23, 0
  %v28 = vmul.f32 %v18, %v26
  %v29 = vmul.f32 %v19, %v27
  %v30 = vperm.slane %v20, 1
  %v31 = vperm.slane %v20, 3
  %v34 = vperm.slane %v30, 1
  %v35 = vperm.slane %v31, 1
  %v36 = vadd.f32 %v28, %v34
  %v37 = vadd.f32 %v29, %v35
  %vm38 = vcmp.gt.f32.partialorder %v36, 0.0
  %vm39 = vcmp.gt.f32.partialorder %v37, 0.0
  %v40 = vmul.f32 %v36, 0.33
  %v41 = vmul.f32 %v37, 0.33
  %v42 = vsel %vm38, %v36, %v40
  %v43 = vsel %vm39, %v37, %v41
  %v44 = vpack.c.bf16 %v42, %v42
  %v45 = vpack.c.bf16 %v43, %v43
  %v46 = vld [vmem:[%s1] sm:$0xf]
  %v47 = vld [vmem:[%s1 + $0x4] sm:$0xf]
  %v48 = vld [vmem:[%s1 + $0x8] sm:$0xf]
  %v49 = vld [vmem:[%s1 + $0xc] sm:$0xf]
  %v50 = vld [vmem:[%s1 + $0x10] sm:$0xf]
  %v51 = vld [vmem:[%s1 + $0x14] sm:$0xf]
  %v52 = vld [vmem:[%s1 + $0x18] sm:$0xf]
  %v53 = vld [vmem:[%s1 + $0x1c] sm:$0xf]
  %v54 = vld [vmem:[%s1 + $0x20] sm:$0xf]
  %v55 = vld [vmem:[%s1 + $0x24] sm:$0xf]
  %v56 = vld [vmem:[%s1 + $0x28] sm:$0xf]
  %v57 = vld [vmem:[%s1 + $0x2c] sm:$0xf]
  %v58 = vld [vmem:[%s1 + $0x30] sm:$0xf]
  %v59 = vld [vmem:[%s1 + $0x34] sm:$0xf]
  %v60 = vld [vmem:[%s1 + $0x38] sm:$0xf]
  %v61 = vld [vmem:[%s1 + $0x3c] sm:$0xf]
  %v62 = vld [vmem:[%s1 + $0x40] sm:$0xf]
  %v63 = vld [vmem:[%s1 + $0x44] sm:$0xf]
  %v64 = vld [vmem:[%s1 + $0x48] sm:$0xf]
  %v65 = vld [vmem:[%s1 + $0x4c] sm:$0xf]
  %v66 = vld [vmem:[%s1 + $0x50] sm:$0xf]
  %v67 = vld [vmem:[%s1 + $0x54] sm:$0xf]
  %v68 = vld [vmem:[%s1 + $0x58] sm:$0xf]
  %v69 = vld [vmem:[%s1 + $0x5c] sm:$0xf]
  %v70 = vld [vmem:[%s1 + $0x60] sm:$0xf]
  %v71 = vld [vmem:[%s1 + $0x64] sm:$0xf]
  %v72 = vld [vmem:[%s1 + $0x68] sm:$0xf]
  %v73 = vld [vmem:[%s1 + $0x6c] sm:$0xf]
  %v74 = vld [vmem:[%s1 + $0x70] sm:$0xf]
  %v75 = vld [vmem:[%s1 + $0x74] sm:$0xf]
  %v76 = vld [vmem:[%s1 + $0x78] sm:$0xf]
  %v77 = vld [vmem:[%s1 + $0x7c] sm:$0xf]
  %v78 = vld [vmem:[%s3] sm:$0x1]
  %v80 = vperm.slane %v78, 0
  %v114 = vunpack.c.l.b16 %v46
  %v115 = vunpack.c.l.b16 %v47
  %v116 = vunpack.c.l.b16 %v48
  %v117 = vunpack.c.l.b16 %v49
  %v118 = vunpack.c.l.b16 %v50
  %v119 = vunpack.c.l.b16 %v51
  %v120 = vunpack.c.l.b16 %v52
  %v121 = vunpack.c.l.b16 %v53
  %v122 = vunpack.c.l.b16 %v54
  %v123 = vunpack.c.l.b16 %v55
  %v124 = vunpack.c.l.b16 %v56
  %v125 = vunpack.c.l.b16 %v57
  %v126 = vunpack.c.l.b16 %v58
  %v127 = vunpack.c.l.b16 %v59
  %v128 = vunpack.c.l.b16 %v60
  %v129 = vunpack.c.l.b16 %v61
  %v130 = vunpack.c.l.b16 %v62
  %v131 = vunpack.c.l.b16 %v63
  %v132 = vunpack.c.l.b16 %v64
  %v133 = vunpack.c.l.b16 %v65
  %v134 = vunpack.c.l.b16 %v66
  %v135 = vunpack.c.l.b16 %v67
  %v136 = vunpack.c.l.b16 %v68
  %v137 = vunpack.c.l.b16 %v69
  %v138 = vunpack.c.l.b16 %v70
  %v139 = vunpack.c.l.b16 %v71
  %v140 = vunpack.c.l.b16 %v72
  %v141 = vunpack.c.l.b16 %v73
  %v142 = vunpack.c.l.b16 %v74
  %v143 = vunpack.c.l.b16 %v75
  %v144 = vunpack.c.l.b16 %v76
  %v145 = vunpack.c.l.b16 %v77
  %v146 = vpack.c.b16 %v115, %v114
  %v147 = vpack.c.b16 %v117, %v116
  %v148 = vpack.c.b16 %v119, %v118
  %v149 = vpack.c.b16 %v121, %v120
  %v150 = vpack.c.b16 %v123, %v122
  %v151 = vpack.c.b16 %v125, %v124
  %v152 = vpack.c.b16 %v127, %v126
  %v153 = vpack.c.b16 %v129, %v128
  %v154 = vpack.c.b16 %v131, %v130
  %v155 = vpack.c.b16 %v133, %v132
  %v156 = vpack.c.b16 %v135, %v134
  %v157 = vpack.c.b16 %v137, %v136
  %v158 = vpack.c.b16 %v139, %v138
  %v159 = vpack.c.b16 %v141, %v140
  %v160 = vpack.c.b16 %v143, %v142
  %v161 = vpack.c.b16 %v145, %v144
  %178 = vmatpush.bf16.msra.mxu0 %v153
  %179 = vmatpush.bf16.msra.mxu0 %v152
  %180 = vmatpush.bf16.msra.mxu0 %v151
  %181 = vmatpush.bf16.msra.mxu0 %v150
  %182 = vmatpush.bf16.msra.mxu0 %v149
  %183 = vmatpush.bf16.msra.mxu0 %v148
  %184 = vmatpush.bf16.msra.mxu0 %v147
  %185 = vmatpush.bf16.msra.mxu0 %v146
  %186 = vmatmul.bf16.gmra.mxu0 %v44
  %v187 = vpop.f32.mrf.mxu0
  %v188 = vadd.f32 %v80, %v187
  %v189 = vpop.f32.mrf.mxu0
  %190 = vdwg.mxu0
  %191 = vmatpush.bf16.msra.mxu0 %v161
  %192 = vmatpush.bf16.msra.mxu0 %v160
  %193 = vmatpush.bf16.msra.mxu0 %v159
  %194 = vmatpush.bf16.msra.mxu0 %v158
  %195 = vmatpush.bf16.msra.mxu0 %v157
  %196 = vmatpush.bf16.msra.mxu0 %v156
  %197 = vmatpush.bf16.msra.mxu0 %v155
  %198 = vmatpush.bf16.msra.mxu0 %v154
  %199 = vmatmul.bf16.gmra.mxu0 %v45
  %v200 = vpop.f32.mrf.mxu0
  %v201 = vadd.f32 %v188, %v200
  %v202 = vpop.f32.mrf.mxu0
  %203 = vdwg.mxu0
  %v204 = vpack.c.bf16 %v201, %v201
  %205 = vst [vmem:[%s4] sm:$0xf] %v204
  // Predicated region
  $region18: #{_lambda_.14} parent=0 // pred_check
    _
  $region19: #{_lambda_.14} parent=0 // pred_check_branch
    %207 = sbr.rel (0) target = $region21
  $region20: #{_lambda_.14} parent=0 // pred_region
    _
  $region21: #{_lambda_.14} parent=0 // pred_fallthru
    _
  // Predicated region
  $region22: #{_lambda_.14} parent=0 // pred_check
    _
  $region23: #{_lambda_.14} parent=0 // pred_check_branch
    %209 = sbr.rel (0) target = $region25
  $region24: #{_lambda_.14} parent=0 // pred_region
    _
  $region25: #{_lambda_.14} parent=0 // pred_fallthru
    _

// kernel: _lambda_.11
$region0: #{_lambda_.11}
  #allocation0 [shape = 'u32[]', space=smem, size = 0x4, offset = 0x4, fixed_abs, tag = 'smem constant byte address 0x4 - core index']
  #allocation1 [shape = 'u32[72,128]{1,0:T(1,128)}', space=vmem, size = 0x9000, scoped, tag = 'internal scratch']
  #allocation2 [shape = 'bf16[34,128]{1,0:T(8,128)(2,1)}', space=vmem, size = 0x2800, scoped, tag = 'scratch operand']
  %s0 = inlined_call_operand.vmem [shape: bf16[32,128], index: 0, kind: input, shape index: {}]
  %s1 = inlined_call_operand.vmem [shape: bf16[4,384,128], index: 1, kind: input, shape index: {}]
  %s2 = inlined_call_operand.vmem [shape: f32[4,3,128], index: 2, kind: input, shape index: {}]
  %s3 = inlined_call_operand.vmem [shape: bf16[32,128], index: 3, kind: output, shape index: {}]
  %s4 = sld [smem:[#allocation0]]
  $region22: #{_lambda_.11} parent=0
    _
  %s6 = ssub.s32 1, %s4
  %s7 = scalar_select 0, %s6, %s4
  // Predicated region
  $region2: #{_lambda_.11} parent=0 // pred_check
    _
  $region3: #{_lambda_.11} parent=0 // pred_check_branch
    %9 = sbr.rel (0) target = $region5
  $region4: #{_lambda_.11} parent=0 // pred_region
    _
  $region5: #{_lambda_.11} parent=0 // pred_fallthru
    _
  // Predicated region
  $region6: #{_lambda_.11} parent=0 // pred_check
    _
  $region7: #{_lambda_.11} parent=0 // pred_check_branch
    %11 = sbr.rel (0) target = $region9
  $region8: #{_lambda_.11} parent=0 // pred_region
    _
  $region9: #{_lambda_.11} parent=0 // pred_fallthru
    _
  // Predicated region
  $region10: #{_lambda_.11} parent=0 // pred_check
    _
  $region11: #{_lambda_.11} parent=0 // pred_check_branch
    %13 = sbr.rel (0) target = $region13
  $region12: #{_lambda_.11} parent=0 // pred_region
    _
  $region13: #{_lambda_.11} parent=0 // pred_fallthru
    _
  %vm17 = vcmask 1040384
  %vm18 = vsmask.f32 256
  %vm19 = vmand %vm17, %vm18
  %v20 = vld [vmem:[#allocation2] sm:$0x1]
  %v21 = vsel %vm19, 0, %v20
  %22 = vst [vmem:[#allocation2] sm:$0x1] %v21
  %vm23 = vsmask.f32 7938
  %vm24 = vmand %vm17, %vm23
  %v25 = vld [vmem:[#allocation2 + $0x10] sm:$0x1]
  %v26 = vsel %vm24, 0, %v25
  %27 = vst [vmem:[#allocation2 + $0x10] sm:$0x1] %v26
  %v28 = vlaneseq
  %v29 = vshrl.u32 %v28, 7
  %v30 = vadd.s32 %v29, 8
  %v31 = vadd.s32 %v29, 16
  %v32 = vadd.s32 %v29, 24
  %v33 = vand.u32 %v29, 15
  %v34 = vand.u32 %v30, 15
  %v35 = vand.u32 %v31, 15
  %v36 = vand.u32 %v32, 15
  %v37 = vld [vmem:[%s0] sm:$0xf]
  %v38 = vld [vmem:[%s0 + $0x4] sm:$0xf]
  %v39 = vld [vmem:[%s0 + $0x8] sm:$0xf]
  %v40 = vld [vmem:[%s0 + $0xc] sm:$0xf]
  %v41 = vunpack.c.l.bf16 %v37
  %v42 = vunpack.c.l.bf16 %v38
  %v43 = vunpack.c.l.bf16 %v39
  %v44 = vunpack.c.l.bf16 %v40
  %v45 = vld [vmem:[%s2] sm:$0x7]
  %v46 = vperm.slane %v45, 1
  %v47 = vmul.f32 %v41, %v46
  %v48 = vmul.f32 %v42, %v46
  %v49 = vmul.f32 %v43, %v46
  %v50 = vmul.f32 %v44, %v46
  %v51 = vperm.slane %v45, 2
  %v52 = vadd.f32 %v47, %v51
  %v53 = vadd.f32 %v48, %v51
  %v54 = vadd.f32 %v49, %v51
  %v55 = vadd.f32 %v50, %v51
  %vm56 = vcmp.gt.f32.partialorder %v52, 0.0
  %vm57 = vcmp.gt.f32.partialorder %v53, 0.0
  %vm58 = vcmp.gt.f32.partialorder %v54, 0.0
  %vm59 = vcmp.gt.f32.partialorder %v55, 0.0
  %v60 = vmul.f32 %v52, 0.33
  %v61 = vmul.f32 %v53, 0.33
  %v62 = vmul.f32 %v54, 0.33
  %v63 = vmul.f32 %v55, 0.33
  %v64 = vsel %vm56, %v52, %v60
  %v65 = vsel %vm57, %v53, %v61
  %v66 = vsel %vm58, %v54, %v62
  %v67 = vsel %vm59, %v55, %v63
  %v68 = vpack.c.bf16 %v64, %v64
  %v69 = vpack.c.bf16 %v65, %v65
  %v70 = vpack.c.bf16 %v66, %v66
  %v71 = vpack.c.bf16 %v67, %v67
  %vm72 = vsmask.f32 4368
  %vm73 = vmor %vm18, %vm72
  %v75 = vshrl.u32 %v68, 16
  %v77 = vrot.slane %v75, 7
  %v78 = vshll.u32 %v68, 16
  %v80 = vor.u32 %v77, %v78
  %v81 = vrot.slane %v77, 4
  %v83 = vshrl.u32 %v69, 16
  %v85 = vrot.slane %v83, 7
  %v86 = vshll.u32 %v69, 16
  %v88 = vor.u32 %v85, %v86
  %v89 = vsel %vm73, %v81, %v88
  %v90 = vrot.slane %v85, 4
  %v92 = vshrl.u32 %v70, 16
  %v94 = vrot.slane %v92, 7
  %v95 = vshll.u32 %v70, 16
  %v97 = vor.u32 %v94, %v95
  %v98 = vsel %vm73, %v90, %v97
  %v99 = vrot.slane %v94, 4
  %v101 = vshrl.u32 %v71, 16
  %v103 = vrot.slane %v101, 7
  %v104 = vshll.u32 %v71, 16
  %v106 = vor.u32 %v103, %v104
  %v107 = vsel %vm73, %v99, %v106
  %v108 = vrot.slane %v103, 4
  %vm114 = vcmask 1043456
  %vm115 = vmand %vm114, %vm23
  %v116 = vld [vmem:[#allocation2] sm:$0xf]
  %v117 = vsel %vm115, %v80, %v116
  %118 = vst [vmem:[#allocation2] sm:$0xf] %v117
  %119 = vst [vmem:[#allocation2 + $0x4] sm:$0xf] %v89
  %120 = vst [vmem:[#allocation2 + $0x8] sm:$0xf] %v98
  %121 = vst [vmem:[#allocation2 + $0xc] sm:$0xf] %v107
  %v122 = vld [vmem:[#allocation2 + $0x10] sm:$0x1]
  %v123 = vsel %vm19, %v108, %v122
  %124 = vst [vmem:[#allocation2 + $0x10] sm:$0x1] %v123
  %v125 = vld [vmem:[#allocation2] sm:$0xf]
  %v126 = vld [vmem:[#allocation2 + $0x4] sm:$0xf]
  %v127 = vld [vmem:[#allocation2 + $0x8] sm:$0xf]
  %v128 = vld [vmem:[#allocation2 + $0xc] sm:$0xf]
  %v129 = vadd.s32 %v33, 4294967295
  %v130 = vadd.s32 %v34, 4294967295
  %v131 = vadd.s32 %v35, 4294967295
  %v132 = vadd.s32 %v36, 4294967295
  %vm133 = vcmp.ge.s32.totalorder %v129, 0
  %vm134 = vcmp.ge.s32.totalorder %v130, 0
  %vm135 = vcmp.ge.s32.totalorder %v131, 0
  %vm136 = vcmp.ge.s32.totalorder %v132, 0
  %vm137 = vcmp.lt.s32.totalorder %v129, 16
  %vm138 = vcmp.lt.s32.totalorder %v130, 16
  %vm139 = vcmp.lt.s32.totalorder %v131, 16
  %vm140 = vcmp.lt.s32.totalorder %v132, 16
  %vm141 = vmand %vm133, %vm137
  %vm142 = vmand %vm134, %vm138
  %vm143 = vmand %vm135, %vm139
  %vm144 = vmand %vm136, %vm140
  %vm145 = vmpackc.low %vm141, %vm141
  %vm146 = vmpackc.low %vm142, %vm142
  %vm147 = vmpackc.low %vm143, %vm143
  %vm148 = vmpackc.low %vm144, %vm144
  %v149 = vsel %vm145, %v125, 0
  %v150 = vsel %vm146, %v126, 0
  %v151 = vsel %vm147, %v127, 0
  %v152 = vsel %vm148, %v128, 0
  %v153 = vld [vmem:[#allocation2 + $0x10] sm:$0x1]
  %v154 = vld [vmem:[#allocation2] sm:$0xe]
  %v155 = vadd.s32 %v33, 1
  %v156 = vadd.s32 %v34, 1
  %v157 = vadd.s32 %v35, 1
  %v158 = vadd.s32 %v36, 1
  %vm159 = vcmp.ge.s32.totalorder %v155, 0
  %vm160 = vcmp.ge.s32.totalorder %v156, 0
  %vm161 = vcmp.ge.s32.totalorder %v157, 0
  %vm162 = vcmp.ge.s32.totalorder %v158, 0
  %vm163 = vcmp.lt.s32.totalorder %v155, 16
  %vm164 = vcmp.lt.s32.totalorder %v156, 16
  %vm165 = vcmp.lt.s32.totalorder %v157, 16
  %vm166 = vcmp.lt.s32.totalorder %v158, 16
  %vm167 = vmand %vm159, %vm163
  %vm168 = vmand %vm160, %vm164
  %vm169 = vmand %vm161, %vm165
  %vm170 = vmand %vm162, %vm166
  %vm171 = vmpackc.low %vm167, %vm167
  %vm172 = vmpackc.low %vm168, %vm168
  %vm173 = vmpackc.low %vm169, %vm169
  %vm174 = vmpackc.low %vm170, %vm170
  %v175 = vsel %vm171, 65537, 0
  %v176 = vsel %vm172, 65537, 0
  %v177 = vsel %vm173, 65537, 0
  %v178 = vsel %vm174, 65537, 0
  %vm179 = vcmask 1044484
  %vm180 = vmor %vm17, %vm179
  %v181 = vrot.slane %v175, 7
  %v182 = vrot.slane %v181, 4
  %v183 = vrot.slane %v176, 7
  %v184 = vsel %vm180, %v182, %v183
  %v185 = vrot.slane %v183, 4
  %v186 = vrot.slane %v177, 7
  %v187 = vsel %vm180, %v185, %v186
  %v188 = vrot.slane %v186, 4
  %v189 = vrot.slane %v178, 7
  %v190 = vsel %vm180, %v188, %v189
  %v191 = vrot.slane %v189, 4
  %v192 = vunpack.c.l.b16 %v181
  %v193 = vunpack.c.h.b16 %v181
  %v194 = vunpack.c.l.b16 0
  %v195 = vunpack.c.h.b16 0
  %vm196 = vcmp.ne.s32.totalorder %v192, %v194
  %vm197 = vcmp.ne.s32.totalorder %v193, %v195
  %vm198 = vmpackc.low %vm197, %vm196
  %v199 = vunpack.c.l.b16 %v184
  %v200 = vunpack.c.h.b16 %v184
  %v201 = vunpack.c.l.b16 0
  %v202 = vunpack.c.h.b16 0
  %vm203 = vcmp.ne.s32.totalorder %v199, %v201
  %vm204 = vcmp.ne.s32.totalorder %v200, %v202
  %vm205 = vmpackc.low %vm204, %vm203
  %v206 = vunpack.c.l.b16 %v187
  %v207 = vunpack.c.h.b16 %v187
  %v208 = vunpack.c.l.b16 0
  %v209 = vunpack.c.h.b16 0
  %vm210 = vcmp.ne.s32.totalorder %v206, %v208
  %vm211 = vcmp.ne.s32.totalorder %v207, %v209
  %vm212 = vmpackc.low %vm211, %vm210
  %v213 = vunpack.c.l.b16 %v190
  %v214 = vunpack.c.h.b16 %v190
  %v215 = vunpack.c.l.b16 0
  %v216 = vunpack.c.h.b16 0
  %vm217 = vcmp.ne.s32.totalorder %v213, %v215
  %vm218 = vcmp.ne.s32.totalorder %v214, %v216
  %vm219 = vmpackc.low %vm218, %vm217
  %v220 = vunpack.c.l.b16 %v191
  %v221 = vunpack.c.h.b16 %v191
  %v222 = vunpack.c.l.b16 0
  %v223 = vunpack.c.h.b16 0
  %vm224 = vcmp.ne.s32.totalorder %v220, %v222
  %vm225 = vcmp.ne.s32.totalorder %v221, %v223
  %vm226 = vmpackc.low %vm225, %vm224
  %v227 = vsel %vm198, %v154, 0
  %v228 = vsel %vm205, %v126, 0
  %v229 = vsel %vm212, %v127, 0
  %v230 = vsel %vm219, %v128, 0
  %v231 = vsel %vm226, %v153, 0
  %v236 = vunpack.c.l.b16 %v149
  %v237 = vunpack.c.l.b16 %v150
  %v238 = vunpack.c.l.b16 %v151
  %v239 = vunpack.c.l.b16 %v152
  %v240 = vpack.c.b16 %v237, %v236
  %v241 = vpack.c.b16 %v239, %v238
  %v249 = vunpack.c.l.b16 %v125
  %v250 = vunpack.c.l.b16 %v126
  %v251 = vunpack.c.l.b16 %v127
  %v252 = vunpack.c.l.b16 %v128
  %v253 = vunpack.c.l.b16 %v153
  %v254 = vpack.c.b16 %v250, %v249
  %v255 = vpack.c.b16 %v252, %v251
  %v256 = vpack.c.b16 %v253, %v253
  %vm257 = vsmask.f32 7424
  %v259 = vshrl.u32 %v254, 16
  %v261 = vshll.u32 %v254, 16
  %v263 = vrot.slane %v261, 1
  %v264 = vor.u32 %v259, %v263
  %v266 = vshll.u32 %v255, 16
  %v268 = vrot.slane %v266, 1
  %v269 = vsel %vm257, %v264, %v268
  %v270 = vshrl.u32 %v255, 16
  %v272 = vor.u32 %v270, %v268
  %v274 = vshll.u32 %v256, 16
  %v276 = vrot.slane %v274, 1
  %v277 = vsel %vm257, %v272, %v276
  %v285 = vunpack.c.l.b16 %v227
  %v286 = vunpack.c.l.b16 %v228
  %v287 = vunpack.c.l.b16 %v229
  %v288 = vunpack.c.l.b16 %v230
  %v289 = vunpack.c.l.b16 %v231
  %v290 = vpack.c.b16 %v286, %v285
  %v291 = vpack.c.b16 %v288, %v287
  %v292 = vpack.c.b16 %v289, %v289
  %vm293 = vcmask 1046528
  %v294 = vrot.slane %v290, 1
  %v295 = vrot.slane %v291, 1
  %v296 = vsel %vm293, %v294, %v295
  %v297 = vrot.slane %v292, 1
  %v298 = vsel %vm293, %v295, %v297
  %v301 = vld [vmem:[%s1] sm:$0xf]
  %v302 = vld [vmem:[%s1 + $0x4] sm:$0xf]
  %v303 = vld [vmem:[%s1 + $0x8] sm:$0xf]
  %v304 = vld [vmem:[%s1 + $0xc] sm:$0xf]
  %v305 = vld [vmem:[%s1 + $0x10] sm:$0xf]
  %v306 = vld [vmem:[%s1 + $0x14] sm:$0xf]
  %v307 = vld [vmem:[%s1 + $0x18] sm:$0xf]
  %v308 = vld [vmem:[%s1 + $0x1c] sm:$0xf]
  %v309 = vld [vmem:[%s1 + $0x20] sm:$0xf]
  %v310 = vld [vmem:[%s1 + $0x24] sm:$0xf]
  %v311 = vld [vmem:[%s1 + $0x28] sm:$0xf]
  %v312 = vld [vmem:[%s1 + $0x2c] sm:$0xf]
  %v313 = vld [vmem:[%s1 + $0x30] sm:$0xf]
  %v314 = vld [vmem:[%s1 + $0x34] sm:$0xf]
  %v315 = vld [vmem:[%s1 + $0x38] sm:$0xf]
  %v316 = vld [vmem:[%s1 + $0x3c] sm:$0xf]
  %v317 = vld [vmem:[%s1 + $0x40] sm:$0xf]
  %v318 = vld [vmem:[%s1 + $0x44] sm:$0xf]
  %v319 = vld [vmem:[%s1 + $0x48] sm:$0xf]
  %v320 = vld [vmem:[%s1 + $0x4c] sm:$0xf]
  %v321 = vld [vmem:[%s1 + $0x50] sm:$0xf]
  %v322 = vld [vmem:[%s1 + $0x54] sm:$0xf]
  %v323 = vld [vmem:[%s1 + $0x58] sm:$0xf]
  %v324 = vld [vmem:[%s1 + $0x5c] sm:$0xf]
  %v325 = vld [vmem:[%s1 + $0x60] sm:$0xf]
  %v326 = vld [vmem:[%s1 + $0x64] sm:$0xf]
  %v327 = vld [vmem:[%s1 + $0x68] sm:$0xf]
  %v328 = vld [vmem:[%s1 + $0x6c] sm:$0xf]
  %v329 = vld [vmem:[%s1 + $0x70] sm:$0xf]
  %v330 = vld [vmem:[%s1 + $0x74] sm:$0xf]
  %v331 = vld [vmem:[%s1 + $0x78] sm:$0xf]
  %v332 = vld [vmem:[%s1 + $0x7c] sm:$0xf]
  %v333 = vld [vmem:[%s1 + $0x80] sm:$0xf]
  %v334 = vld [vmem:[%s1 + $0x84] sm:$0xf]
  %v335 = vld [vmem:[%s1 + $0x88] sm:$0xf]
  %v336 = vld [vmem:[%s1 + $0x8c] sm:$0xf]
  %v337 = vld [vmem:[%s1 + $0x90] sm:$0xf]
  %v338 = vld [vmem:[%s1 + $0x94] sm:$0xf]
  %v339 = vld [vmem:[%s1 + $0x98] sm:$0xf]
  %v340 = vld [vmem:[%s1 + $0x9c] sm:$0xf]
  %v341 = vld [vmem:[%s1 + $0xa0] sm:$0xf]
  %v342 = vld [vmem:[%s1 + $0xa4] sm:$0xf]
  %v343 = vld [vmem:[%s1 + $0xa8] sm:$0xf]
  %v344 = vld [vmem:[%s1 + $0xac] sm:$0xf]
  %v345 = vld [vmem:[%s1 + $0xb0] sm:$0xf]
  %v346 = vld [vmem:[%s1 + $0xb4] sm:$0xf]
  %v347 = vld [vmem:[%s1 + $0xb8] sm:$0xf]
  %v348 = vld [vmem:[%s1 + $0xbc] sm:$0xf]
  %v349 = vperm.slane %v45, 0
  %v398 = vunpack.c.l.b16 %v301
  %v399 = vunpack.c.l.b16 %v302
  %v400 = vunpack.c.l.b16 %v303
  %v401 = vunpack.c.l.b16 %v304
  %v402 = vunpack.c.l.b16 %v305
  %v403 = vunpack.c.l.b16 %v306
  %v404 = vunpack.c.l.b16 %v307
  %v405 = vunpack.c.l.b16 %v308
  %v406 = vunpack.c.l.b16 %v309
  %v407 = vunpack.c.l.b16 %v310
  %v408 = vunpack.c.l.b16 %v311
  %v409 = vunpack.c.l.b16 %v312
  %v410 = vunpack.c.l.b16 %v313
  %v411 = vunpack.c.l.b16 %v314
  %v412 = vunpack.c.l.b16 %v315
  %v413 = vunpack.c.l.b16 %v316
  %v414 = vunpack.c.l.b16 %v317
  %v415 = vunpack.c.l.b16 %v318
  %v416 = vunpack.c.l.b16 %v319
  %v417 = vunpack.c.l.b16 %v320
  %v418 = vunpack.c.l.b16 %v321
  %v419 = vunpack.c.l.b16 %v322
  %v420 = vunpack.c.l.b16 %v323
  %v421 = vunpack.c.l.b16 %v324
  %v422 = vunpack.c.l.b16 %v325
  %v423 = vunpack.c.l.b16 %v326
  %v424 = vunpack.c.l.b16 %v327
  %v425 = vunpack.c.l.b16 %v328
  %v426 = vunpack.c.l.b16 %v329
  %v427 = vunpack.c.l.b16 %v330
  %v428 = vunpack.c.l.b16 %v331
  %v429 = vunpack.c.l.b16 %v332
  %v430 = vunpack.c.l.b16 %v333
  %v431 = vunpack.c.l.b16 %v334
  %v432 = vunpack.c.l.b16 %v335
  %v433 = vunpack.c.l.b16 %v336
  %v434 = vunpack.c.l.b16 %v337
  %v435 = vunpack.c.l.b16 %v338
  %v436 = vunpack.c.l.b16 %v339
  %v437 = vunpack.c.l.b16 %v340
  %v438 = vunpack.c.l.b16 %v341
  %v439 = vunpack.c.l.b16 %v342
  %v440 = vunpack.c.l.b16 %v343
  %v441 = vunpack.c.l.b16 %v344
  %v442 = vunpack.c.l.b16 %v345
  %v443 = vunpack.c.l.b16 %v346
  %v444 = vunpack.c.l.b16 %v347
  %v445 = vunpack.c.l.b16 %v348
  %v446 = vpack.c.b16 %v399, %v398
  %v447 = vpack.c.b16 %v401, %v400
  %v448 = vpack.c.b16 %v403, %v402
  %v449 = vpack.c.b16 %v405, %v404
  %v450 = vpack.c.b16 %v407, %v406
  %v451 = vpack.c.b16 %v409, %v408
  %v452 = vpack.c.b16 %v411, %v410
  %v453 = vpack.c.b16 %v413, %v412
  %v454 = vpack.c.b16 %v415, %v414
  %v455 = vpack.c.b16 %v417, %v416
  %v456 = vpack.c.b16 %v419, %v418
  %v457 = vpack.c.b16 %v421, %v420
  %v458 = vpack.c.b16 %v423, %v422
  %v459 = vpack.c.b16 %v425, %v424
  %v460 = vpack.c.b16 %v427, %v426
  %v461 = vpack.c.b16 %v429, %v428
  %v462 = vpack.c.b16 %v431, %v430
  %v463 = vpack.c.b16 %v433, %v432
  %v464 = vpack.c.b16 %v435, %v434
  %v465 = vpack.c.b16 %v437, %v436
  %v466 = vpack.c.b16 %v439, %v438
  %v467 = vpack.c.b16 %v441, %v440
  %v468 = vpack.c.b16 %v443, %v442
  %v469 = vpack.c.b16 %v445, %v444
  %494 = vmatpush.bf16.msra.mxu0 %v453
  %495 = vmatpush.bf16.msra.mxu0 %v452
  %496 = vmatpush.bf16.msra.mxu0 %v451
  %497 = vmatpush.bf16.msra.mxu0 %v450
  %498 = vmatpush.bf16.msra.mxu0 %v449
  %499 = vmatpush.bf16.msra.mxu0 %v448
  %500 = vmatpush.bf16.msra.mxu0 %v447
  %501 = vmatpush.bf16.msra.mxu0 %v446
  %502 = vmatmul.bf16.gmra.mxu0 %v240
  %v503 = vpop.f32.mrf.mxu0
  %v504 = vadd.f32 %v349, %v503
  %v505 = vpop.f32.mrf.mxu0
  %v506 = vadd.f32 %v349, %v505
  %507 = vmatmul.bf16.gmra.mxu0 %v241
  %v508 = vpop.f32.mrf.mxu0
  %v509 = vadd.f32 %v349, %v508
  %v510 = vpop.f32.mrf.mxu0
  %v511 = vadd.f32 %v349, %v510
  %512 = vdwg.mxu0
  %513 = vmatpush.bf16.msra.mxu0 %v461
  %514 = vmatpush.bf16.msra.mxu0 %v460
  %515 = vmatpush.bf16.msra.mxu0 %v459
  %516 = vmatpush.bf16.msra.mxu0 %v458
  %517 = vmatpush.bf16.msra.mxu0 %v457
  %518 = vmatpush.bf16.msra.mxu0 %v456
  %519 = vmatpush.bf16.msra.mxu0 %v455
  %520 = vmatpush.bf16.msra.mxu0 %v454
  %521 = vmatmul.bf16.gmra.mxu0 %v269
  %v522 = vpop.f32.mrf.mxu0
  %v523 = vadd.f32 %v504, %v522
  %v524 = vpop.f32.mrf.mxu0
  %v525 = vadd.f32 %v506, %v524
  %526 = vmatmul.bf16.gmra.mxu0 %v277
  %v527 = vpop.f32.mrf.mxu0
  %v528 = vadd.f32 %v509, %v527
  %v529 = vpop.f32.mrf.mxu0
  %v530 = vadd.f32 %v511, %v529
  %531 = vdwg.mxu0
  %532 = vmatpush.bf16.msra.mxu0 %v469
  %533 = vmatpush.bf16.msra.mxu0 %v468
  %534 = vmatpush.bf16.msra.mxu0 %v467
  %535 = vmatpush.bf16.msra.mxu0 %v466
  %536 = vmatpush.bf16.msra.mxu0 %v465
  %537 = vmatpush.bf16.msra.mxu0 %v464
  %538 = vmatpush.bf16.msra.mxu0 %v463
  %539 = vmatpush.bf16.msra.mxu0 %v462
  %540 = vmatmul.bf16.gmra.mxu0 %v296
  %v541 = vpop.f32.mrf.mxu0
  %v542 = vadd.f32 %v523, %v541
  %v543 = vpop.f32.mrf.mxu0
  %v544 = vadd.f32 %v525, %v543
  %545 = vmatmul.bf16.gmra.mxu0 %v298
  %v546 = vpop.f32.mrf.mxu0
  %v547 = vadd.f32 %v528, %v546
  %v548 = vpop.f32.mrf.mxu0
  %v549 = vadd.f32 %v530, %v548
  %550 = vdwg.mxu0
  %s551 = scalar_lea.vmem %s2, 4
  %v552 = vld [vmem:[%s551] sm:$0x7]
  %v553 = vperm.slane %v552, 1
  %v554 = vmul.f32 %v542, %v553
  %v555 = vmul.f32 %v544, %v553
  %v556 = vmul.f32 %v547, %v553
  %v557 = vmul.f32 %v549, %v553
  %v558 = vperm.slane %v552, 2
  %v559 = vadd.f32 %v554, %v558
  %v560 = vadd.f32 %v555, %v558
  %v561 = vadd.f32 %v556, %v558
  %v562 = vadd.f32 %v557, %v558
  %vm563 = vcmp.gt.f32.partialorder %v559, 0.0
  %vm564 = vcmp.gt.f32.partialorder %v560, 0.0
  %vm565 = vcmp.gt.f32.partialorder %v561, 0.0
  %vm566 = vcmp.gt.f32.partialorder %v562, 0.0
  %v567 = vmul.f32 %v559, 0.33
  %v568 = vmul.f32 %v560, 0.33
  %v569 = vmul.f32 %v561, 0.33
  %v570 = vmul.f32 %v562, 0.33
  %v571 = vsel %vm563, %v559, %v567
  %v572 = vsel %vm564, %v560, %v568
  %v573 = vsel %vm565, %v561, %v569
  %v574 = vsel %vm566, %v562, %v570
  %v575 = vpack.c.bf16 %v571, %v571
  %v576 = vpack.c.bf16 %v572, %v572
  %v577 = vpack.c.bf16 %v573, %v573
  %v578 = vpack.c.bf16 %v574, %v574
  %v580 = vshrl.u32 %v575, 16
  %v582 = vrot.slane %v580, 7
  %v583 = vshll.u32 %v575, 16
  %v585 = vor.u32 %v582, %v583
  %v586 = vrot.slane %v582, 4
  %v588 = vshrl.u32 %v576, 16
  %v590 = vrot.slane %v588, 7
  %v591 = vshll.u32 %v576, 16
  %v593 = vor.u32 %v590, %v591
  %v594 = vsel %vm73, %v586, %v593
  %v595 = vrot.slane %v590, 4
  %v597 = vshrl.u32 %v577, 16
  %v599 = vrot.slane %v597, 7
  %v600 = vshll.u32 %v577, 16
  %v602 = vor.u32 %v599, %v600
  %v603 = vsel %vm73, %v595, %v602
  %v604 = vrot.slane %v599, 4
  %v606 = vshrl.u32 %v578, 16
  %v608 = vrot.slane %v606, 7
  %v609 = vshll.u32 %v578, 16
  %v611 = vor.u32 %v608, %v609
  %v612 = vsel %vm73, %v604, %v611
  %v613 = vrot.slane %v608, 4
  %v619 = vsel %vm115, %v585, %v125
  %620 = vst [vmem:[#allocation2] sm:$0xf] %v619
  %621 = vst [vmem:[#allocation2 + $0x4] sm:$0xf] %v594
  %622 = vst [vmem:[#allocation2 + $0x8] sm:$0xf] %v603
  %623 = vst [vmem:[#allocation2 + $0xc] sm:$0xf] %v612
  %v624 = vld [vmem:[#allocation2 + $0x10] sm:$0x1]
  %v625 = vsel %vm19, %v613, %v624
  %626 = vst [vmem:[#allocation2 + $0x10] sm:$0x1] %v625
  %v627 = vld [vmem:[#allocation2] sm:$0xf]
  %v628 = vld [vmem:[#allocation2 + $0x4] sm:$0xf]
  %v629 = vld [vmem:[#allocation2 + $0x8] sm:$0xf]
  %v630 = vld [vmem:[#allocation2 + $0xc] sm:$0xf]
  %v631 = vsel %vm145, %v627, 0
  %v632 = vsel %vm146, %v628, 0
  %v633 = vsel %vm147, %v629, 0
  %v634 = vsel %vm148, %v630, 0
  %v635 = vld [vmem:[#allocation2 + $0x10] sm:$0x1]
  %v636 = vld [vmem:[#allocation2] sm:$0xe]
  %v637 = vsel %vm198, %v636, 0
  %v638 = vsel %vm205, %v628, 0
  %v639 = vsel %vm212, %v629, 0
  %v640 = vsel %vm219, %v630, 0
  %v641 = vsel %vm226, %v635, 0
  %v646 = vunpack.c.l.b16 %v631
  %v647 = vunpack.c.l.b16 %v632
  %v648 = vunpack.c.l.b16 %v633
  %v649 = vunpack.c.l.b16 %v634
  %v650 = vpack.c.b16 %v647, %v646
  %v651 = vpack.c.b16 %v649, %v648
  %v659 = vunpack.c.l.b16 %v627
  %v660 = vunpack.c.l.b16 %v628
  %v661 = vunpack.c.l.b16 %v629
  %v662 = vunpack.c.l.b16 %v630
  %v663 = vunpack.c.l.b16 %v635
  %v664 = vpack.c.b16 %v660, %v659
  %v665 = vpack.c.b16 %v662, %v661
  %v666 = vpack.c.b16 %v663, %v663
  %v668 = vshrl.u32 %v664, 16
  %v670 = vshll.u32 %v664, 16
  %v672 = vrot.slane %v670, 1
  %v673 = vor.u32 %v668, %v672
  %v675 = vshll.u32 %v665, 16
  %v677 = vrot.slane %v675, 1
  %v678 = vsel %vm257, %v673, %v677
  %v679 = vshrl.u32 %v665, 16
  %v681 = vor.u32 %v679, %v677
  %v683 = vshll.u32 %v666, 16
  %v685 = vrot.slane %v683, 1
  %v686 = vsel %vm257, %v681, %v685
  %v694 = vunpack.c.l.b16 %v637
  %v695 = vunpack.c.l.b16 %v638
  %v696 = vunpack.c.l.b16 %v639
  %v697 = vunpack.c.l.b16 %v640
  %v698 = vunpack.c.l.b16 %v641
  %v699 = vpack.c.b16 %v695, %v694
  %v700 = vpack.c.b16 %v697, %v696
  %v701 = vpack.c.b16 %v698, %v698
  %v702 = vrot.slane %v699, 1
  %v703 = vrot.slane %v700, 1
  %v704 = vsel %vm293, %v702, %v703
  %v705 = vrot.slane %v701, 1
  %v706 = vsel %vm293, %v703, %v705
  %s709 = scalar_lea.vmem %s1, 192
  %v710 = vld [vmem:[%s709] sm:$0xf]
  %v711 = vld [vmem:[%s709 + $0x4] sm:$0xf]
  %v712 = vld [vmem:[%s709 + $0x8] sm:$0xf]
  %v713 = vld [vmem:[%s709 + $0xc] sm:$0xf]
  %v714 = vld [vmem:[%s709 + $0x10] sm:$0xf]
  %v715 = vld [vmem:[%s709 + $0x14] sm:$0xf]
  %v716 = vld [vmem:[%s709 + $0x18] sm:$0xf]
  %v717 = vld [vmem:[%s709 + $0x1c] sm:$0xf]
  %v718 = vld [vmem:[%s709 + $0x20] sm:$0xf]
  %v719 = vld [vmem:[%s709 + $0x24] sm:$0xf]
  %v720 = vld [vmem:[%s709 + $0x28] sm:$0xf]
  %v721 = vld [vmem:[%s709 + $0x2c] sm:$0xf]
  %v722 = vld [vmem:[%s709 + $0x30] sm:$0xf]
  %v723 = vld [vmem:[%s709 + $0x34] sm:$0xf]
  %v724 = vld [vmem:[%s709 + $0x38] sm:$0xf]
  %v725 = vld [vmem:[%s709 + $0x3c] sm:$0xf]
  %v726 = vld [vmem:[%s709 + $0x40] sm:$0xf]
  %v727 = vld [vmem:[%s709 + $0x44] sm:$0xf]
  %v728 = vld [vmem:[%s709 + $0x48] sm:$0xf]
  %v729 = vld [vmem:[%s709 + $0x4c] sm:$0xf]
  %v730 = vld [vmem:[%s709 + $0x50] sm:$0xf]
  %v731 = vld [vmem:[%s709 + $0x54] sm:$0xf]
  %v732 = vld [vmem:[%s709 + $0x58] sm:$0xf]
  %v733 = vld [vmem:[%s709 + $0x5c] sm:$0xf]
  %v734 = vld [vmem:[%s709 + $0x60] sm:$0xf]
  %v735 = vld [vmem:[%s709 + $0x64] sm:$0xf]
  %v736 = vld [vmem:[%s709 + $0x68] sm:$0xf]
  %v737 = vld [vmem:[%s709 + $0x6c] sm:$0xf]
  %v738 = vld [vmem:[%s709 + $0x70] sm:$0xf]
  %v739 = vld [vmem:[%s709 + $0x74] sm:$0xf]
  %v740 = vld [vmem:[%s709 + $0x78] sm:$0xf]
  %v741 = vld [vmem:[%s709 + $0x7c] sm:$0xf]
  %v742 = vld [vmem:[%s709 + $0x80] sm:$0xf]
  %v743 = vld [vmem:[%s709 + $0x84] sm:$0xf]
  %v744 = vld [vmem:[%s709 + $0x88] sm:$0xf]
  %v745 = vld [vmem:[%s709 + $0x8c] sm:$0xf]
  %v746 = vld [vmem:[%s709 + $0x90] sm:$0xf]
  %v747 = vld [vmem:[%s709 + $0x94] sm:$0xf]
  %v748 = vld [vmem:[%s709 + $0x98] sm:$0xf]
  %v749 = vld [vmem:[%s709 + $0x9c] sm:$0xf]
  %v750 = vld [vmem:[%s709 + $0xa0] sm:$0xf]
  %v751 = vld [vmem:[%s709 + $0xa4] sm:$0xf]
  %v752 = vld [vmem:[%s709 + $0xa8] sm:$0xf]
  %v753 = vld [vmem:[%s709 + $0xac] sm:$0xf]
  %v754 = vld [vmem:[%s709 + $0xb0] sm:$0xf]
  %v755 = vld [vmem:[%s709 + $0xb4] sm:$0xf]
  %v756 = vld [vmem:[%s709 + $0xb8] sm:$0xf]
  %v757 = vld [vmem:[%s709 + $0xbc] sm:$0xf]
  %v758 = vperm.slane %v552, 0
  %v807 = vunpack.c.l.b16 %v710
  %v808 = vunpack.c.l.b16 %v711
  %v809 = vunpack.c.l.b16 %v712
  %v810 = vunpack.c.l.b16 %v713
  %v811 = vunpack.c.l.b16 %v714
  %v812 = vunpack.c.l.b16 %v715
  %v813 = vunpack.c.l.b16 %v716
  %v814 = vunpack.c.l.b16 %v717
  %v815 = vunpack.c.l.b16 %v718
  %v816 = vunpack.c.l.b16 %v719
  %v817 = vunpack.c.l.b16 %v720
  %v818 = vunpack.c.l.b16 %v721
  %v819 = vunpack.c.l.b16 %v722
  %v820 = vunpack.c.l.b16 %v723
  %v821 = vunpack.c.l.b16 %v724
  %v822 = vunpack.c.l.b16 %v725
  %v823 = vunpack.c.l.b16 %v726
  %v824 = vunpack.c.l.b16 %v727
  %v825 = vunpack.c.l.b16 %v728
  %v826 = vunpack.c.l.b16 %v729
  %v827 = vunpack.c.l.b16 %v730
  %v828 = vunpack.c.l.b16 %v731
  %v829 = vunpack.c.l.b16 %v732
  %v830 = vunpack.c.l.b16 %v733
  %v831 = vunpack.c.l.b16 %v734
  %v832 = vunpack.c.l.b16 %v735
  %v833 = vunpack.c.l.b16 %v736
  %v834 = vunpack.c.l.b16 %v737
  %v835 = vunpack.c.l.b16 %v738
  %v836 = vunpack.c.l.b16 %v739
  %v837 = vunpack.c.l.b16 %v740
  %v838 = vunpack.c.l.b16 %v741
  %v839 = vunpack.c.l.b16 %v742
  %v840 = vunpack.c.l.b16 %v743
  %v841 = vunpack.c.l.b16 %v744
  %v842 = vunpack.c.l.b16 %v745
  %v843 = vunpack.c.l.b16 %v746
  %v844 = vunpack.c.l.b16 %v747
  %v845 = vunpack.c.l.b16 %v748
  %v846 = vunpack.c.l.b16 %v749
  %v847 = vunpack.c.l.b16 %v750
  %v848 = vunpack.c.l.b16 %v751
  %v849 = vunpack.c.l.b16 %v752
  %v850 = vunpack.c.l.b16 %v753
  %v851 = vunpack.c.l.b16 %v754
  %v852 = vunpack.c.l.b16 %v755
  %v853 = vunpack.c.l.b16 %v756
  %v854 = vunpack.c.l.b16 %v757
  %v855 = vpack.c.b16 %v808, %v807
  %v856 = vpack.c.b16 %v810, %v809
  %v857 = vpack.c.b16 %v812, %v811
  %v858 = vpack.c.b16 %v814, %v813
  %v859 = vpack.c.b16 %v816, %v815
  %v860 = vpack.c.b16 %v818, %v817
  %v861 = vpack.c.b16 %v820, %v819
  %v862 = vpack.c.b16 %v822, %v821
  %v863 = vpack.c.b16 %v824, %v823
  %v864 = vpack.c.b16 %v826, %v825
  %v865 = vpack.c.b16 %v828, %v827
  %v866 = vpack.c.b16 %v830, %v829
  %v867 = vpack.c.b16 %v832, %v831
  %v868 = vpack.c.b16 %v834, %v833
  %v869 = vpack.c.b16 %v836, %v835
  %v870 = vpack.c.b16 %v838, %v837
  %v871 = vpack.c.b16 %v840, %v839
  %v872 = vpack.c.b16 %v842, %v841
  %v873 = vpack.c.b16 %v844, %v843
  %v874 = vpack.c.b16 %v846, %v845
  %v875 = vpack.c.b16 %v848, %v847
  %v876 = vpack.c.b16 %v850, %v849
  %v877 = vpack.c.b16 %v852, %v851
  %v878 = vpack.c.b16 %v854, %v853
  %903 = vmatpush.bf16.msra.mxu0 %v862
  %904 = vmatpush.bf16.msra.mxu0 %v861
  %905 = vmatpush.bf16.msra.mxu0 %v860
  %906 = vmatpush.bf16.msra.mxu0 %v859
  %907 = vmatpush.bf16.msra.mxu0 %v858
  %908 = vmatpush.bf16.msra.mxu0 %v857
  %909 = vmatpush.bf16.msra.mxu0 %v856
  %910 = vmatpush.bf16.msra.mxu0 %v855
  %911 = vmatmul.bf16.gmra.mxu0 %v650
  %v912 = vpop.f32.mrf.mxu0
  %v913 = vadd.f32 %v758, %v912
  %v914 = vpop.f32.mrf.mxu0
  %v915 = vadd.f32 %v758, %v914
  %916 = vmatmul.bf16.gmra.mxu0 %v651
  %v917 = vpop.f32.mrf.mxu0
  %v918 = vadd.f32 %v758, %v917
  %v919 = vpop.f32.mrf.mxu0
  %v920 = vadd.f32 %v758, %v919
  %921 = vdwg.mxu0
  %922 = vmatpush.bf16.msra.mxu0 %v870
  %923 = vmatpush.bf16.msra.mxu0 %v869
  %924 = vmatpush.bf16.msra.mxu0 %v868
  %925 = vmatpush.bf16.msra.mxu0 %v867
  %926 = vmatpush.bf16.msra.mxu0 %v866
  %927 = vmatpush.bf16.msra.mxu0 %v865
  %928 = vmatpush.bf16.msra.mxu0 %v864
  %929 = vmatpush.bf16.msra.mxu0 %v863
  %930 = vmatmul.bf16.gmra.mxu0 %v678
  %v931 = vpop.f32.mrf.mxu0
  %v932 = vadd.f32 %v913, %v931
  %v933 = vpop.f32.mrf.mxu0
  %v934 = vadd.f32 %v915, %v933
  %935 = vmatmul.bf16.gmra.mxu0 %v686
  %v936 = vpop.f32.mrf.mxu0
  %v937 = vadd.f32 %v918, %v936
  %v938 = vpop.f32.mrf.mxu0
  %v939 = vadd.f32 %v920, %v938
  %940 = vdwg.mxu0
  %941 = vmatpush.bf16.msra.mxu0 %v878
  %942 = vmatpush.bf16.msra.mxu0 %v877
  %943 = vmatpush.bf16.msra.mxu0 %v876
  %944 = vmatpush.bf16.msra.mxu0 %v875
  %945 = vmatpush.bf16.msra.mxu0 %v874
  %946 = vmatpush.bf16.msra.mxu0 %v873
  %947 = vmatpush.bf16.msra.mxu0 %v872
  %948 = vmatpush.bf16.msra.mxu0 %v871
  %949 = vmatmul.bf16.gmra.mxu0 %v704
  %v950 = vpop.f32.mrf.mxu0
  %v951 = vadd.f32 %v932, %v950
  %v952 = vpop.f32.mrf.mxu0
  %v953 = vadd.f32 %v934, %v952
  %954 = vmatmul.bf16.gmra.mxu0 %v706
  %v955 = vpop.f32.mrf.mxu0
  %v956 = vadd.f32 %v937, %v955
  %v957 = vpop.f32.mrf.mxu0
  %v958 = vadd.f32 %v939, %v957
  %959 = vdwg.mxu0
  %v960 = vadd.f32 %v41, %v951
  %v961 = vadd.f32 %v42, %v953
  %v962 = vadd.f32 %v43, %v956
  %v963 = vadd.f32 %v44, %v958
  %s964 = scalar_lea.vmem %s2, 8
  %v965 = vld [vmem:[%s964] sm:$0x7]
  %v966 = vperm.slane %v965, 1
  %v967 = vmul.f32 %v960, %v966
  %v968 = vmul.f32 %v961, %v966
  %v969 = vmul.f32 %v962, %v966
  %v970 = vmul.f32 %v963, %v966
  %v971 = vperm.slane %v965, 2
  %v972 = vadd.f32 %v967, %v971
  %v973 = vadd.f32 %v968, %v971
  %v974 = vadd.f32 %v969, %v971
  %v975 = vadd.f32 %v970, %v971
  %vm976 = vcmp.gt.f32.partialorder %v972, 0.0
  %vm977 = vcmp.gt.f32.partialorder %v973, 0.0
  %vm978 = vcmp.gt.f32.partialorder %v974, 0.0
  %vm979 = vcmp.gt.f32.partialorder %v975, 0.0
  %v980 = vmul.f32 %v972, 0.33
  %v981 = vmul.f32 %v973, 0.33
  %v982 = vmul.f32 %v974, 0.33
  %v983 = vmul.f32 %v975, 0.33
  %v984 = vsel %vm976, %v972, %v980
  %v985 = vsel %vm977, %v973, %v981
  %v986 = vsel %vm978, %v974, %v982
  %v987 = vsel %vm979, %v975, %v983
  %v988 = vpack.c.bf16 %v984, %v984
  %v989 = vpack.c.bf16 %v985, %v985
  %v990 = vpack.c.bf16 %v986, %v986
  %v991 = vpack.c.bf16 %v987, %v987
  %v993 = vshrl.u32 %v988, 16
  %v995 = vrot.slane %v993, 7
  %v996 = vshll.u32 %v988, 16
  %v998 = vor.u32 %v995, %v996
  %v999 = vrot.slane %v995, 4
  %v1001 = vshrl.u32 %v989, 16
  %v1003 = vrot.slane %v1001, 7
  %v1004 = vshll.u32 %v989, 16
  %v1006 = vor.u32 %v1003, %v1004
  %v1007 = vsel %vm73, %v999, %v1006
  %v1008 = vrot.slane %v1003, 4
  %v1010 = vshrl.u32 %v990, 16
  %v1012 = vrot.slane %v1010, 7
  %v1013 = vshll.u32 %v990, 16
  %v1015 = vor.u32 %v1012, %v1013
  %v1016 = vsel %vm73, %v1008, %v1015
  %v1017 = vrot.slane %v1012, 4
  %v1019 = vshrl.u32 %v991, 16
  %v1021 = vrot.slane %v1019, 7
  %v1022 = vshll.u32 %v991, 16
  %v1024 = vor.u32 %v1021, %v1022
  %v1025 = vsel %vm73, %v1017, %v1024
  %v1026 = vrot.slane %v1021, 4
  %v1032 = vsel %vm115, %v998, %v627
  %1033 = vst [vmem:[#allocation2] sm:$0xf] %v1032
  %1034 = vst [vmem:[#allocation2 + $0x4] sm:$0xf] %v1007
  %1035 = vst [vmem:[#allocation2 + $0x8] sm:$0xf] %v1016
  %1036 = vst [vmem:[#allocation2 + $0xc] sm:$0xf] %v1025
  %v1037 = vld [vmem:[#allocation2 + $0x10] sm:$0x1]
  %v1038 = vsel %vm19, %v1026, %v1037
  %1039 = vst [vmem:[#allocation2 + $0x10] sm:$0x1] %v1038
  %v1040 = vld [vmem:[#allocation2] sm:$0xf]
  %v1041 = vld [vmem:[#allocation2 + $0x4] sm:$0xf]
  %v1042 = vld [vmem:[#allocation2 + $0x8] sm:$0xf]
  %v1043 = vld [vmem:[#allocation2 + $0xc] sm:$0xf]
  %v1044 = vsel %vm145, %v1040, 0
  %v1045 = vsel %vm146, %v1041, 0
  %v1046 = vsel %vm147, %v1042, 0
  %v1047 = vsel %vm148, %v1043, 0
  %v1048 = vld [vmem:[#allocation2 + $0x10] sm:$0x1]
  %v1049 = vld [vmem:[#allocation2] sm:$0xe]
  %v1050 = vsel %vm198, %v1049, 0
  %v1051 = vsel %vm205, %v1041, 0
  %v1052 = vsel %vm212, %v1042, 0
  %v1053 = vsel %vm219, %v1043, 0
  %v1054 = vsel %vm226, %v1048, 0
  %v1059 = vunpack.c.l.b16 %v1044
  %v1060 = vunpack.c.l.b16 %v1045
  %v1061 = vunpack.c.l.b16 %v1046
  %v1062 = vunpack.c.l.b16 %v1047
  %v1063 = vpack.c.b16 %v1060, %v1059
  %v1064 = vpack.c.b16 %v1062, %v1061
  %v1072 = vunpack.c.l.b16 %v1040
  %v1073 = vunpack.c.l.b16 %v1041
  %v1074 = vunpack.c.l.b16 %v1042
  %v1075 = vunpack.c.l.b16 %v1043
  %v1076 = vunpack.c.l.b16 %v1048
  %v1077 = vpack.c.b16 %v1073, %v1072
  %v1078 = vpack.c.b16 %v1075, %v1074
  %v1079 = vpack.c.b16 %v1076, %v1076
  %v1081 = vshrl.u32 %v1077, 16
  %v1083 = vshll.u32 %v1077, 16
  %v1085 = vrot.slane %v1083, 1
  %v1086 = vor.u32 %v1081, %v1085
  %v1088 = vshll.u32 %v1078, 16
  %v1090 = vrot.slane %v1088, 1
  %v1091 = vsel %vm257, %v1086, %v1090
  %v1092 = vshrl.u32 %v1078, 16
  %v1094 = vor.u32 %v1092, %v1090
  %v1096 = vshll.u32 %v1079, 16
  %v1098 = vrot.slane %v1096, 1
  %v1099 = vsel %vm257, %v1094, %v1098
  %v1107 = vunpack.c.l.b16 %v1050
  %v1108 = vunpack.c.l.b16 %v1051
  %v1109 = vunpack.c.l.b16 %v1052
  %v1110 = vunpack.c.l.b16 %v1053
  %v1111 = vunpack.c.l.b16 %v1054
  %v1112 = vpack.c.b16 %v1108, %v1107
  %v1113 = vpack.c.b16 %v1110, %v1109
  %v1114 = vpack.c.b16 %v1111, %v1111
  %v1115 = vrot.slane %v1112, 1
  %v1116 = vrot.slane %v1113, 1
  %v1117 = vsel %vm293, %v1115, %v1116
  %v1118 = vrot.slane %v1114, 1
  %v1119 = vsel %vm293, %v1116, %v1118
  %s1122 = scalar_lea.vmem %s1, 384
  %v1123 = vld [vmem:[%s1122] sm:$0xf]
  %v1124 = vld [vmem:[%s1122 + $0x4] sm:$0xf]
  %v1125 = vld [vmem:[%s1122 + $0x8] sm:$0xf]
  %v1126 = vld [vmem:[%s1122 + $0xc] sm:$0xf]
  %v1127 = vld [vmem:[%s1122 + $0x10] sm:$0xf]
  %v1128 = vld [vmem:[%s1122 + $0x14] sm:$0xf]
  %v1129 = vld [vmem:[%s1122 + $0x18] sm:$0xf]
  %v1130 = vld [vmem:[%s1122 + $0x1c] sm:$0xf]
  %v1131 = vld [vmem:[%s1122 + $0x20] sm:$0xf]
  %v1132 = vld [vmem:[%s1122 + $0x24] sm:$0xf]
  %v1133 = vld [vmem:[%s1122 + $0x28] sm:$0xf]
  %v1134 = vld [vmem:[%s1122 + $0x2c] sm:$0xf]
  %v1135 = vld [vmem:[%s1122 + $0x30] sm:$0xf]
  %v1136 = vld [vmem:[%s1122 + $0x34] sm:$0xf]
  %v1137 = vld [vmem:[%s1122 + $0x38] sm:$0xf]
  %v1138 = vld [vmem:[%s1122 + $0x3c] sm:$0xf]
  %v1139 = vld [vmem:[%s1122 + $0x40] sm:$0xf]
  %v1140 = vld [vmem:[%s1122 + $0x44] sm:$0xf]
  %v1141 = vld [vmem:[%s1122 + $0x48] sm:$0xf]
  %v1142 = vld [vmem:[%s1122 + $0x4c] sm:$0xf]
  %v1143 = vld [vmem:[%s1122 + $0x50] sm:$0xf]
  %v1144 = vld [vmem:[%s1122 + $0x54] sm:$0xf]
  %v1145 = vld [vmem:[%s1122 + $0x58] sm:$0xf]
  %v1146 = vld [vmem:[%s1122 + $0x5c] sm:$0xf]
  %v1147 = vld [vmem:[%s1122 + $0x60] sm:$0xf]
  %v1148 = vld [vmem:[%s1122 + $0x64] sm:$0xf]
  %v1149 = vld [vmem:[%s1122 + $0x68] sm:$0xf]
  %v1150 = vld [vmem:[%s1122 + $0x6c] sm:$0xf]
  %v1151 = vld [vmem:[%s1122 + $0x70] sm:$0xf]
  %v1152 = vld [vmem:[%s1122 + $0x74] sm:$0xf]
  %v1153 = vld [vmem:[%s1122 + $0x78] sm:$0xf]
  %v1154 = vld [vmem:[%s1122 + $0x7c] sm:$0xf]
  %v1155 = vld [vmem:[%s1122 + $0x80] sm:$0xf]
  %v1156 = vld [vmem:[%s1122 + $0x84] sm:$0xf]
  %v1157 = vld [vmem:[%s1122 + $0x88] sm:$0xf]
  %v1158 = vld [vmem:[%s1122 + $0x8c] sm:$0xf]
  %v1159 = vld [vmem:[%s1122 + $0x90] sm:$0xf]
  %v1160 = vld [vmem:[%s1122 + $0x94] sm:$0xf]
  %v1161 = vld [vmem:[%s1122 + $0x98] sm:$0xf]
  %v1162 = vld [vmem:[%s1122 + $0x9c] sm:$0xf]
  %v1163 = vld [vmem:[%s1122 + $0xa0] sm:$0xf]
  %v1164 = vld [vmem:[%s1122 + $0xa4] sm:$0xf]
  %v1165 = vld [vmem:[%s1122 + $0xa8] sm:$0xf]
  %v1166 = vld [vmem:[%s1122 + $0xac] sm:$0xf]
  %v1167 = vld [vmem:[%s1122 + $0xb0] sm:$0xf]
  %v1168 = vld [vmem:[%s1122 + $0xb4] sm:$0xf]
  %v1169 = vld [vmem:[%s1122 + $0xb8] sm:$0xf]
  %v1170 = vld [vmem:[%s1122 + $0xbc] sm:$0xf]
  %v1171 = vperm.slane %v965, 0
  %v1220 = vunpack.c.l.b16 %v1123
  %v1221 = vunpack.c.l.b16 %v1124
  %v1222 = vunpack.c.l.b16 %v1125
  %v1223 = vunpack.c.l.b16 %v1126
  %v1224 = vunpack.c.l.b16 %v1127
  %v1225 = vunpack.c.l.b16 %v1128
  %v1226 = vunpack.c.l.b16 %v1129
  %v1227 = vunpack.c.l.b16 %v1130
  %v1228 = vunpack.c.l.b16 %v1131
  %v1229 = vunpack.c.l.b16 %v1132
  %v1230 = vunpack.c.l.b16 %v1133
  %v1231 = vunpack.c.l.b16 %v1134
  %v1232 = vunpack.c.l.b16 %v1135
  %v1233 = vunpack.c.l.b16 %v1136
  %v1234 = vunpack.c.l.b16 %v1137
  %v1235 = vunpack.c.l.b16 %v1138
  %v1236 = vunpack.c.l.b16 %v1139
  %v1237 = vunpack.c.l.b16 %v1140
  %v1238 = vunpack.c.l.b16 %v1141
  %v1239 = vunpack.c.l.b16 %v1142
  %v1240 = vunpack.c.l.b16 %v1143
  %v1241 = vunpack.c.l.b16 %v1144
  %v1242 = vunpack.c.l.b16 %v1145
  %v1243 = vunpack.c.l.b16 %v1146
  %v1244 = vunpack.c.l.b16 %v1147
  %v1245 = vunpack.c.l.b16 %v1148
  %v1246 = vunpack.c.l.b16 %v1149
  %v1247 = vunpack.c.l.b16 %v1150
  %v1248 = vunpack.c.l.b16 %v1151
  %v1249 = vunpack.c.l.b16 %v1152
  %v1250 = vunpack.c.l.b16 %v1153
  %v1251 = vunpack.c.l.b16 %v1154
  %v1252 = vunpack.c.l.b16 %v1155
  %v1253 = vunpack.c.l.b16 %v1156
  %v1254 = vunpack.c.l.b16 %v1157
  %v1255 = vunpack.c.l.b16 %v1158
  %v1256 = vunpack.c.l.b16 %v1159
  %v1257 = vunpack.c.l.b16 %v1160
  %v1258 = vunpack.c.l.b16 %v1161
  %v1259 = vunpack.c.l.b16 %v1162
  %v1260 = vunpack.c.l.b16 %v1163
  %v1261 = vunpack.c.l.b16 %v1164
  %v1262 = vunpack.c.l.b16 %v1165
  %v1263 = vunpack.c.l.b16 %v1166
  %v1264 = vunpack.c.l.b16 %v1167
  %v1265 = vunpack.c.l.b16 %v1168
  %v1266 = vunpack.c.l.b16 %v1169
  %v1267 = vunpack.c.l.b16 %v1170
  %v1268 = vpack.c.b16 %v1221, %v1220
  %v1269 = vpack.c.b16 %v1223, %v1222
  %v1270 = vpack.c.b16 %v1225, %v1224
  %v1271 = vpack.c.b16 %v1227, %v1226
  %v1272 = vpack.c.b16 %v1229, %v1228
  %v1273 = vpack.c.b16 %v1231, %v1230
  %v1274 = vpack.c.b16 %v1233, %v1232
  %v1275 = vpack.c.b16 %v1235, %v1234
  %v1276 = vpack.c.b16 %v1237, %v1236
  %v1277 = vpack.c.b16 %v1239, %v1238
  %v1278 = vpack.c.b16 %v1241, %v1240
  %v1279 = vpack.c.b16 %v1243, %v1242
  %v1280 = vpack.c.b16 %v1245, %v1244
  %v1281 = vpack.c.b16 %v1247, %v1246
  %v1282 = vpack.c.b16 %v1249, %v1248
  %v1283 = vpack.c.b16 %v1251, %v1250
  %v1284 = vpack.c.b16 %v1253, %v1252
  %v1285 = vpack.c.b16 %v1255, %v1254
  %v1286 = vpack.c.b16 %v1257, %v1256
  %v1287 = vpack.c.b16 %v1259, %v1258
  %v1288 = vpack.c.b16 %v1261, %v1260
  %v1289 = vpack.c.b16 %v1263, %v1262
  %v1290 = vpack.c.b16 %v1265, %v1264
  %v1291 = vpack.c.b16 %v1267, %v1266
  %1316 = vmatpush.bf16.msra.mxu0 %v1275
  %1317 = vmatpush.bf16.msra.mxu0 %v1274
  %1318 = vmatpush.bf16.msra.mxu0 %v1273
  %1319 = vmatpush.bf16.msra.mxu0 %v1272
  %1320 = vmatpush.bf16.msra.mxu0 %v1271
  %1321 = vmatpush.bf16.msra.mxu0 %v1270
  %1322 = vmatpush.bf16.msra.mxu0 %v1269
  %1323 = vmatpush.bf16.msra.mxu0 %v1268
  %1324 = vmatmul.bf16.gmra.mxu0 %v1063
  %v1325 = vpop.f32.mrf.mxu0
  %v1326 = vadd.f32 %v1171, %v1325
  %v1327 = vpop.f32.mrf.mxu0
  %v1328 = vadd.f32 %v1171, %v1327
  %1329 = vmatmul.bf16.gmra.mxu0 %v1064
  %v1330 = vpop.f32.mrf.mxu0
  %v1331 = vadd.f32 %v1171, %v1330
  %v1332 = vpop.f32.mrf.mxu0
  %v1333 = vadd.f32 %v1171, %v1332
  %1334 = vdwg.mxu0
  %1335 = vmatpush.bf16.msra.mxu0 %v1283
  %1336 = vmatpush.bf16.msra.mxu0 %v1282
  %1337 = vmatpush.bf16.msra.mxu0 %v1281
  %1338 = vmatpush.bf16.msra.mxu0 %v1280
  %1339 = vmatpush.bf16.msra.mxu0 %v1279
  %1340 = vmatpush.bf16.msra.mxu0 %v1278
  %1341 = vmatpush.bf16.msra.mxu0 %v1277
  %1342 = vmatpush.bf16.msra.mxu0 %v1276
  %1343 = vmatmul.bf16.gmra.mxu0 %v1091
  %v1344 = vpop.f32.mrf.mxu0
  %v1345 = vadd.f32 %v1326, %v1344
  %v1346 = vpop.f32.mrf.mxu0
  %v1347 = vadd.f32 %v1328, %v1346
  %1348 = vmatmul.bf16.gmra.mxu0 %v1099
  %v1349 = vpop.f32.mrf.mxu0
  %v1350 = vadd.f32 %v1331, %v1349
  %v1351 = vpop.f32.mrf.mxu0
  %v1352 = vadd.f32 %v1333, %v1351
  %1353 = vdwg.mxu0
  %1354 = vmatpush.bf16.msra.mxu0 %v1291
  %1355 = vmatpush.bf16.msra.mxu0 %v1290
  %1356 = vmatpush.bf16.msra.mxu0 %v1289
  %1357 = vmatpush.bf16.msra.mxu0 %v1288
  %1358 = vmatpush.bf16.msra.mxu0 %v1287
  %1359 = vmatpush.bf16.msra.mxu0 %v1286
  %1360 = vmatpush.bf16.msra.mxu0 %v1285
  %1361 = vmatpush.bf16.msra.mxu0 %v1284
  %1362 = vmatmul.bf16.gmra.mxu0 %v1117
  %v1363 = vpop.f32.mrf.mxu0
  %v1364 = vadd.f32 %v1345, %v1363
  %v1365 = vpop.f32.mrf.mxu0
  %v1366 = vadd.f32 %v1347, %v1365
  %1367 = vmatmul.bf16.gmra.mxu0 %v1119
  %v1368 = vpop.f32.mrf.mxu0
  %v1369 = vadd.f32 %v1350, %v1368
  %v1370 = vpop.f32.mrf.mxu0
  %v1371 = vadd.f32 %v1352, %v1370
  %1372 = vdwg.mxu0
  %s1373 = scalar_lea.vmem %s2, 12
  %v1374 = vld [vmem:[%s1373] sm:$0x7]
  %v1375 = vperm.slane %v1374, 1
  %v1376 = vmul.f32 %v1364, %v1375
  %v1377 = vmul.f32 %v1366, %v1375
  %v1378 = vmul.f32 %v1369, %v1375
  %v1379 = vmul.f32 %v1371, %v1375
  %v1380 = vperm.slane %v1374, 2
  %v1381 = vadd.f32 %v1376, %v1380
  %v1382 = vadd.f32 %v1377, %v1380
  %v1383 = vadd.f32 %v1378, %v1380
  %v1384 = vadd.f32 %v1379, %v1380
  %vm1385 = vcmp.gt.f32.partialorder %v1381, 0.0
  %vm1386 = vcmp.gt.f32.partialorder %v1382, 0.0
  %vm1387 = vcmp.gt.f32.partialorder %v1383, 0.0
  %vm1388 = vcmp.gt.f32.partialorder %v1384, 0.0
  %v1389 = vmul.f32 %v1381, 0.33
  %v1390 = vmul.f32 %v1382, 0.33
  %v1391 = vmul.f32 %v1383, 0.33
  %v1392 = vmul.f32 %v1384, 0.33
  %v1393 = vsel %vm1385, %v1381, %v1389
  %v1394 = vsel %vm1386, %v1382, %v1390
  %v1395 = vsel %vm1387, %v1383, %v1391
  %v1396 = vsel %vm1388, %v1384, %v1392
  %v1397 = vpack.c.bf16 %v1393, %v1393
  %v1398 = vpack.c.bf16 %v1394, %v1394
  %v1399 = vpack.c.bf16 %v1395, %v1395
  %v1400 = vpack.c.bf16 %v1396, %v1396
  %v1402 = vshrl.u32 %v1397, 16
  %v1404 = vrot.slane %v1402, 7
  %v1405 = vshll.u32 %v1397, 16
  %v1407 = vor.u32 %v1404, %v1405
  %v1408 = vrot.slane %v1404, 4
  %v1410 = vshrl.u32 %v1398, 16
  %v1412 = vrot.slane %v1410, 7
  %v1413 = vshll.u32 %v1398, 16
  %v1415 = vor.u32 %v1412, %v1413
  %v1416 = vsel %vm73, %v1408, %v1415
  %v1417 = vrot.slane %v1412, 4
  %v1419 = vshrl.u32 %v1399, 16
  %v1421 = vrot.slane %v1419, 7
  %v1422 = vshll.u32 %v1399, 16
  %v1424 = vor.u32 %v1421, %v1422
  %v1425 = vsel %vm73, %v1417, %v1424
  %v1426 = vrot.slane %v1421, 4
  %v1428 = vshrl.u32 %v1400, 16
  %v1430 = vrot.slane %v1428, 7
  %v1431 = vshll.u32 %v1400, 16
  %v1433 = vor.u32 %v1430, %v1431
  %v1434 = vsel %vm73, %v1426, %v1433
  %v1435 = vrot.slane %v1430, 4
  %v1441 = vsel %vm115, %v1407, %v1040
  %1442 = vst [vmem:[#allocation2] sm:$0xf] %v1441
  %1443 = vst [vmem:[#allocation2 + $0x4] sm:$0xf] %v1416
  %1444 = vst [vmem:[#allocation2 + $0x8] sm:$0xf] %v1425
  %1445 = vst [vmem:[#allocation2 + $0xc] sm:$0xf] %v1434
  %v1446 = vld [vmem:[#allocation2 + $0x10] sm:$0x1]
  %v1447 = vsel %vm19, %v1435, %v1446
  %1448 = vst [vmem:[#allocation2 + $0x10] sm:$0x1] %v1447
  %v1449 = vld [vmem:[#allocation2] sm:$0xf]
  %v1450 = vld [vmem:[#allocation2 + $0x4] sm:$0xf]
  %v1451 = vld [vmem:[#allocation2 + $0x8] sm:$0xf]
  %v1452 = vld [vmem:[#allocation2 + $0xc] sm:$0xf]
  %v1453 = vsel %vm145, %v1449, 0
  %v1454 = vsel %vm146, %v1450, 0
  %v1455 = vsel %vm147, %v1451, 0
  %v1456 = vsel %vm148, %v1452, 0
  %v1457 = vld [vmem:[#allocation2 + $0x10] sm:$0x1]
  %v1458 = vld [vmem:[#allocation2] sm:$0xe]
  %v1459 = vsel %vm198, %v1458, 0
  %v1460 = vsel %vm205, %v1450, 0
  %v1461 = vsel %vm212, %v1451, 0
  %v1462 = vsel %vm219, %v1452, 0
  %v1463 = vsel %vm226, %v1457, 0
  %v1468 = vunpack.c.l.b16 %v1453
  %v1469 = vunpack.c.l.b16 %v1454
  %v1470 = vunpack.c.l.b16 %v1455
  %v1471 = vunpack.c.l.b16 %v1456
  %v1472 = vpack.c.b16 %v1469, %v1468
  %v1473 = vpack.c.b16 %v1471, %v1470
  %v1481 = vunpack.c.l.b16 %v1449
  %v1482 = vunpack.c.l.b16 %v1450
  %v1483 = vunpack.c.l.b16 %v1451
  %v1484 = vunpack.c.l.b16 %v1452
  %v1485 = vunpack.c.l.b16 %v1457
  %v1486 = vpack.c.b16 %v1482, %v1481
  %v1487 = vpack.c.b16 %v1484, %v1483
  %v1488 = vpack.c.b16 %v1485, %v1485
  %v1490 = vshrl.u32 %v1486, 16
  %v1492 = vshll.u32 %v1486, 16
  %v1494 = vrot.slane %v1492, 1
  %v1495 = vor.u32 %v1490, %v1494
  %v1497 = vshll.u32 %v1487, 16
  %v1499 = vrot.slane %v1497, 1
  %v1500 = vsel %vm257, %v1495, %v1499
  %v1501 = vshrl.u32 %v1487, 16
  %v1503 = vor.u32 %v1501, %v1499
  %v1505 = vshll.u32 %v1488, 16
  %v1507 = vrot.slane %v1505, 1
  %v1508 = vsel %vm257, %v1503, %v1507
  %v1516 = vunpack.c.l.b16 %v1459
  %v1517 = vunpack.c.l.b16 %v1460
  %v1518 = vunpack.c.l.b16 %v1461
  %v1519 = vunpack.c.l.b16 %v1462
  %v1520 = vunpack.c.l.b16 %v1463
  %v1521 = vpack.c.b16 %v1517, %v1516
  %v1522 = vpack.c.b16 %v1519, %v1518
  %v1523 = vpack.c.b16 %v1520, %v1520
  %v1524 = vrot.slane %v1521, 1
  %v1525 = vrot.slane %v1522, 1
  %v1526 = vsel %vm293, %v1524, %v1525
  %v1527 = vrot.slane %v1523, 1
  %v1528 = vsel %vm293, %v1525, %v1527
  %s1531 = scalar_lea.vmem %s1, 576
  %v1532 = vld [vmem:[%s1531] sm:$0xf]
  %v1533 = vld [vmem:[%s1531 + $0x4] sm:$0xf]
  %v1534 = vld [vmem:[%s1531 + $0x8] sm:$0xf]
  %v1535 = vld [vmem:[%s1531 + $0xc] sm:$0xf]
  %v1536 = vld [vmem:[%s1531 + $0x10] sm:$0xf]
  %v1537 = vld [vmem:[%s1531 + $0x14] sm:$0xf]
  %v1538 = vld [vmem:[%s1531 + $0x18] sm:$0xf]
  %v1539 = vld [vmem:[%s1531 + $0x1c] sm:$0xf]
  %v1540 = vld [vmem:[%s1531 + $0x20] sm:$0xf]
  %v1541 = vld [vmem:[%s1531 + $0x24] sm:$0xf]
  %v1542 = vld [vmem:[%s1531 + $0x28] sm:$0xf]
  %v1543 = vld [vmem:[%s1531 + $0x2c] sm:$0xf]
  %v1544 = vld [vmem:[%s1531 + $0x30] sm:$0xf]
  %v1545 = vld [vmem:[%s1531 + $0x34] sm:$0xf]
  %v1546 = vld [vmem:[%s1531 + $0x38] sm:$0xf]
  %v1547 = vld [vmem:[%s1531 + $0x3c] sm:$0xf]
  %v1548 = vld [vmem:[%s1531 + $0x40] sm:$0xf]
  %v1549 = vld [vmem:[%s1531 + $0x44] sm:$0xf]
  %v1550 = vld [vmem:[%s1531 + $0x48] sm:$0xf]
  %v1551 = vld [vmem:[%s1531 + $0x4c] sm:$0xf]
  %v1552 = vld [vmem:[%s1531 + $0x50] sm:$0xf]
  %v1553 = vld [vmem:[%s1531 + $0x54] sm:$0xf]
  %v1554 = vld [vmem:[%s1531 + $0x58] sm:$0xf]
  %v1555 = vld [vmem:[%s1531 + $0x5c] sm:$0xf]
  %v1556 = vld [vmem:[%s1531 + $0x60] sm:$0xf]
  %v1557 = vld [vmem:[%s1531 + $0x64] sm:$0xf]
  %v1558 = vld [vmem:[%s1531 + $0x68] sm:$0xf]
  %v1559 = vld [vmem:[%s1531 + $0x6c] sm:$0xf]
  %v1560 = vld [vmem:[%s1531 + $0x70] sm:$0xf]
  %v1561 = vld [vmem:[%s1531 + $0x74] sm:$0xf]
  %v1562 = vld [vmem:[%s1531 + $0x78] sm:$0xf]
  %v1563 = vld [vmem:[%s1531 + $0x7c] sm:$0xf]
  %v1564 = vld [vmem:[%s1531 + $0x80] sm:$0xf]
  %v1565 = vld [vmem:[%s1531 + $0x84] sm:$0xf]
  %v1566 = vld [vmem:[%s1531 + $0x88] sm:$0xf]
  %v1567 = vld [vmem:[%s1531 + $0x8c] sm:$0xf]
  %v1568 = vld [vmem:[%s1531 + $0x90] sm:$0xf]
  %v1569 = vld [vmem:[%s1531 + $0x94] sm:$0xf]
  %v1570 = vld [vmem:[%s1531 + $0x98] sm:$0xf]
  %v1571 = vld [vmem:[%s1531 + $0x9c] sm:$0xf]
  %v1572 = vld [vmem:[%s1531 + $0xa0] sm:$0xf]
  %v1573 = vld [vmem:[%s1531 + $0xa4] sm:$0xf]
  %v1574 = vld [vmem:[%s1531 + $0xa8] sm:$0xf]
  %v1575 = vld [vmem:[%s1531 + $0xac] sm:$0xf]
  %v1576 = vld [vmem:[%s1531 + $0xb0] sm:$0xf]
  %v1577 = vld [vmem:[%s1531 + $0xb4] sm:$0xf]
  %v1578 = vld [vmem:[%s1531 + $0xb8] sm:$0xf]
  %v1579 = vld [vmem:[%s1531 + $0xbc] sm:$0xf]
  %v1580 = vperm.slane %v1374, 0
  %v1629 = vunpack.c.l.b16 %v1532
  %v1630 = vunpack.c.l.b16 %v1533
  %v1631 = vunpack.c.l.b16 %v1534
  %v1632 = vunpack.c.l.b16 %v1535
  %v1633 = vunpack.c.l.b16 %v1536
  %v1634 = vunpack.c.l.b16 %v1537
  %v1635 = vunpack.c.l.b16 %v1538
  %v1636 = vunpack.c.l.b16 %v1539
  %v1637 = vunpack.c.l.b16 %v1540
  %v1638 = vunpack.c.l.b16 %v1541
  %v1639 = vunpack.c.l.b16 %v1542
  %v1640 = vunpack.c.l.b16 %v1543
  %v1641 = vunpack.c.l.b16 %v1544
  %v1642 = vunpack.c.l.b16 %v1545
  %v1643 = vunpack.c.l.b16 %v1546
  %v1644 = vunpack.c.l.b16 %v1547
  %v1645 = vunpack.c.l.b16 %v1548
  %v1646 = vunpack.c.l.b16 %v1549
  %v1647 = vunpack.c.l.b16 %v1550
  %v1648 = vunpack.c.l.b16 %v1551
  %v1649 = vunpack.c.l.b16 %v1552
  %v1650 = vunpack.c.l.b16 %v1553
  %v1651 = vunpack.c.l.b16 %v1554
  %v1652 = vunpack.c.l.b16 %v1555
  %v1653 = vunpack.c.l.b16 %v1556
  %v1654 = vunpack.c.l.b16 %v1557
  %v1655 = vunpack.c.l.b16 %v1558
  %v1656 = vunpack.c.l.b16 %v1559
  %v1657 = vunpack.c.l.b16 %v1560
  %v1658 = vunpack.c.l.b16 %v1561
  %v1659 = vunpack.c.l.b16 %v1562
  %v1660 = vunpack.c.l.b16 %v1563
  %v1661 = vunpack.c.l.b16 %v1564
  %v1662 = vunpack.c.l.b16 %v1565
  %v1663 = vunpack.c.l.b16 %v1566
  %v1664 = vunpack.c.l.b16 %v1567
  %v1665 = vunpack.c.l.b16 %v1568
  %v1666 = vunpack.c.l.b16 %v1569
  %v1667 = vunpack.c.l.b16 %v1570
  %v1668 = vunpack.c.l.b16 %v1571
  %v1669 = vunpack.c.l.b16 %v1572
  %v1670 = vunpack.c.l.b16 %v1573
  %v1671 = vunpack.c.l.b16 %v1574
  %v1672 = vunpack.c.l.b16 %v1575
  %v1673 = vunpack.c.l.b16 %v1576
  %v1674 = vunpack.c.l.b16 %v1577
  %v1675 = vunpack.c.l.b16 %v1578
  %v1676 = vunpack.c.l.b16 %v1579
  %v1677 = vpack.c.b16 %v1630, %v1629
  %v1678 = vpack.c.b16 %v1632, %v1631
  %v1679 = vpack.c.b16 %v1634, %v1633
  %v1680 = vpack.c.b16 %v1636, %v1635
  %v1681 = vpack.c.b16 %v1638, %v1637
  %v1682 = vpack.c.b16 %v1640, %v1639
  %v1683 = vpack.c.b16 %v1642, %v1641
  %v1684 = vpack.c.b16 %v1644, %v1643
  %v1685 = vpack.c.b16 %v1646, %v1645
  %v1686 = vpack.c.b16 %v1648, %v1647
  %v1687 = vpack.c.b16 %v1650, %v1649
  %v1688 = vpack.c.b16 %v1652, %v1651
  %v1689 = vpack.c.b16 %v1654, %v1653
  %v1690 = vpack.c.b16 %v1656, %v1655
  %v1691 = vpack.c.b16 %v1658, %v1657
  %v1692 = vpack.c.b16 %v1660, %v1659
  %v1693 = vpack.c.b16 %v1662, %v1661
  %v1694 = vpack.c.b16 %v1664, %v1663
  %v1695 = vpack.c.b16 %v1666, %v1665
  %v1696 = vpack.c.b16 %v1668, %v1667
  %v1697 = vpack.c.b16 %v1670, %v1669
  %v1698 = vpack.c.b16 %v1672, %v1671
  %v1699 = vpack.c.b16 %v1674, %v1673
  %v1700 = vpack.c.b16 %v1676, %v1675
  %1725 = vmatpush.bf16.msra.mxu0 %v1684
  %1726 = vmatpush.bf16.msra.mxu0 %v1683
  %1727 = vmatpush.bf16.msra.mxu0 %v1682
  %1728 = vmatpush.bf16.msra.mxu0 %v1681
  %1729 = vmatpush.bf16.msra.mxu0 %v1680
  %1730 = vmatpush.bf16.msra.mxu0 %v1679
  %1731 = vmatpush.bf16.msra.mxu0 %v1678
  %1732 = vmatpush.bf16.msra.mxu0 %v1677
  %1733 = vmatmul.bf16.gmra.mxu0 %v1472
  %v1734 = vpop.f32.mrf.mxu0
  %v1735 = vadd.f32 %v1580, %v1734
  %v1736 = vpop.f32.mrf.mxu0
  %v1737 = vadd.f32 %v1580, %v1736
  %1738 = vmatmul.bf16.gmra.mxu0 %v1473
  %v1739 = vpop.f32.mrf.mxu0
  %v1740 = vadd.f32 %v1580, %v1739
  %v1741 = vpop.f32.mrf.mxu0
  %v1742 = vadd.f32 %v1580, %v1741
  %1743 = vdwg.mxu0
  %1744 = vmatpush.bf16.msra.mxu0 %v1692
  %1745 = vmatpush.bf16.msra.mxu0 %v1691
  %1746 = vmatpush.bf16.msra.mxu0 %v1690
  %1747 = vmatpush.bf16.msra.mxu0 %v1689
  %1748 = vmatpush.bf16.msra.mxu0 %v1688
  %1749 = vmatpush.bf16.msra.mxu0 %v1687
  %1750 = vmatpush.bf16.msra.mxu0 %v1686
  %1751 = vmatpush.bf16.msra.mxu0 %v1685
  %1752 = vmatmul.bf16.gmra.mxu0 %v1500
  %v1753 = vpop.f32.mrf.mxu0
  %v1754 = vadd.f32 %v1735, %v1753
  %v1755 = vpop.f32.mrf.mxu0
  %v1756 = vadd.f32 %v1737, %v1755
  %1757 = vmatmul.bf16.gmra.mxu0 %v1508
  %v1758 = vpop.f32.mrf.mxu0
  %v1759 = vadd.f32 %v1740, %v1758
  %v1760 = vpop.f32.mrf.mxu0
  %v1761 = vadd.f32 %v1742, %v1760
  %1762 = vdwg.mxu0
  %1763 = vmatpush.bf16.msra.mxu0 %v1700
  %1764 = vmatpush.bf16.msra.mxu0 %v1699
  %1765 = vmatpush.bf16.msra.mxu0 %v1698
  %1766 = vmatpush.bf16.msra.mxu0 %v1697
  %1767 = vmatpush.bf16.msra.mxu0 %v1696
  %1768 = vmatpush.bf16.msra.mxu0 %v1695
  %1769 = vmatpush.bf16.msra.mxu0 %v1694
  %1770 = vmatpush.bf16.msra.mxu0 %v1693
  %1771 = vmatmul.bf16.gmra.mxu0 %v1526
  %v1772 = vpop.f32.mrf.mxu0
  %v1773 = vadd.f32 %v1754, %v1772
  %v1774 = vpop.f32.mrf.mxu0
  %v1775 = vadd.f32 %v1756, %v1774
  %1776 = vmatmul.bf16.gmra.mxu0 %v1528
  %v1777 = vpop.f32.mrf.mxu0
  %v1778 = vadd.f32 %v1759, %v1777
  %v1779 = vpop.f32.mrf.mxu0
  %v1780 = vadd.f32 %v1761, %v1779
  %1781 = vdwg.mxu0
  %v1782 = vadd.f32 %v960, %v1773
  %v1783 = vadd.f32 %v961, %v1775
  %v1784 = vadd.f32 %v962, %v1778
  %v1785 = vadd.f32 %v963, %v1780
  %v1786 = vpack.c.bf16 %v1782, %v1782
  %v1787 = vpack.c.bf16 %v1783, %v1783
  %v1788 = vpack.c.bf16 %v1784, %v1784
  %v1789 = vpack.c.bf16 %v1785, %v1785
  %1790 = vst [vmem:[%s3] sm:$0xf] %v1786
  %1791 = vst [vmem:[%s3 + $0x4] sm:$0xf] %v1787
  %1792 = vst [vmem:[%s3 + $0x8] sm:$0xf] %v1788
  %1793 = vst [vmem:[%s3 + $0xc] sm:$0xf] %v1789
  // Predicated region
  $region14: #{_lambda_.11} parent=0 // pred_check
    _
  $region15: #{_lambda_.11} parent=0 // pred_check_branch
    %1795 = sbr.rel (0) target = $region17
  $region16: #{_lambda_.11} parent=0 // pred_region
    _
  $region17: #{_lambda_.11} parent=0 // pred_fallthru
    _
  // Predicated region
  $region18: #{_lambda_.11} parent=0 // pred_check
    _
  $region19: #{_lambda_.11} parent=0 // pred_check_branch
    %1797 = sbr.rel (0) target = $region21
  $region20: #{_lambda_.11} parent=0 // pred_region
    _
  $region21: #{_lambda_.11} parent=0 // pred_fallthru
    _

// kernel: _lambda_.15
$region0: #{_lambda_.15}
  #allocation0 [shape = 'u32[]', space=smem, size = 0x4, offset = 0x4, fixed_abs, tag = 'smem constant byte address 0x4 - core index']
  #allocation1 [shape = 'u32[72,128]{1,0:T(1,128)}', space=vmem, size = 0x9000, scoped, tag = 'internal scratch']
  #allocation2 [shape = 'bf16[10,128]{1,0:T(8,128)(2,1)}', space=vmem, size = 0x1000, scoped, tag = 'scratch operand']
  %s0 = inlined_call_operand.vmem [shape: bf16[8,128], index: 0, kind: input, shape index: {}]
  %s1 = inlined_call_operand.vmem [shape: bf16[4,384,128], index: 1, kind: input, shape index: {}]
  %s2 = inlined_call_operand.vmem [shape: f32[4,3,128], index: 2, kind: input, shape index: {}]
  %s3 = inlined_call_operand.vmem [shape: bf16[8,128], index: 3, kind: output, shape index: {}]
  %s4 = sld [smem:[#allocation0]]
  $region22: #{_lambda_.15} parent=0
    _
  %s6 = ssub.s32 1, %s4
  %s7 = scalar_select 0, %s6, %s4
  // Predicated region
  $region2: #{_lambda_.15} parent=0 // pred_check
    _
  $region3: #{_lambda_.15} parent=0 // pred_check_branch
    %9 = sbr.rel (0) target = $region5
  $region4: #{_lambda_.15} parent=0 // pred_region
    _
  $region5: #{_lambda_.15} parent=0 // pred_fallthru
    _
  // Predicated region
  $region6: #{_lambda_.15} parent=0 // pred_check
    _
  $region7: #{_lambda_.15} parent=0 // pred_check_branch
    %11 = sbr.rel (0) target = $region9
  $region8: #{_lambda_.15} parent=0 // pred_region
    _
  $region9: #{_lambda_.15} parent=0 // pred_fallthru
    _
  // Predicated region
  $region10: #{_lambda_.15} parent=0 // pred_check
    _
  $region11: #{_lambda_.15} parent=0 // pred_check_branch
    %13 = sbr.rel (0) target = $region13
  $region12: #{_lambda_.15} parent=0 // pred_region
    _
  $region13: #{_lambda_.15} parent=0 // pred_fallthru
    _
  %vm17 = vcmask 1040384
  %vm18 = vsmask.f32 256
  %vm19 = vmand %vm17, %vm18
  %v20 = vld [vmem:[#allocation2] sm:$0x1]
  %v21 = vsel %vm19, 0, %v20
  %22 = vst [vmem:[#allocation2] sm:$0x1] %v21
  %vm23 = vsmask.f32 7938
  %vm24 = vmand %vm17, %vm23
  %v25 = vld [vmem:[#allocation2 + $0x4] sm:$0x1]
  %v26 = vsel %vm24, 0, %v25
  %27 = vst [vmem:[#allocation2 + $0x4] sm:$0x1] %v26
  %v28 = vlaneseq
  %v29 = vshrl.u32 %v28, 7
  %v30 = vand.u32 %v29, 3
  %v31 = vld [vmem:[%s0] sm:$0xf]
  %v32 = vunpack.c.l.bf16 %v31
  %v33 = vld [vmem:[%s2] sm:$0x7]
  %v34 = vperm.slane %v33, 1
  %v35 = vmul.f32 %v32, %v34
  %v36 = vperm.slane %v33, 2
  %v37 = vadd.f32 %v35, %v36
  %vm38 = vcmp.gt.f32.partialorder %v37, 0.0
  %v39 = vmul.f32 %v37, 0.33
  %v40 = vsel %vm38, %v37, %v39
  %v41 = vpack.c.bf16 %v40, %v40
  %v43 = vshrl.u32 %v41, 16
  %v45 = vrot.slane %v43, 7
  %v46 = vshll.u32 %v41, 16
  %v48 = vor.u32 %v45, %v46
  %v49 = vrot.slane %v45, 4
  %vm52 = vcmask 1043456
  %vm53 = vmand %vm52, %vm23
  %v54 = vld [vmem:[#allocation2] sm:$0xf]
  %v55 = vsel %vm53, %v48, %v54
  %56 = vst [vmem:[#allocation2] sm:$0xf] %v55
  %v57 = vld [vmem:[#allocation2 + $0x4] sm:$0x1]
  %v58 = vsel %vm19, %v49, %v57
  %59 = vst [vmem:[#allocation2 + $0x4] sm:$0x1] %v58
  %v60 = vld [vmem:[#allocation2] sm:$0xf]
  %v61 = vadd.s32 %v30, 4294967295
  %vm62 = vcmp.ge.s32.totalorder %v61, 0
  %vm63 = vcmp.lt.s32.totalorder %v61, 4
  %vm64 = vmand %vm62, %vm63
  %vm65 = vmpackc.low %vm64, %vm64
  %v66 = vsel %vm65, %v60, 0
  %v67 = vld [vmem:[#allocation2 + $0x4] sm:$0x1]
  %v68 = vld [vmem:[#allocation2] sm:$0xe]
  %v69 = vadd.s32 %v30, 1
  %vm70 = vcmp.ge.s32.totalorder %v69, 0
  %vm71 = vcmp.lt.s32.totalorder %v69, 4
  %vm72 = vmand %vm70, %vm71
  %vm73 = vmpackc.low %vm72, %vm72
  %v74 = vsel %vm73, 65537, 0
  %v75 = vrot.slane %v74, 7
  %v76 = vrot.slane %v75, 4
  %v77 = vunpack.c.l.b16 %v75
  %v78 = vunpack.c.h.b16 %v75
  %v79 = vunpack.c.l.b16 0
  %v80 = vunpack.c.h.b16 0
  %vm81 = vcmp.ne.s32.totalorder %v77, %v79
  %vm82 = vcmp.ne.s32.totalorder %v78, %v80
  %vm83 = vmpackc.low %vm82, %vm81
  %v84 = vunpack.c.l.b16 %v76
  %v85 = vunpack.c.h.b16 %v76
  %v86 = vunpack.c.l.b16 0
  %v87 = vunpack.c.h.b16 0
  %vm88 = vcmp.ne.s32.totalorder %v84, %v86
  %vm89 = vcmp.ne.s32.totalorder %v85, %v87
  %vm90 = vmpackc.low %vm89, %vm88
  %v91 = vsel %vm83, %v68, 0
  %v92 = vsel %vm90, %v67, 0
  %v95 = vunpack.c.l.b16 %v60
  %v96 = vunpack.c.l.b16 %v67
  %v97 = vpack.c.b16 %v96, %v95
  %v99 = vshrl.u32 %v97, 16
  %v101 = vshll.u32 %v97, 16
  %v103 = vrot.slane %v101, 1
  %v104 = vor.u32 %v99, %v103
  %v108 = vunpack.c.l.b16 %v91
  %v109 = vunpack.c.l.b16 %v92
  %v110 = vpack.c.b16 %v109, %v108
  %v111 = vrot.slane %v110, 1
  %v113 = vld [vmem:[%s1] sm:$0xf]
  %v114 = vld [vmem:[%s1 + $0x4] sm:$0xf]
  %v115 = vld [vmem:[%s1 + $0x8] sm:$0xf]
  %v116 = vld [vmem:[%s1 + $0xc] sm:$0xf]
  %v117 = vld [vmem:[%s1 + $0x10] sm:$0xf]
  %v118 = vld [vmem:[%s1 + $0x14] sm:$0xf]
  %v119 = vld [vmem:[%s1 + $0x18] sm:$0xf]
  %v120 = vld [vmem:[%s1 + $0x1c] sm:$0xf]
  %v121 = vld [vmem:[%s1 + $0x20] sm:$0xf]
  %v122 = vld [vmem:[%s1 + $0x24] sm:$0xf]
  %v123 = vld [vmem:[%s1 + $0x28] sm:$0xf]
  %v124 = vld [vmem:[%s1 + $0x2c] sm:$0xf]
  %v125 = vld [vmem:[%s1 + $0x30] sm:$0xf]
  %v126 = vld [vmem:[%s1 + $0x34] sm:$0xf]
  %v127 = vld [vmem:[%s1 + $0x38] sm:$0xf]
  %v128 = vld [vmem:[%s1 + $0x3c] sm:$0xf]
  %v129 = vld [vmem:[%s1 + $0x40] sm:$0xf]
  %v130 = vld [vmem:[%s1 + $0x44] sm:$0xf]
  %v131 = vld [vmem:[%s1 + $0x48] sm:$0xf]
  %v132 = vld [vmem:[%s1 + $0x4c] sm:$0xf]
  %v133 = vld [vmem:[%s1 + $0x50] sm:$0xf]
  %v134 = vld [vmem:[%s1 + $0x54] sm:$0xf]
  %v135 = vld [vmem:[%s1 + $0x58] sm:$0xf]
  %v136 = vld [vmem:[%s1 + $0x5c] sm:$0xf]
  %v137 = vld [vmem:[%s1 + $0x60] sm:$0xf]
  %v138 = vld [vmem:[%s1 + $0x64] sm:$0xf]
  %v139 = vld [vmem:[%s1 + $0x68] sm:$0xf]
  %v140 = vld [vmem:[%s1 + $0x6c] sm:$0xf]
  %v141 = vld [vmem:[%s1 + $0x70] sm:$0xf]
  %v142 = vld [vmem:[%s1 + $0x74] sm:$0xf]
  %v143 = vld [vmem:[%s1 + $0x78] sm:$0xf]
  %v144 = vld [vmem:[%s1 + $0x7c] sm:$0xf]
  %v145 = vld [vmem:[%s1 + $0x80] sm:$0xf]
  %v146 = vld [vmem:[%s1 + $0x84] sm:$0xf]
  %v147 = vld [vmem:[%s1 + $0x88] sm:$0xf]
  %v148 = vld [vmem:[%s1 + $0x8c] sm:$0xf]
  %v149 = vld [vmem:[%s1 + $0x90] sm:$0xf]
  %v150 = vld [vmem:[%s1 + $0x94] sm:$0xf]
  %v151 = vld [vmem:[%s1 + $0x98] sm:$0xf]
  %v152 = vld [vmem:[%s1 + $0x9c] sm:$0xf]
  %v153 = vld [vmem:[%s1 + $0xa0] sm:$0xf]
  %v154 = vld [vmem:[%s1 + $0xa4] sm:$0xf]
  %v155 = vld [vmem:[%s1 + $0xa8] sm:$0xf]
  %v156 = vld [vmem:[%s1 + $0xac] sm:$0xf]
  %v157 = vld [vmem:[%s1 + $0xb0] sm:$0xf]
  %v158 = vld [vmem:[%s1 + $0xb4] sm:$0xf]
  %v159 = vld [vmem:[%s1 + $0xb8] sm:$0xf]
  %v160 = vld [vmem:[%s1 + $0xbc] sm:$0xf]
  %v161 = vperm.slane %v33, 0
  %v210 = vunpack.c.l.b16 %v113
  %v211 = vunpack.c.l.b16 %v114
  %v212 = vunpack.c.l.b16 %v115
  %v213 = vunpack.c.l.b16 %v116
  %v214 = vunpack.c.l.b16 %v117
  %v215 = vunpack.c.l.b16 %v118
  %v216 = vunpack.c.l.b16 %v119
  %v217 = vunpack.c.l.b16 %v120
  %v218 = vunpack.c.l.b16 %v121
  %v219 = vunpack.c.l.b16 %v122
  %v220 = vunpack.c.l.b16 %v123
  %v221 = vunpack.c.l.b16 %v124
  %v222 = vunpack.c.l.b16 %v125
  %v223 = vunpack.c.l.b16 %v126
  %v224 = vunpack.c.l.b16 %v127
  %v225 = vunpack.c.l.b16 %v128
  %v226 = vunpack.c.l.b16 %v129
  %v227 = vunpack.c.l.b16 %v130
  %v228 = vunpack.c.l.b16 %v131
  %v229 = vunpack.c.l.b16 %v132
  %v230 = vunpack.c.l.b16 %v133
  %v231 = vunpack.c.l.b16 %v134
  %v232 = vunpack.c.l.b16 %v135
  %v233 = vunpack.c.l.b16 %v136
  %v234 = vunpack.c.l.b16 %v137
  %v235 = vunpack.c.l.b16 %v138
  %v236 = vunpack.c.l.b16 %v139
  %v237 = vunpack.c.l.b16 %v140
  %v238 = vunpack.c.l.b16 %v141
  %v239 = vunpack.c.l.b16 %v142
  %v240 = vunpack.c.l.b16 %v143
  %v241 = vunpack.c.l.b16 %v144
  %v242 = vunpack.c.l.b16 %v145
  %v243 = vunpack.c.l.b16 %v146
  %v244 = vunpack.c.l.b16 %v147
  %v245 = vunpack.c.l.b16 %v148
  %v246 = vunpack.c.l.b16 %v149
  %v247 = vunpack.c.l.b16 %v150
  %v248 = vunpack.c.l.b16 %v151
  %v249 = vunpack.c.l.b16 %v152
  %v250 = vunpack.c.l.b16 %v153
  %v251 = vunpack.c.l.b16 %v154
  %v252 = vunpack.c.l.b16 %v155
  %v253 = vunpack.c.l.b16 %v156
  %v254 = vunpack.c.l.b16 %v157
  %v255 = vunpack.c.l.b16 %v158
  %v256 = vunpack.c.l.b16 %v159
  %v257 = vunpack.c.l.b16 %v160
  %v258 = vpack.c.b16 %v211, %v210
  %v259 = vpack.c.b16 %v213, %v212
  %v260 = vpack.c.b16 %v215, %v214
  %v261 = vpack.c.b16 %v217, %v216
  %v262 = vpack.c.b16 %v219, %v218
  %v263 = vpack.c.b16 %v221, %v220
  %v264 = vpack.c.b16 %v223, %v222
  %v265 = vpack.c.b16 %v225, %v224
  %v266 = vpack.c.b16 %v227, %v226
  %v267 = vpack.c.b16 %v229, %v228
  %v268 = vpack.c.b16 %v231, %v230
  %v269 = vpack.c.b16 %v233, %v232
  %v270 = vpack.c.b16 %v235, %v234
  %v271 = vpack.c.b16 %v237, %v236
  %v272 = vpack.c.b16 %v239, %v238
  %v273 = vpack.c.b16 %v241, %v240
  %v274 = vpack.c.b16 %v243, %v242
  %v275 = vpack.c.b16 %v245, %v244
  %v276 = vpack.c.b16 %v247, %v246
  %v277 = vpack.c.b16 %v249, %v248
  %v278 = vpack.c.b16 %v251, %v250
  %v279 = vpack.c.b16 %v253, %v252
  %v280 = vpack.c.b16 %v255, %v254
  %v281 = vpack.c.b16 %v257, %v256
  %306 = vmatpush.bf16.msra.mxu0 %v265
  %307 = vmatpush.bf16.msra.mxu0 %v264
  %308 = vmatpush.bf16.msra.mxu0 %v263
  %309 = vmatpush.bf16.msra.mxu0 %v262
  %310 = vmatpush.bf16.msra.mxu0 %v261
  %311 = vmatpush.bf16.msra.mxu0 %v260
  %312 = vmatpush.bf16.msra.mxu0 %v259
  %313 = vmatpush.bf16.msra.mxu0 %v258
  %314 = vmatmul.bf16.gmra.mxu0 %v66
  %v315 = vpop.f32.mrf.mxu0
  %v316 = vadd.f32 %v161, %v315
  %v317 = vpop.f32.mrf.mxu0
  %318 = vdwg.mxu0
  %319 = vmatpush.bf16.msra.mxu0 %v273
  %320 = vmatpush.bf16.msra.mxu0 %v272
  %321 = vmatpush.bf16.msra.mxu0 %v271
  %322 = vmatpush.bf16.msra.mxu0 %v270
  %323 = vmatpush.bf16.msra.mxu0 %v269
  %324 = vmatpush.bf16.msra.mxu0 %v268
  %325 = vmatpush.bf16.msra.mxu0 %v267
  %326 = vmatpush.bf16.msra.mxu0 %v266
  %327 = vmatmul.bf16.gmra.mxu0 %v104
  %v328 = vpop.f32.mrf.mxu0
  %v329 = vadd.f32 %v316, %v328
  %v330 = vpop.f32.mrf.mxu0
  %331 = vdwg.mxu0
  %332 = vmatpush.bf16.msra.mxu0 %v281
  %333 = vmatpush.bf16.msra.mxu0 %v280
  %334 = vmatpush.bf16.msra.mxu0 %v279
  %335 = vmatpush.bf16.msra.mxu0 %v278
  %336 = vmatpush.bf16.msra.mxu0 %v277
  %337 = vmatpush.bf16.msra.mxu0 %v276
  %338 = vmatpush.bf16.msra.mxu0 %v275
  %339 = vmatpush.bf16.msra.mxu0 %v274
  %340 = vmatmul.bf16.gmra.mxu0 %v111
  %v341 = vpop.f32.mrf.mxu0
  %v342 = vadd.f32 %v329, %v341
  %v343 = vpop.f32.mrf.mxu0
  %344 = vdwg.mxu0
  %s345 = scalar_lea.vmem %s2, 4
  %v346 = vld [vmem:[%s345] sm:$0x7]
  %v347 = vperm.slane %v346, 1
  %v348 = vmul.f32 %v342, %v347
  %v349 = vperm.slane %v346, 2
  %v350 = vadd.f32 %v348, %v349
  %vm351 = vcmp.gt.f32.partialorder %v350, 0.0
  %v352 = vmul.f32 %v350, 0.33
  %v353 = vsel %vm351, %v350, %v352
  %v354 = vpack.c.bf16 %v353, %v353
  %v356 = vshrl.u32 %v354, 16
  %v358 = vrot.slane %v356, 7
  %v359 = vshll.u32 %v354, 16
  %v361 = vor.u32 %v358, %v359
  %v362 = vrot.slane %v358, 4
  %v365 = vsel %vm53, %v361, %v60
  %366 = vst [vmem:[#allocation2] sm:$0xf] %v365
  %v367 = vld [vmem:[#allocation2 + $0x4] sm:$0x1]
  %v368 = vsel %vm19, %v362, %v367
  %369 = vst [vmem:[#allocation2 + $0x4] sm:$0x1] %v368
  %v370 = vld [vmem:[#allocation2] sm:$0xf]
  %v371 = vsel %vm65, %v370, 0
  %v372 = vld [vmem:[#allocation2 + $0x4] sm:$0x1]
  %v373 = vld [vmem:[#allocation2] sm:$0xe]
  %v374 = vsel %vm83, %v373, 0
  %v375 = vsel %vm90, %v372, 0
  %v378 = vunpack.c.l.b16 %v370
  %v379 = vunpack.c.l.b16 %v372
  %v380 = vpack.c.b16 %v379, %v378
  %v382 = vshrl.u32 %v380, 16
  %v384 = vshll.u32 %v380, 16
  %v386 = vrot.slane %v384, 1
  %v387 = vor.u32 %v382, %v386
  %v391 = vunpack.c.l.b16 %v374
  %v392 = vunpack.c.l.b16 %v375
  %v393 = vpack.c.b16 %v392, %v391
  %v394 = vrot.slane %v393, 1
  %s396 = scalar_lea.vmem %s1, 192
  %v397 = vld [vmem:[%s396] sm:$0xf]
  %v398 = vld [vmem:[%s396 + $0x4] sm:$0xf]
  %v399 = vld [vmem:[%s396 + $0x8] sm:$0xf]
  %v400 = vld [vmem:[%s396 + $0xc] sm:$0xf]
  %v401 = vld [vmem:[%s396 + $0x10] sm:$0xf]
  %v402 = vld [vmem:[%s396 + $0x14] sm:$0xf]
  %v403 = vld [vmem:[%s396 + $0x18] sm:$0xf]
  %v404 = vld [vmem:[%s396 + $0x1c] sm:$0xf]
  %v405 = vld [vmem:[%s396 + $0x20] sm:$0xf]
  %v406 = vld [vmem:[%s396 + $0x24] sm:$0xf]
  %v407 = vld [vmem:[%s396 + $0x28] sm:$0xf]
  %v408 = vld [vmem:[%s396 + $0x2c] sm:$0xf]
  %v409 = vld [vmem:[%s396 + $0x30] sm:$0xf]
  %v410 = vld [vmem:[%s396 + $0x34] sm:$0xf]
  %v411 = vld [vmem:[%s396 + $0x38] sm:$0xf]
  %v412 = vld [vmem:[%s396 + $0x3c] sm:$0xf]
  %v413 = vld [vmem:[%s396 + $0x40] sm:$0xf]
  %v414 = vld [vmem:[%s396 + $0x44] sm:$0xf]
  %v415 = vld [vmem:[%s396 + $0x48] sm:$0xf]
  %v416 = vld [vmem:[%s396 + $0x4c] sm:$0xf]
  %v417 = vld [vmem:[%s396 + $0x50] sm:$0xf]
  %v418 = vld [vmem:[%s396 + $0x54] sm:$0xf]
  %v419 = vld [vmem:[%s396 + $0x58] sm:$0xf]
  %v420 = vld [vmem:[%s396 + $0x5c] sm:$0xf]
  %v421 = vld [vmem:[%s396 + $0x60] sm:$0xf]
  %v422 = vld [vmem:[%s396 + $0x64] sm:$0xf]
  %v423 = vld [vmem:[%s396 + $0x68] sm:$0xf]
  %v424 = vld [vmem:[%s396 + $0x6c] sm:$0xf]
  %v425 = vld [vmem:[%s396 + $0x70] sm:$0xf]
  %v426 = vld [vmem:[%s396 + $0x74] sm:$0xf]
  %v427 = vld [vmem:[%s396 + $0x78] sm:$0xf]
  %v428 = vld [vmem:[%s396 + $0x7c] sm:$0xf]
  %v429 = vld [vmem:[%s396 + $0x80] sm:$0xf]
  %v430 = vld [vmem:[%s396 + $0x84] sm:$0xf]
  %v431 = vld [vmem:[%s396 + $0x88] sm:$0xf]
  %v432 = vld [vmem:[%s396 + $0x8c] sm:$0xf]
  %v433 = vld [vmem:[%s396 + $0x90] sm:$0xf]
  %v434 = vld [vmem:[%s396 + $0x94] sm:$0xf]
  %v435 = vld [vmem:[%s396 + $0x98] sm:$0xf]
  %v436 = vld [vmem:[%s396 + $0x9c] sm:$0xf]
  %v437 = vld [vmem:[%s396 + $0xa0] sm:$0xf]
  %v438 = vld [vmem:[%s396 + $0xa4] sm:$0xf]
  %v439 = vld [vmem:[%s396 + $0xa8] sm:$0xf]
  %v440 = vld [vmem:[%s396 + $0xac] sm:$0xf]
  %v441 = vld [vmem:[%s396 + $0xb0] sm:$0xf]
  %v442 = vld [vmem:[%s396 + $0xb4] sm:$0xf]
  %v443 = vld [vmem:[%s396 + $0xb8] sm:$0xf]
  %v444 = vld [vmem:[%s396 + $0xbc] sm:$0xf]
  %v445 = vperm.slane %v346, 0
  %v494 = vunpack.c.l.b16 %v397
  %v495 = vunpack.c.l.b16 %v398
  %v496 = vunpack.c.l.b16 %v399
  %v497 = vunpack.c.l.b16 %v400
  %v498 = vunpack.c.l.b16 %v401
  %v499 = vunpack.c.l.b16 %v402
  %v500 = vunpack.c.l.b16 %v403
  %v501 = vunpack.c.l.b16 %v404
  %v502 = vunpack.c.l.b16 %v405
  %v503 = vunpack.c.l.b16 %v406
  %v504 = vunpack.c.l.b16 %v407
  %v505 = vunpack.c.l.b16 %v408
  %v506 = vunpack.c.l.b16 %v409
  %v507 = vunpack.c.l.b16 %v410
  %v508 = vunpack.c.l.b16 %v411
  %v509 = vunpack.c.l.b16 %v412
  %v510 = vunpack.c.l.b16 %v413
  %v511 = vunpack.c.l.b16 %v414
  %v512 = vunpack.c.l.b16 %v415
  %v513 = vunpack.c.l.b16 %v416
  %v514 = vunpack.c.l.b16 %v417
  %v515 = vunpack.c.l.b16 %v418
  %v516 = vunpack.c.l.b16 %v419
  %v517 = vunpack.c.l.b16 %v420
  %v518 = vunpack.c.l.b16 %v421
  %v519 = vunpack.c.l.b16 %v422
  %v520 = vunpack.c.l.b16 %v423
  %v521 = vunpack.c.l.b16 %v424
  %v522 = vunpack.c.l.b16 %v425
  %v523 = vunpack.c.l.b16 %v426
  %v524 = vunpack.c.l.b16 %v427
  %v525 = vunpack.c.l.b16 %v428
  %v526 = vunpack.c.l.b16 %v429
  %v527 = vunpack.c.l.b16 %v430
  %v528 = vunpack.c.l.b16 %v431
  %v529 = vunpack.c.l.b16 %v432
  %v530 = vunpack.c.l.b16 %v433
  %v531 = vunpack.c.l.b16 %v434
  %v532 = vunpack.c.l.b16 %v435
  %v533 = vunpack.c.l.b16 %v436
  %v534 = vunpack.c.l.b16 %v437
  %v535 = vunpack.c.l.b16 %v438
  %v536 = vunpack.c.l.b16 %v439
  %v537 = vunpack.c.l.b16 %v440
  %v538 = vunpack.c.l.b16 %v441
  %v539 = vunpack.c.l.b16 %v442
  %v540 = vunpack.c.l.b16 %v443
  %v541 = vunpack.c.l.b16 %v444
  %v542 = vpack.c.b16 %v495, %v494
  %v543 = vpack.c.b16 %v497, %v496
  %v544 = vpack.c.b16 %v499, %v498
  %v545 = vpack.c.b16 %v501, %v500
  %v546 = vpack.c.b16 %v503, %v502
  %v547 = vpack.c.b16 %v505, %v504
  %v548 = vpack.c.b16 %v507, %v506
  %v549 = vpack.c.b16 %v509, %v508
  %v550 = vpack.c.b16 %v511, %v510
  %v551 = vpack.c.b16 %v513, %v512
  %v552 = vpack.c.b16 %v515, %v514
  %v553 = vpack.c.b16 %v517, %v516
  %v554 = vpack.c.b16 %v519, %v518
  %v555 = vpack.c.b16 %v521, %v520
  %v556 = vpack.c.b16 %v523, %v522
  %v557 = vpack.c.b16 %v525, %v524
  %v558 = vpack.c.b16 %v527, %v526
  %v559 = vpack.c.b16 %v529, %v528
  %v560 = vpack.c.b16 %v531, %v530
  %v561 = vpack.c.b16 %v533, %v532
  %v562 = vpack.c.b16 %v535, %v534
  %v563 = vpack.c.b16 %v537, %v536
  %v564 = vpack.c.b16 %v539, %v538
  %v565 = vpack.c.b16 %v541, %v540
  %590 = vmatpush.bf16.msra.mxu0 %v549
  %591 = vmatpush.bf16.msra.mxu0 %v548
  %592 = vmatpush.bf16.msra.mxu0 %v547
  %593 = vmatpush.bf16.msra.mxu0 %v546
  %594 = vmatpush.bf16.msra.mxu0 %v545
  %595 = vmatpush.bf16.msra.mxu0 %v544
  %596 = vmatpush.bf16.msra.mxu0 %v543
  %597 = vmatpush.bf16.msra.mxu0 %v542
  %598 = vmatmul.bf16.gmra.mxu0 %v371
  %v599 = vpop.f32.mrf.mxu0
  %v600 = vadd.f32 %v445, %v599
  %v601 = vpop.f32.mrf.mxu0
  %602 = vdwg.mxu0
  %603 = vmatpush.bf16.msra.mxu0 %v557
  %604 = vmatpush.bf16.msra.mxu0 %v556
  %605 = vmatpush.bf16.msra.mxu0 %v555
  %606 = vmatpush.bf16.msra.mxu0 %v554
  %607 = vmatpush.bf16.msra.mxu0 %v553
  %608 = vmatpush.bf16.msra.mxu0 %v552
  %609 = vmatpush.bf16.msra.mxu0 %v551
  %610 = vmatpush.bf16.msra.mxu0 %v550
  %611 = vmatmul.bf16.gmra.mxu0 %v387
  %v612 = vpop.f32.mrf.mxu0
  %v613 = vadd.f32 %v600, %v612
  %v614 = vpop.f32.mrf.mxu0
  %615 = vdwg.mxu0
  %616 = vmatpush.bf16.msra.mxu0 %v565
  %617 = vmatpush.bf16.msra.mxu0 %v564
  %618 = vmatpush.bf16.msra.mxu0 %v563
  %619 = vmatpush.bf16.msra.mxu0 %v562
  %620 = vmatpush.bf16.msra.mxu0 %v561
  %621 = vmatpush.bf16.msra.mxu0 %v560
  %622 = vmatpush.bf16.msra.mxu0 %v559
  %623 = vmatpush.bf16.msra.mxu0 %v558
  %624 = vmatmul.bf16.gmra.mxu0 %v394
  %v625 = vpop.f32.mrf.mxu0
  %v626 = vadd.f32 %v613, %v625
  %v627 = vpop.f32.mrf.mxu0
  %628 = vdwg.mxu0
  %v629 = vadd.f32 %v32, %v626
  %s630 = scalar_lea.vmem %s2, 8
  %v631 = vld [vmem:[%s630] sm:$0x7]
  %v632 = vperm.slane %v631, 1
  %v633 = vmul.f32 %v629, %v632
  %v634 = vperm.slane %v631, 2
  %v635 = vadd.f32 %v633, %v634
  %vm636 = vcmp.gt.f32.partialorder %v635, 0.0
  %v637 = vmul.f32 %v635, 0.33
  %v638 = vsel %vm636, %v635, %v637
  %v639 = vpack.c.bf16 %v638, %v638
  %v641 = vshrl.u32 %v639, 16
  %v643 = vrot.slane %v641, 7
  %v644 = vshll.u32 %v639, 16
  %v646 = vor.u32 %v643, %v644
  %v647 = vrot.slane %v643, 4
  %v650 = vsel %vm53, %v646, %v370
  %651 = vst [vmem:[#allocation2] sm:$0xf] %v650
  %v652 = vld [vmem:[#allocation2 + $0x4] sm:$0x1]
  %v653 = vsel %vm19, %v647, %v652
  %654 = vst [vmem:[#allocation2 + $0x4] sm:$0x1] %v653
  %v655 = vld [vmem:[#allocation2] sm:$0xf]
  %v656 = vsel %vm65, %v655, 0
  %v657 = vld [vmem:[#allocation2 + $0x4] sm:$0x1]
  %v658 = vld [vmem:[#allocation2] sm:$0xe]
  %v659 = vsel %vm83, %v658, 0
  %v660 = vsel %vm90, %v657, 0
  %v663 = vunpack.c.l.b16 %v655
  %v664 = vunpack.c.l.b16 %v657
  %v665 = vpack.c.b16 %v664, %v663
  %v667 = vshrl.u32 %v665, 16
  %v669 = vshll.u32 %v665, 16
  %v671 = vrot.slane %v669, 1
  %v672 = vor.u32 %v667, %v671
  %v676 = vunpack.c.l.b16 %v659
  %v677 = vunpack.c.l.b16 %v660
  %v678 = vpack.c.b16 %v677, %v676
  %v679 = vrot.slane %v678, 1
  %s681 = scalar_lea.vmem %s1, 384
  %v682 = vld [vmem:[%s681] sm:$0xf]
  %v683 = vld [vmem:[%s681 + $0x4] sm:$0xf]
  %v684 = vld [vmem:[%s681 + $0x8] sm:$0xf]
  %v685 = vld [vmem:[%s681 + $0xc] sm:$0xf]
  %v686 = vld [vmem:[%s681 + $0x10] sm:$0xf]
  %v687 = vld [vmem:[%s681 + $0x14] sm:$0xf]
  %v688 = vld [vmem:[%s681 + $0x18] sm:$0xf]
  %v689 = vld [vmem:[%s681 + $0x1c] sm:$0xf]
  %v690 = vld [vmem:[%s681 + $0x20] sm:$0xf]
  %v691 = vld [vmem:[%s681 + $0x24] sm:$0xf]
  %v692 = vld [vmem:[%s681 + $0x28] sm:$0xf]
  %v693 = vld [vmem:[%s681 + $0x2c] sm:$0xf]
  %v694 = vld [vmem:[%s681 + $0x30] sm:$0xf]
  %v695 = vld [vmem:[%s681 + $0x34] sm:$0xf]
  %v696 = vld [vmem:[%s681 + $0x38] sm:$0xf]
  %v697 = vld [vmem:[%s681 + $0x3c] sm:$0xf]
  %v698 = vld [vmem:[%s681 + $0x40] sm:$0xf]
  %v699 = vld [vmem:[%s681 + $0x44] sm:$0xf]
  %v700 = vld [vmem:[%s681 + $0x48] sm:$0xf]
  %v701 = vld [vmem:[%s681 + $0x4c] sm:$0xf]
  %v702 = vld [vmem:[%s681 + $0x50] sm:$0xf]
  %v703 = vld [vmem:[%s681 + $0x54] sm:$0xf]
  %v704 = vld [vmem:[%s681 + $0x58] sm:$0xf]
  %v705 = vld [vmem:[%s681 + $0x5c] sm:$0xf]
  %v706 = vld [vmem:[%s681 + $0x60] sm:$0xf]
  %v707 = vld [vmem:[%s681 + $0x64] sm:$0xf]
  %v708 = vld [vmem:[%s681 + $0x68] sm:$0xf]
  %v709 = vld [vmem:[%s681 + $0x6c] sm:$0xf]
  %v710 = vld [vmem:[%s681 + $0x70] sm:$0xf]
  %v711 = vld [vmem:[%s681 + $0x74] sm:$0xf]
  %v712 = vld [vmem:[%s681 + $0x78] sm:$0xf]
  %v713 = vld [vmem:[%s681 + $0x7c] sm:$0xf]
  %v714 = vld [vmem:[%s681 + $0x80] sm:$0xf]
  %v715 = vld [vmem:[%s681 + $0x84] sm:$0xf]
  %v716 = vld [vmem:[%s681 + $0x88] sm:$0xf]
  %v717 = vld [vmem:[%s681 + $0x8c] sm:$0xf]
  %v718 = vld [vmem:[%s681 + $0x90] sm:$0xf]
  %v719 = vld [vmem:[%s681 + $0x94] sm:$0xf]
  %v720 = vld [vmem:[%s681 + $0x98] sm:$0xf]
  %v721 = vld [vmem:[%s681 + $0x9c] sm:$0xf]
  %v722 = vld [vmem:[%s681 + $0xa0] sm:$0xf]
  %v723 = vld [vmem:[%s681 + $0xa4] sm:$0xf]
  %v724 = vld [vmem:[%s681 + $0xa8] sm:$0xf]
  %v725 = vld [vmem:[%s681 + $0xac] sm:$0xf]
  %v726 = vld [vmem:[%s681 + $0xb0] sm:$0xf]
  %v727 = vld [vmem:[%s681 + $0xb4] sm:$0xf]
  %v728 = vld [vmem:[%s681 + $0xb8] sm:$0xf]
  %v729 = vld [vmem:[%s681 + $0xbc] sm:$0xf]
  %v730 = vperm.slane %v631, 0
  %v779 = vunpack.c.l.b16 %v682
  %v780 = vunpack.c.l.b16 %v683
  %v781 = vunpack.c.l.b16 %v684
  %v782 = vunpack.c.l.b16 %v685
  %v783 = vunpack.c.l.b16 %v686
  %v784 = vunpack.c.l.b16 %v687
  %v785 = vunpack.c.l.b16 %v688
  %v786 = vunpack.c.l.b16 %v689
  %v787 = vunpack.c.l.b16 %v690
  %v788 = vunpack.c.l.b16 %v691
  %v789 = vunpack.c.l.b16 %v692
  %v790 = vunpack.c.l.b16 %v693
  %v791 = vunpack.c.l.b16 %v694
  %v792 = vunpack.c.l.b16 %v695
  %v793 = vunpack.c.l.b16 %v696
  %v794 = vunpack.c.l.b16 %v697
  %v795 = vunpack.c.l.b16 %v698
  %v796 = vunpack.c.l.b16 %v699
  %v797 = vunpack.c.l.b16 %v700
  %v798 = vunpack.c.l.b16 %v701
  %v799 = vunpack.c.l.b16 %v702
  %v800 = vunpack.c.l.b16 %v703
  %v801 = vunpack.c.l.b16 %v704
  %v802 = vunpack.c.l.b16 %v705
  %v803 = vunpack.c.l.b16 %v706
  %v804 = vunpack.c.l.b16 %v707
  %v805 = vunpack.c.l.b16 %v708
  %v806 = vunpack.c.l.b16 %v709
  %v807 = vunpack.c.l.b16 %v710
  %v808 = vunpack.c.l.b16 %v711
  %v809 = vunpack.c.l.b16 %v712
  %v810 = vunpack.c.l.b16 %v713
  %v811 = vunpack.c.l.b16 %v714
  %v812 = vunpack.c.l.b16 %v715
  %v813 = vunpack.c.l.b16 %v716
  %v814 = vunpack.c.l.b16 %v717
  %v815 = vunpack.c.l.b16 %v718
  %v816 = vunpack.c.l.b16 %v719
  %v817 = vunpack.c.l.b16 %v720
  %v818 = vunpack.c.l.b16 %v721
  %v819 = vunpack.c.l.b16 %v722
  %v820 = vunpack.c.l.b16 %v723
  %v821 = vunpack.c.l.b16 %v724
  %v822 = vunpack.c.l.b16 %v725
  %v823 = vunpack.c.l.b16 %v726
  %v824 = vunpack.c.l.b16 %v727
  %v825 = vunpack.c.l.b16 %v728
  %v826 = vunpack.c.l.b16 %v729
  %v827 = vpack.c.b16 %v780, %v779
  %v828 = vpack.c.b16 %v782, %v781
  %v829 = vpack.c.b16 %v784, %v783
  %v830 = vpack.c.b16 %v786, %v785
  %v831 = vpack.c.b16 %v788, %v787
  %v832 = vpack.c.b16 %v790, %v789
  %v833 = vpack.c.b16 %v792, %v791
  %v834 = vpack.c.b16 %v794, %v793
  %v835 = vpack.c.b16 %v796, %v795
  %v836 = vpack.c.b16 %v798, %v797
  %v837 = vpack.c.b16 %v800, %v799
  %v838 = vpack.c.b16 %v802, %v801
  %v839 = vpack.c.b16 %v804, %v803
  %v840 = vpack.c.b16 %v806, %v805
  %v841 = vpack.c.b16 %v808, %v807
  %v842 = vpack.c.b16 %v810, %v809
  %v843 = vpack.c.b16 %v812, %v811
  %v844 = vpack.c.b16 %v814, %v813
  %v845 = vpack.c.b16 %v816, %v815
  %v846 = vpack.c.b16 %v818, %v817
  %v847 = vpack.c.b16 %v820, %v819
  %v848 = vpack.c.b16 %v822, %v821
  %v849 = vpack.c.b16 %v824, %v823
  %v850 = vpack.c.b16 %v826, %v825
  %875 = vmatpush.bf16.msra.mxu0 %v834
  %876 = vmatpush.bf16.msra.mxu0 %v833
  %877 = vmatpush.bf16.msra.mxu0 %v832
  %878 = vmatpush.bf16.msra.mxu0 %v831
  %879 = vmatpush.bf16.msra.mxu0 %v830
  %880 = vmatpush.bf16.msra.mxu0 %v829
  %881 = vmatpush.bf16.msra.mxu0 %v828
  %882 = vmatpush.bf16.msra.mxu0 %v827
  %883 = vmatmul.bf16.gmra.mxu0 %v656
  %v884 = vpop.f32.mrf.mxu0
  %v885 = vadd.f32 %v730, %v884
  %v886 = vpop.f32.mrf.mxu0
  %887 = vdwg.mxu0
  %888 = vmatpush.bf16.msra.mxu0 %v842
  %889 = vmatpush.bf16.msra.mxu0 %v841
  %890 = vmatpush.bf16.msra.mxu0 %v840
  %891 = vmatpush.bf16.msra.mxu0 %v839
  %892 = vmatpush.bf16.msra.mxu0 %v838
  %893 = vmatpush.bf16.msra.mxu0 %v837
  %894 = vmatpush.bf16.msra.mxu0 %v836
  %895 = vmatpush.bf16.msra.mxu0 %v835
  %896 = vmatmul.bf16.gmra.mxu0 %v672
  %v897 = vpop.f32.mrf.mxu0
  %v898 = vadd.f32 %v885, %v897
  %v899 = vpop.f32.mrf.mxu0
  %900 = vdwg.mxu0
  %901 = vmatpush.bf16.msra.mxu0 %v850
  %902 = vmatpush.bf16.msra.mxu0 %v849
  %903 = vmatpush.bf16.msra.mxu0 %v848
  %904 = vmatpush.bf16.msra.mxu0 %v847
  %905 = vmatpush.bf16.msra.mxu0 %v846
  %906 = vmatpush.bf16.msra.mxu0 %v845
  %907 = vmatpush.bf16.msra.mxu0 %v844
  %908 = vmatpush.bf16.msra.mxu0 %v843
  %909 = vmatmul.bf16.gmra.mxu0 %v679
  %v910 = vpop.f32.mrf.mxu0
  %v911 = vadd.f32 %v898, %v910
  %v912 = vpop.f32.mrf.mxu0
  %913 = vdwg.mxu0
  %s914 = scalar_lea.vmem %s2, 12
  %v915 = vld [vmem:[%s914] sm:$0x7]
  %v916 = vperm.slane %v915, 1
  %v917 = vmul.f32 %v911, %v916
  %v918 = vperm.slane %v915, 2
  %v919 = vadd.f32 %v917, %v918
  %vm920 = vcmp.gt.f32.partialorder %v919, 0.0
  %v921 = vmul.f32 %v919, 0.33
  %v922 = vsel %vm920, %v919, %v921
  %v923 = vpack.c.bf16 %v922, %v922
  %v925 = vshrl.u32 %v923, 16
  %v927 = vrot.slane %v925, 7
  %v928 = vshll.u32 %v923, 16
  %v930 = vor.u32 %v927, %v928
  %v931 = vrot.slane %v927, 4
  %v934 = vsel %vm53, %v930, %v655
  %935 = vst [vmem:[#allocation2] sm:$0xf] %v934
  %v936 = vld [vmem:[#allocation2 + $0x4] sm:$0x1]
  %v937 = vsel %vm19, %v931, %v936
  %938 = vst [vmem:[#allocation2 + $0x4] sm:$0x1] %v937
  %v939 = vld [vmem:[#allocation2] sm:$0xf]
  %v940 = vsel %vm65, %v939, 0
  %v941 = vld [vmem:[#allocation2 + $0x4] sm:$0x1]
  %v942 = vld [vmem:[#allocation2] sm:$0xe]
  %v943 = vsel %vm83, %v942, 0
  %v944 = vsel %vm90, %v941, 0
  %v947 = vunpack.c.l.b16 %v939
  %v948 = vunpack.c.l.b16 %v941
  %v949 = vpack.c.b16 %v948, %v947
  %v951 = vshrl.u32 %v949, 16
  %v953 = vshll.u32 %v949, 16
  %v955 = vrot.slane %v953, 1
  %v956 = vor.u32 %v951, %v955
  %v960 = vunpack.c.l.b16 %v943
  %v961 = vunpack.c.l.b16 %v944
  %v962 = vpack.c.b16 %v961, %v960
  %v963 = vrot.slane %v962, 1
  %s965 = scalar_lea.vmem %s1, 576
  %v966 = vld [vmem:[%s965] sm:$0xf]
  %v967 = vld [vmem:[%s965 + $0x4] sm:$0xf]
  %v968 = vld [vmem:[%s965 + $0x8] sm:$0xf]
  %v969 = vld [vmem:[%s965 + $0xc] sm:$0xf]
  %v970 = vld [vmem:[%s965 + $0x10] sm:$0xf]
  %v971 = vld [vmem:[%s965 + $0x14] sm:$0xf]
  %v972 = vld [vmem:[%s965 + $0x18] sm:$0xf]
  %v973 = vld [vmem:[%s965 + $0x1c] sm:$0xf]
  %v974 = vld [vmem:[%s965 + $0x20] sm:$0xf]
  %v975 = vld [vmem:[%s965 + $0x24] sm:$0xf]
  %v976 = vld [vmem:[%s965 + $0x28] sm:$0xf]
  %v977 = vld [vmem:[%s965 + $0x2c] sm:$0xf]
  %v978 = vld [vmem:[%s965 + $0x30] sm:$0xf]
  %v979 = vld [vmem:[%s965 + $0x34] sm:$0xf]
  %v980 = vld [vmem:[%s965 + $0x38] sm:$0xf]
  %v981 = vld [vmem:[%s965 + $0x3c] sm:$0xf]
  %v982 = vld [vmem:[%s965 + $0x40] sm:$0xf]
  %v983 = vld [vmem:[%s965 + $0x44] sm:$0xf]
  %v984 = vld [vmem:[%s965 + $0x48] sm:$0xf]
  %v985 = vld [vmem:[%s965 + $0x4c] sm:$0xf]
  %v986 = vld [vmem:[%s965 + $0x50] sm:$0xf]
  %v987 = vld [vmem:[%s965 + $0x54] sm:$0xf]
  %v988 = vld [vmem:[%s965 + $0x58] sm:$0xf]
  %v989 = vld [vmem:[%s965 + $0x5c] sm:$0xf]
  %v990 = vld [vmem:[%s965 + $0x60] sm:$0xf]
  %v991 = vld [vmem:[%s965 + $0x64] sm:$0xf]
  %v992 = vld [vmem:[%s965 + $0x68] sm:$0xf]
  %v993 = vld [vmem:[%s965 + $0x6c] sm:$0xf]
  %v994 = vld [vmem:[%s965 + $0x70] sm:$0xf]
  %v995 = vld [vmem:[%s965 + $0x74] sm:$0xf]
  %v996 = vld [vmem:[%s965 + $0x78] sm:$0xf]
  %v997 = vld [vmem:[%s965 + $0x7c] sm:$0xf]
  %v998 = vld [vmem:[%s965 + $0x80] sm:$0xf]
  %v999 = vld [vmem:[%s965 + $0x84] sm:$0xf]
  %v1000 = vld [vmem:[%s965 + $0x88] sm:$0xf]
  %v1001 = vld [vmem:[%s965 + $0x8c] sm:$0xf]
  %v1002 = vld [vmem:[%s965 + $0x90] sm:$0xf]
  %v1003 = vld [vmem:[%s965 + $0x94] sm:$0xf]
  %v1004 = vld [vmem:[%s965 + $0x98] sm:$0xf]
  %v1005 = vld [vmem:[%s965 + $0x9c] sm:$0xf]
  %v1006 = vld [vmem:[%s965 + $0xa0] sm:$0xf]
  %v1007 = vld [vmem:[%s965 + $0xa4] sm:$0xf]
  %v1008 = vld [vmem:[%s965 + $0xa8] sm:$0xf]
  %v1009 = vld [vmem:[%s965 + $0xac] sm:$0xf]
  %v1010 = vld [vmem:[%s965 + $0xb0] sm:$0xf]
  %v1011 = vld [vmem:[%s965 + $0xb4] sm:$0xf]
  %v1012 = vld [vmem:[%s965 + $0xb8] sm:$0xf]
  %v1013 = vld [vmem:[%s965 + $0xbc] sm:$0xf]
  %v1014 = vperm.slane %v915, 0
  %v1063 = vunpack.c.l.b16 %v966
  %v1064 = vunpack.c.l.b16 %v967
  %v1065 = vunpack.c.l.b16 %v968
  %v1066 = vunpack.c.l.b16 %v969
  %v1067 = vunpack.c.l.b16 %v970
  %v1068 = vunpack.c.l.b16 %v971
  %v1069 = vunpack.c.l.b16 %v972
  %v1070 = vunpack.c.l.b16 %v973
  %v1071 = vunpack.c.l.b16 %v974
  %v1072 = vunpack.c.l.b16 %v975
  %v1073 = vunpack.c.l.b16 %v976
  %v1074 = vunpack.c.l.b16 %v977
  %v1075 = vunpack.c.l.b16 %v978
  %v1076 = vunpack.c.l.b16 %v979
  %v1077 = vunpack.c.l.b16 %v980
  %v1078 = vunpack.c.l.b16 %v981
  %v1079 = vunpack.c.l.b16 %v982
  %v1080 = vunpack.c.l.b16 %v983
  %v1081 = vunpack.c.l.b16 %v984
  %v1082 = vunpack.c.l.b16 %v985
  %v1083 = vunpack.c.l.b16 %v986
  %v1084 = vunpack.c.l.b16 %v987
  %v1085 = vunpack.c.l.b16 %v988
  %v1086 = vunpack.c.l.b16 %v989
  %v1087 = vunpack.c.l.b16 %v990
  %v1088 = vunpack.c.l.b16 %v991
  %v1089 = vunpack.c.l.b16 %v992
  %v1090 = vunpack.c.l.b16 %v993
  %v1091 = vunpack.c.l.b16 %v994
  %v1092 = vunpack.c.l.b16 %v995
  %v1093 = vunpack.c.l.b16 %v996
  %v1094 = vunpack.c.l.b16 %v997
  %v1095 = vunpack.c.l.b16 %v998
  %v1096 = vunpack.c.l.b16 %v999
  %v1097 = vunpack.c.l.b16 %v1000
  %v1098 = vunpack.c.l.b16 %v1001
  %v1099 = vunpack.c.l.b16 %v1002
  %v1100 = vunpack.c.l.b16 %v1003
  %v1101 = vunpack.c.l.b16 %v1004
  %v1102 = vunpack.c.l.b16 %v1005
  %v1103 = vunpack.c.l.b16 %v1006
  %v1104 = vunpack.c.l.b16 %v1007
  %v1105 = vunpack.c.l.b16 %v1008
  %v1106 = vunpack.c.l.b16 %v1009
  %v1107 = vunpack.c.l.b16 %v1010
  %v1108 = vunpack.c.l.b16 %v1011
  %v1109 = vunpack.c.l.b16 %v1012
  %v1110 = vunpack.c.l.b16 %v1013
  %v1111 = vpack.c.b16 %v1064, %v1063
  %v1112 = vpack.c.b16 %v1066, %v1065
  %v1113 = vpack.c.b16 %v1068, %v1067
  %v1114 = vpack.c.b16 %v1070, %v1069
  %v1115 = vpack.c.b16 %v1072, %v1071
  %v1116 = vpack.c.b16 %v1074, %v1073
  %v1117 = vpack.c.b16 %v1076, %v1075
  %v1118 = vpack.c.b16 %v1078, %v1077
  %v1119 = vpack.c.b16 %v1080, %v1079
  %v1120 = vpack.c.b16 %v1082, %v1081
  %v1121 = vpack.c.b16 %v1084, %v1083
  %v1122 = vpack.c.b16 %v1086, %v1085
  %v1123 = vpack.c.b16 %v1088, %v1087
  %v1124 = vpack.c.b16 %v1090, %v1089
  %v1125 = vpack.c.b16 %v1092, %v1091
  %v1126 = vpack.c.b16 %v1094, %v1093
  %v1127 = vpack.c.b16 %v1096, %v1095
  %v1128 = vpack.c.b16 %v1098, %v1097
  %v1129 = vpack.c.b16 %v1100, %v1099
  %v1130 = vpack.c.b16 %v1102, %v1101
  %v1131 = vpack.c.b16 %v1104, %v1103
  %v1132 = vpack.c.b16 %v1106, %v1105
  %v1133 = vpack.c.b16 %v1108, %v1107
  %v1134 = vpack.c.b16 %v1110, %v1109
  %1159 = vmatpush.bf16.msra.mxu0 %v1118
  %1160 = vmatpush.bf16.msra.mxu0 %v1117
  %1161 = vmatpush.bf16.msra.mxu0 %v1116
  %1162 = vmatpush.bf16.msra.mxu0 %v1115
  %1163 = vmatpush.bf16.msra.mxu0 %v1114
  %1164 = vmatpush.bf16.msra.mxu0 %v1113
  %1165 = vmatpush.bf16.msra.mxu0 %v1112
  %1166 = vmatpush.bf16.msra.mxu0 %v1111
  %1167 = vmatmul.bf16.gmra.mxu0 %v940
  %v1168 = vpop.f32.mrf.mxu0
  %v1169 = vadd.f32 %v1014, %v1168
  %v1170 = vpop.f32.mrf.mxu0
  %1171 = vdwg.mxu0
  %1172 = vmatpush.bf16.msra.mxu0 %v1126
  %1173 = vmatpush.bf16.msra.mxu0 %v1125
  %1174 = vmatpush.bf16.msra.mxu0 %v1124
  %1175 = vmatpush.bf16.msra.mxu0 %v1123
  %1176 = vmatpush.bf16.msra.mxu0 %v1122
  %1177 = vmatpush.bf16.msra.mxu0 %v1121
  %1178 = vmatpush.bf16.msra.mxu0 %v1120
  %1179 = vmatpush.bf16.msra.mxu0 %v1119
  %1180 = vmatmul.bf16.gmra.mxu0 %v956
  %v1181 = vpop.f32.mrf.mxu0
  %v1182 = vadd.f32 %v1169, %v1181
  %v1183 = vpop.f32.mrf.mxu0
  %1184 = vdwg.mxu0
  %1185 = vmatpush.bf16.msra.mxu0 %v1134
  %1186 = vmatpush.bf16.msra.mxu0 %v1133
  %1187 = vmatpush.bf16.msra.mxu0 %v1132
  %1188 = vmatpush.bf16.msra.mxu0 %v1131
  %1189 = vmatpush.bf16.msra.mxu0 %v1130
  %1190 = vmatpush.bf16.msra.mxu0 %v1129
  %1191 = vmatpush.bf16.msra.mxu0 %v1128
  %1192 = vmatpush.bf16.msra.mxu0 %v1127
  %1193 = vmatmul.bf16.gmra.mxu0 %v963
  %v1194 = vpop.f32.mrf.mxu0
  %v1195 = vadd.f32 %v1182, %v1194
  %v1196 = vpop.f32.mrf.mxu0
  %1197 = vdwg.mxu0
  %v1198 = vadd.f32 %v629, %v1195
  %v1199 = vpack.c.bf16 %v1198, %v1198
  %1200 = vst [vmem:[%s3] sm:$0xf] %v1199
  // Predicated region
  $region14: #{_lambda_.15} parent=0 // pred_check
    _
  $region15: #{_lambda_.15} parent=0 // pred_check_branch
    %1202 = sbr.rel (0) target = $region17
  $region16: #{_lambda_.15} parent=0 // pred_region
    _
  $region17: #{_lambda_.15} parent=0 // pred_fallthru
    _
  // Predicated region
  $region18: #{_lambda_.15} parent=0 // pred_check
    _
  $region19: #{_lambda_.15} parent=0 // pred_check_branch
    %1204 = sbr.rel (0) target = $region21
  $region20: #{_lambda_.15} parent=0 // pred_region
    _
  $region21: #{_lambda_.15} parent=0 // pred_fallthru
    _

// kernel: _lambda_.16
$region0: #{_lambda_.16}
  #allocation0 [shape = 'u32[]', space=smem, size = 0x4, offset = 0x4, fixed_abs, tag = 'smem constant byte address 0x4 - core index']
  #allocation1 [shape = 'u32[72,128]{1,0:T(1,128)}', space=vmem, size = 0x9000, scoped, tag = 'internal scratch']
  %s0 = inlined_call_operand.vmem [shape: bf16[8,128], index: 0, kind: input, shape index: {}]
  %s1 = inlined_call_operand.vmem [shape: bf16[8,256], index: 1, kind: input, shape index: {}]
  %s2 = inlined_call_operand.vmem [shape: bf16[128,256], index: 2, kind: input, shape index: {}]
  %s3 = inlined_call_operand.vmem [shape: bf16[256,256], index: 3, kind: input, shape index: {}]
  %s4 = inlined_call_operand.vmem [shape: f32[2,128], index: 4, kind: input, shape index: {}]
  %s5 = inlined_call_operand.vmem [shape: f32[1,256], index: 5, kind: input, shape index: {}]
  %s6 = inlined_call_operand.vmem [shape: bf16[8,256], index: 6, kind: output, shape index: {}]
  %s7 = sld [smem:[#allocation0]]
  $region34: #{_lambda_.16} parent=0
    _
  %s9 = ssub.s32 1, %s7
  %s10 = scalar_select 0, %s9, %s7
  // Predicated region
  $region2: #{_lambda_.16} parent=0 // pred_check
    _
  $region3: #{_lambda_.16} parent=0 // pred_check_branch
    %12 = sbr.rel (0) target = $region5
  $region4: #{_lambda_.16} parent=0 // pred_region
    _
  $region5: #{_lambda_.16} parent=0 // pred_fallthru
    _
  // Predicated region
  $region6: #{_lambda_.16} parent=0 // pred_check
    _
  $region7: #{_lambda_.16} parent=0 // pred_check_branch
    %14 = sbr.rel (0) target = $region9
  $region8: #{_lambda_.16} parent=0 // pred_region
    _
  $region9: #{_lambda_.16} parent=0 // pred_fallthru
    _
  // Predicated region
  $region10: #{_lambda_.16} parent=0 // pred_check
    _
  $region11: #{_lambda_.16} parent=0 // pred_check_branch
    %16 = sbr.rel (0) target = $region13
  $region12: #{_lambda_.16} parent=0 // pred_region
    _
  $region13: #{_lambda_.16} parent=0 // pred_fallthru
    _
  // Predicated region
  $region14: #{_lambda_.16} parent=0 // pred_check
    _
  $region15: #{_lambda_.16} parent=0 // pred_check_branch
    %18 = sbr.rel (0) target = $region17
  $region16: #{_lambda_.16} parent=0 // pred_region
    _
  $region17: #{_lambda_.16} parent=0 // pred_fallthru
    _
  // Predicated region
  $region18: #{_lambda_.16} parent=0 // pred_check
    _
  $region19: #{_lambda_.16} parent=0 // pred_check_branch
    %20 = sbr.rel (0) target = $region21
  $region20: #{_lambda_.16} parent=0 // pred_region
    _
  $region21: #{_lambda_.16} parent=0 // pred_fallthru
    _
  // Predicated region
  $region22: #{_lambda_.16} parent=0 // pred_check
    _
  $region23: #{_lambda_.16} parent=0 // pred_check_branch
    %22 = sbr.rel (0) target = $region25
  $region24: #{_lambda_.16} parent=0 // pred_region
    _
  $region25: #{_lambda_.16} parent=0 // pred_fallthru
    _
  %v23 = vld [vmem:[%s0] sm:$0xf]
  %v24 = vunpack.c.l.bf16 %v23
  %v25 = vld [vmem:[%s4] sm:$0x3]
  %v26 = vperm.slane %v25, 0
  %v27 = vmul.f32 %v24, %v26
  %v28 = vperm.slane %v25, 1
  %v29 = vadd.f32 %v27, %v28
  %vm30 = vcmp.gt.f32.partialorder %v29, 0.0
  %v31 = vmul.f32 %v29, 0.33
  %v32 = vsel %vm30, %v29, %v31
  %v33 = vpack.c.bf16 %v32, %v32
  %v34 = vld [vmem:[%s2] sm:$0xff]
  %v35 = vld [vmem:[%s2 + $0x8] sm:$0xff]
  %v36 = vld [vmem:[%s2 + $0x10] sm:$0xff]
  %v37 = vld [vmem:[%s2 + $0x18] sm:$0xff]
  %v38 = vld [vmem:[%s2 + $0x20] sm:$0xff]
  %v39 = vld [vmem:[%s2 + $0x28] sm:$0xff]
  %v40 = vld [vmem:[%s2 + $0x30] sm:$0xff]
  %v41 = vld [vmem:[%s2 + $0x38] sm:$0xff]
  %v42 = vld [vmem:[%s2 + $0x40] sm:$0xff]
  %v43 = vld [vmem:[%s2 + $0x48] sm:$0xff]
  %v44 = vld [vmem:[%s2 + $0x50] sm:$0xff]
  %v45 = vld [vmem:[%s2 + $0x58] sm:$0xff]
  %v46 = vld [vmem:[%s2 + $0x60] sm:$0xff]
  %v47 = vld [vmem:[%s2 + $0x68] sm:$0xff]
  %v48 = vld [vmem:[%s2 + $0x70] sm:$0xff]
  %v49 = vld [vmem:[%s2 + $0x78] sm:$0xff]
  %v50 = vld [vmem:[%s1] sm:$0xff]
  %v51 = vld [vmem:[%s3] sm:$0xff]
  %v52 = vld [vmem:[%s3 + $0x8] sm:$0xff]
  %v53 = vld [vmem:[%s3 + $0x10] sm:$0xff]
  %v54 = vld [vmem:[%s3 + $0x18] sm:$0xff]
  %v55 = vld [vmem:[%s3 + $0x20] sm:$0xff]
  %v56 = vld [vmem:[%s3 + $0x28] sm:$0xff]
  %v57 = vld [vmem:[%s3 + $0x30] sm:$0xff]
  %v58 = vld [vmem:[%s3 + $0x38] sm:$0xff]
  %v59 = vld [vmem:[%s3 + $0x40] sm:$0xff]
  %v60 = vld [vmem:[%s3 + $0x48] sm:$0xff]
  %v61 = vld [vmem:[%s3 + $0x50] sm:$0xff]
  %v62 = vld [vmem:[%s3 + $0x58] sm:$0xff]
  %v63 = vld [vmem:[%s3 + $0x60] sm:$0xff]
  %v64 = vld [vmem:[%s3 + $0x68] sm:$0xff]
  %v65 = vld [vmem:[%s3 + $0x70] sm:$0xff]
  %v66 = vld [vmem:[%s3 + $0x78] sm:$0xff]
  %v67 = vld [vmem:[%s3 + $0x80] sm:$0xff]
  %v68 = vld [vmem:[%s3 + $0x88] sm:$0xff]
  %v69 = vld [vmem:[%s3 + $0x90] sm:$0xff]
  %v70 = vld [vmem:[%s3 + $0x98] sm:$0xff]
  %v71 = vld [vmem:[%s3 + $0xa0] sm:$0xff]
  %v72 = vld [vmem:[%s3 + $0xa8] sm:$0xff]
  %v73 = vld [vmem:[%s3 + $0xb0] sm:$0xff]
  %v74 = vld [vmem:[%s3 + $0xb8] sm:$0xff]
  %v75 = vld [vmem:[%s3 + $0xc0] sm:$0xff]
  %v76 = vld [vmem:[%s3 + $0xc8] sm:$0xff]
  %v77 = vld [vmem:[%s3 + $0xd0] sm:$0xff]
  %v78 = vld [vmem:[%s3 + $0xd8] sm:$0xff]
  %v79 = vld [vmem:[%s3 + $0xe0] sm:$0xff]
  %v80 = vld [vmem:[%s3 + $0xe8] sm:$0xff]
  %v81 = vld [vmem:[%s3 + $0xf0] sm:$0xff]
  %v82 = vld [vmem:[%s3 + $0xf8] sm:$0xff]
  %v84 = vunpack.c.l.b16 %v50
  %v85 = vunpack.c.h.b16 %v50
  %v86 = vpack.c.b16 %v84, %v84
  %v87 = vpack.c.b16 %v85, %v85
  %v122 = vunpack.c.l.b16 %v51
  %v123 = vunpack.c.h.b16 %v51
  %v124 = vunpack.c.l.b16 %v52
  %v125 = vunpack.c.h.b16 %v52
  %v126 = vunpack.c.l.b16 %v53
  %v127 = vunpack.c.h.b16 %v53
  %v128 = vunpack.c.l.b16 %v54
  %v129 = vunpack.c.h.b16 %v54
  %v130 = vunpack.c.l.b16 %v55
  %v131 = vunpack.c.h.b16 %v55
  %v132 = vunpack.c.l.b16 %v56
  %v133 = vunpack.c.h.b16 %v56
  %v134 = vunpack.c.l.b16 %v57
  %v135 = vunpack.c.h.b16 %v57
  %v136 = vunpack.c.l.b16 %v58
  %v137 = vunpack.c.h.b16 %v58
  %v138 = vunpack.c.l.b16 %v59
  %v139 = vunpack.c.h.b16 %v59
  %v140 = vunpack.c.l.b16 %v60
  %v141 = vunpack.c.h.b16 %v60
  %v142 = vunpack.c.l.b16 %v61
  %v143 = vunpack.c.h.b16 %v61
  %v144 = vunpack.c.l.b16 %v62
  %v145 = vunpack.c.h.b16 %v62
  %v146 = vunpack.c.l.b16 %v63
  %v147 = vunpack.c.h.b16 %v63
  %v148 = vunpack.c.l.b16 %v64
  %v149 = vunpack.c.h.b16 %v64
  %v150 = vunpack.c.l.b16 %v65
  %v151 = vunpack.c.h.b16 %v65
  %v152 = vunpack.c.l.b16 %v66
  %v153 = vunpack.c.h.b16 %v66
  %v154 = vunpack.c.l.b16 %v67
  %v155 = vunpack.c.h.b16 %v67
  %v156 = vunpack.c.l.b16 %v68
  %v157 = vunpack.c.h.b16 %v68
  %v158 = vunpack.c.l.b16 %v69
  %v159 = vunpack.c.h.b16 %v69
  %v160 = vunpack.c.l.b16 %v70
  %v161 = vunpack.c.h.b16 %v70
  %v162 = vunpack.c.l.b16 %v71
  %v163 = vunpack.c.h.b16 %v71
  %v164 = vunpack.c.l.b16 %v72
  %v165 = vunpack.c.h.b16 %v72
  %v166 = vunpack.c.l.b16 %v73
  %v167 = vunpack.c.h.b16 %v73
  %v168 = vunpack.c.l.b16 %v74
  %v169 = vunpack.c.h.b16 %v74
  %v170 = vunpack.c.l.b16 %v75
  %v171 = vunpack.c.h.b16 %v75
  %v172 = vunpack.c.l.b16 %v76
  %v173 = vunpack.c.h.b16 %v76
  %v174 = vunpack.c.l.b16 %v77
  %v175 = vunpack.c.h.b16 %v77
  %v176 = vunpack.c.l.b16 %v78
  %v177 = vunpack.c.h.b16 %v78
  %v178 = vunpack.c.l.b16 %v79
  %v179 = vunpack.c.h.b16 %v79
  %v180 = vunpack.c.l.b16 %v80
  %v181 = vunpack.c.h.b16 %v80
  %v182 = vunpack.c.l.b16 %v81
  %v183 = vunpack.c.h.b16 %v81
  %v184 = vunpack.c.l.b16 %v82
  %v185 = vunpack.c.h.b16 %v82
  %v186 = vpack.c.b16 %v124, %v122
  %v187 = vpack.c.b16 %v125, %v123
  %v188 = vpack.c.b16 %v128, %v126
  %v189 = vpack.c.b16 %v129, %v127
  %v190 = vpack.c.b16 %v132, %v130
  %v191 = vpack.c.b16 %v133, %v131
  %v192 = vpack.c.b16 %v136, %v134
  %v193 = vpack.c.b16 %v137, %v135
  %v194 = vpack.c.b16 %v140, %v138
  %v195 = vpack.c.b16 %v141, %v139
  %v196 = vpack.c.b16 %v144, %v142
  %v197 = vpack.c.b16 %v145, %v143
  %v198 = vpack.c.b16 %v148, %v146
  %v199 = vpack.c.b16 %v149, %v147
  %v200 = vpack.c.b16 %v152, %v150
  %v201 = vpack.c.b16 %v153, %v151
  %v202 = vpack.c.b16 %v156, %v154
  %v203 = vpack.c.b16 %v157, %v155
  %v204 = vpack.c.b16 %v160, %v158
  %v205 = vpack.c.b16 %v161, %v159
  %v206 = vpack.c.b16 %v164, %v162
  %v207 = vpack.c.b16 %v165, %v163
  %v208 = vpack.c.b16 %v168, %v166
  %v209 = vpack.c.b16 %v169, %v167
  %v210 = vpack.c.b16 %v172, %v170
  %v211 = vpack.c.b16 %v173, %v171
  %v212 = vpack.c.b16 %v176, %v174
  %v213 = vpack.c.b16 %v177, %v175
  %v214 = vpack.c.b16 %v180, %v178
  %v215 = vpack.c.b16 %v181, %v179
  %v216 = vpack.c.b16 %v184, %v182
  %v217 = vpack.c.b16 %v185, %v183
  %250 = vmatpush.bf16.msra.mxu0 %v200
  %251 = vmatpush.bf16.msra.mxu0 %v198
  %252 = vmatpush.bf16.msra.mxu0 %v196
  %253 = vmatpush.bf16.msra.mxu0 %v194
  %254 = vmatpush.bf16.msra.mxu0 %v192
  %255 = vmatpush.bf16.msra.mxu0 %v190
  %256 = vmatpush.bf16.msra.mxu0 %v188
  %257 = vmatpush.bf16.msra.mxu0 %v186
  %258 = vmatmul.bf16.gmra.mxu0 %v86
  %v259 = vpop.f32.mrf.mxu0
  %v260 = vadd.f32 0.0, %v259
  %v261 = vpop.f32.mrf.mxu0
  %262 = vdwg.mxu0
  %263 = vmatpush.bf16.msra.mxu0 %v216
  %264 = vmatpush.bf16.msra.mxu0 %v214
  %265 = vmatpush.bf16.msra.mxu0 %v212
  %266 = vmatpush.bf16.msra.mxu0 %v210
  %267 = vmatpush.bf16.msra.mxu0 %v208
  %268 = vmatpush.bf16.msra.mxu0 %v206
  %269 = vmatpush.bf16.msra.mxu0 %v204
  %270 = vmatpush.bf16.msra.mxu0 %v202
  %271 = vmatmul.bf16.gmra.mxu0 %v87
  %v272 = vpop.f32.mrf.mxu0
  %v273 = vadd.f32 %v260, %v272
  %v274 = vpop.f32.mrf.mxu0
  %275 = vdwg.mxu0
  %276 = vmatpush.bf16.msra.mxu0 %v201
  %277 = vmatpush.bf16.msra.mxu0 %v199
  %278 = vmatpush.bf16.msra.mxu0 %v197
  %279 = vmatpush.bf16.msra.mxu0 %v195
  %280 = vmatpush.bf16.msra.mxu0 %v193
  %281 = vmatpush.bf16.msra.mxu0 %v191
  %282 = vmatpush.bf16.msra.mxu0 %v189
  %283 = vmatpush.bf16.msra.mxu0 %v187
  %284 = vmatmul.bf16.gmra.mxu0 %v86
  %v285 = vpop.f32.mrf.mxu0
  %v286 = vadd.f32 0.0, %v285
  %v287 = vpop.f32.mrf.mxu0
  %288 = vdwg.mxu0
  %289 = vmatpush.bf16.msra.mxu0 %v217
  %290 = vmatpush.bf16.msra.mxu0 %v215
  %291 = vmatpush.bf16.msra.mxu0 %v213
  %292 = vmatpush.bf16.msra.mxu0 %v211
  %293 = vmatpush.bf16.msra.mxu0 %v209
  %294 = vmatpush.bf16.msra.mxu0 %v207
  %295 = vmatpush.bf16.msra.mxu0 %v205
  %296 = vmatpush.bf16.msra.mxu0 %v203
  %297 = vmatmul.bf16.gmra.mxu0 %v87
  %v298 = vpop.f32.mrf.mxu0
  %v299 = vadd.f32 %v286, %v298
  %v300 = vpop.f32.mrf.mxu0
  %301 = vdwg.mxu0
  %v318 = vunpack.c.l.b16 %v34
  %v319 = vunpack.c.h.b16 %v34
  %v320 = vunpack.c.l.b16 %v35
  %v321 = vunpack.c.h.b16 %v35
  %v322 = vunpack.c.l.b16 %v36
  %v323 = vunpack.c.h.b16 %v36
  %v324 = vunpack.c.l.b16 %v37
  %v325 = vunpack.c.h.b16 %v37
  %v326 = vunpack.c.l.b16 %v38
  %v327 = vunpack.c.h.b16 %v38
  %v328 = vunpack.c.l.b16 %v39
  %v329 = vunpack.c.h.b16 %v39
  %v330 = vunpack.c.l.b16 %v40
  %v331 = vunpack.c.h.b16 %v40
  %v332 = vunpack.c.l.b16 %v41
  %v333 = vunpack.c.h.b16 %v41
  %v334 = vunpack.c.l.b16 %v42
  %v335 = vunpack.c.h.b16 %v42
  %v336 = vunpack.c.l.b16 %v43
  %v337 = vunpack.c.h.b16 %v43
  %v338 = vunpack.c.l.b16 %v44
  %v339 = vunpack.c.h.b16 %v44
  %v340 = vunpack.c.l.b16 %v45
  %v341 = vunpack.c.h.b16 %v45
  %v342 = vunpack.c.l.b16 %v46
  %v343 = vunpack.c.h.b16 %v46
  %v344 = vunpack.c.l.b16 %v47
  %v345 = vunpack.c.h.b16 %v47
  %v346 = vunpack.c.l.b16 %v48
  %v347 = vunpack.c.h.b16 %v48
  %v348 = vunpack.c.l.b16 %v49
  %v349 = vunpack.c.h.b16 %v49
  %v350 = vpack.c.b16 %v320, %v318
  %v351 = vpack.c.b16 %v321, %v319
  %v352 = vpack.c.b16 %v324, %v322
  %v353 = vpack.c.b16 %v325, %v323
  %v354 = vpack.c.b16 %v328, %v326
  %v355 = vpack.c.b16 %v329, %v327
  %v356 = vpack.c.b16 %v332, %v330
  %v357 = vpack.c.b16 %v333, %v331
  %v358 = vpack.c.b16 %v336, %v334
  %v359 = vpack.c.b16 %v337, %v335
  %v360 = vpack.c.b16 %v340, %v338
  %v361 = vpack.c.b16 %v341, %v339
  %v362 = vpack.c.b16 %v344, %v342
  %v363 = vpack.c.b16 %v345, %v343
  %v364 = vpack.c.b16 %v348, %v346
  %v365 = vpack.c.b16 %v349, %v347
  %382 = vmatpush.bf16.msra.mxu0 %v364
  %383 = vmatpush.bf16.msra.mxu0 %v362
  %384 = vmatpush.bf16.msra.mxu0 %v360
  %385 = vmatpush.bf16.msra.mxu0 %v358
  %386 = vmatpush.bf16.msra.mxu0 %v356
  %387 = vmatpush.bf16.msra.mxu0 %v354
  %388 = vmatpush.bf16.msra.mxu0 %v352
  %389 = vmatpush.bf16.msra.mxu0 %v350
  %390 = vmatmul.bf16.gmra.mxu0 %v33
  %v391 = vpop.f32.mrf.mxu0
  %v392 = vadd.f32 %v273, %v391
  %v393 = vpop.f32.mrf.mxu0
  %394 = vdwg.mxu0
  %395 = vmatpush.bf16.msra.mxu0 %v365
  %396 = vmatpush.bf16.msra.mxu0 %v363
  %397 = vmatpush.bf16.msra.mxu0 %v361
  %398 = vmatpush.bf16.msra.mxu0 %v359
  %399 = vmatpush.bf16.msra.mxu0 %v357
  %400 = vmatpush.bf16.msra.mxu0 %v355
  %401 = vmatpush.bf16.msra.mxu0 %v353
  %402 = vmatpush.bf16.msra.mxu0 %v351
  %403 = vmatmul.bf16.gmra.mxu0 %v33
  %v404 = vpop.f32.mrf.mxu0
  %v405 = vadd.f32 %v299, %v404
  %v406 = vpop.f32.mrf.mxu0
  %407 = vdwg.mxu0
  %v408 = vld [vmem:[%s5] sm:$0x3]
  %v410 = vperm.slane %v408, 0
  %v411 = vperm.slane %v408, 1
  %v414 = vadd.f32 %v392, %v410
  %v415 = vadd.f32 %v405, %v411
  %v416 = vpack.c.bf16 %v415, %v414
  %417 = vst [vmem:[%s6] sm:$0xff] %v416
  // Predicated region
  $region26: #{_lambda_.16} parent=0 // pred_check
    _
  $region27: #{_lambda_.16} parent=0 // pred_check_branch
    %419 = sbr.rel (0) target = $region29
  $region28: #{_lambda_.16} parent=0 // pred_region
    _
  $region29: #{_lambda_.16} parent=0 // pred_fallthru
    _
  // Predicated region
  $region30: #{_lambda_.16} parent=0 // pred_check
    _
  $region31: #{_lambda_.16} parent=0 // pred_check_branch
    %421 = sbr.rel (0) target = $region33
  $region32: #{_lambda_.16} parent=0 // pred_region
    _
  $region33: #{_lambda_.16} parent=0 // pred_fallthru
    _

// kernel: _lambda_.18
$region0: #{_lambda_.18}
  #allocation0 [shape = 'u32[]', space=smem, size = 0x4, offset = 0x4, fixed_abs, tag = 'smem constant byte address 0x4 - core index']
  #allocation1 [shape = 'u32[72,128]{1,0:T(1,128)}', space=vmem, size = 0x9000, scoped, tag = 'internal scratch']
  %s0 = inlined_call_operand.vmem [shape: bf16[16,128], index: 0, kind: input, shape index: {}]
  %s1 = inlined_call_operand.vmem [shape: bf16[16,256], index: 1, kind: input, shape index: {}]
  %s2 = inlined_call_operand.vmem [shape: bf16[128,256], index: 2, kind: input, shape index: {}]
  %s3 = inlined_call_operand.vmem [shape: bf16[256,256], index: 3, kind: input, shape index: {}]
  %s4 = inlined_call_operand.vmem [shape: f32[2,128], index: 4, kind: input, shape index: {}]
  %s5 = inlined_call_operand.vmem [shape: f32[1,256], index: 5, kind: input, shape index: {}]
  %s6 = inlined_call_operand.vmem [shape: bf16[16,256], index: 6, kind: output, shape index: {}]
  %s7 = sld [smem:[#allocation0]]
  $region34: #{_lambda_.18} parent=0
    _
  %s9 = ssub.s32 1, %s7
  %s10 = scalar_select 0, %s9, %s7
  // Predicated region
  $region2: #{_lambda_.18} parent=0 // pred_check
    _
  $region3: #{_lambda_.18} parent=0 // pred_check_branch
    %12 = sbr.rel (0) target = $region5
  $region4: #{_lambda_.18} parent=0 // pred_region
    _
  $region5: #{_lambda_.18} parent=0 // pred_fallthru
    _
  // Predicated region
  $region6: #{_lambda_.18} parent=0 // pred_check
    _
  $region7: #{_lambda_.18} parent=0 // pred_check_branch
    %14 = sbr.rel (0) target = $region9
  $region8: #{_lambda_.18} parent=0 // pred_region
    _
  $region9: #{_lambda_.18} parent=0 // pred_fallthru
    _
  // Predicated region
  $region10: #{_lambda_.18} parent=0 // pred_check
    _
  $region11: #{_lambda_.18} parent=0 // pred_check_branch
    %16 = sbr.rel (0) target = $region13
  $region12: #{_lambda_.18} parent=0 // pred_region
    _
  $region13: #{_lambda_.18} parent=0 // pred_fallthru
    _
  // Predicated region
  $region14: #{_lambda_.18} parent=0 // pred_check
    _
  $region15: #{_lambda_.18} parent=0 // pred_check_branch
    %18 = sbr.rel (0) target = $region17
  $region16: #{_lambda_.18} parent=0 // pred_region
    _
  $region17: #{_lambda_.18} parent=0 // pred_fallthru
    _
  // Predicated region
  $region18: #{_lambda_.18} parent=0 // pred_check
    _
  $region19: #{_lambda_.18} parent=0 // pred_check_branch
    %20 = sbr.rel (0) target = $region21
  $region20: #{_lambda_.18} parent=0 // pred_region
    _
  $region21: #{_lambda_.18} parent=0 // pred_fallthru
    _
  // Predicated region
  $region22: #{_lambda_.18} parent=0 // pred_check
    _
  $region23: #{_lambda_.18} parent=0 // pred_check_branch
    %22 = sbr.rel (0) target = $region25
  $region24: #{_lambda_.18} parent=0 // pred_region
    _
  $region25: #{_lambda_.18} parent=0 // pred_fallthru
    _
  %v23 = vld [vmem:[%s0] sm:$0xf]
  %v24 = vld [vmem:[%s0 + $0x4] sm:$0xf]
  %v25 = vunpack.c.l.bf16 %v23
  %v26 = vunpack.c.l.bf16 %v24
  %v27 = vld [vmem:[%s4] sm:$0x3]
  %v28 = vperm.slane %v27, 0
  %v29 = vmul.f32 %v25, %v28
  %v30 = vmul.f32 %v26, %v28
  %v31 = vperm.slane %v27, 1
  %v32 = vadd.f32 %v29, %v31
  %v33 = vadd.f32 %v30, %v31
  %vm34 = vcmp.gt.f32.partialorder %v32, 0.0
  %vm35 = vcmp.gt.f32.partialorder %v33, 0.0
  %v36 = vmul.f32 %v32, 0.33
  %v37 = vmul.f32 %v33, 0.33
  %v38 = vsel %vm34, %v32, %v36
  %v39 = vsel %vm35, %v33, %v37
  %v40 = vpack.c.bf16 %v39, %v38
  %v41 = vld [vmem:[%s2] sm:$0xff]
  %v42 = vld [vmem:[%s2 + $0x8] sm:$0xff]
  %v43 = vld [vmem:[%s2 + $0x10] sm:$0xff]
  %v44 = vld [vmem:[%s2 + $0x18] sm:$0xff]
  %v45 = vld [vmem:[%s2 + $0x20] sm:$0xff]
  %v46 = vld [vmem:[%s2 + $0x28] sm:$0xff]
  %v47 = vld [vmem:[%s2 + $0x30] sm:$0xff]
  %v48 = vld [vmem:[%s2 + $0x38] sm:$0xff]
  %v49 = vld [vmem:[%s2 + $0x40] sm:$0xff]
  %v50 = vld [vmem:[%s2 + $0x48] sm:$0xff]
  %v51 = vld [vmem:[%s2 + $0x50] sm:$0xff]
  %v52 = vld [vmem:[%s2 + $0x58] sm:$0xff]
  %v53 = vld [vmem:[%s2 + $0x60] sm:$0xff]
  %v54 = vld [vmem:[%s2 + $0x68] sm:$0xff]
  %v55 = vld [vmem:[%s2 + $0x70] sm:$0xff]
  %v56 = vld [vmem:[%s2 + $0x78] sm:$0xff]
  %v57 = vld [vmem:[%s1] sm:$0xff]
  %v58 = vld [vmem:[%s1 + $0x8] sm:$0xff]
  %v59 = vld [vmem:[%s3] sm:$0xff]
  %v60 = vld [vmem:[%s3 + $0x8] sm:$0xff]
  %v61 = vld [vmem:[%s3 + $0x10] sm:$0xff]
  %v62 = vld [vmem:[%s3 + $0x18] sm:$0xff]
  %v63 = vld [vmem:[%s3 + $0x20] sm:$0xff]
  %v64 = vld [vmem:[%s3 + $0x28] sm:$0xff]
  %v65 = vld [vmem:[%s3 + $0x30] sm:$0xff]
  %v66 = vld [vmem:[%s3 + $0x38] sm:$0xff]
  %v67 = vld [vmem:[%s3 + $0x40] sm:$0xff]
  %v68 = vld [vmem:[%s3 + $0x48] sm:$0xff]
  %v69 = vld [vmem:[%s3 + $0x50] sm:$0xff]
  %v70 = vld [vmem:[%s3 + $0x58] sm:$0xff]
  %v71 = vld [vmem:[%s3 + $0x60] sm:$0xff]
  %v72 = vld [vmem:[%s3 + $0x68] sm:$0xff]
  %v73 = vld [vmem:[%s3 + $0x70] sm:$0xff]
  %v74 = vld [vmem:[%s3 + $0x78] sm:$0xff]
  %v75 = vld [vmem:[%s3 + $0x80] sm:$0xff]
  %v76 = vld [vmem:[%s3 + $0x88] sm:$0xff]
  %v77 = vld [vmem:[%s3 + $0x90] sm:$0xff]
  %v78 = vld [vmem:[%s3 + $0x98] sm:$0xff]
  %v79 = vld [vmem:[%s3 + $0xa0] sm:$0xff]
  %v80 = vld [vmem:[%s3 + $0xa8] sm:$0xff]
  %v81 = vld [vmem:[%s3 + $0xb0] sm:$0xff]
  %v82 = vld [vmem:[%s3 + $0xb8] sm:$0xff]
  %v83 = vld [vmem:[%s3 + $0xc0] sm:$0xff]
  %v84 = vld [vmem:[%s3 + $0xc8] sm:$0xff]
  %v85 = vld [vmem:[%s3 + $0xd0] sm:$0xff]
  %v86 = vld [vmem:[%s3 + $0xd8] sm:$0xff]
  %v87 = vld [vmem:[%s3 + $0xe0] sm:$0xff]
  %v88 = vld [vmem:[%s3 + $0xe8] sm:$0xff]
  %v89 = vld [vmem:[%s3 + $0xf0] sm:$0xff]
  %v90 = vld [vmem:[%s3 + $0xf8] sm:$0xff]
  %v93 = vunpack.c.l.b16 %v57
  %v94 = vunpack.c.h.b16 %v57
  %v95 = vunpack.c.l.b16 %v58
  %v96 = vunpack.c.h.b16 %v58
  %v97 = vpack.c.b16 %v95, %v93
  %v98 = vpack.c.b16 %v96, %v94
  %v133 = vunpack.c.l.b16 %v59
  %v134 = vunpack.c.h.b16 %v59
  %v135 = vunpack.c.l.b16 %v60
  %v136 = vunpack.c.h.b16 %v60
  %v137 = vunpack.c.l.b16 %v61
  %v138 = vunpack.c.h.b16 %v61
  %v139 = vunpack.c.l.b16 %v62
  %v140 = vunpack.c.h.b16 %v62
  %v141 = vunpack.c.l.b16 %v63
  %v142 = vunpack.c.h.b16 %v63
  %v143 = vunpack.c.l.b16 %v64
  %v144 = vunpack.c.h.b16 %v64
  %v145 = vunpack.c.l.b16 %v65
  %v146 = vunpack.c.h.b16 %v65
  %v147 = vunpack.c.l.b16 %v66
  %v148 = vunpack.c.h.b16 %v66
  %v149 = vunpack.c.l.b16 %v67
  %v150 = vunpack.c.h.b16 %v67
  %v151 = vunpack.c.l.b16 %v68
  %v152 = vunpack.c.h.b16 %v68
  %v153 = vunpack.c.l.b16 %v69
  %v154 = vunpack.c.h.b16 %v69
  %v155 = vunpack.c.l.b16 %v70
  %v156 = vunpack.c.h.b16 %v70
  %v157 = vunpack.c.l.b16 %v71
  %v158 = vunpack.c.h.b16 %v71
  %v159 = vunpack.c.l.b16 %v72
  %v160 = vunpack.c.h.b16 %v72
  %v161 = vunpack.c.l.b16 %v73
  %v162 = vunpack.c.h.b16 %v73
  %v163 = vunpack.c.l.b16 %v74
  %v164 = vunpack.c.h.b16 %v74
  %v165 = vunpack.c.l.b16 %v75
  %v166 = vunpack.c.h.b16 %v75
  %v167 = vunpack.c.l.b16 %v76
  %v168 = vunpack.c.h.b16 %v76
  %v169 = vunpack.c.l.b16 %v77
  %v170 = vunpack.c.h.b16 %v77
  %v171 = vunpack.c.l.b16 %v78
  %v172 = vunpack.c.h.b16 %v78
  %v173 = vunpack.c.l.b16 %v79
  %v174 = vunpack.c.h.b16 %v79
  %v175 = vunpack.c.l.b16 %v80
  %v176 = vunpack.c.h.b16 %v80
  %v177 = vunpack.c.l.b16 %v81
  %v178 = vunpack.c.h.b16 %v81
  %v179 = vunpack.c.l.b16 %v82
  %v180 = vunpack.c.h.b16 %v82
  %v181 = vunpack.c.l.b16 %v83
  %v182 = vunpack.c.h.b16 %v83
  %v183 = vunpack.c.l.b16 %v84
  %v184 = vunpack.c.h.b16 %v84
  %v185 = vunpack.c.l.b16 %v85
  %v186 = vunpack.c.h.b16 %v85
  %v187 = vunpack.c.l.b16 %v86
  %v188 = vunpack.c.h.b16 %v86
  %v189 = vunpack.c.l.b16 %v87
  %v190 = vunpack.c.h.b16 %v87
  %v191 = vunpack.c.l.b16 %v88
  %v192 = vunpack.c.h.b16 %v88
  %v193 = vunpack.c.l.b16 %v89
  %v194 = vunpack.c.h.b16 %v89
  %v195 = vunpack.c.l.b16 %v90
  %v196 = vunpack.c.h.b16 %v90
  %v197 = vpack.c.b16 %v135, %v133
  %v198 = vpack.c.b16 %v136, %v134
  %v199 = vpack.c.b16 %v139, %v137
  %v200 = vpack.c.b16 %v140, %v138
  %v201 = vpack.c.b16 %v143, %v141
  %v202 = vpack.c.b16 %v144, %v142
  %v203 = vpack.c.b16 %v147, %v145
  %v204 = vpack.c.b16 %v148, %v146
  %v205 = vpack.c.b16 %v151, %v149
  %v206 = vpack.c.b16 %v152, %v150
  %v207 = vpack.c.b16 %v155, %v153
  %v208 = vpack.c.b16 %v156, %v154
  %v209 = vpack.c.b16 %v159, %v157
  %v210 = vpack.c.b16 %v160, %v158
  %v211 = vpack.c.b16 %v163, %v161
  %v212 = vpack.c.b16 %v164, %v162
  %v213 = vpack.c.b16 %v167, %v165
  %v214 = vpack.c.b16 %v168, %v166
  %v215 = vpack.c.b16 %v171, %v169
  %v216 = vpack.c.b16 %v172, %v170
  %v217 = vpack.c.b16 %v175, %v173
  %v218 = vpack.c.b16 %v176, %v174
  %v219 = vpack.c.b16 %v179, %v177
  %v220 = vpack.c.b16 %v180, %v178
  %v221 = vpack.c.b16 %v183, %v181
  %v222 = vpack.c.b16 %v184, %v182
  %v223 = vpack.c.b16 %v187, %v185
  %v224 = vpack.c.b16 %v188, %v186
  %v225 = vpack.c.b16 %v191, %v189
  %v226 = vpack.c.b16 %v192, %v190
  %v227 = vpack.c.b16 %v195, %v193
  %v228 = vpack.c.b16 %v196, %v194
  %261 = vmatpush.bf16.msra.mxu0 %v211
  %262 = vmatpush.bf16.msra.mxu0 %v209
  %263 = vmatpush.bf16.msra.mxu0 %v207
  %264 = vmatpush.bf16.msra.mxu0 %v205
  %265 = vmatpush.bf16.msra.mxu0 %v203
  %266 = vmatpush.bf16.msra.mxu0 %v201
  %267 = vmatpush.bf16.msra.mxu0 %v199
  %268 = vmatpush.bf16.msra.mxu0 %v197
  %269 = vmatmul.bf16.gmra.mxu0 %v97
  %v270 = vpop.f32.mrf.mxu0
  %v271 = vadd.f32 0.0, %v270
  %v272 = vpop.f32.mrf.mxu0
  %v273 = vadd.f32 0.0, %v272
  %274 = vdwg.mxu0
  %275 = vmatpush.bf16.msra.mxu0 %v227
  %276 = vmatpush.bf16.msra.mxu0 %v225
  %277 = vmatpush.bf16.msra.mxu0 %v223
  %278 = vmatpush.bf16.msra.mxu0 %v221
  %279 = vmatpush.bf16.msra.mxu0 %v219
  %280 = vmatpush.bf16.msra.mxu0 %v217
  %281 = vmatpush.bf16.msra.mxu0 %v215
  %282 = vmatpush.bf16.msra.mxu0 %v213
  %283 = vmatmul.bf16.gmra.mxu0 %v98
  %v284 = vpop.f32.mrf.mxu0
  %v285 = vadd.f32 %v271, %v284
  %v286 = vpop.f32.mrf.mxu0
  %v287 = vadd.f32 %v273, %v286
  %288 = vdwg.mxu0
  %289 = vmatpush.bf16.msra.mxu0 %v212
  %290 = vmatpush.bf16.msra.mxu0 %v210
  %291 = vmatpush.bf16.msra.mxu0 %v208
  %292 = vmatpush.bf16.msra.mxu0 %v206
  %293 = vmatpush.bf16.msra.mxu0 %v204
  %294 = vmatpush.bf16.msra.mxu0 %v202
  %295 = vmatpush.bf16.msra.mxu0 %v200
  %296 = vmatpush.bf16.msra.mxu0 %v198
  %297 = vmatmul.bf16.gmra.mxu0 %v97
  %v298 = vpop.f32.mrf.mxu0
  %v299 = vadd.f32 0.0, %v298
  %v300 = vpop.f32.mrf.mxu0
  %v301 = vadd.f32 0.0, %v300
  %302 = vdwg.mxu0
  %303 = vmatpush.bf16.msra.mxu0 %v228
  %304 = vmatpush.bf16.msra.mxu0 %v226
  %305 = vmatpush.bf16.msra.mxu0 %v224
  %306 = vmatpush.bf16.msra.mxu0 %v222
  %307 = vmatpush.bf16.msra.mxu0 %v220
  %308 = vmatpush.bf16.msra.mxu0 %v218
  %309 = vmatpush.bf16.msra.mxu0 %v216
  %310 = vmatpush.bf16.msra.mxu0 %v214
  %311 = vmatmul.bf16.gmra.mxu0 %v98
  %v312 = vpop.f32.mrf.mxu0
  %v313 = vadd.f32 %v299, %v312
  %v314 = vpop.f32.mrf.mxu0
  %v315 = vadd.f32 %v301, %v314
  %316 = vdwg.mxu0
  %v333 = vunpack.c.l.b16 %v41
  %v334 = vunpack.c.h.b16 %v41
  %v335 = vunpack.c.l.b16 %v42
  %v336 = vunpack.c.h.b16 %v42
  %v337 = vunpack.c.l.b16 %v43
  %v338 = vunpack.c.h.b16 %v43
  %v339 = vunpack.c.l.b16 %v44
  %v340 = vunpack.c.h.b16 %v44
  %v341 = vunpack.c.l.b16 %v45
  %v342 = vunpack.c.h.b16 %v45
  %v343 = vunpack.c.l.b16 %v46
  %v344 = vunpack.c.h.b16 %v46
  %v345 = vunpack.c.l.b16 %v47
  %v346 = vunpack.c.h.b16 %v47
  %v347 = vunpack.c.l.b16 %v48
  %v348 = vunpack.c.h.b16 %v48
  %v349 = vunpack.c.l.b16 %v49
  %v350 = vunpack.c.h.b16 %v49
  %v351 = vunpack.c.l.b16 %v50
  %v352 = vunpack.c.h.b16 %v50
  %v353 = vunpack.c.l.b16 %v51
  %v354 = vunpack.c.h.b16 %v51
  %v355 = vunpack.c.l.b16 %v52
  %v356 = vunpack.c.h.b16 %v52
  %v357 = vunpack.c.l.b16 %v53
  %v358 = vunpack.c.h.b16 %v53
  %v359 = vunpack.c.l.b16 %v54
  %v360 = vunpack.c.h.b16 %v54
  %v361 = vunpack.c.l.b16 %v55
  %v362 = vunpack.c.h.b16 %v55
  %v363 = vunpack.c.l.b16 %v56
  %v364 = vunpack.c.h.b16 %v56
  %v365 = vpack.c.b16 %v335, %v333
  %v366 = vpack.c.b16 %v336, %v334
  %v367 = vpack.c.b16 %v339, %v337
  %v368 = vpack.c.b16 %v340, %v338
  %v369 = vpack.c.b16 %v343, %v341
  %v370 = vpack.c.b16 %v344, %v342
  %v371 = vpack.c.b16 %v347, %v345
  %v372 = vpack.c.b16 %v348, %v346
  %v373 = vpack.c.b16 %v351, %v349
  %v374 = vpack.c.b16 %v352, %v350
  %v375 = vpack.c.b16 %v355, %v353
  %v376 = vpack.c.b16 %v356, %v354
  %v377 = vpack.c.b16 %v359, %v357
  %v378 = vpack.c.b16 %v360, %v358
  %v379 = vpack.c.b16 %v363, %v361
  %v380 = vpack.c.b16 %v364, %v362
  %397 = vmatpush.bf16.msra.mxu0 %v379
  %398 = vmatpush.bf16.msra.mxu0 %v377
  %399 = vmatpush.bf16.msra.mxu0 %v375
  %400 = vmatpush.bf16.msra.mxu0 %v373
  %401 = vmatpush.bf16.msra.mxu0 %v371
  %402 = vmatpush.bf16.msra.mxu0 %v369
  %403 = vmatpush.bf16.msra.mxu0 %v367
  %404 = vmatpush.bf16.msra.mxu0 %v365
  %405 = vmatmul.bf16.gmra.mxu0 %v40
  %v406 = vpop.f32.mrf.mxu0
  %v407 = vadd.f32 %v285, %v406
  %v408 = vpop.f32.mrf.mxu0
  %v409 = vadd.f32 %v287, %v408
  %410 = vdwg.mxu0
  %411 = vmatpush.bf16.msra.mxu0 %v380
  %412 = vmatpush.bf16.msra.mxu0 %v378
  %413 = vmatpush.bf16.msra.mxu0 %v376
  %414 = vmatpush.bf16.msra.mxu0 %v374
  %415 = vmatpush.bf16.msra.mxu0 %v372
  %416 = vmatpush.bf16.msra.mxu0 %v370
  %417 = vmatpush.bf16.msra.mxu0 %v368
  %418 = vmatpush.bf16.msra.mxu0 %v366
  %419 = vmatmul.bf16.gmra.mxu0 %v40
  %v420 = vpop.f32.mrf.mxu0
  %v421 = vadd.f32 %v313, %v420
  %v422 = vpop.f32.mrf.mxu0
  %v423 = vadd.f32 %v315, %v422
  %424 = vdwg.mxu0
  %v425 = vld [vmem:[%s5] sm:$0x3]
  %v427 = vperm.slane %v425, 0
  %v428 = vperm.slane %v425, 1
  %v431 = vadd.f32 %v407, %v427
  %v432 = vadd.f32 %v421, %v428
  %v433 = vadd.f32 %v409, %v427
  %v434 = vadd.f32 %v423, %v428
  %v435 = vpack.c.bf16 %v432, %v431
  %v436 = vpack.c.bf16 %v434, %v433
  %437 = vst [vmem:[%s6] sm:$0xff] %v435
  %438 = vst [vmem:[%s6 + $0x8] sm:$0xff] %v436
  // Predicated region
  $region26: #{_lambda_.18} parent=0 // pred_check
    _
  $region27: #{_lambda_.18} parent=0 // pred_check_branch
    %440 = sbr.rel (0) target = $region29
  $region28: #{_lambda_.18} parent=0 // pred_region
    _
  $region29: #{_lambda_.18} parent=0 // pred_fallthru
    _
  // Predicated region
  $region30: #{_lambda_.18} parent=0 // pred_check
    _
  $region31: #{_lambda_.18} parent=0 // pred_check_branch
    %442 = sbr.rel (0) target = $region33
  $region32: #{_lambda_.18} parent=0 // pred_region
    _
  $region33: #{_lambda_.18} parent=0 // pred_fallthru
    _

</llo_original>
